<compile_context>
chip_gen: v6e
topology: v6e:2x2x1
jax: 0.10.0
libtpu: 0.0.40
codegen_flags: <defaults>
</compile_context>

<pallas_src>
import functools
import math

import jax
import jax.numpy as jnp
from jax.experimental import pallas as pl
from jax.experimental.pallas import tpu as pltpu

LN_EPS = 1e-5
NUM_VEC_ROWS = 16  # 10 used, padded to a multiple of 8 sublanes
# packed-vector row layout (f32):
#   0 = bq * (1/sqrt(head_dim)) ; 1 = bk ; 2 = bv ; 3 = bo ;
#   4, 5 = gamma1, beta1 ; 6, 7 = b_fc1, b_fc2 ; 8, 9 = gamma2, beta2 ;
#   10..15 unused (zero)


def _layer_norm(x, gamma, beta):
    mean = jnp.mean(x, axis=-1, keepdims=True)
    var = jnp.mean((x - mean) ** 2, axis=-1, keepdims=True)
    return (x - mean) * jax.lax.rsqrt(var + LN_EPS) * gamma + beta


def _encoder_kernel(x_ref, pe_ref, w_ref, vec_ref, o_ref, act_ref,
                    *, num_heads, seq_len):
    layer = pl.program_id(1)
    num_layers = pl.num_programs(1)

    # Layer 0: bring this batch block into the VMEM-resident activation
    # scratch, fusing the positional-encoding add.
    @pl.when(layer == 0)
    def _():
        xb = x_ref[...].astype(jnp.float32) + pe_ref[...][None, :, :]
        act_ref[...] = xb.reshape(act_ref.shape)

    x = act_ref[...]                       # (Bb*S, D) f32, VMEM resident
    N, D = x.shape
    Bb = N // seq_len
    H = num_heads
    hd = D // H

    w = w_ref[0]                           # (D, 6D) bf16 packed weight slab
    vec = vec_ref[0]                       # (16, D) f32 packed biases / LN params

    x_bf = x.astype(jnp.bfloat16)

    # ---- fused Q/K/V projection (one bf16 matmul) --------------------------
    qkv = jnp.dot(x_bf, w[:, 0:3 * D], preferred_element_type=jnp.float32)
    # scale 1/sqrt(hd) already folded into Wq columns and bq row
    q = (qkv[:, 0:D] + vec[0]).reshape(Bb, seq_len, D)
    k = (qkv[:, D:2 * D] + vec[1]).reshape(Bb, seq_len, D)
    v = (qkv[:, 2 * D:3 * D] + vec[2]).reshape(Bb, seq_len, D)

    # ---- scaled dot-product attention, batched over the Bb samples ---------
    ctx_heads = []
    for h in range(H):                     # static unroll over heads
        sl = slice(h * hd, (h + 1) * hd)
        qh = q[:, :, sl].astype(jnp.bfloat16)     # (Bb, S, hd)
        kh = k[:, :, sl].astype(jnp.bfloat16)
        vh = v[:, :, sl].astype(jnp.bfloat16)
        s = jnp.einsum("bqd,bkd->bqk", qh, kh,
                       preferred_element_type=jnp.float32)        # (Bb, S, S)
        s = s - jnp.max(s, axis=-1, keepdims=True)
        p = jnp.exp(s)
        p = p / jnp.sum(p, axis=-1, keepdims=True)                # exact softmax
        ctx_heads.append(
            jnp.einsum("bqk,bkd->bqd", p.astype(jnp.bfloat16), vh,
                       preferred_element_type=jnp.float32))       # (Bb, S, hd)
    ctx = jnp.concatenate(ctx_heads, axis=-1).reshape(N, D)

    attn = jnp.dot(ctx.astype(jnp.bfloat16), w[:, 3 * D:4 * D],
                   preferred_element_type=jnp.float32) + vec[3]

    # residual + layer norm 1
    y = _layer_norm(attn + x, vec[4], vec[5])

    # ---- feed forward: Linear(D,D) -> ReLU -> Linear(D,D) ------------------
    h1 = jnp.dot(y.astype(jnp.bfloat16), w[:, 4 * D:5 * D],
                 preferred_element_type=jnp.float32) + vec[6]
    h1 = jnp.maximum(h1, 0.0)
    h2 = jnp.dot(h1.astype(jnp.bfloat16), w[:, 5 * D:6 * D],
                 preferred_element_type=jnp.float32) + vec[7]

    # residual + layer norm 2
    out = _layer_norm(h2 + y, vec[8], vec[9])
    act_ref[...] = out

    # Final layer: single HBM writeback for this batch block.
    @pl.when(layer == num_layers - 1)
    def _():
        o_ref[...] = out.reshape(o_ref.shape).astype(o_ref.dtype)


def sinusoidal_pe(seq_len, d_model):
    pos = jnp.arange(seq_len, dtype=jnp.float32)[:, None]
    i = jnp.arange(0, d_model, 2, dtype=jnp.float32)[None, :]
    angle = pos / jnp.power(10000.0, i / d_model)
    pe = jnp.zeros((seq_len, d_model), jnp.float32)
    pe = pe.at[:, 0::2].set(jnp.sin(angle))
    pe = pe.at[:, 1::2].set(jnp.cos(angle))
    return pe


def original_transformer_encoder(x, params, num_heads, *, block_b=8,
                                 vmem_limit_bytes=48 * 1024 * 1024):
    B, S, D = x.shape
    L = params["w"].shape[0]
    Bb = min(block_b, B)
    assert B % Bb == 0, "batch must be divisible by the batch block"
    assert D % num_heads == 0 and D % 128 == 0

    pe = sinusoidal_pe(S, D)
    kernel = functools.partial(_encoder_kernel, num_heads=num_heads, seq_len=S)

    # TODO(synk): on v7x consider pltpu.CORE_PARALLEL on the batch-block axis
    # so the two TensorCores split the batch when B // Bb > 1.
    return pl.pallas_call(
        kernel,
        out_shape=jax.ShapeDtypeStruct((B, S, D), x.dtype),
        grid=(B // Bb, L),
        in_specs=[
            pl.BlockSpec((Bb, S, D), lambda b, l: (b, 0, 0)),               # x
            pl.BlockSpec((S, D), lambda b, l: (0, 0)),                      # pe
            pl.BlockSpec((1, D, 6 * D), lambda b, l: (l, 0, 0)),            # packed weights (bf16)
            pl.BlockSpec((1, NUM_VEC_ROWS, D), lambda b, l: (l, 0, 0)),     # packed vectors (f32)
        ],
        out_specs=pl.BlockSpec((Bb, S, D), lambda b, l: (b, 0, 0)),
        scratch_shapes=[pltpu.VMEM((Bb * S, D), jnp.float32)],
        compiler_params=pltpu.CompilerParams(
            dimension_semantics=("parallel", "arbitrary"),
            vmem_limit_bytes=vmem_limit_bytes),
    )(x, pe, params["w"], params["vec"])


def init_params(key, num_layers, d, num_heads):
    """Per-layer weights packed into a (L, D, 6D) bf16 slab + (L, 16, D) f32 vecs.

    Weight matrices use (in, out) layout, i.e. the transpose of PyTorch
    nn.Linear.weight.  The 1/sqrt(head_dim) attention scale is folded into the
    Wq columns and the bq row.
    """
    scale = 1.0 / math.sqrt(d // num_heads)
    layer_keys = jax.random.split(key, num_layers)
    w_all, vec_all = [], []
    for lk in layer_keys:
        ks = jax.random.split(lk, 7)

        def lin(kk):
            return jax.random.normal(kk, (d, d), jnp.float32) * 0.05

        wq, wk, wv, wo, w1, w2 = (lin(ks[i]) for i in range(6))
        slab = jnp.concatenate([wq * scale, wk, wv, wo, w1, w2], axis=1)
        w_all.append(slab.astype(jnp.bfloat16))

        v = jax.random.normal(ks[6], (NUM_VEC_ROWS, d), jnp.float32) * 0.02
        v = v.at[0].multiply(scale)  # bq * scale (fold attention scale)
        v = v.at[4].set(1.0)         # gamma1
        v = v.at[8].set(1.0)         # gamma2
        v = v.at[10:].set(0.0)       # unused padding rows
        vec_all.append(v)

    return dict(w=jnp.stack(w_all), vec=jnp.stack(vec_all))


if __name__ == "__main__":
    # batch, seq, embed_dim (lane-dense multiple of 128), heads, layers
    B, S, D, H, L = 8, 16, 128, 8, 2
    key = jax.random.PRNGKey(0)
    kx, kp = jax.random.split(key)
    x = jax.random.normal(kx, (B, S, D), jnp.float32)
    params = init_params(kp, L, D, H)

    y = original_transformer_encoder(x, params, H)
    jax.block_until_ready(y)
    assert y.shape == (B, S, D)
    assert bool(jnp.all(jnp.isfinite(y)))
    print("KERNEL_OK")
</pallas_src>

<mosaic_0001>
module attributes {stable_mosaic.version = 11 : i64} {
  func.func @_encoder_kernel(%arg0: i32, %arg1: i32, %arg2: memref<8x16x128xf32, #tpu.memory_space<vmem>>, %arg3: memref<16x128xf32, #tpu.memory_space<vmem>>, %arg4: memref<1x128x768xbf16, #tpu.memory_space<vmem>>, %arg5: memref<1x16x128xf32, #tpu.memory_space<vmem>>, %arg6: memref<8x16x128xf32, #tpu.memory_space<vmem>>, %arg7: memref<128x128xf32, #tpu.memory_space<vmem>>) attributes {dimension_semantics = [#tpu.dimension_semantics<parallel>, #tpu.dimension_semantics<arbitrary>], iteration_bounds = array<i64: 1, 2>, scalar_prefetch = 0 : i64, scratch_operands = 1 : i64, tpu.core_type = #tpu.core_type<tc>, window_params = [{transform_indices = @transform_0, window_bounds = array<i64: 8, 16, 128>}, {pipeline_mode = #tpu.pipeline_mode<synchronous>, transform_indices = @transform_1, window_bounds = array<i64: 16, 128>}, {transform_indices = @transform_2, window_bounds = array<i64: 1, 128, 768>}, {transform_indices = @transform_3, window_bounds = array<i64: 1, 16, 128>}, {transform_indices = @transform_4, window_bounds = array<i64: 8, 16, 128>}]} {
    %c0_i32 = arith.constant 0 : i32
    %0 = arith.cmpi eq, %arg1, %c0_i32 : i32
    %1 = arith.extui %0 : i1 to i32
    %c0_i32_0 = arith.constant 0 : i32
    %2 = arith.cmpi ne, %1, %c0_i32_0 : i32
    scf.if %2 {
      %c0_57 = arith.constant 0 : index
      %c0_58 = arith.constant 0 : index
      %c0_59 = arith.constant 0 : index
      %266 = vector.load %arg2[%c0_57, %c0_58, %c0_59] : memref<8x16x128xf32, #tpu.memory_space<vmem>>, vector<8x16x128xf32>
      %c0_60 = arith.constant 0 : index
      %c0_61 = arith.constant 0 : index
      %267 = vector.load %arg3[%c0_60, %c0_61] : memref<16x128xf32, #tpu.memory_space<vmem>>, vector<16x128xf32>
      %268 = vector.shape_cast %267 : vector<16x128xf32> to vector<1x16x128xf32>
      %269 = vector.broadcast %268 : vector<1x16x128xf32> to vector<8x16x128xf32>
      %270 = arith.addf %266, %269 : vector<8x16x128xf32>
      %271 = vector.shape_cast %270 : vector<8x16x128xf32> to vector<128x128xf32>
      %c0_62 = arith.constant 0 : index
      %c0_63 = arith.constant 0 : index
      %272 = vector.load %arg7[%c0_62, %c0_63] : memref<128x128xf32, #tpu.memory_space<vmem>>, vector<128x128xf32>
      tpu.vector_store %arg7[%c0_62, %c0_63], %271 {strides = array<i32>} : memref<128x128xf32, #tpu.memory_space<vmem>>, vector<128x128xf32>,
    } else {
    }
    %c0 = arith.constant 0 : index
    %c0_1 = arith.constant 0 : index
    %3 = vector.load %arg7[%c0, %c0_1] : memref<128x128xf32, #tpu.memory_space<vmem>>, vector<128x128xf32>
    %c0_2 = arith.constant 0 : index
    %c0_3 = arith.constant 0 : index
    %c0_4 = arith.constant 0 : index
    %4 = vector.load %arg4[%c0_2, %c0_3, %c0_4] : memref<1x128x768xbf16, #tpu.memory_space<vmem>>, vector<1x128x768xbf16>
    %5 = vector.shape_cast %4 : vector<1x128x768xbf16> to vector<128x768xbf16>
    %c0_5 = arith.constant 0 : index
    %c0_6 = arith.constant 0 : index
    %c0_7 = arith.constant 0 : index
    %6 = vector.load %arg5[%c0_5, %c0_6, %c0_7] : memref<1x16x128xf32, #tpu.memory_space<vmem>>, vector<1x16x128xf32>
    %7 = vector.shape_cast %6 : vector<1x16x128xf32> to vector<16x128xf32>
    %8 = arith.truncf %3 : vector<128x128xf32> to vector<128x128xbf16>
    %9 = vector.extract_strided_slice %5 {offsets = [0, 0], sizes = [128, 384], strides = [1, 1]} : vector<128x768xbf16> to vector<128x384xbf16>
    %cst = arith.constant dense<0.000000e+00> : vector<128x384xf32>
    %10 = tpu.matmul %8, %9, %cst {dimension_numbers = #tpu.dot_dimension_numbers<[1], [0], [0], [1], [0, 0, 1, 1], [], []>} : vector<128x128xbf16>, vector<128x384xbf16>, vector<128x384xf32> -> vector<128x384xf32>
    %11 = vector.extract_strided_slice %10 {offsets = [0, 0], sizes = [128, 128], strides = [1, 1]} : vector<128x384xf32> to vector<128x128xf32>
    %12 = vector.extract_strided_slice %7 {offsets = [0, 0], sizes = [1, 128], strides = [1, 1]} : vector<16x128xf32> to vector<1x128xf32>
    %13 = vector.shape_cast %12 : vector<1x128xf32> to vector<128xf32>
    %14 = vector.shape_cast %13 : vector<128xf32> to vector<1x128xf32>
    %15 = vector.broadcast %14 : vector<1x128xf32> to vector<128x128xf32>
    %16 = arith.addf %11, %15 : vector<128x128xf32>
    %17 = vector.shape_cast %16 : vector<128x128xf32> to vector<8x16x128xf32>
    %18 = vector.extract_strided_slice %10 {offsets = [0, 128], sizes = [128, 128], strides = [1, 1]} : vector<128x384xf32> to vector<128x128xf32>
    %19 = vector.extract_strided_slice %7 {offsets = [1, 0], sizes = [1, 128], strides = [1, 1]} : vector<16x128xf32> to vector<1x128xf32>
    %20 = vector.shape_cast %19 : vector<1x128xf32> to vector<128xf32>
    %21 = vector.shape_cast %20 : vector<128xf32> to vector<1x128xf32>
    %22 = vector.broadcast %21 : vector<1x128xf32> to vector<128x128xf32>
    %23 = arith.addf %18, %22 : vector<128x128xf32>
    %24 = vector.shape_cast %23 : vector<128x128xf32> to vector<8x16x128xf32>
    %25 = vector.extract_strided_slice %10 {offsets = [0, 256], sizes = [128, 128], strides = [1, 1]} : vector<128x384xf32> to vector<128x128xf32>
    %26 = vector.extract_strided_slice %7 {offsets = [2, 0], sizes = [1, 128], strides = [1, 1]} : vector<16x128xf32> to vector<1x128xf32>
    %27 = vector.shape_cast %26 : vector<1x128xf32> to vector<128xf32>
    %28 = vector.shape_cast %27 : vector<128xf32> to vector<1x128xf32>
    %29 = vector.broadcast %28 : vector<1x128xf32> to vector<128x128xf32>
    %30 = arith.addf %25, %29 : vector<128x128xf32>
    %31 = vector.shape_cast %30 : vector<128x128xf32> to vector<8x16x128xf32>
    %32 = vector.extract_strided_slice %17 {offsets = [0, 0, 0], sizes = [8, 16, 16], strides = [1, 1, 1]} : vector<8x16x128xf32> to vector<8x16x16xf32>
    %33 = arith.truncf %32 : vector<8x16x16xf32> to vector<8x16x16xbf16>
    %34 = vector.extract_strided_slice %24 {offsets = [0, 0, 0], sizes = [8, 16, 16], strides = [1, 1, 1]} : vector<8x16x128xf32> to vector<8x16x16xf32>
    %35 = arith.truncf %34 : vector<8x16x16xf32> to vector<8x16x16xbf16>
    %36 = vector.extract_strided_slice %31 {offsets = [0, 0, 0], sizes = [8, 16, 16], strides = [1, 1, 1]} : vector<8x16x128xf32> to vector<8x16x16xf32>
    %37 = arith.truncf %36 : vector<8x16x16xf32> to vector<8x16x16xbf16>
    "tpu.trace_start"() <{level = 10 : i32, message = "bqd,bkd->bqk"}> : () -> ()
    %cst_8 = arith.constant dense<0.000000e+00> : vector<8x16x16xf32>
    %38 = tpu.matmul %33, %35, %cst_8 {dimension_numbers = #tpu.dot_dimension_numbers<[2], [2], [1], [1], [0, 0, 0, 1, 1, 1], [0], [0]>} : vector<8x16x16xbf16>, vector<8x16x16xbf16>, vector<8x16x16xf32> -> vector<8x16x16xf32>
    "tpu.trace_stop"() : () -> ()
    %cst_9 = arith.constant dense<0xFF800000> : vector<8x16xf32>
    %39 = vector.multi_reduction <maximumf>, %38, %cst_9 [2] : vector<8x16x16xf32> to vector<8x16xf32>
    %40 = vector.shape_cast %39 : vector<8x16xf32> to vector<8x16x1xf32>
    %41 = vector.broadcast %40 : vector<8x16x1xf32> to vector<8x16x16xf32>
    %42 = arith.subf %38, %41 : vector<8x16x16xf32>
    %43 = math.exp %42 : vector<8x16x16xf32>
    %cst_10 = arith.constant dense<0.000000e+00> : vector<8x16xf32>
    %44 = vector.multi_reduction <add>, %43, %cst_10 [2] : vector<8x16x16xf32> to vector<8x16xf32>
    %45 = vector.shape_cast %44 : vector<8x16xf32> to vector<8x16x1xf32>
    %46 = vector.broadcast %45 : vector<8x16x1xf32> to vector<8x16x16xf32>
    %47 = arith.divf %43, %46 : vector<8x16x16xf32>
    %48 = arith.truncf %47 : vector<8x16x16xf32> to vector<8x16x16xbf16>
    "tpu.trace_start"() <{level = 10 : i32, message = "bqk,bkd->bqd"}> : () -> ()
    %cst_11 = arith.constant dense<0.000000e+00> : vector<8x16x16xf32>
    %49 = tpu.matmul %48, %37, %cst_11 {dimension_numbers = #tpu.dot_dimension_numbers<[2], [1], [1], [2], [0, 0, 0, 1, 1, 2], [0], [0]>} : vector<8x16x16xbf16>, vector<8x16x16xbf16>, vector<8x16x16xf32> -> vector<8x16x16xf32>
    "tpu.trace_stop"() : () -> ()
    %50 = vector.extract_strided_slice %17 {offsets = [0, 0, 16], sizes = [8, 16, 16], strides = [1, 1, 1]} : vector<8x16x128xf32> to vector<8x16x16xf32>
    %51 = arith.truncf %50 : vector<8x16x16xf32> to vector<8x16x16xbf16>
    %52 = vector.extract_strided_slice %24 {offsets = [0, 0, 16], sizes = [8, 16, 16], strides = [1, 1, 1]} : vector<8x16x128xf32> to vector<8x16x16xf32>
    %53 = arith.truncf %52 : vector<8x16x16xf32> to vector<8x16x16xbf16>
    %54 = vector.extract_strided_slice %31 {offsets = [0, 0, 16], sizes = [8, 16, 16], strides = [1, 1, 1]} : vector<8x16x128xf32> to vector<8x16x16xf32>
    %55 = arith.truncf %54 : vector<8x16x16xf32> to vector<8x16x16xbf16>
    "tpu.trace_start"() <{level = 10 : i32, message = "bqd,bkd->bqk"}> : () -> ()
    %cst_12 = arith.constant dense<0.000000e+00> : vector<8x16x16xf32>
    %56 = tpu.matmul %51, %53, %cst_12 {dimension_numbers = #tpu.dot_dimension_numbers<[2], [2], [1], [1], [0, 0, 0, 1, 1, 1], [0], [0]>} : vector<8x16x16xbf16>, vector<8x16x16xbf16>, vector<8x16x16xf32> -> vector<8x16x16xf32>
    "tpu.trace_stop"() : () -> ()
    %cst_13 = arith.constant dense<0xFF800000> : vector<8x16xf32>
    %57 = vector.multi_reduction <maximumf>, %56, %cst_13 [2] : vector<8x16x16xf32> to vector<8x16xf32>
    %58 = vector.shape_cast %57 : vector<8x16xf32> to vector<8x16x1xf32>
    %59 = vector.broadcast %58 : vector<8x16x1xf32> to vector<8x16x16xf32>
    %60 = arith.subf %56, %59 : vector<8x16x16xf32>
    %61 = math.exp %60 : vector<8x16x16xf32>
    %cst_14 = arith.constant dense<0.000000e+00> : vector<8x16xf32>
    %62 = vector.multi_reduction <add>, %61, %cst_14 [2] : vector<8x16x16xf32> to vector<8x16xf32>
    %63 = vector.shape_cast %62 : vector<8x16xf32> to vector<8x16x1xf32>
    %64 = vector.broadcast %63 : vector<8x16x1xf32> to vector<8x16x16xf32>
    %65 = arith.divf %61, %64 : vector<8x16x16xf32>
    %66 = arith.truncf %65 : vector<8x16x16xf32> to vector<8x16x16xbf16>
    "tpu.trace_start"() <{level = 10 : i32, message = "bqk,bkd->bqd"}> : () -> ()
    %cst_15 = arith.constant dense<0.000000e+00> : vector<8x16x16xf32>
    %67 = tpu.matmul %66, %55, %cst_15 {dimension_numbers = #tpu.dot_dimension_numbers<[2], [1], [1], [2], [0, 0, 0, 1, 1, 2], [0], [0]>} : vector<8x16x16xbf16>, vector<8x16x16xbf16>, vector<8x16x16xf32> -> vector<8x16x16xf32>
    "tpu.trace_stop"() : () -> ()
    %68 = vector.extract_strided_slice %17 {offsets = [0, 0, 32], sizes = [8, 16, 16], strides = [1, 1, 1]} : vector<8x16x128xf32> to vector<8x16x16xf32>
    %69 = arith.truncf %68 : vector<8x16x16xf32> to vector<8x16x16xbf16>
    %70 = vector.extract_strided_slice %24 {offsets = [0, 0, 32], sizes = [8, 16, 16], strides = [1, 1, 1]} : vector<8x16x128xf32> to vector<8x16x16xf32>
    %71 = arith.truncf %70 : vector<8x16x16xf32> to vector<8x16x16xbf16>
    %72 = vector.extract_strided_slice %31 {offsets = [0, 0, 32], sizes = [8, 16, 16], strides = [1, 1, 1]} : vector<8x16x128xf32> to vector<8x16x16xf32>
    %73 = arith.truncf %72 : vector<8x16x16xf32> to vector<8x16x16xbf16>
    "tpu.trace_start"() <{level = 10 : i32, message = "bqd,bkd->bqk"}> : () -> ()
    %cst_16 = arith.constant dense<0.000000e+00> : vector<8x16x16xf32>
    %74 = tpu.matmul %69, %71, %cst_16 {dimension_numbers = #tpu.dot_dimension_numbers<[2], [2], [1], [1], [0, 0, 0, 1, 1, 1], [0], [0]>} : vector<8x16x16xbf16>, vector<8x16x16xbf16>, vector<8x16x16xf32> -> vector<8x16x16xf32>
    "tpu.trace_stop"() : () -> ()
    %cst_17 = arith.constant dense<0xFF800000> : vector<8x16xf32>
    %75 = vector.multi_reduction <maximumf>, %74, %cst_17 [2] : vector<8x16x16xf32> to vector<8x16xf32>
    %76 = vector.shape_cast %75 : vector<8x16xf32> to vector<8x16x1xf32>
    %77 = vector.broadcast %76 : vector<8x16x1xf32> to vector<8x16x16xf32>
    %78 = arith.subf %74, %77 : vector<8x16x16xf32>
    %79 = math.exp %78 : vector<8x16x16xf32>
    %cst_18 = arith.constant dense<0.000000e+00> : vector<8x16xf32>
    %80 = vector.multi_reduction <add>, %79, %cst_18 [2] : vector<8x16x16xf32> to vector<8x16xf32>
    %81 = vector.shape_cast %80 : vector<8x16xf32> to vector<8x16x1xf32>
    %82 = vector.broadcast %81 : vector<8x16x1xf32> to vector<8x16x16xf32>
    %83 = arith.divf %79, %82 : vector<8x16x16xf32>
    %84 = arith.truncf %83 : vector<8x16x16xf32> to vector<8x16x16xbf16>
    "tpu.trace_start"() <{level = 10 : i32, message = "bqk,bkd->bqd"}> : () -> ()
    %cst_19 = arith.constant dense<0.000000e+00> : vector<8x16x16xf32>
    %85 = tpu.matmul %84, %73, %cst_19 {dimension_numbers = #tpu.dot_dimension_numbers<[2], [1], [1], [2], [0, 0, 0, 1, 1, 2], [0], [0]>} : vector<8x16x16xbf16>, vector<8x16x16xbf16>, vector<8x16x16xf32> -> vector<8x16x16xf32>
    "tpu.trace_stop"() : () -> ()
    %86 = vector.extract_strided_slice %17 {offsets = [0, 0, 48], sizes = [8, 16, 16], strides = [1, 1, 1]} : vector<8x16x128xf32> to vector<8x16x16xf32>
    %87 = arith.truncf %86 : vector<8x16x16xf32> to vector<8x16x16xbf16>
    %88 = vector.extract_strided_slice %24 {offsets = [0, 0, 48], sizes = [8, 16, 16], strides = [1, 1, 1]} : vector<8x16x128xf32> to vector<8x16x16xf32>
    %89 = arith.truncf %88 : vector<8x16x16xf32> to vector<8x16x16xbf16>
    %90 = vector.extract_strided_slice %31 {offsets = [0, 0, 48], sizes = [8, 16, 16], strides = [1, 1, 1]} : vector<8x16x128xf32> to vector<8x16x16xf32>
    %91 = arith.truncf %90 : vector<8x16x16xf32> to vector<8x16x16xbf16>
    "tpu.trace_start"() <{level = 10 : i32, message = "bqd,bkd->bqk"}> : () -> ()
    %cst_20 = arith.constant dense<0.000000e+00> : vector<8x16x16xf32>
    %92 = tpu.matmul %87, %89, %cst_20 {dimension_numbers = #tpu.dot_dimension_numbers<[2], [2], [1], [1], [0, 0, 0, 1, 1, 1], [0], [0]>} : vector<8x16x16xbf16>, vector<8x16x16xbf16>, vector<8x16x16xf32> -> vector<8x16x16xf32>
    "tpu.trace_stop"() : () -> ()
    %cst_21 = arith.constant dense<0xFF800000> : vector<8x16xf32>
    %93 = vector.multi_reduction <maximumf>, %92, %cst_21 [2] : vector<8x16x16xf32> to vector<8x16xf32>
    %94 = vector.shape_cast %93 : vector<8x16xf32> to vector<8x16x1xf32>
    %95 = vector.broadcast %94 : vector<8x16x1xf32> to vector<8x16x16xf32>
    %96 = arith.subf %92, %95 : vector<8x16x16xf32>
    %97 = math.exp %96 : vector<8x16x16xf32>
    %cst_22 = arith.constant dense<0.000000e+00> : vector<8x16xf32>
    %98 = vector.multi_reduction <add>, %97, %cst_22 [2] : vector<8x16x16xf32> to vector<8x16xf32>
    %99 = vector.shape_cast %98 : vector<8x16xf32> to vector<8x16x1xf32>
    %100 = vector.broadcast %99 : vector<8x16x1xf32> to vector<8x16x16xf32>
    %101 = arith.divf %97, %100 : vector<8x16x16xf32>
    %102 = arith.truncf %101 : vector<8x16x16xf32> to vector<8x16x16xbf16>
    "tpu.trace_start"() <{level = 10 : i32, message = "bqk,bkd->bqd"}> : () -> ()
    %cst_23 = arith.constant dense<0.000000e+00> : vector<8x16x16xf32>
    %103 = tpu.matmul %102, %91, %cst_23 {dimension_numbers = #tpu.dot_dimension_numbers<[2], [1], [1], [2], [0, 0, 0, 1, 1, 2], [0], [0]>} : vector<8x16x16xbf16>, vector<8x16x16xbf16>, vector<8x16x16xf32> -> vector<8x16x16xf32>
    "tpu.trace_stop"() : () -> ()
    %104 = vector.extract_strided_slice %17 {offsets = [0, 0, 64], sizes = [8, 16, 16], strides = [1, 1, 1]} : vector<8x16x128xf32> to vector<8x16x16xf32>
    %105 = arith.truncf %104 : vector<8x16x16xf32> to vector<8x16x16xbf16>
    %106 = vector.extract_strided_slice %24 {offsets = [0, 0, 64], sizes = [8, 16, 16], strides = [1, 1, 1]} : vector<8x16x128xf32> to vector<8x16x16xf32>
    %107 = arith.truncf %106 : vector<8x16x16xf32> to vector<8x16x16xbf16>
    %108 = vector.extract_strided_slice %31 {offsets = [0, 0, 64], sizes = [8, 16, 16], strides = [1, 1, 1]} : vector<8x16x128xf32> to vector<8x16x16xf32>
    %109 = arith.truncf %108 : vector<8x16x16xf32> to vector<8x16x16xbf16>
    "tpu.trace_start"() <{level = 10 : i32, message = "bqd,bkd->bqk"}> : () -> ()
    %cst_24 = arith.constant dense<0.000000e+00> : vector<8x16x16xf32>
    %110 = tpu.matmul %105, %107, %cst_24 {dimension_numbers = #tpu.dot_dimension_numbers<[2], [2], [1], [1], [0, 0, 0, 1, 1, 1], [0], [0]>} : vector<8x16x16xbf16>, vector<8x16x16xbf16>, vector<8x16x16xf32> -> vector<8x16x16xf32>
    "tpu.trace_stop"() : () -> ()
    %cst_25 = arith.constant dense<0xFF800000> : vector<8x16xf32>
    %111 = vector.multi_reduction <maximumf>, %110, %cst_25 [2] : vector<8x16x16xf32> to vector<8x16xf32>
    %112 = vector.shape_cast %111 : vector<8x16xf32> to vector<8x16x1xf32>
    %113 = vector.broadcast %112 : vector<8x16x1xf32> to vector<8x16x16xf32>
    %114 = arith.subf %110, %113 : vector<8x16x16xf32>
    %115 = math.exp %114 : vector<8x16x16xf32>
    %cst_26 = arith.constant dense<0.000000e+00> : vector<8x16xf32>
    %116 = vector.multi_reduction <add>, %115, %cst_26 [2] : vector<8x16x16xf32> to vector<8x16xf32>
    %117 = vector.shape_cast %116 : vector<8x16xf32> to vector<8x16x1xf32>
    %118 = vector.broadcast %117 : vector<8x16x1xf32> to vector<8x16x16xf32>
    %119 = arith.divf %115, %118 : vector<8x16x16xf32>
    %120 = arith.truncf %119 : vector<8x16x16xf32> to vector<8x16x16xbf16>
    "tpu.trace_start"() <{level = 10 : i32, message = "bqk,bkd->bqd"}> : () -> ()
    %cst_27 = arith.constant dense<0.000000e+00> : vector<8x16x16xf32>
    %121 = tpu.matmul %120, %109, %cst_27 {dimension_numbers = #tpu.dot_dimension_numbers<[2], [1], [1], [2], [0, 0, 0, 1, 1, 2], [0], [0]>} : vector<8x16x16xbf16>, vector<8x16x16xbf16>, vector<8x16x16xf32> -> vector<8x16x16xf32>
    "tpu.trace_stop"() : () -> ()
    %122 = vector.extract_strided_slice %17 {offsets = [0, 0, 80], sizes = [8, 16, 16], strides = [1, 1, 1]} : vector<8x16x128xf32> to vector<8x16x16xf32>
    %123 = arith.truncf %122 : vector<8x16x16xf32> to vector<8x16x16xbf16>
    %124 = vector.extract_strided_slice %24 {offsets = [0, 0, 80], sizes = [8, 16, 16], strides = [1, 1, 1]} : vector<8x16x128xf32> to vector<8x16x16xf32>
    %125 = arith.truncf %124 : vector<8x16x16xf32> to vector<8x16x16xbf16>
    %126 = vector.extract_strided_slice %31 {offsets = [0, 0, 80], sizes = [8, 16, 16], strides = [1, 1, 1]} : vector<8x16x128xf32> to vector<8x16x16xf32>
    %127 = arith.truncf %126 : vector<8x16x16xf32> to vector<8x16x16xbf16>
    "tpu.trace_start"() <{level = 10 : i32, message = "bqd,bkd->bqk"}> : () -> ()
    %cst_28 = arith.constant dense<0.000000e+00> : vector<8x16x16xf32>
    %128 = tpu.matmul %123, %125, %cst_28 {dimension_numbers = #tpu.dot_dimension_numbers<[2], [2], [1], [1], [0, 0, 0, 1, 1, 1], [0], [0]>} : vector<8x16x16xbf16>, vector<8x16x16xbf16>, vector<8x16x16xf32> -> vector<8x16x16xf32>
    "tpu.trace_stop"() : () -> ()
    %cst_29 = arith.constant dense<0xFF800000> : vector<8x16xf32>
    %129 = vector.multi_reduction <maximumf>, %128, %cst_29 [2] : vector<8x16x16xf32> to vector<8x16xf32>
    %130 = vector.shape_cast %129 : vector<8x16xf32> to vector<8x16x1xf32>
    %131 = vector.broadcast %130 : vector<8x16x1xf32> to vector<8x16x16xf32>
    %132 = arith.subf %128, %131 : vector<8x16x16xf32>
    %133 = math.exp %132 : vector<8x16x16xf32>
    %cst_30 = arith.constant dense<0.000000e+00> : vector<8x16xf32>
    %134 = vector.multi_reduction <add>, %133, %cst_30 [2] : vector<8x16x16xf32> to vector<8x16xf32>
    %135 = vector.shape_cast %134 : vector<8x16xf32> to vector<8x16x1xf32>
    %136 = vector.broadcast %135 : vector<8x16x1xf32> to vector<8x16x16xf32>
    %137 = arith.divf %133, %136 : vector<8x16x16xf32>
    %138 = arith.truncf %137 : vector<8x16x16xf32> to vector<8x16x16xbf16>
    "tpu.trace_start"() <{level = 10 : i32, message = "bqk,bkd->bqd"}> : () -> ()
    %cst_31 = arith.constant dense<0.000000e+00> : vector<8x16x16xf32>
    %139 = tpu.matmul %138, %127, %cst_31 {dimension_numbers = #tpu.dot_dimension_numbers<[2], [1], [1], [2], [0, 0, 0, 1, 1, 2], [0], [0]>} : vector<8x16x16xbf16>, vector<8x16x16xbf16>, vector<8x16x16xf32> -> vector<8x16x16xf32>
    "tpu.trace_stop"() : () -> ()
    %140 = vector.extract_strided_slice %17 {offsets = [0, 0, 96], sizes = [8, 16, 16], strides = [1, 1, 1]} : vector<8x16x128xf32> to vector<8x16x16xf32>
    %141 = arith.truncf %140 : vector<8x16x16xf32> to vector<8x16x16xbf16>
    %142 = vector.extract_strided_slice %24 {offsets = [0, 0, 96], sizes = [8, 16, 16], strides = [1, 1, 1]} : vector<8x16x128xf32> to vector<8x16x16xf32>
    %143 = arith.truncf %142 : vector<8x16x16xf32> to vector<8x16x16xbf16>
    %144 = vector.extract_strided_slice %31 {offsets = [0, 0, 96], sizes = [8, 16, 16], strides = [1, 1, 1]} : vector<8x16x128xf32> to vector<8x16x16xf32>
    %145 = arith.truncf %144 : vector<8x16x16xf32> to vector<8x16x16xbf16>
    "tpu.trace_start"() <{level = 10 : i32, message = "bqd,bkd->bqk"}> : () -> ()
    %cst_32 = arith.constant dense<0.000000e+00> : vector<8x16x16xf32>
    %146 = tpu.matmul %141, %143, %cst_32 {dimension_numbers = #tpu.dot_dimension_numbers<[2], [2], [1], [1], [0, 0, 0, 1, 1, 1], [0], [0]>} : vector<8x16x16xbf16>, vector<8x16x16xbf16>, vector<8x16x16xf32> -> vector<8x16x16xf32>
    "tpu.trace_stop"() : () -> ()
    %cst_33 = arith.constant dense<0xFF800000> : vector<8x16xf32>
    %147 = vector.multi_reduction <maximumf>, %146, %cst_33 [2] : vector<8x16x16xf32> to vector<8x16xf32>
    %148 = vector.shape_cast %147 : vector<8x16xf32> to vector<8x16x1xf32>
    %149 = vector.broadcast %148 : vector<8x16x1xf32> to vector<8x16x16xf32>
    %150 = arith.subf %146, %149 : vector<8x16x16xf32>
    %151 = math.exp %150 : vector<8x16x16xf32>
    %cst_34 = arith.constant dense<0.000000e+00> : vector<8x16xf32>
    %152 = vector.multi_reduction <add>, %151, %cst_34 [2] : vector<8x16x16xf32> to vector<8x16xf32>
    %153 = vector.shape_cast %152 : vector<8x16xf32> to vector<8x16x1xf32>
    %154 = vector.broadcast %153 : vector<8x16x1xf32> to vector<8x16x16xf32>
    %155 = arith.divf %151, %154 : vector<8x16x16xf32>
    %156 = arith.truncf %155 : vector<8x16x16xf32> to vector<8x16x16xbf16>
    "tpu.trace_start"() <{level = 10 : i32, message = "bqk,bkd->bqd"}> : () -> ()
    %cst_35 = arith.constant dense<0.000000e+00> : vector<8x16x16xf32>
    %157 = tpu.matmul %156, %145, %cst_35 {dimension_numbers = #tpu.dot_dimension_numbers<[2], [1], [1], [2], [0, 0, 0, 1, 1, 2], [0], [0]>} : vector<8x16x16xbf16>, vector<8x16x16xbf16>, vector<8x16x16xf32> -> vector<8x16x16xf32>
    "tpu.trace_stop"() : () -> ()
    %158 = vector.extract_strided_slice %17 {offsets = [0, 0, 112], sizes = [8, 16, 16], strides = [1, 1, 1]} : vector<8x16x128xf32> to vector<8x16x16xf32>
    %159 = arith.truncf %158 : vector<8x16x16xf32> to vector<8x16x16xbf16>
    %160 = vector.extract_strided_slice %24 {offsets = [0, 0, 112], sizes = [8, 16, 16], strides = [1, 1, 1]} : vector<8x16x128xf32> to vector<8x16x16xf32>
    %161 = arith.truncf %160 : vector<8x16x16xf32> to vector<8x16x16xbf16>
    %162 = vector.extract_strided_slice %31 {offsets = [0, 0, 112], sizes = [8, 16, 16], strides = [1, 1, 1]} : vector<8x16x128xf32> to vector<8x16x16xf32>
    %163 = arith.truncf %162 : vector<8x16x16xf32> to vector<8x16x16xbf16>
    "tpu.trace_start"() <{level = 10 : i32, message = "bqd,bkd->bqk"}> : () -> ()
    %cst_36 = arith.constant dense<0.000000e+00> : vector<8x16x16xf32>
    %164 = tpu.matmul %159, %161, %cst_36 {dimension_numbers = #tpu.dot_dimension_numbers<[2], [2], [1], [1], [0, 0, 0, 1, 1, 1], [0], [0]>} : vector<8x16x16xbf16>, vector<8x16x16xbf16>, vector<8x16x16xf32> -> vector<8x16x16xf32>
    "tpu.trace_stop"() : () -> ()
    %cst_37 = arith.constant dense<0xFF800000> : vector<8x16xf32>
    %165 = vector.multi_reduction <maximumf>, %164, %cst_37 [2] : vector<8x16x16xf32> to vector<8x16xf32>
    %166 = vector.shape_cast %165 : vector<8x16xf32> to vector<8x16x1xf32>
    %167 = vector.broadcast %166 : vector<8x16x1xf32> to vector<8x16x16xf32>
    %168 = arith.subf %164, %167 : vector<8x16x16xf32>
    %169 = math.exp %168 : vector<8x16x16xf32>
    %cst_38 = arith.constant dense<0.000000e+00> : vector<8x16xf32>
    %170 = vector.multi_reduction <add>, %169, %cst_38 [2] : vector<8x16x16xf32> to vector<8x16xf32>
    %171 = vector.shape_cast %170 : vector<8x16xf32> to vector<8x16x1xf32>
    %172 = vector.broadcast %171 : vector<8x16x1xf32> to vector<8x16x16xf32>
    %173 = arith.divf %169, %172 : vector<8x16x16xf32>
    %174 = arith.truncf %173 : vector<8x16x16xf32> to vector<8x16x16xbf16>
    "tpu.trace_start"() <{level = 10 : i32, message = "bqk,bkd->bqd"}> : () -> ()
    %cst_39 = arith.constant dense<0.000000e+00> : vector<8x16x16xf32>
    %175 = tpu.matmul %174, %163, %cst_39 {dimension_numbers = #tpu.dot_dimension_numbers<[2], [1], [1], [2], [0, 0, 0, 1, 1, 2], [0], [0]>} : vector<8x16x16xbf16>, vector<8x16x16xbf16>, vector<8x16x16xf32> -> vector<8x16x16xf32>
    "tpu.trace_stop"() : () -> ()
    %176 = tpu.concatenate %49, %67, %85, %103, %121, %139, %157, %175 in 2 : vector<8x16x16xf32>, vector<8x16x16xf32>, vector<8x16x16xf32>, vector<8x16x16xf32>, vector<8x16x16xf32>, vector<8x16x16xf32>, vector<8x16x16xf32>, vector<8x16x16xf32> -> vector<8x16x128xf32>
    %177 = vector.shape_cast %176 : vector<8x16x128xf32> to vector<128x128xf32>
    %178 = arith.truncf %177 : vector<128x128xf32> to vector<128x128xbf16>
    %179 = vector.extract_strided_slice %5 {offsets = [0, 384], sizes = [128, 128], strides = [1, 1]} : vector<128x768xbf16> to vector<128x128xbf16>
    %cst_40 = arith.constant dense<0.000000e+00> : vector<128x128xf32>
    %180 = tpu.matmul %178, %179, %cst_40 {dimension_numbers = #tpu.dot_dimension_numbers<[1], [0], [0], [1], [0, 0, 1, 1], [], []>} : vector<128x128xbf16>, vector<128x128xbf16>, vector<128x128xf32> -> vector<128x128xf32>
    %181 = vector.extract_strided_slice %7 {offsets = [3, 0], sizes = [1, 128], strides = [1, 1]} : vector<16x128xf32> to vector<1x128xf32>
    %182 = vector.shape_cast %181 : vector<1x128xf32> to vector<128xf32>
    %183 = vector.shape_cast %182 : vector<128xf32> to vector<1x128xf32>
    %184 = vector.broadcast %183 : vector<1x128xf32> to vector<128x128xf32>
    %185 = arith.addf %180, %184 : vector<128x128xf32>
    %186 = arith.addf %185, %3 : vector<128x128xf32>
    %187 = vector.extract_strided_slice %7 {offsets = [4, 0], sizes = [1, 128], strides = [1, 1]} : vector<16x128xf32> to vector<1x128xf32>
    %188 = vector.shape_cast %187 : vector<1x128xf32> to vector<128xf32>
    %189 = vector.extract_strided_slice %7 {offsets = [5, 0], sizes = [1, 128], strides = [1, 1]} : vector<16x128xf32> to vector<1x128xf32>
    %190 = vector.shape_cast %189 : vector<1x128xf32> to vector<128xf32>
    %cst_41 = arith.constant dense<0.000000e+00> : vector<128xf32>
    %191 = vector.multi_reduction <add>, %186, %cst_41 [1] : vector<128x128xf32> to vector<128xf32>
    %192 = vector.shape_cast %191 : vector<128xf32> to vector<128x1xf32>
    %cst_42 = arith.constant 1.280000e+02 : f32
    %193 = vector.broadcast %cst_42 : f32 to vector<128x1xf32>
    %194 = arith.divf %192, %193 : vector<128x1xf32>
    %195 = vector.broadcast %194 : vector<128x1xf32> to vector<128x128xf32>
    %196 = arith.subf %186, %195 : vector<128x128xf32>
    %197 = arith.mulf %196, %196 : vector<128x128xf32>
    %cst_43 = arith.constant dense<0.000000e+00> : vector<128xf32>
    %198 = vector.multi_reduction <add>, %197, %cst_43 [1] : vector<128x128xf32> to vector<128xf32>
    %199 = vector.shape_cast %198 : vector<128xf32> to vector<128x1xf32>
    %cst_44 = arith.constant 1.280000e+02 : f32
    %200 = vector.broadcast %cst_44 : f32 to vector<128x1xf32>
    %201 = arith.divf %199, %200 : vector<128x1xf32>
    %202 = vector.broadcast %194 : vector<128x1xf32> to vector<128x128xf32>
    %203 = arith.subf %186, %202 : vector<128x128xf32>
    %cst_45 = arith.constant 9.99999974E-6 : f32
    %204 = vector.broadcast %cst_45 : f32 to vector<128x1xf32>
    %205 = arith.addf %201, %204 : vector<128x1xf32>
    %206 = math.rsqrt %205 : vector<128x1xf32>
    %207 = vector.broadcast %206 : vector<128x1xf32> to vector<128x128xf32>
    %208 = arith.mulf %203, %207 : vector<128x128xf32>
    %209 = vector.shape_cast %188 : vector<128xf32> to vector<1x128xf32>
    %210 = vector.broadcast %209 : vector<1x128xf32> to vector<128x128xf32>
    %211 = arith.mulf %208, %210 : vector<128x128xf32>
    %212 = vector.shape_cast %190 : vector<128xf32> to vector<1x128xf32>
    %213 = vector.broadcast %212 : vector<1x128xf32> to vector<128x128xf32>
    %214 = arith.addf %211, %213 : vector<128x128xf32>
    %215 = arith.truncf %214 : vector<128x128xf32> to vector<128x128xbf16>
    %216 = vector.extract_strided_slice %5 {offsets = [0, 512], sizes = [128, 128], strides = [1, 1]} : vector<128x768xbf16> to vector<128x128xbf16>
    %cst_46 = arith.constant dense<0.000000e+00> : vector<128x128xf32>
    %217 = tpu.matmul %215, %216, %cst_46 {dimension_numbers = #tpu.dot_dimension_numbers<[1], [0], [0], [1], [0, 0, 1, 1], [], []>} : vector<128x128xbf16>, vector<128x128xbf16>, vector<128x128xf32> -> vector<128x128xf32>
    %218 = vector.extract_strided_slice %7 {offsets = [6, 0], sizes = [1, 128], strides = [1, 1]} : vector<16x128xf32> to vector<1x128xf32>
    %219 = vector.shape_cast %218 : vector<1x128xf32> to vector<128xf32>
    %220 = vector.shape_cast %219 : vector<128xf32> to vector<1x128xf32>
    %221 = vector.broadcast %220 : vector<1x128xf32> to vector<128x128xf32>
    %222 = arith.addf %217, %221 : vector<128x128xf32>
    %cst_47 = arith.constant 0.000000e+00 : f32
    %223 = vector.broadcast %cst_47 : f32 to vector<128x128xf32>
    %224 = arith.maximumf %222, %223 : vector<128x128xf32>
    %225 = arith.truncf %224 : vector<128x128xf32> to vector<128x128xbf16>
    %226 = vector.extract_strided_slice %5 {offsets = [0, 640], sizes = [128, 128], strides = [1, 1]} : vector<128x768xbf16> to vector<128x128xbf16>
    %cst_48 = arith.constant dense<0.000000e+00> : vector<128x128xf32>
    %227 = tpu.matmul %225, %226, %cst_48 {dimension_numbers = #tpu.dot_dimension_numbers<[1], [0], [0], [1], [0, 0, 1, 1], [], []>} : vector<128x128xbf16>, vector<128x128xbf16>, vector<128x128xf32> -> vector<128x128xf32>
    %228 = vector.extract_strided_slice %7 {offsets = [7, 0], sizes = [1, 128], strides = [1, 1]} : vector<16x128xf32> to vector<1x128xf32>
    %229 = vector.shape_cast %228 : vector<1x128xf32> to vector<128xf32>
    %230 = vector.shape_cast %229 : vector<128xf32> to vector<1x128xf32>
    %231 = vector.broadcast %230 : vector<1x128xf32> to vector<128x128xf32>
    %232 = arith.addf %227, %231 : vector<128x128xf32>
    %233 = arith.addf %232, %214 : vector<128x128xf32>
    %234 = vector.extract_strided_slice %7 {offsets = [8, 0], sizes = [1, 128], strides = [1, 1]} : vector<16x128xf32> to vector<1x128xf32>
    %235 = vector.shape_cast %234 : vector<1x128xf32> to vector<128xf32>
    %236 = vector.extract_strided_slice %7 {offsets = [9, 0], sizes = [1, 128], strides = [1, 1]} : vector<16x128xf32> to vector<1x128xf32>
    %237 = vector.shape_cast %236 : vector<1x128xf32> to vector<128xf32>
    %cst_49 = arith.constant dense<0.000000e+00> : vector<128xf32>
    %238 = vector.multi_reduction <add>, %233, %cst_49 [1] : vector<128x128xf32> to vector<128xf32>
    %239 = vector.shape_cast %238 : vector<128xf32> to vector<128x1xf32>
    %cst_50 = arith.constant 1.280000e+02 : f32
    %240 = vector.broadcast %cst_50 : f32 to vector<128x1xf32>
    %241 = arith.divf %239, %240 : vector<128x1xf32>
    %242 = vector.broadcast %241 : vector<128x1xf32> to vector<128x128xf32>
    %243 = arith.subf %233, %242 : vector<128x128xf32>
    %244 = arith.mulf %243, %243 : vector<128x128xf32>
    %cst_51 = arith.constant dense<0.000000e+00> : vector<128xf32>
    %245 = vector.multi_reduction <add>, %244, %cst_51 [1] : vector<128x128xf32> to vector<128xf32>
    %246 = vector.shape_cast %245 : vector<128xf32> to vector<128x1xf32>
    %cst_52 = arith.constant 1.280000e+02 : f32
    %247 = vector.broadcast %cst_52 : f32 to vector<128x1xf32>
    %248 = arith.divf %246, %247 : vector<128x1xf32>
    %249 = vector.broadcast %241 : vector<128x1xf32> to vector<128x128xf32>
    %250 = arith.subf %233, %249 : vector<128x128xf32>
    %cst_53 = arith.constant 9.99999974E-6 : f32
    %251 = vector.broadcast %cst_53 : f32 to vector<128x1xf32>
    %252 = arith.addf %248, %251 : vector<128x1xf32>
    %253 = math.rsqrt %252 : vector<128x1xf32>
    %254 = vector.broadcast %253 : vector<128x1xf32> to vector<128x128xf32>
    %255 = arith.mulf %250, %254 : vector<128x128xf32>
    %256 = vector.shape_cast %235 : vector<128xf32> to vector<1x128xf32>
    %257 = vector.broadcast %256 : vector<1x128xf32> to vector<128x128xf32>
    %258 = arith.mulf %255, %257 : vector<128x128xf32>
    %259 = vector.shape_cast %237 : vector<128xf32> to vector<1x128xf32>
    %260 = vector.broadcast %259 : vector<1x128xf32> to vector<128x128xf32>
    %261 = arith.addf %258, %260 : vector<128x128xf32>
    %c0_54 = arith.constant 0 : index
    %c0_55 = arith.constant 0 : index
    %262 = vector.load %arg7[%c0_54, %c0_55] : memref<128x128xf32, #tpu.memory_space<vmem>>, vector<128x128xf32>
    tpu.vector_store %arg7[%c0_54, %c0_55], %261 {strides = array<i32>} : memref<128x128xf32, #tpu.memory_space<vmem>>, vector<128x128xf32>,
    %c1_i32 = arith.constant 1 : i32
    %263 = arith.cmpi eq, %arg1, %c1_i32 : i32
    %264 = arith.extui %263 : i1 to i32
    %c0_i32_56 = arith.constant 0 : i32
    %265 = arith.cmpi ne, %264, %c0_i32_56 : i32
    scf.if %265 {
      %266 = vector.shape_cast %261 : vector<128x128xf32> to vector<8x16x128xf32>
      %c0_57 = arith.constant 0 : index
      %c0_58 = arith.constant 0 : index
      %c0_59 = arith.constant 0 : index
      %267 = vector.load %arg6[%c0_57, %c0_58, %c0_59] : memref<8x16x128xf32, #tpu.memory_space<vmem>>, vector<8x16x128xf32>
      tpu.vector_store %arg6[%c0_57, %c0_58, %c0_59], %266 {strides = array<i32>} : memref<8x16x128xf32, #tpu.memory_space<vmem>>, vector<8x16x128xf32>,
    } else {
    }
    return
  }
  func.func @transform_0(%arg0: i32, %arg1: i32) -> (i32, i32, i32) {
    %c0_i32 = arith.constant 0 : i32
    %c0_i32_0 = arith.constant 0 : i32
    %c0_i32_1 = arith.constant 0 : i32
    return %arg0, %c0_i32, %c0_i32_0 : i32, i32, i32
  }
  func.func @transform_1(%arg0: i32, %arg1: i32) -> (i32, i32) {
    %c0_i32 = arith.constant 0 : i32
    %c0_i32_0 = arith.constant 0 : i32
    %c0_i32_1 = arith.constant 0 : i32
    return %c0_i32, %c0_i32_0 : i32, i32
  }
  func.func @transform_2(%arg0: i32, %arg1: i32) -> (i32, i32, i32) {
    %c0_i32 = arith.constant 0 : i32
    %c0_i32_0 = arith.constant 0 : i32
    %c0_i32_1 = arith.constant 0 : i32
    return %arg1, %c0_i32, %c0_i32_0 : i32, i32, i32
  }
  func.func @transform_3(%arg0: i32, %arg1: i32) -> (i32, i32, i32) {
    %c0_i32 = arith.constant 0 : i32
    %c0_i32_0 = arith.constant 0 : i32
    %c0_i32_1 = arith.constant 0 : i32
    return %arg1, %c0_i32, %c0_i32_0 : i32, i32, i32
  }
  func.func @transform_4(%arg0: i32, %arg1: i32) -> (i32, i32, i32) {
    %c0_i32 = arith.constant 0 : i32
    %c0_i32_0 = arith.constant 0 : i32
    %c0_i32_1 = arith.constant 0 : i32
    return %arg0, %c0_i32, %c0_i32_0 : i32, i32, i32
  }
}

</mosaic_0001>

<llo_original>
// kernel: tpu_custom_call.1
$region0: #{tpu_custom_call.1}
  #allocation0 [shape = 'u32[]', space=smem, size = 0x4, offset = 0x4, fixed_abs, tag = 'smem constant byte address 0x4 - core index']
  #allocation1 [shape = 'u32[144,128]{1,0:T(1,128)}', space=vmem, size = 0x12000, scoped, tag = 'internal scratch']
  #allocation2 [shape = 'f32[128,128]{1,0:T(8,128)}', space=vmem, size = 0x10000, scoped, tag = 'scratch operand']
  %s0 = inlined_call_operand.hbm [shape: f32[8,16,128], index: 0, kind: input, shape index: {}]
  %s1 = inlined_call_operand.hbm [shape: f32[16,128], index: 1, kind: input, shape index: {}]
  %s2 = inlined_call_operand.hbm [shape: bf16[2,128,768], index: 2, kind: input, shape index: {}]
  %s3 = inlined_call_operand.hbm [shape: f32[2,16,128], index: 3, kind: input, shape index: {}]
  %s4 = inlined_call_operand.hbm [shape: f32[8,16,128], index: 4, kind: output, shape index: {}]
  %s5 = sld [smem:[#allocation0]]
  $region73: #{tpu_custom_call.1} parent=0
    _
  %s7 = ssub.s32 1, %s5
  %s8 = scalar_select 0, %s7, %s5
  $region1: #{tpu_custom_call.1} parent=0
    #allocation3 [shape = 'u8[65536]{0}', space=vmem, size = 0x10000, scoped, tag = 'input window, operand 0, single buffered']
    #allocation4 [shape = 's32[2]{0}', space=sflag, size = 0x8, scoped, tag = 'scoped memory for tpu_custom_call.1']
    #allocation5 [shape = 's32[2]{0}', space=sflag, size = 0x8, scoped, tag = 'scoped memory for tpu_custom_call.1']
    #allocation6 [shape = 'u8[8192]{0}', space=vmem, size = 0x2000, scoped, tag = 'input window, operand 1, single buffered']
    #allocation7 [shape = 's32[1]{0}', space=sflag, size = 0x4, scoped, tag = 'scoped memory for tpu_custom_call.1']
    #allocation8 [shape = 'u8[393216]{0}', space=vmem, size = 0x60000, scoped, tag = 'input window, operand 2']
    #allocation9 [shape = 'u8[16384]{0}', space=vmem, size = 0x4000, scoped, tag = 'input window, operand 3']
    #allocation10 [shape = 'u8[65536]{0}', space=vmem, size = 0x10000, scoped, tag = 'output window, operand 0, single buffered']
    %9 = vsyncpa [#allocation4], 0
    %10 = vsyncpa [#allocation7], 0
    %11 = vsyncpa [#allocation5], 0
    loop: start=0, step=1, limit=4
    $region2: #{tpu_custom_call.1} parent=1 // loop_pre_header
      _
    $region3: #{tpu_custom_call.1} parent=1 // loop_header
      %s13 = sphi 0, %s17
      %p14 = scmp.ge.s32.totalorder %s13, 4
      %s20 = sphi 0, %s32
      %s21 = sphi 0, %s28
      %s22 = sphi 0, %s20
      %s23 = sphi 0, %s21
      %s24 = sphi 0, %s22
      %s25 = sphi 0, %s23
      %s35 = sphi 0, %s37
      %s38 = sphi 0, %s35
      %s39 = sphi 0, %s38
      %s55 = sphi 0, %s39
      %s59 = sphi 0, %s59
      %s61 = sphi 0, %s59
      %s62 = sphi 0, %s61
      %s76 = sphi 0, %s62
      %s82 = sphi 0, %s84
      %s85 = sphi 0, %s82
      %s86 = sphi 0, %s85
      %s102 = sphi 0, %s86
      %s108 = sphi 0, %s110
      %s111 = sphi 0, %s108
      %s112 = sphi 0, %s111
      %s128 = sphi 0, %s112
      %s134 = sphi 0, %s136
      %s137 = sphi 0, %s134
      %s138 = sphi 0, %s137
      %s154 = sphi 0, %s138
    $region4: #{tpu_custom_call.1} parent=1 // loop_header_branch
      %16 = sbr.rel (%p14) target = $region8
    $region5: #{tpu_custom_call.1} parent=1 // loop_body
      %s18 = ssub.s32 %s13, 1
      %s19 = ssub.s32 %s13, 2
      %s26 = sadd.s32 1, %s21
      %p27 = scmp.ge.s32.totalorder %s26, 2
      %s28 = scalar_select %p27, 0, %s26
      %s29 = sadd.s32 1, %s20
      %s30 = scalar_select %p27, %s29, %s20
      %p31 = scmp.ge.s32.totalorder %s30, 1
      %s32 = scalar_select %p31, 0, %s30
      %s33 = ssub.s32 %s20, %s32
      %p34 = scmp.eq.s32.totalorder %s33, 0
      %s36 = sadd.s32 %s35, 1
      %s37 = scalar_select %p34, %s35, %s36
      %p40 = pneg %p34
      %p41 = scmp.eq.s32.totalorder %s13, 1
      %p42 = por %p40, %p41
      %p43 = scmp.ne.s32.totalorder %s35, %s38
      %p44 = scmp.eq.s32.totalorder %s13, 0
      %p45 = por %p43, %p44
      %p46 = scmp.ne.s32.totalorder %s35, %s38
      %p47 = scmp.eq.s32.totalorder %s18, 1
      %p48 = por %p46, %p47
      %p49 = scmp.ne.s32.totalorder %s38, %s39
      %p50 = scmp.eq.s32.totalorder %s18, 0
      %p51 = por %p49, %p50
      %p52 = scmp.ne.s32.totalorder %s38, %s39
      %p53 = scmp.eq.s32.totalorder %s19, 1
      %p54 = por %p52, %p53
      %p56 = scmp.ne.s32.totalorder %s39, %s55
      %p57 = scmp.eq.s32.totalorder %s19, 0
      %p58 = por %p56, %p57
      %s60 = sadd.s32 %s59, 1
      %p63 = scmp.eq.s32.totalorder %s13, 1
      %p64 = scmp.ne.s32.totalorder %s59, %s61
      %p65 = scmp.eq.s32.totalorder %s13, 0
      %p66 = por %p64, %p65
      %p67 = scmp.ne.s32.totalorder %s59, %s61
      %p68 = scmp.eq.s32.totalorder %s18, 1
      %p69 = por %p67, %p68
      %p70 = scmp.ne.s32.totalorder %s61, %s62
      %p71 = scmp.eq.s32.totalorder %s18, 0
      %p72 = por %p70, %p71
      %p73 = scmp.ne.s32.totalorder %s61, %s62
      %p74 = scmp.eq.s32.totalorder %s19, 1
      %p75 = por %p73, %p74
      %p77 = scmp.ne.s32.totalorder %s62, %s76
      %p78 = scmp.eq.s32.totalorder %s19, 0
      %p79 = por %p77, %p78
      %s80 = ssub.s32 %s21, %s28
      %p81 = scmp.eq.s32.totalorder %s80, 0
      %s83 = sadd.s32 %s82, 1
      %s84 = scalar_select %p81, %s82, %s83
      %p87 = pneg %p81
      %p88 = scmp.eq.s32.totalorder %s13, 1
      %p89 = por %p87, %p88
      %p90 = scmp.ne.s32.totalorder %s82, %s85
      %p91 = scmp.eq.s32.totalorder %s13, 0
      %p92 = por %p90, %p91
      %p93 = scmp.ne.s32.totalorder %s82, %s85
      %p94 = scmp.eq.s32.totalorder %s18, 1
      %p95 = por %p93, %p94
      %p96 = scmp.ne.s32.totalorder %s85, %s86
      %p97 = scmp.eq.s32.totalorder %s18, 0
      %p98 = por %p96, %p97
      %p99 = scmp.ne.s32.totalorder %s85, %s86
      %p100 = scmp.eq.s32.totalorder %s19, 1
      %p101 = por %p99, %p100
      %p103 = scmp.ne.s32.totalorder %s86, %s102
      %p104 = scmp.eq.s32.totalorder %s19, 0
      %p105 = por %p103, %p104
      %s106 = ssub.s32 %s21, %s28
      %p107 = scmp.eq.s32.totalorder %s106, 0
      %s109 = sadd.s32 %s108, 1
      %s110 = scalar_select %p107, %s108, %s109
      %p113 = pneg %p107
      %p114 = scmp.eq.s32.totalorder %s13, 1
      %p115 = por %p113, %p114
      %p116 = scmp.ne.s32.totalorder %s108, %s111
      %p117 = scmp.eq.s32.totalorder %s13, 0
      %p118 = por %p116, %p117
      %p119 = scmp.ne.s32.totalorder %s108, %s111
      %p120 = scmp.eq.s32.totalorder %s18, 1
      %p121 = por %p119, %p120
      %p122 = scmp.ne.s32.totalorder %s111, %s112
      %p123 = scmp.eq.s32.totalorder %s18, 0
      %p124 = por %p122, %p123
      %p125 = scmp.ne.s32.totalorder %s111, %s112
      %p126 = scmp.eq.s32.totalorder %s19, 1
      %p127 = por %p125, %p126
      %p129 = scmp.ne.s32.totalorder %s112, %s128
      %p130 = scmp.eq.s32.totalorder %s19, 0
      %p131 = por %p129, %p130
      %s132 = ssub.s32 %s20, %s32
      %p133 = scmp.eq.s32.totalorder %s132, 0
      %s135 = sadd.s32 %s134, 1
      %s136 = scalar_select %p133, %s134, %s135
      %p139 = pneg %p133
      %p140 = scmp.eq.s32.totalorder %s13, 1
      %p141 = por %p139, %p140
      %p142 = scmp.ne.s32.totalorder %s134, %s137
      %p143 = scmp.eq.s32.totalorder %s13, 0
      %p144 = por %p142, %p143
      %p145 = scmp.ne.s32.totalorder %s134, %s137
      %p146 = scmp.eq.s32.totalorder %s18, 1
      %p147 = por %p145, %p146
      %p148 = scmp.ne.s32.totalorder %s137, %s138
      %p149 = scmp.eq.s32.totalorder %s18, 0
      %p150 = por %p148, %p149
      %p151 = scmp.ne.s32.totalorder %s137, %s138
      %p152 = scmp.eq.s32.totalorder %s19, 1
      %p153 = por %p151, %p152
      %p155 = scmp.ne.s32.totalorder %s138, %s154
      %p156 = scmp.eq.s32.totalorder %s19, 0
      %p157 = por %p155, %p156
      %p158 = scmp.le.s32.totalorder 1, %s13
      %p159 = scmp.lt.s32.totalorder %s13, 3
      %p160 = pnand %p158, %p159
      %p161 = pneg %p160
      // Predicated region
      $region9: #{tpu_custom_call.1} parent=5 // pred_check
        _
      $region10: #{tpu_custom_call.1} parent=5 // pred_check_branch
        %163 = sbr.rel (%p160) target = $region12
      $region11: #{tpu_custom_call.1} parent=5 // pred_region
        %s164 = ssub.s32 %s13, 1
        // Predicated region
        $region13: #{tpu_custom_call.1} parent=11 // pred_check
          %p165 = pneg %p51
        $region14: #{tpu_custom_call.1} parent=11 // pred_check_branch
          %167 = sbr.rel (%p165) target = $region16
        $region15: #{tpu_custom_call.1} parent=11 // pred_region
          %s168 = smul.u32 8, %s22
          %s170 = ssub.s32 2048, 2048
          %171 = vsyncadd [#allocation4], %s170
          %s172 = smul.addr %s168, 2
          %s173 = smul.addr %s172, 128
          %s174 = scalar_lea.hbm %s0, %s173
          %s175 = sshll.u32 [#allocation3], 4
          %s176 = int_to_ptr.vmem [resolvable:$true] %s175
          %181 = dma.hbm_to_vmem [thread:$0]  %s174, 2048, %s176, [#allocation4], 128, 128, 8
        $region16: #{tpu_custom_call.1} parent=11 // pred_fallthru
          _
        // Predicated region
        $region17: #{tpu_custom_call.1} parent=11 // pred_check
          %p182 = pneg %p72
        $region18: #{tpu_custom_call.1} parent=11 // pred_check_branch
          %184 = sbr.rel (%p182) target = $region20
        $region19: #{tpu_custom_call.1} parent=11 // pred_region
          %s186 = ssub.s32 256, 256
          %187 = vsyncadd [#allocation7], %s186
          %s188 = sshll.u32 [#allocation6], 4
          %s189 = int_to_ptr.vmem [resolvable:$true] %s188
          %194 = dma.hbm_to_vmem [thread:$0]  %s1, 256, %s189, [#allocation7], 128, 128, 8
        $region20: #{tpu_custom_call.1} parent=11 // pred_fallthru
          _
      $region12: #{tpu_custom_call.1} parent=5 // pred_fallthru
        _
      %p195 = scmp.lt.s32.totalorder %s13, 2
      // Predicated region
      $region21: #{tpu_custom_call.1} parent=5 // pred_check
        %p196 = pneg %p195
      $region22: #{tpu_custom_call.1} parent=5 // pred_check_branch
        %198 = sbr.rel (%p196) target = $region24
      $region23: #{tpu_custom_call.1} parent=5 // pred_region
        // Predicated region
        $region25: #{tpu_custom_call.1} parent=23 // pred_check
          %p199 = pneg %p92
        $region26: #{tpu_custom_call.1} parent=23 // pred_check_branch
          %201 = sbr.rel (%p199) target = $region28
        $region27: #{tpu_custom_call.1} parent=23 // pred_region
          %s202 = sand.u32 %s13, 1
          %s203 = scalar_lea.sflag [#allocation4], %s202
          %s204 = sand.u32 %s82, 1
          %s205 = smul.addr %s204, 384
          %s206 = scalar_lea.vmem [#allocation8], %s205
          %s208 = ssub.s32 6144, 6144
          %209 = vsyncadd %s203, %s208
          %s210 = smul.addr %s21, 96
          %s211 = smul.addr %s210, 64
          %s212 = scalar_lea.hbm %s2, %s211
          %s213 = sshll.u32 %s206, 4
          %s214 = int_to_ptr.vmem [resolvable:$true] %s213
          %219 = dma.hbm_to_vmem [thread:$0]  %s212, 6144, %s214, %s203, 384, 384, 24
        $region28: #{tpu_custom_call.1} parent=23 // pred_fallthru
          _
        // Predicated region
        $region29: #{tpu_custom_call.1} parent=23 // pred_check
          %p220 = pneg %p118
        $region30: #{tpu_custom_call.1} parent=23 // pred_check_branch
          %222 = sbr.rel (%p220) target = $region32
        $region31: #{tpu_custom_call.1} parent=23 // pred_region
          %s223 = sand.u32 %s13, 1
          %s224 = scalar_lea.sflag [#allocation4], %s223
          %s225 = sand.u32 %s108, 1
          %s226 = smul.addr %s225, 16
          %s227 = scalar_lea.vmem [#allocation9], %s226
          %s229 = ssub.s32 256, 256
          %230 = vsyncadd %s224, %s229
          %s231 = smul.addr %s21, 2
          %s232 = smul.addr %s231, 128
          %s233 = scalar_lea.hbm %s3, %s232
          %s234 = sshll.u32 %s227, 4
          %s235 = int_to_ptr.vmem [resolvable:$true] %s234
          %240 = dma.hbm_to_vmem [thread:$0]  %s233, 256, %s235, %s224, 128, 128, 8
        $region32: #{tpu_custom_call.1} parent=23 // pred_fallthru
          _
      $region24: #{tpu_custom_call.1} parent=5 // pred_fallthru
        _
      %p241 = scmp.le.s32.totalorder 1, %s13
      %p242 = scmp.lt.s32.totalorder %s13, 3
      %p243 = pnand %p241, %p242
      %p244 = pneg %p243
      // Predicated region
      $region33: #{tpu_custom_call.1} parent=5 // pred_check
        _
      $region34: #{tpu_custom_call.1} parent=5 // pred_check_branch
        %246 = sbr.rel (%p243) target = $region36
      $region35: #{tpu_custom_call.1} parent=5 // pred_region
        %s247 = ssub.s32 %s13, 1
        // Predicated region
        $region37: #{tpu_custom_call.1} parent=35 // pred_check
          %p248 = pneg %p51
        $region38: #{tpu_custom_call.1} parent=35 // pred_check_branch
          %250 = sbr.rel (%p248) target = $region40
        $region39: #{tpu_custom_call.1} parent=35 // pred_region
          %251 = dma.done [#allocation4], 2048
        $region40: #{tpu_custom_call.1} parent=35 // pred_fallthru
          _
        // Predicated region
        $region41: #{tpu_custom_call.1} parent=35 // pred_check
          %p252 = pneg %p72
        $region42: #{tpu_custom_call.1} parent=35 // pred_check_branch
          %254 = sbr.rel (%p252) target = $region44
        $region43: #{tpu_custom_call.1} parent=35 // pred_region
          %255 = dma.done [#allocation7], 256
        $region44: #{tpu_custom_call.1} parent=35 // pred_fallthru
          _
        %s256 = sand.u32 %s18, 1
        %s257 = scalar_lea.sflag [#allocation4], %s256
        %s258 = sand.u32 %s85, 1
        %s259 = smul.addr %s258, 384
        %s260 = scalar_lea.vmem [#allocation8], %s259
        // Predicated region
        $region45: #{tpu_custom_call.1} parent=35 // pred_check
          %p261 = pneg %p98
        $region46: #{tpu_custom_call.1} parent=35 // pred_check_branch
          %263 = sbr.rel (%p261) target = $region48
        $region47: #{tpu_custom_call.1} parent=35 // pred_region
          %264 = dma.done %s257, 6144
        $region48: #{tpu_custom_call.1} parent=35 // pred_fallthru
          _
        %s265 = sand.u32 %s18, 1
        %s266 = scalar_lea.sflag [#allocation4], %s265
        %s267 = sand.u32 %s111, 1
        %s268 = smul.addr %s267, 16
        %s269 = scalar_lea.vmem [#allocation9], %s268
        // Predicated region
        $region49: #{tpu_custom_call.1} parent=35 // pred_check
          %p270 = pneg %p124
        $region50: #{tpu_custom_call.1} parent=35 // pred_check_branch
          %272 = sbr.rel (%p270) target = $region52
        $region51: #{tpu_custom_call.1} parent=35 // pred_region
          %273 = dma.done %s266, 256
        $region52: #{tpu_custom_call.1} parent=35 // pred_fallthru
          _
        %p274 = pneg %p51
        %p275 = pneg %p48
        %p276 = pneg %p72
        %p277 = pneg %p69
        %s278 = sand.u32 %s18, 1
        %s279 = scalar_lea.sflag [#allocation4], %s278
        %s280 = sand.u32 %s85, 1
        %s281 = smul.addr %s280, 384
        %s282 = scalar_lea.vmem [#allocation8], %s281
        %p283 = pneg %p98
        %p284 = pneg %p95
        %s285 = sand.u32 %s18, 1
        %s286 = scalar_lea.sflag [#allocation4], %s285
        %s287 = sand.u32 %s111, 1
        %s288 = smul.addr %s287, 16
        %s289 = scalar_lea.vmem [#allocation9], %s288
        %p290 = pneg %p124
        %p291 = pneg %p121
        %p292 = pneg %p150
        %p293 = pneg %p147
        %s294 = smul.u32 8, %s22
        %s295 = smul.u32 8, %s22
        %p297 = scmp.eq.s32.totalorder %s23, 0
        // Predicated region
        $region53: #{tpu_custom_call.1} parent=35 // pred_check
          %p298 = pneg %p297
        $region54: #{tpu_custom_call.1} parent=35 // pred_check_branch
          %300 = sbr.rel (%p298) target = $region56
        $region55: #{tpu_custom_call.1} parent=35 // pred_region
          %v301 = vld [vmem:[#allocation3] sm:$0xff]
          %v302 = vld [vmem:[#allocation3 + $0x8] sm:$0xff]
          %v303 = vld [vmem:[#allocation3 + $0x10] sm:$0xff]
          %v304 = vld [vmem:[#allocation3 + $0x18] sm:$0xff]
          %v305 = vld [vmem:[#allocation3 + $0x20] sm:$0xff]
          %v306 = vld [vmem:[#allocation3 + $0x28] sm:$0xff]
          %v307 = vld [vmem:[#allocation3 + $0x30] sm:$0xff]
          %v308 = vld [vmem:[#allocation3 + $0x38] sm:$0xff]
          %v309 = vld [vmem:[#allocation3 + $0x40] sm:$0xff]
          %v310 = vld [vmem:[#allocation3 + $0x48] sm:$0xff]
          %v311 = vld [vmem:[#allocation3 + $0x50] sm:$0xff]
          %v312 = vld [vmem:[#allocation3 + $0x58] sm:$0xff]
          %v313 = vld [vmem:[#allocation3 + $0x60] sm:$0xff]
          %v314 = vld [vmem:[#allocation3 + $0x68] sm:$0xff]
          %v315 = vld [vmem:[#allocation3 + $0x70] sm:$0xff]
          %v316 = vld [vmem:[#allocation3 + $0x78] sm:$0xff]
          %v317 = vld [vmem:[#allocation6] sm:$0xff]
          %v318 = vld [vmem:[#allocation6 + $0x8] sm:$0xff]
          %v319 = vadd.f32 %v301, %v317
          %v320 = vadd.f32 %v302, %v318
          %v321 = vadd.f32 %v303, %v317
          %v322 = vadd.f32 %v304, %v318
          %v323 = vadd.f32 %v305, %v317
          %v324 = vadd.f32 %v306, %v318
          %v325 = vadd.f32 %v307, %v317
          %v326 = vadd.f32 %v308, %v318
          %v327 = vadd.f32 %v309, %v317
          %v328 = vadd.f32 %v310, %v318
          %v329 = vadd.f32 %v311, %v317
          %v330 = vadd.f32 %v312, %v318
          %v331 = vadd.f32 %v313, %v317
          %v332 = vadd.f32 %v314, %v318
          %v333 = vadd.f32 %v315, %v317
          %v334 = vadd.f32 %v316, %v318
          %335 = vst [vmem:[#allocation2] sm:$0xff] %v319
          %336 = vst [vmem:[#allocation2 + $0x8] sm:$0xff] %v320
          %337 = vst [vmem:[#allocation2 + $0x10] sm:$0xff] %v321
          %338 = vst [vmem:[#allocation2 + $0x18] sm:$0xff] %v322
          %339 = vst [vmem:[#allocation2 + $0x20] sm:$0xff] %v323
          %340 = vst [vmem:[#allocation2 + $0x28] sm:$0xff] %v324
          %341 = vst [vmem:[#allocation2 + $0x30] sm:$0xff] %v325
          %342 = vst [vmem:[#allocation2 + $0x38] sm:$0xff] %v326
          %343 = vst [vmem:[#allocation2 + $0x40] sm:$0xff] %v327
          %344 = vst [vmem:[#allocation2 + $0x48] sm:$0xff] %v328
          %345 = vst [vmem:[#allocation2 + $0x50] sm:$0xff] %v329
          %346 = vst [vmem:[#allocation2 + $0x58] sm:$0xff] %v330
          %347 = vst [vmem:[#allocation2 + $0x60] sm:$0xff] %v331
          %348 = vst [vmem:[#allocation2 + $0x68] sm:$0xff] %v332
          %349 = vst [vmem:[#allocation2 + $0x70] sm:$0xff] %v333
          %350 = vst [vmem:[#allocation2 + $0x78] sm:$0xff] %v334
        $region56: #{tpu_custom_call.1} parent=35 // pred_fallthru
          _
        %v351 = vld [vmem:[#allocation2] sm:$0xff]
        %v352 = vld [vmem:[#allocation2 + $0x8] sm:$0xff]
        %v353 = vld [vmem:[#allocation2 + $0x10] sm:$0xff]
        %v354 = vld [vmem:[#allocation2 + $0x18] sm:$0xff]
        %v355 = vld [vmem:[#allocation2 + $0x20] sm:$0xff]
        %v356 = vld [vmem:[#allocation2 + $0x28] sm:$0xff]
        %v357 = vld [vmem:[#allocation2 + $0x30] sm:$0xff]
        %v358 = vld [vmem:[#allocation2 + $0x38] sm:$0xff]
        %v359 = vld [vmem:[#allocation2 + $0x40] sm:$0xff]
        %v360 = vld [vmem:[#allocation2 + $0x48] sm:$0xff]
        %v361 = vld [vmem:[#allocation2 + $0x50] sm:$0xff]
        %v362 = vld [vmem:[#allocation2 + $0x58] sm:$0xff]
        %v363 = vld [vmem:[#allocation2 + $0x60] sm:$0xff]
        %v364 = vld [vmem:[#allocation2 + $0x68] sm:$0xff]
        %v365 = vld [vmem:[#allocation2 + $0x70] sm:$0xff]
        %v366 = vld [vmem:[#allocation2 + $0x78] sm:$0xff]
        %v367 = vld [vmem:[%s260] sm:$0xff]
        %v368 = vld [vmem:[%s260 + $0x8] sm:$0xff]
        %v369 = vld [vmem:[%s260 + $0x10] sm:$0xff]
        %v370 = vld [vmem:[%s260 + $0x18] sm:$0xff]
        %v371 = vld [vmem:[%s260 + $0x20] sm:$0xff]
        %v372 = vld [vmem:[%s260 + $0x28] sm:$0xff]
        %v373 = vld [vmem:[%s260 + $0x30] sm:$0xff]
        %v374 = vld [vmem:[%s260 + $0x38] sm:$0xff]
        %v375 = vld [vmem:[%s260 + $0x40] sm:$0xff]
        %v376 = vld [vmem:[%s260 + $0x48] sm:$0xff]
        %v377 = vld [vmem:[%s260 + $0x50] sm:$0xff]
        %v378 = vld [vmem:[%s260 + $0x58] sm:$0xff]
        %v379 = vld [vmem:[%s260 + $0x60] sm:$0xff]
        %v380 = vld [vmem:[%s260 + $0x68] sm:$0xff]
        %v381 = vld [vmem:[%s260 + $0x70] sm:$0xff]
        %v382 = vld [vmem:[%s260 + $0x78] sm:$0xff]
        %v383 = vld [vmem:[%s260 + $0x80] sm:$0xff]
        %v384 = vld [vmem:[%s260 + $0x88] sm:$0xff]
        %v385 = vld [vmem:[%s260 + $0x90] sm:$0xff]
        %v386 = vld [vmem:[%s260 + $0x98] sm:$0xff]
        %v387 = vld [vmem:[%s260 + $0xa0] sm:$0xff]
        %v388 = vld [vmem:[%s260 + $0xa8] sm:$0xff]
        %v389 = vld [vmem:[%s260 + $0xb0] sm:$0xff]
        %v390 = vld [vmem:[%s260 + $0xb8] sm:$0xff]
        %v391 = vld [vmem:[%s260 + $0xc0] sm:$0xff]
        %v392 = vld [vmem:[%s260 + $0xc8] sm:$0xff]
        %v393 = vld [vmem:[%s260 + $0xd0] sm:$0xff]
        %v394 = vld [vmem:[%s260 + $0xd8] sm:$0xff]
        %v395 = vld [vmem:[%s260 + $0xe0] sm:$0xff]
        %v396 = vld [vmem:[%s260 + $0xe8] sm:$0xff]
        %v397 = vld [vmem:[%s260 + $0xf0] sm:$0xff]
        %v398 = vld [vmem:[%s260 + $0xf8] sm:$0xff]
        %v399 = vld [vmem:[%s260 + $0x100] sm:$0xff]
        %v400 = vld [vmem:[%s260 + $0x108] sm:$0xff]
        %v401 = vld [vmem:[%s260 + $0x110] sm:$0xff]
        %v402 = vld [vmem:[%s260 + $0x118] sm:$0xff]
        %v403 = vld [vmem:[%s260 + $0x120] sm:$0xff]
        %v404 = vld [vmem:[%s260 + $0x128] sm:$0xff]
        %v405 = vld [vmem:[%s260 + $0x130] sm:$0xff]
        %v406 = vld [vmem:[%s260 + $0x138] sm:$0xff]
        %v407 = vld [vmem:[%s260 + $0x140] sm:$0xff]
        %v408 = vld [vmem:[%s260 + $0x148] sm:$0xff]
        %v409 = vld [vmem:[%s260 + $0x150] sm:$0xff]
        %v410 = vld [vmem:[%s260 + $0x158] sm:$0xff]
        %v411 = vld [vmem:[%s260 + $0x160] sm:$0xff]
        %v412 = vld [vmem:[%s260 + $0x168] sm:$0xff]
        %v413 = vld [vmem:[%s260 + $0x170] sm:$0xff]
        %v414 = vld [vmem:[%s260 + $0x178] sm:$0xff]
        %v415 = vld [vmem:[%s269] sm:$0xff]
        %v416 = vld [vmem:[%s269 + $0x8] sm:$0xff]
        %v417 = vpack.c.bf16 %v352, %v351
        %v418 = vpack.c.bf16 %v354, %v353
        %v419 = vpack.c.bf16 %v356, %v355
        %v420 = vpack.c.bf16 %v358, %v357
        %v421 = vpack.c.bf16 %v360, %v359
        %v422 = vpack.c.bf16 %v362, %v361
        %v423 = vpack.c.bf16 %v364, %v363
        %v424 = vpack.c.bf16 %v366, %v365
        %v457 = vunpack.c.l.b16 %v367
        %v458 = vunpack.c.h.b16 %v367
        %v459 = vunpack.c.l.b16 %v368
        %v460 = vunpack.c.l.b16 %v370
        %v461 = vunpack.c.h.b16 %v370
        %v462 = vunpack.c.l.b16 %v371
        %v463 = vunpack.c.l.b16 %v373
        %v464 = vunpack.c.h.b16 %v373
        %v465 = vunpack.c.l.b16 %v374
        %v466 = vunpack.c.l.b16 %v376
        %v467 = vunpack.c.h.b16 %v376
        %v468 = vunpack.c.l.b16 %v377
        %v469 = vunpack.c.l.b16 %v379
        %v470 = vunpack.c.h.b16 %v379
        %v471 = vunpack.c.l.b16 %v380
        %v472 = vunpack.c.l.b16 %v382
        %v473 = vunpack.c.h.b16 %v382
        %v474 = vunpack.c.l.b16 %v383
        %v475 = vunpack.c.l.b16 %v385
        %v476 = vunpack.c.h.b16 %v385
        %v477 = vunpack.c.l.b16 %v386
        %v478 = vunpack.c.l.b16 %v388
        %v479 = vunpack.c.h.b16 %v388
        %v480 = vunpack.c.l.b16 %v389
        %v481 = vunpack.c.l.b16 %v391
        %v482 = vunpack.c.h.b16 %v391
        %v483 = vunpack.c.l.b16 %v392
        %v484 = vunpack.c.l.b16 %v394
        %v485 = vunpack.c.h.b16 %v394
        %v486 = vunpack.c.l.b16 %v395
        %v487 = vunpack.c.l.b16 %v397
        %v488 = vunpack.c.h.b16 %v397
        %v489 = vunpack.c.l.b16 %v398
        %v490 = vunpack.c.l.b16 %v400
        %v491 = vunpack.c.h.b16 %v400
        %v492 = vunpack.c.l.b16 %v401
        %v493 = vunpack.c.l.b16 %v403
        %v494 = vunpack.c.h.b16 %v403
        %v495 = vunpack.c.l.b16 %v404
        %v496 = vunpack.c.l.b16 %v406
        %v497 = vunpack.c.h.b16 %v406
        %v498 = vunpack.c.l.b16 %v407
        %v499 = vunpack.c.l.b16 %v409
        %v500 = vunpack.c.h.b16 %v409
        %v501 = vunpack.c.l.b16 %v410
        %v502 = vunpack.c.l.b16 %v412
        %v503 = vunpack.c.h.b16 %v412
        %v504 = vunpack.c.l.b16 %v413
        %v505 = vpack.c.b16 %v460, %v457
        %v506 = vpack.c.b16 %v461, %v458
        %v507 = vpack.c.b16 %v462, %v459
        %v508 = vpack.c.b16 %v466, %v463
        %v509 = vpack.c.b16 %v467, %v464
        %v510 = vpack.c.b16 %v468, %v465
        %v511 = vpack.c.b16 %v472, %v469
        %v512 = vpack.c.b16 %v473, %v470
        %v513 = vpack.c.b16 %v474, %v471
        %v514 = vpack.c.b16 %v478, %v475
        %v515 = vpack.c.b16 %v479, %v476
        %v516 = vpack.c.b16 %v480, %v477
        %v517 = vpack.c.b16 %v484, %v481
        %v518 = vpack.c.b16 %v485, %v482
        %v519 = vpack.c.b16 %v486, %v483
        %v520 = vpack.c.b16 %v490, %v487
        %v521 = vpack.c.b16 %v491, %v488
        %v522 = vpack.c.b16 %v492, %v489
        %v523 = vpack.c.b16 %v496, %v493
        %v524 = vpack.c.b16 %v497, %v494
        %v525 = vpack.c.b16 %v498, %v495
        %v526 = vpack.c.b16 %v502, %v499
        %v527 = vpack.c.b16 %v503, %v500
        %v528 = vpack.c.b16 %v504, %v501
        %553 = vmatprep.subr.bf16.mxu0 %v527
        %554 = vmatpush1.bf16.msra.mxu0 %v526
        %555 = vmatprep.subr.bf16.mxu0 %v524
        %556 = vmatpush1.bf16.msra.mxu0 %v523
        %557 = vmatprep.subr.bf16.mxu0 %v521
        %558 = vmatpush1.bf16.msra.mxu0 %v520
        %559 = vmatprep.subr.bf16.mxu0 %v518
        %560 = vmatpush1.bf16.msra.mxu0 %v517
        %561 = vmatprep.subr.bf16.mxu0 %v515
        %562 = vmatpush1.bf16.msra.mxu0 %v514
        %563 = vmatprep.subr.bf16.mxu0 %v512
        %564 = vmatpush1.bf16.msra.mxu0 %v511
        %565 = vmatprep.subr.bf16.mxu0 %v509
        %566 = vmatpush1.bf16.msra.mxu0 %v508
        %567 = vmatprep.subr.bf16.mxu0 %v506
        %568 = vmatpush1.bf16.msra.mxu0 %v505
        %569 = vmatprep.subr.bf16.mxu0 0
        %570 = vmatpush2.bf16.msra.mxu0 0
        %571 = vmatprep.subr.bf16.mxu0 0
        %572 = vmatpush2.bf16.msra.mxu0 0
        %573 = vmatprep.subr.bf16.mxu0 0
        %574 = vmatpush2.bf16.msra.mxu0 0
        %575 = vmatprep.subr.bf16.mxu0 0
        %576 = vmatpush2.bf16.msra.mxu0 0
        %577 = vmatprep.subr.bf16.mxu0 0
        %578 = vmatpush2.bf16.msra.mxu0 0
        %579 = vmatprep.subr.bf16.mxu0 0
        %580 = vmatpush2.bf16.msra.mxu0 0
        %581 = vmatprep.subr.bf16.mxu0 0
        %582 = vmatpush2.bf16.msra.mxu0 0
        %583 = vmatprep.subr.bf16.mxu0 0
        %584 = vmatpush2.bf16.msra.mxu0 0
        %585 = vmatprep.mubr.bf16.mxu0 0
        %586 = vmatmul.mubr.bf16.gmra.mxu0 %v417
        %v587 = vpop.f32.mrf.mxu0
        %v588 = vadd.f32 0.0, %v587
        %v589 = vpop.f32.mrf.mxu0
        %v590 = vadd.f32 0.0, %v589
        %v591 = vpop.f32.mrf.mxu0
        %v592 = vadd.f32 0.0, %v591
        %v593 = vpop.f32.mrf.mxu0
        %v594 = vadd.f32 0.0, %v593
        %595 = vmatprep.mubr.bf16.mxu0 0
        %596 = vmatmul.mubr.bf16.gmra.mxu0 %v418
        %v597 = vpop.f32.mrf.mxu0
        %v598 = vadd.f32 0.0, %v597
        %v599 = vpop.f32.mrf.mxu0
        %v600 = vadd.f32 0.0, %v599
        %v601 = vpop.f32.mrf.mxu0
        %v602 = vadd.f32 0.0, %v601
        %v603 = vpop.f32.mrf.mxu0
        %v604 = vadd.f32 0.0, %v603
        %605 = vmatprep.mubr.bf16.mxu0 0
        %606 = vmatmul.mubr.bf16.gmra.mxu0 %v419
        %v607 = vpop.f32.mrf.mxu0
        %v608 = vadd.f32 0.0, %v607
        %v609 = vpop.f32.mrf.mxu0
        %v610 = vadd.f32 0.0, %v609
        %v611 = vpop.f32.mrf.mxu0
        %v612 = vadd.f32 0.0, %v611
        %v613 = vpop.f32.mrf.mxu0
        %v614 = vadd.f32 0.0, %v613
        %615 = vmatprep.mubr.bf16.mxu0 0
        %616 = vmatmul.mubr.bf16.gmra.mxu0 %v420
        %v617 = vpop.f32.mrf.mxu0
        %v618 = vadd.f32 0.0, %v617
        %v619 = vpop.f32.mrf.mxu0
        %v620 = vadd.f32 0.0, %v619
        %v621 = vpop.f32.mrf.mxu0
        %v622 = vadd.f32 0.0, %v621
        %v623 = vpop.f32.mrf.mxu0
        %v624 = vadd.f32 0.0, %v623
        %625 = vmatprep.mubr.bf16.mxu0 0
        %626 = vmatmul.mubr.bf16.gmra.mxu0 %v421
        %v627 = vpop.f32.mrf.mxu0
        %v628 = vadd.f32 0.0, %v627
        %v629 = vpop.f32.mrf.mxu0
        %v630 = vadd.f32 0.0, %v629
        %v631 = vpop.f32.mrf.mxu0
        %v632 = vadd.f32 0.0, %v631
        %v633 = vpop.f32.mrf.mxu0
        %v634 = vadd.f32 0.0, %v633
        %635 = vmatprep.mubr.bf16.mxu0 0
        %636 = vmatmul.mubr.bf16.gmra.mxu0 %v422
        %v637 = vpop.f32.mrf.mxu0
        %v638 = vadd.f32 0.0, %v637
        %v639 = vpop.f32.mrf.mxu0
        %v640 = vadd.f32 0.0, %v639
        %v641 = vpop.f32.mrf.mxu0
        %v642 = vadd.f32 0.0, %v641
        %v643 = vpop.f32.mrf.mxu0
        %v644 = vadd.f32 0.0, %v643
        %645 = vmatprep.mubr.bf16.mxu0 0
        %646 = vmatmul.mubr.bf16.gmra.mxu0 %v423
        %v647 = vpop.f32.mrf.mxu0
        %v648 = vadd.f32 0.0, %v647
        %v649 = vpop.f32.mrf.mxu0
        %v650 = vadd.f32 0.0, %v649
        %v651 = vpop.f32.mrf.mxu0
        %v652 = vadd.f32 0.0, %v651
        %v653 = vpop.f32.mrf.mxu0
        %v654 = vadd.f32 0.0, %v653
        %655 = vmatprep.mubr.bf16.mxu0 0
        %656 = vmatmul.mubr.bf16.gmra.mxu0 %v424
        %v657 = vpop.f32.mrf.mxu0
        %v658 = vadd.f32 0.0, %v657
        %v659 = vpop.f32.mrf.mxu0
        %v660 = vadd.f32 0.0, %v659
        %v661 = vpop.f32.mrf.mxu0
        %v662 = vadd.f32 0.0, %v661
        %v663 = vpop.f32.mrf.mxu0
        %v664 = vadd.f32 0.0, %v663
        %665 = vdwg.mxu0
        %666 = vmatprep.subr.bf16.mxu0 0
        %667 = vmatpush1.bf16.msra.mxu0 %v528
        %668 = vmatprep.subr.bf16.mxu0 0
        %669 = vmatpush1.bf16.msra.mxu0 %v525
        %670 = vmatprep.subr.bf16.mxu0 0
        %671 = vmatpush1.bf16.msra.mxu0 %v522
        %672 = vmatprep.subr.bf16.mxu0 0
        %673 = vmatpush1.bf16.msra.mxu0 %v519
        %674 = vmatprep.subr.bf16.mxu0 0
        %675 = vmatpush1.bf16.msra.mxu0 %v516
        %676 = vmatprep.subr.bf16.mxu0 0
        %677 = vmatpush1.bf16.msra.mxu0 %v513
        %678 = vmatprep.subr.bf16.mxu0 0
        %679 = vmatpush1.bf16.msra.mxu0 %v510
        %680 = vmatprep.subr.bf16.mxu0 0
        %681 = vmatpush1.bf16.msra.mxu0 %v507
        %682 = vmatprep.subr.bf16.mxu0 0
        %683 = vmatpush2.bf16.msra.mxu0 0
        %684 = vmatprep.subr.bf16.mxu0 0
        %685 = vmatpush2.bf16.msra.mxu0 0
        %686 = vmatprep.subr.bf16.mxu0 0
        %687 = vmatpush2.bf16.msra.mxu0 0
        %688 = vmatprep.subr.bf16.mxu0 0
        %689 = vmatpush2.bf16.msra.mxu0 0
        %690 = vmatprep.subr.bf16.mxu0 0
        %691 = vmatpush2.bf16.msra.mxu0 0
        %692 = vmatprep.subr.bf16.mxu0 0
        %693 = vmatpush2.bf16.msra.mxu0 0
        %694 = vmatprep.subr.bf16.mxu0 0
        %695 = vmatpush2.bf16.msra.mxu0 0
        %696 = vmatprep.subr.bf16.mxu0 0
        %697 = vmatpush2.bf16.msra.mxu0 0
        %698 = vmatprep.mubr.bf16.mxu0 0
        %699 = vmatmul.mubr.bf16.gmra.mxu0 %v417
        %v700 = vpop.f32.mrf.mxu0
        %v701 = vadd.f32 0.0, %v700
        %v702 = vpop.f32.mrf.mxu0
        %v703 = vpop.f32.mrf.mxu0
        %v704 = vadd.f32 0.0, %v703
        %v705 = vpop.f32.mrf.mxu0
        %706 = vmatprep.mubr.bf16.mxu0 0
        %707 = vmatmul.mubr.bf16.gmra.mxu0 %v418
        %v708 = vpop.f32.mrf.mxu0
        %v709 = vadd.f32 0.0, %v708
        %v710 = vpop.f32.mrf.mxu0
        %v711 = vpop.f32.mrf.mxu0
        %v712 = vadd.f32 0.0, %v711
        %v713 = vpop.f32.mrf.mxu0
        %714 = vmatprep.mubr.bf16.mxu0 0
        %715 = vmatmul.mubr.bf16.gmra.mxu0 %v419
        %v716 = vpop.f32.mrf.mxu0
        %v717 = vadd.f32 0.0, %v716
        %v718 = vpop.f32.mrf.mxu0
        %v719 = vpop.f32.mrf.mxu0
        %v720 = vadd.f32 0.0, %v719
        %v721 = vpop.f32.mrf.mxu0
        %722 = vmatprep.mubr.bf16.mxu0 0
        %723 = vmatmul.mubr.bf16.gmra.mxu0 %v420
        %v724 = vpop.f32.mrf.mxu0
        %v725 = vadd.f32 0.0, %v724
        %v726 = vpop.f32.mrf.mxu0
        %v727 = vpop.f32.mrf.mxu0
        %v728 = vadd.f32 0.0, %v727
        %v729 = vpop.f32.mrf.mxu0
        %730 = vmatprep.mubr.bf16.mxu0 0
        %731 = vmatmul.mubr.bf16.gmra.mxu0 %v421
        %v732 = vpop.f32.mrf.mxu0
        %v733 = vadd.f32 0.0, %v732
        %v734 = vpop.f32.mrf.mxu0
        %v735 = vpop.f32.mrf.mxu0
        %v736 = vadd.f32 0.0, %v735
        %v737 = vpop.f32.mrf.mxu0
        %738 = vmatprep.mubr.bf16.mxu0 0
        %739 = vmatmul.mubr.bf16.gmra.mxu0 %v422
        %v740 = vpop.f32.mrf.mxu0
        %v741 = vadd.f32 0.0, %v740
        %v742 = vpop.f32.mrf.mxu0
        %v743 = vpop.f32.mrf.mxu0
        %v744 = vadd.f32 0.0, %v743
        %v745 = vpop.f32.mrf.mxu0
        %746 = vmatprep.mubr.bf16.mxu0 0
        %747 = vmatmul.mubr.bf16.gmra.mxu0 %v423
        %v748 = vpop.f32.mrf.mxu0
        %v749 = vadd.f32 0.0, %v748
        %v750 = vpop.f32.mrf.mxu0
        %v751 = vpop.f32.mrf.mxu0
        %v752 = vadd.f32 0.0, %v751
        %v753 = vpop.f32.mrf.mxu0
        %754 = vmatprep.mubr.bf16.mxu0 0
        %755 = vmatmul.mubr.bf16.gmra.mxu0 %v424
        %v756 = vpop.f32.mrf.mxu0
        %v757 = vadd.f32 0.0, %v756
        %v758 = vpop.f32.mrf.mxu0
        %v759 = vpop.f32.mrf.mxu0
        %v760 = vadd.f32 0.0, %v759
        %v761 = vpop.f32.mrf.mxu0
        %762 = vdwg.mxu0
        %v763 = vlaneseq
        %v764 = vshrl.u32 %v763, 7
        %v765 = vsub.s32 0, %v764
        %v766 = vrot.slane %v415, %v765
        %v767 = vadd.f32 %v588, %v766
        %v768 = vadd.f32 %v592, %v766
        %v769 = vadd.f32 %v598, %v766
        %v770 = vadd.f32 %v602, %v766
        %v771 = vadd.f32 %v608, %v766
        %v772 = vadd.f32 %v612, %v766
        %v773 = vadd.f32 %v618, %v766
        %v774 = vadd.f32 %v622, %v766
        %v775 = vadd.f32 %v628, %v766
        %v776 = vadd.f32 %v632, %v766
        %v777 = vadd.f32 %v638, %v766
        %v778 = vadd.f32 %v642, %v766
        %v779 = vadd.f32 %v648, %v766
        %v780 = vadd.f32 %v652, %v766
        %v781 = vadd.f32 %v658, %v766
        %v782 = vadd.f32 %v662, %v766
        %v783 = vlaneseq
        %v784 = vshrl.u32 %v783, 7
        %v785 = vsub.s32 1, %v784
        %v786 = vrot.slane %v415, %v785
        %v787 = vadd.f32 %v590, %v786
        %v788 = vadd.f32 %v594, %v786
        %v789 = vadd.f32 %v600, %v786
        %v790 = vadd.f32 %v604, %v786
        %v791 = vadd.f32 %v610, %v786
        %v792 = vadd.f32 %v614, %v786
        %v793 = vadd.f32 %v620, %v786
        %v794 = vadd.f32 %v624, %v786
        %v795 = vadd.f32 %v630, %v786
        %v796 = vadd.f32 %v634, %v786
        %v797 = vadd.f32 %v640, %v786
        %v798 = vadd.f32 %v644, %v786
        %v799 = vadd.f32 %v650, %v786
        %v800 = vadd.f32 %v654, %v786
        %v801 = vadd.f32 %v660, %v786
        %v802 = vadd.f32 %v664, %v786
        %v803 = vlaneseq
        %v804 = vshrl.u32 %v803, 7
        %v805 = vsub.s32 2, %v804
        %v806 = vrot.slane %v415, %v805
        %v807 = vadd.f32 %v701, %v806
        %v808 = vadd.f32 %v704, %v806
        %v809 = vadd.f32 %v709, %v806
        %v810 = vadd.f32 %v712, %v806
        %v811 = vadd.f32 %v717, %v806
        %v812 = vadd.f32 %v720, %v806
        %v813 = vadd.f32 %v725, %v806
        %v814 = vadd.f32 %v728, %v806
        %v815 = vadd.f32 %v733, %v806
        %v816 = vadd.f32 %v736, %v806
        %v817 = vadd.f32 %v741, %v806
        %v818 = vadd.f32 %v744, %v806
        %v819 = vadd.f32 %v749, %v806
        %v820 = vadd.f32 %v752, %v806
        %v821 = vadd.f32 %v757, %v806
        %v822 = vadd.f32 %v760, %v806
        %v823 = vpack.c.bf16 %v768, %v767
        %v824 = vpack.c.bf16 %v770, %v769
        %v825 = vpack.c.bf16 %v772, %v771
        %v826 = vpack.c.bf16 %v774, %v773
        %v827 = vpack.c.bf16 %v776, %v775
        %v828 = vpack.c.bf16 %v778, %v777
        %v829 = vpack.c.bf16 %v780, %v779
        %v830 = vpack.c.bf16 %v782, %v781
        %v831 = vpack.c.bf16 %v788, %v787
        %v832 = vpack.c.bf16 %v790, %v789
        %v833 = vpack.c.bf16 %v792, %v791
        %v834 = vpack.c.bf16 %v794, %v793
        %v835 = vpack.c.bf16 %v796, %v795
        %v836 = vpack.c.bf16 %v798, %v797
        %v837 = vpack.c.bf16 %v800, %v799
        %v838 = vpack.c.bf16 %v802, %v801
        %v839 = vpack.c.bf16 %v808, %v807
        %v840 = vpack.c.bf16 %v810, %v809
        %v841 = vpack.c.bf16 %v812, %v811
        %v842 = vpack.c.bf16 %v814, %v813
        %v843 = vpack.c.bf16 %v816, %v815
        %v844 = vpack.c.bf16 %v818, %v817
        %v845 = vpack.c.bf16 %v820, %v819
        %v846 = vpack.c.bf16 %v822, %v821
        %vm847 = vcmask 130048
        %v849 = vsel %vm847, %v823, 0
        %v852 = vsel %vm847, %v831, 0
        %854 = vmatprep.subr.bf16.mxu0 0
        %855 = vmatpush1.bf16.xpose.msra.mxu0 0
        %856 = vmatprep.subr.bf16.mxu0 0
        %857 = vmatpush1.bf16.xpose.msra.mxu0 0
        %858 = vmatprep.subr.bf16.mxu0 0
        %859 = vmatpush1.bf16.xpose.msra.mxu0 0
        %860 = vmatprep.subr.bf16.mxu0 0
        %861 = vmatpush1.bf16.xpose.msra.mxu0 0
        %862 = vmatprep.subr.bf16.mxu0 0
        %863 = vmatpush1.bf16.xpose.msra.mxu0 0
        %864 = vmatprep.subr.bf16.mxu0 0
        %865 = vmatpush1.bf16.xpose.msra.mxu0 0
        %866 = vmatprep.subr.bf16.mxu0 0
        %867 = vmatpush1.bf16.xpose.msra.mxu0 0
        %868 = vmatprep.subr.bf16.mxu0 0
        %869 = vmatpush1.bf16.xpose.msra.mxu0 %v852
        %870 = vmatprep.subr.bf16.mxu0 0
        %871 = vmatpush2.bf16.xpose.msra.mxu0 0
        %872 = vmatprep.subr.bf16.mxu0 0
        %873 = vmatpush2.bf16.xpose.msra.mxu0 0
        %874 = vmatprep.subr.bf16.mxu0 0
        %875 = vmatpush2.bf16.xpose.msra.mxu0 0
        %876 = vmatprep.subr.bf16.mxu0 0
        %877 = vmatpush2.bf16.xpose.msra.mxu0 0
        %878 = vmatprep.subr.bf16.mxu0 0
        %879 = vmatpush2.bf16.xpose.msra.mxu0 0
        %880 = vmatprep.subr.bf16.mxu0 0
        %881 = vmatpush2.bf16.xpose.msra.mxu0 0
        %882 = vmatprep.subr.bf16.mxu0 0
        %883 = vmatpush2.bf16.xpose.msra.mxu0 0
        %884 = vmatprep.subr.bf16.mxu0 0
        %885 = vmatpush2.bf16.xpose.msra.mxu0 0
        %886 = vmatprep.mubr.bf16.mxu0 0
        %887 = vmatmul.mubr.bf16.gmra.mxu0 %v849
        %v888 = vpop.f32.mrf.mxu0
        %v889 = vadd.f32 0.0, %v888
        %v890 = vpop.f32.mrf.mxu0
        %v891 = vpop.f32.mrf.mxu0
        %v892 = vadd.f32 0.0, %v891
        %v893 = vpop.f32.mrf.mxu0
        %894 = vdwg.mxu0
        %v896 = vsel %vm847, %v824, 0
        %v899 = vsel %vm847, %v832, 0
        %901 = vmatprep.subr.bf16.mxu0 0
        %902 = vmatpush1.bf16.xpose.msra.mxu0 0
        %903 = vmatprep.subr.bf16.mxu0 0
        %904 = vmatpush1.bf16.xpose.msra.mxu0 0
        %905 = vmatprep.subr.bf16.mxu0 0
        %906 = vmatpush1.bf16.xpose.msra.mxu0 0
        %907 = vmatprep.subr.bf16.mxu0 0
        %908 = vmatpush1.bf16.xpose.msra.mxu0 0
        %909 = vmatprep.subr.bf16.mxu0 0
        %910 = vmatpush1.bf16.xpose.msra.mxu0 0
        %911 = vmatprep.subr.bf16.mxu0 0
        %912 = vmatpush1.bf16.xpose.msra.mxu0 0
        %913 = vmatprep.subr.bf16.mxu0 0
        %914 = vmatpush1.bf16.xpose.msra.mxu0 0
        %915 = vmatprep.subr.bf16.mxu0 0
        %916 = vmatpush1.bf16.xpose.msra.mxu0 %v899
        %917 = vmatprep.subr.bf16.mxu0 0
        %918 = vmatpush2.bf16.xpose.msra.mxu0 0
        %919 = vmatprep.subr.bf16.mxu0 0
        %920 = vmatpush2.bf16.xpose.msra.mxu0 0
        %921 = vmatprep.subr.bf16.mxu0 0
        %922 = vmatpush2.bf16.xpose.msra.mxu0 0
        %923 = vmatprep.subr.bf16.mxu0 0
        %924 = vmatpush2.bf16.xpose.msra.mxu0 0
        %925 = vmatprep.subr.bf16.mxu0 0
        %926 = vmatpush2.bf16.xpose.msra.mxu0 0
        %927 = vmatprep.subr.bf16.mxu0 0
        %928 = vmatpush2.bf16.xpose.msra.mxu0 0
        %929 = vmatprep.subr.bf16.mxu0 0
        %930 = vmatpush2.bf16.xpose.msra.mxu0 0
        %931 = vmatprep.subr.bf16.mxu0 0
        %932 = vmatpush2.bf16.xpose.msra.mxu0 0
        %933 = vmatprep.mubr.bf16.mxu0 0
        %934 = vmatmul.mubr.bf16.gmra.mxu0 %v896
        %v935 = vpop.f32.mrf.mxu0
        %v936 = vadd.f32 0.0, %v935
        %v937 = vpop.f32.mrf.mxu0
        %v938 = vpop.f32.mrf.mxu0
        %v939 = vadd.f32 0.0, %v938
        %v940 = vpop.f32.mrf.mxu0
        %941 = vdwg.mxu0
        %v943 = vsel %vm847, %v825, 0
        %v946 = vsel %vm847, %v833, 0
        %948 = vmatprep.subr.bf16.mxu0 0
        %949 = vmatpush1.bf16.xpose.msra.mxu0 0
        %950 = vmatprep.subr.bf16.mxu0 0
        %951 = vmatpush1.bf16.xpose.msra.mxu0 0
        %952 = vmatprep.subr.bf16.mxu0 0
        %953 = vmatpush1.bf16.xpose.msra.mxu0 0
        %954 = vmatprep.subr.bf16.mxu0 0
        %955 = vmatpush1.bf16.xpose.msra.mxu0 0
        %956 = vmatprep.subr.bf16.mxu0 0
        %957 = vmatpush1.bf16.xpose.msra.mxu0 0
        %958 = vmatprep.subr.bf16.mxu0 0
        %959 = vmatpush1.bf16.xpose.msra.mxu0 0
        %960 = vmatprep.subr.bf16.mxu0 0
        %961 = vmatpush1.bf16.xpose.msra.mxu0 0
        %962 = vmatprep.subr.bf16.mxu0 0
        %963 = vmatpush1.bf16.xpose.msra.mxu0 %v946
        %964 = vmatprep.subr.bf16.mxu0 0
        %965 = vmatpush2.bf16.xpose.msra.mxu0 0
        %966 = vmatprep.subr.bf16.mxu0 0
        %967 = vmatpush2.bf16.xpose.msra.mxu0 0
        %968 = vmatprep.subr.bf16.mxu0 0
        %969 = vmatpush2.bf16.xpose.msra.mxu0 0
        %970 = vmatprep.subr.bf16.mxu0 0
        %971 = vmatpush2.bf16.xpose.msra.mxu0 0
        %972 = vmatprep.subr.bf16.mxu0 0
        %973 = vmatpush2.bf16.xpose.msra.mxu0 0
        %974 = vmatprep.subr.bf16.mxu0 0
        %975 = vmatpush2.bf16.xpose.msra.mxu0 0
        %976 = vmatprep.subr.bf16.mxu0 0
        %977 = vmatpush2.bf16.xpose.msra.mxu0 0
        %978 = vmatprep.subr.bf16.mxu0 0
        %979 = vmatpush2.bf16.xpose.msra.mxu0 0
        %980 = vmatprep.mubr.bf16.mxu0 0
        %981 = vmatmul.mubr.bf16.gmra.mxu0 %v943
        %v982 = vpop.f32.mrf.mxu0
        %v983 = vadd.f32 0.0, %v982
        %v984 = vpop.f32.mrf.mxu0
        %v985 = vpop.f32.mrf.mxu0
        %v986 = vadd.f32 0.0, %v985
        %v987 = vpop.f32.mrf.mxu0
        %988 = vdwg.mxu0
        %v990 = vsel %vm847, %v826, 0
        %v993 = vsel %vm847, %v834, 0
        %995 = vmatprep.subr.bf16.mxu0 0
        %996 = vmatpush1.bf16.xpose.msra.mxu0 0
        %997 = vmatprep.subr.bf16.mxu0 0
        %998 = vmatpush1.bf16.xpose.msra.mxu0 0
        %999 = vmatprep.subr.bf16.mxu0 0
        %1000 = vmatpush1.bf16.xpose.msra.mxu0 0
        %1001 = vmatprep.subr.bf16.mxu0 0
        %1002 = vmatpush1.bf16.xpose.msra.mxu0 0
        %1003 = vmatprep.subr.bf16.mxu0 0
        %1004 = vmatpush1.bf16.xpose.msra.mxu0 0
        %1005 = vmatprep.subr.bf16.mxu0 0
        %1006 = vmatpush1.bf16.xpose.msra.mxu0 0
        %1007 = vmatprep.subr.bf16.mxu0 0
        %1008 = vmatpush1.bf16.xpose.msra.mxu0 0
        %1009 = vmatprep.subr.bf16.mxu0 0
        %1010 = vmatpush1.bf16.xpose.msra.mxu0 %v993
        %1011 = vmatprep.subr.bf16.mxu0 0
        %1012 = vmatpush2.bf16.xpose.msra.mxu0 0
        %1013 = vmatprep.subr.bf16.mxu0 0
        %1014 = vmatpush2.bf16.xpose.msra.mxu0 0
        %1015 = vmatprep.subr.bf16.mxu0 0
        %1016 = vmatpush2.bf16.xpose.msra.mxu0 0
        %1017 = vmatprep.subr.bf16.mxu0 0
        %1018 = vmatpush2.bf16.xpose.msra.mxu0 0
        %1019 = vmatprep.subr.bf16.mxu0 0
        %1020 = vmatpush2.bf16.xpose.msra.mxu0 0
        %1021 = vmatprep.subr.bf16.mxu0 0
        %1022 = vmatpush2.bf16.xpose.msra.mxu0 0
        %1023 = vmatprep.subr.bf16.mxu0 0
        %1024 = vmatpush2.bf16.xpose.msra.mxu0 0
        %1025 = vmatprep.subr.bf16.mxu0 0
        %1026 = vmatpush2.bf16.xpose.msra.mxu0 0
        %1027 = vmatprep.mubr.bf16.mxu0 0
        %1028 = vmatmul.mubr.bf16.gmra.mxu0 %v990
        %v1029 = vpop.f32.mrf.mxu0
        %v1030 = vadd.f32 0.0, %v1029
        %v1031 = vpop.f32.mrf.mxu0
        %v1032 = vpop.f32.mrf.mxu0
        %v1033 = vadd.f32 0.0, %v1032
        %v1034 = vpop.f32.mrf.mxu0
        %1035 = vdwg.mxu0
        %v1037 = vsel %vm847, %v827, 0
        %v1040 = vsel %vm847, %v835, 0
        %1042 = vmatprep.subr.bf16.mxu0 0
        %1043 = vmatpush1.bf16.xpose.msra.mxu0 0
        %1044 = vmatprep.subr.bf16.mxu0 0
        %1045 = vmatpush1.bf16.xpose.msra.mxu0 0
        %1046 = vmatprep.subr.bf16.mxu0 0
        %1047 = vmatpush1.bf16.xpose.msra.mxu0 0
        %1048 = vmatprep.subr.bf16.mxu0 0
        %1049 = vmatpush1.bf16.xpose.msra.mxu0 0
        %1050 = vmatprep.subr.bf16.mxu0 0
        %1051 = vmatpush1.bf16.xpose.msra.mxu0 0
        %1052 = vmatprep.subr.bf16.mxu0 0
        %1053 = vmatpush1.bf16.xpose.msra.mxu0 0
        %1054 = vmatprep.subr.bf16.mxu0 0
        %1055 = vmatpush1.bf16.xpose.msra.mxu0 0
        %1056 = vmatprep.subr.bf16.mxu0 0
        %1057 = vmatpush1.bf16.xpose.msra.mxu0 %v1040
        %1058 = vmatprep.subr.bf16.mxu0 0
        %1059 = vmatpush2.bf16.xpose.msra.mxu0 0
        %1060 = vmatprep.subr.bf16.mxu0 0
        %1061 = vmatpush2.bf16.xpose.msra.mxu0 0
        %1062 = vmatprep.subr.bf16.mxu0 0
        %1063 = vmatpush2.bf16.xpose.msra.mxu0 0
        %1064 = vmatprep.subr.bf16.mxu0 0
        %1065 = vmatpush2.bf16.xpose.msra.mxu0 0
        %1066 = vmatprep.subr.bf16.mxu0 0
        %1067 = vmatpush2.bf16.xpose.msra.mxu0 0
        %1068 = vmatprep.subr.bf16.mxu0 0
        %1069 = vmatpush2.bf16.xpose.msra.mxu0 0
        %1070 = vmatprep.subr.bf16.mxu0 0
        %1071 = vmatpush2.bf16.xpose.msra.mxu0 0
        %1072 = vmatprep.subr.bf16.mxu0 0
        %1073 = vmatpush2.bf16.xpose.msra.mxu0 0
        %1074 = vmatprep.mubr.bf16.mxu0 0
        %1075 = vmatmul.mubr.bf16.gmra.mxu0 %v1037
        %v1076 = vpop.f32.mrf.mxu0
        %v1077 = vadd.f32 0.0, %v1076
        %v1078 = vpop.f32.mrf.mxu0
        %v1079 = vpop.f32.mrf.mxu0
        %v1080 = vadd.f32 0.0, %v1079
        %v1081 = vpop.f32.mrf.mxu0
        %1082 = vdwg.mxu0
        %v1084 = vsel %vm847, %v828, 0
        %v1087 = vsel %vm847, %v836, 0
        %1089 = vmatprep.subr.bf16.mxu0 0
        %1090 = vmatpush1.bf16.xpose.msra.mxu0 0
        %1091 = vmatprep.subr.bf16.mxu0 0
        %1092 = vmatpush1.bf16.xpose.msra.mxu0 0
        %1093 = vmatprep.subr.bf16.mxu0 0
        %1094 = vmatpush1.bf16.xpose.msra.mxu0 0
        %1095 = vmatprep.subr.bf16.mxu0 0
        %1096 = vmatpush1.bf16.xpose.msra.mxu0 0
        %1097 = vmatprep.subr.bf16.mxu0 0
        %1098 = vmatpush1.bf16.xpose.msra.mxu0 0
        %1099 = vmatprep.subr.bf16.mxu0 0
        %1100 = vmatpush1.bf16.xpose.msra.mxu0 0
        %1101 = vmatprep.subr.bf16.mxu0 0
        %1102 = vmatpush1.bf16.xpose.msra.mxu0 0
        %1103 = vmatprep.subr.bf16.mxu0 0
        %1104 = vmatpush1.bf16.xpose.msra.mxu0 %v1087
        %1105 = vmatprep.subr.bf16.mxu0 0
        %1106 = vmatpush2.bf16.xpose.msra.mxu0 0
        %1107 = vmatprep.subr.bf16.mxu0 0
        %1108 = vmatpush2.bf16.xpose.msra.mxu0 0
        %1109 = vmatprep.subr.bf16.mxu0 0
        %1110 = vmatpush2.bf16.xpose.msra.mxu0 0
        %1111 = vmatprep.subr.bf16.mxu0 0
        %1112 = vmatpush2.bf16.xpose.msra.mxu0 0
        %1113 = vmatprep.subr.bf16.mxu0 0
        %1114 = vmatpush2.bf16.xpose.msra.mxu0 0
        %1115 = vmatprep.subr.bf16.mxu0 0
        %1116 = vmatpush2.bf16.xpose.msra.mxu0 0
        %1117 = vmatprep.subr.bf16.mxu0 0
        %1118 = vmatpush2.bf16.xpose.msra.mxu0 0
        %1119 = vmatprep.subr.bf16.mxu0 0
        %1120 = vmatpush2.bf16.xpose.msra.mxu0 0
        %1121 = vmatprep.mubr.bf16.mxu0 0
        %1122 = vmatmul.mubr.bf16.gmra.mxu0 %v1084
        %v1123 = vpop.f32.mrf.mxu0
        %v1124 = vadd.f32 0.0, %v1123
        %v1125 = vpop.f32.mrf.mxu0
        %v1126 = vpop.f32.mrf.mxu0
        %v1127 = vadd.f32 0.0, %v1126
        %v1128 = vpop.f32.mrf.mxu0
        %1129 = vdwg.mxu0
        %v1131 = vsel %vm847, %v829, 0
        %v1134 = vsel %vm847, %v837, 0
        %1136 = vmatprep.subr.bf16.mxu0 0
        %1137 = vmatpush1.bf16.xpose.msra.mxu0 0
        %1138 = vmatprep.subr.bf16.mxu0 0
        %1139 = vmatpush1.bf16.xpose.msra.mxu0 0
        %1140 = vmatprep.subr.bf16.mxu0 0
        %1141 = vmatpush1.bf16.xpose.msra.mxu0 0
        %1142 = vmatprep.subr.bf16.mxu0 0
        %1143 = vmatpush1.bf16.xpose.msra.mxu0 0
        %1144 = vmatprep.subr.bf16.mxu0 0
        %1145 = vmatpush1.bf16.xpose.msra.mxu0 0
        %1146 = vmatprep.subr.bf16.mxu0 0
        %1147 = vmatpush1.bf16.xpose.msra.mxu0 0
        %1148 = vmatprep.subr.bf16.mxu0 0
        %1149 = vmatpush1.bf16.xpose.msra.mxu0 0
        %1150 = vmatprep.subr.bf16.mxu0 0
        %1151 = vmatpush1.bf16.xpose.msra.mxu0 %v1134
        %1152 = vmatprep.subr.bf16.mxu0 0
        %1153 = vmatpush2.bf16.xpose.msra.mxu0 0
        %1154 = vmatprep.subr.bf16.mxu0 0
        %1155 = vmatpush2.bf16.xpose.msra.mxu0 0
        %1156 = vmatprep.subr.bf16.mxu0 0
        %1157 = vmatpush2.bf16.xpose.msra.mxu0 0
        %1158 = vmatprep.subr.bf16.mxu0 0
        %1159 = vmatpush2.bf16.xpose.msra.mxu0 0
        %1160 = vmatprep.subr.bf16.mxu0 0
        %1161 = vmatpush2.bf16.xpose.msra.mxu0 0
        %1162 = vmatprep.subr.bf16.mxu0 0
        %1163 = vmatpush2.bf16.xpose.msra.mxu0 0
        %1164 = vmatprep.subr.bf16.mxu0 0
        %1165 = vmatpush2.bf16.xpose.msra.mxu0 0
        %1166 = vmatprep.subr.bf16.mxu0 0
        %1167 = vmatpush2.bf16.xpose.msra.mxu0 0
        %1168 = vmatprep.mubr.bf16.mxu0 0
        %1169 = vmatmul.mubr.bf16.gmra.mxu0 %v1131
        %v1170 = vpop.f32.mrf.mxu0
        %v1171 = vadd.f32 0.0, %v1170
        %v1172 = vpop.f32.mrf.mxu0
        %v1173 = vpop.f32.mrf.mxu0
        %v1174 = vadd.f32 0.0, %v1173
        %v1175 = vpop.f32.mrf.mxu0
        %1176 = vdwg.mxu0
        %v1178 = vsel %vm847, %v830, 0
        %v1181 = vsel %vm847, %v838, 0
        %1183 = vmatprep.subr.bf16.mxu0 0
        %1184 = vmatpush1.bf16.xpose.msra.mxu0 0
        %1185 = vmatprep.subr.bf16.mxu0 0
        %1186 = vmatpush1.bf16.xpose.msra.mxu0 0
        %1187 = vmatprep.subr.bf16.mxu0 0
        %1188 = vmatpush1.bf16.xpose.msra.mxu0 0
        %1189 = vmatprep.subr.bf16.mxu0 0
        %1190 = vmatpush1.bf16.xpose.msra.mxu0 0
        %1191 = vmatprep.subr.bf16.mxu0 0
        %1192 = vmatpush1.bf16.xpose.msra.mxu0 0
        %1193 = vmatprep.subr.bf16.mxu0 0
        %1194 = vmatpush1.bf16.xpose.msra.mxu0 0
        %1195 = vmatprep.subr.bf16.mxu0 0
        %1196 = vmatpush1.bf16.xpose.msra.mxu0 0
        %1197 = vmatprep.subr.bf16.mxu0 0
        %1198 = vmatpush1.bf16.xpose.msra.mxu0 %v1181
        %1199 = vmatprep.subr.bf16.mxu0 0
        %1200 = vmatpush2.bf16.xpose.msra.mxu0 0
        %1201 = vmatprep.subr.bf16.mxu0 0
        %1202 = vmatpush2.bf16.xpose.msra.mxu0 0
        %1203 = vmatprep.subr.bf16.mxu0 0
        %1204 = vmatpush2.bf16.xpose.msra.mxu0 0
        %1205 = vmatprep.subr.bf16.mxu0 0
        %1206 = vmatpush2.bf16.xpose.msra.mxu0 0
        %1207 = vmatprep.subr.bf16.mxu0 0
        %1208 = vmatpush2.bf16.xpose.msra.mxu0 0
        %1209 = vmatprep.subr.bf16.mxu0 0
        %1210 = vmatpush2.bf16.xpose.msra.mxu0 0
        %1211 = vmatprep.subr.bf16.mxu0 0
        %1212 = vmatpush2.bf16.xpose.msra.mxu0 0
        %1213 = vmatprep.subr.bf16.mxu0 0
        %1214 = vmatpush2.bf16.xpose.msra.mxu0 0
        %1215 = vmatprep.mubr.bf16.mxu0 0
        %1216 = vmatmul.mubr.bf16.gmra.mxu0 %v1178
        %v1217 = vpop.f32.mrf.mxu0
        %v1218 = vadd.f32 0.0, %v1217
        %v1219 = vpop.f32.mrf.mxu0
        %v1220 = vpop.f32.mrf.mxu0
        %v1221 = vadd.f32 0.0, %v1220
        %v1222 = vpop.f32.mrf.mxu0
        %1223 = vdwg.mxu0
        %v1224 = vsel %vm847, %v889, -inf
        %1225 = vmax.xlane.f32.xlu0 %v1224
        %v1226 = vpop.xlane.xlu0 %1225
        %v1227 = vsel %vm847, %v892, -inf
        %1228 = vmax.xlane.f32.xlu0 %v1227
        %v1229 = vpop.xlane.xlu0 %1228
        %v1230 = vsel %vm847, %v936, -inf
        %1231 = vmax.xlane.f32.xlu0 %v1230
        %v1232 = vpop.xlane.xlu0 %1231
        %v1233 = vsel %vm847, %v939, -inf
        %1234 = vmax.xlane.f32.xlu0 %v1233
        %v1235 = vpop.xlane.xlu0 %1234
        %v1236 = vsel %vm847, %v983, -inf
        %1237 = vmax.xlane.f32.xlu0 %v1236
        %v1238 = vpop.xlane.xlu0 %1237
        %v1239 = vsel %vm847, %v986, -inf
        %1240 = vmax.xlane.f32.xlu0 %v1239
        %v1241 = vpop.xlane.xlu0 %1240
        %v1242 = vsel %vm847, %v1030, -inf
        %1243 = vmax.xlane.f32.xlu0 %v1242
        %v1244 = vpop.xlane.xlu0 %1243
        %v1245 = vsel %vm847, %v1033, -inf
        %1246 = vmax.xlane.f32.xlu0 %v1245
        %v1247 = vpop.xlane.xlu0 %1246
        %v1248 = vsel %vm847, %v1077, -inf
        %1249 = vmax.xlane.f32.xlu0 %v1248
        %v1250 = vpop.xlane.xlu0 %1249
        %v1251 = vsel %vm847, %v1080, -inf
        %1252 = vmax.xlane.f32.xlu0 %v1251
        %v1253 = vpop.xlane.xlu0 %1252
        %v1254 = vsel %vm847, %v1124, -inf
        %1255 = vmax.xlane.f32.xlu0 %v1254
        %v1256 = vpop.xlane.xlu0 %1255
        %v1257 = vsel %vm847, %v1127, -inf
        %1258 = vmax.xlane.f32.xlu0 %v1257
        %v1259 = vpop.xlane.xlu0 %1258
        %v1260 = vsel %vm847, %v1171, -inf
        %1261 = vmax.xlane.f32.xlu0 %v1260
        %v1262 = vpop.xlane.xlu0 %1261
        %v1263 = vsel %vm847, %v1174, -inf
        %1264 = vmax.xlane.f32.xlu0 %v1263
        %v1265 = vpop.xlane.xlu0 %1264
        %v1266 = vsel %vm847, %v1218, -inf
        %1267 = vmax.xlane.f32.xlu0 %v1266
        %v1268 = vpop.xlane.xlu0 %1267
        %v1269 = vsel %vm847, %v1221, -inf
        %1270 = vmax.xlane.f32.xlu0 %v1269
        %v1271 = vpop.xlane.xlu0 %1270
        %v1272 = vsub.f32 %v889, %v1226
        %v1273 = vsub.f32 %v892, %v1229
        %v1274 = vsub.f32 %v936, %v1232
        %v1275 = vsub.f32 %v939, %v1235
        %v1276 = vsub.f32 %v983, %v1238
        %v1277 = vsub.f32 %v986, %v1241
        %v1278 = vsub.f32 %v1030, %v1244
        %v1279 = vsub.f32 %v1033, %v1247
        %v1280 = vsub.f32 %v1077, %v1250
        %v1281 = vsub.f32 %v1080, %v1253
        %v1282 = vsub.f32 %v1124, %v1256
        %v1283 = vsub.f32 %v1127, %v1259
        %v1284 = vsub.f32 %v1171, %v1262
        %v1285 = vsub.f32 %v1174, %v1265
        %v1286 = vsub.f32 %v1218, %v1268
        %v1287 = vsub.f32 %v1221, %v1271
        %v1288 = vmul.f32 %v1272, 1.442695
        %v1289 = vpow.pop %v1288
        %v1290 = vmul.f32 %v1273, 1.442695
        %v1291 = vpow.pop %v1290
        %v1292 = vmul.f32 %v1274, 1.442695
        %v1293 = vpow.pop %v1292
        %v1294 = vmul.f32 %v1275, 1.442695
        %v1295 = vpow.pop %v1294
        %v1296 = vmul.f32 %v1276, 1.442695
        %v1297 = vpow.pop %v1296
        %v1298 = vmul.f32 %v1277, 1.442695
        %v1299 = vpow.pop %v1298
        %v1300 = vmul.f32 %v1278, 1.442695
        %v1301 = vpow.pop %v1300
        %v1302 = vmul.f32 %v1279, 1.442695
        %v1303 = vpow.pop %v1302
        %v1304 = vmul.f32 %v1280, 1.442695
        %v1305 = vpow.pop %v1304
        %v1306 = vmul.f32 %v1281, 1.442695
        %v1307 = vpow.pop %v1306
        %v1308 = vmul.f32 %v1282, 1.442695
        %v1309 = vpow.pop %v1308
        %v1310 = vmul.f32 %v1283, 1.442695
        %v1311 = vpow.pop %v1310
        %v1312 = vmul.f32 %v1284, 1.442695
        %v1313 = vpow.pop %v1312
        %v1314 = vmul.f32 %v1285, 1.442695
        %v1315 = vpow.pop %v1314
        %v1316 = vmul.f32 %v1286, 1.442695
        %v1317 = vpow.pop %v1316
        %v1318 = vmul.f32 %v1287, 1.442695
        %v1319 = vpow.pop %v1318
        %v1320 = vsel %vm847, %v1289, 0.0
        %1321 = vadd.xlane.f32.xlu0 %v1320
        %v1322 = vpop.xlane.xlu0 %1321
        %v1323 = vsel %vm847, %v1291, 0.0
        %1324 = vadd.xlane.f32.xlu0 %v1323
        %v1325 = vpop.xlane.xlu0 %1324
        %v1326 = vsel %vm847, %v1293, 0.0
        %1327 = vadd.xlane.f32.xlu0 %v1326
        %v1328 = vpop.xlane.xlu0 %1327
        %v1329 = vsel %vm847, %v1295, 0.0
        %1330 = vadd.xlane.f32.xlu0 %v1329
        %v1331 = vpop.xlane.xlu0 %1330
        %v1332 = vsel %vm847, %v1297, 0.0
        %1333 = vadd.xlane.f32.xlu0 %v1332
        %v1334 = vpop.xlane.xlu0 %1333
        %v1335 = vsel %vm847, %v1299, 0.0
        %1336 = vadd.xlane.f32.xlu0 %v1335
        %v1337 = vpop.xlane.xlu0 %1336
        %v1338 = vsel %vm847, %v1301, 0.0
        %1339 = vadd.xlane.f32.xlu0 %v1338
        %v1340 = vpop.xlane.xlu0 %1339
        %v1341 = vsel %vm847, %v1303, 0.0
        %1342 = vadd.xlane.f32.xlu0 %v1341
        %v1343 = vpop.xlane.xlu0 %1342
        %v1344 = vsel %vm847, %v1305, 0.0
        %1345 = vadd.xlane.f32.xlu0 %v1344
        %v1346 = vpop.xlane.xlu0 %1345
        %v1347 = vsel %vm847, %v1307, 0.0
        %1348 = vadd.xlane.f32.xlu0 %v1347
        %v1349 = vpop.xlane.xlu0 %1348
        %v1350 = vsel %vm847, %v1309, 0.0
        %1351 = vadd.xlane.f32.xlu0 %v1350
        %v1352 = vpop.xlane.xlu0 %1351
        %v1353 = vsel %vm847, %v1311, 0.0
        %1354 = vadd.xlane.f32.xlu0 %v1353
        %v1355 = vpop.xlane.xlu0 %1354
        %v1356 = vsel %vm847, %v1313, 0.0
        %1357 = vadd.xlane.f32.xlu0 %v1356
        %v1358 = vpop.xlane.xlu0 %1357
        %v1359 = vsel %vm847, %v1315, 0.0
        %1360 = vadd.xlane.f32.xlu0 %v1359
        %v1361 = vpop.xlane.xlu0 %1360
        %v1362 = vsel %vm847, %v1317, 0.0
        %1363 = vadd.xlane.f32.xlu0 %v1362
        %v1364 = vpop.xlane.xlu0 %1363
        %v1365 = vsel %vm847, %v1319, 0.0
        %1366 = vadd.xlane.f32.xlu0 %v1365
        %v1367 = vpop.xlane.xlu0 %1366
        %v1368 = vrcp.pop %v1322
        %v1369 = vmul.f32 %v1289, %v1368
        %v1370 = vrcp.pop %v1325
        %v1371 = vmul.f32 %v1291, %v1370
        %v1372 = vrcp.pop %v1328
        %v1373 = vmul.f32 %v1293, %v1372
        %v1374 = vrcp.pop %v1331
        %v1375 = vmul.f32 %v1295, %v1374
        %v1376 = vrcp.pop %v1334
        %v1377 = vmul.f32 %v1297, %v1376
        %v1378 = vrcp.pop %v1337
        %v1379 = vmul.f32 %v1299, %v1378
        %v1380 = vrcp.pop %v1340
        %v1381 = vmul.f32 %v1301, %v1380
        %v1382 = vrcp.pop %v1343
        %v1383 = vmul.f32 %v1303, %v1382
        %v1384 = vrcp.pop %v1346
        %v1385 = vmul.f32 %v1305, %v1384
        %v1386 = vrcp.pop %v1349
        %v1387 = vmul.f32 %v1307, %v1386
        %v1388 = vrcp.pop %v1352
        %v1389 = vmul.f32 %v1309, %v1388
        %v1390 = vrcp.pop %v1355
        %v1391 = vmul.f32 %v1311, %v1390
        %v1392 = vrcp.pop %v1358
        %v1393 = vmul.f32 %v1313, %v1392
        %v1394 = vrcp.pop %v1361
        %v1395 = vmul.f32 %v1315, %v1394
        %v1396 = vrcp.pop %v1364
        %v1397 = vmul.f32 %v1317, %v1396
        %v1398 = vrcp.pop %v1367
        %v1399 = vmul.f32 %v1319, %v1398
        %v1400 = vpack.c.bf16 %v1371, %v1369
        %v1401 = vpack.c.bf16 %v1375, %v1373
        %v1402 = vpack.c.bf16 %v1379, %v1377
        %v1403 = vpack.c.bf16 %v1383, %v1381
        %v1404 = vpack.c.bf16 %v1387, %v1385
        %v1405 = vpack.c.bf16 %v1391, %v1389
        %v1406 = vpack.c.bf16 %v1395, %v1393
        %v1407 = vpack.c.bf16 %v1399, %v1397
        %v1409 = vsel %vm847, %v1400, 0
        %1411 = vmatprep.subr.bf16.mxu0 0
        %1412 = vmatpush1.bf16.msra.mxu0 0
        %1413 = vmatprep.subr.bf16.mxu0 0
        %1414 = vmatpush1.bf16.msra.mxu0 0
        %1415 = vmatprep.subr.bf16.mxu0 0
        %1416 = vmatpush1.bf16.msra.mxu0 0
        %1417 = vmatprep.subr.bf16.mxu0 0
        %1418 = vmatpush1.bf16.msra.mxu0 0
        %1419 = vmatprep.subr.bf16.mxu0 0
        %1420 = vmatpush1.bf16.msra.mxu0 0
        %1421 = vmatprep.subr.bf16.mxu0 0
        %1422 = vmatpush1.bf16.msra.mxu0 0
        %1423 = vmatprep.subr.bf16.mxu0 0
        %1424 = vmatpush1.bf16.msra.mxu0 0
        %1425 = vmatprep.subr.bf16.mxu0 0
        %1426 = vmatpush1.bf16.msra.mxu0 %v839
        %1427 = vmatprep.subr.bf16.mxu0 0
        %1428 = vmatpush2.bf16.msra.mxu0 0
        %1429 = vmatprep.subr.bf16.mxu0 0
        %1430 = vmatpush2.bf16.msra.mxu0 0
        %1431 = vmatprep.subr.bf16.mxu0 0
        %1432 = vmatpush2.bf16.msra.mxu0 0
        %1433 = vmatprep.subr.bf16.mxu0 0
        %1434 = vmatpush2.bf16.msra.mxu0 0
        %1435 = vmatprep.subr.bf16.mxu0 0
        %1436 = vmatpush2.bf16.msra.mxu0 0
        %1437 = vmatprep.subr.bf16.mxu0 0
        %1438 = vmatpush2.bf16.msra.mxu0 0
        %1439 = vmatprep.subr.bf16.mxu0 0
        %1440 = vmatpush2.bf16.msra.mxu0 0
        %1441 = vmatprep.subr.bf16.mxu0 0
        %1442 = vmatpush2.bf16.msra.mxu0 0
        %1443 = vmatprep.mubr.bf16.mxu0 0
        %1444 = vmatmul.mubr.bf16.gmra.mxu0 %v1409
        %v1445 = vpop.f32.mrf.mxu0
        %v1446 = vadd.f32 0.0, %v1445
        %v1447 = vpop.f32.mrf.mxu0
        %v1448 = vpop.f32.mrf.mxu0
        %v1449 = vadd.f32 0.0, %v1448
        %v1450 = vpop.f32.mrf.mxu0
        %1451 = vdwg.mxu0
        %v1453 = vsel %vm847, %v1401, 0
        %1455 = vmatprep.subr.bf16.mxu0 0
        %1456 = vmatpush1.bf16.msra.mxu0 0
        %1457 = vmatprep.subr.bf16.mxu0 0
        %1458 = vmatpush1.bf16.msra.mxu0 0
        %1459 = vmatprep.subr.bf16.mxu0 0
        %1460 = vmatpush1.bf16.msra.mxu0 0
        %1461 = vmatprep.subr.bf16.mxu0 0
        %1462 = vmatpush1.bf16.msra.mxu0 0
        %1463 = vmatprep.subr.bf16.mxu0 0
        %1464 = vmatpush1.bf16.msra.mxu0 0
        %1465 = vmatprep.subr.bf16.mxu0 0
        %1466 = vmatpush1.bf16.msra.mxu0 0
        %1467 = vmatprep.subr.bf16.mxu0 0
        %1468 = vmatpush1.bf16.msra.mxu0 0
        %1469 = vmatprep.subr.bf16.mxu0 0
        %1470 = vmatpush1.bf16.msra.mxu0 %v840
        %1471 = vmatprep.subr.bf16.mxu0 0
        %1472 = vmatpush2.bf16.msra.mxu0 0
        %1473 = vmatprep.subr.bf16.mxu0 0
        %1474 = vmatpush2.bf16.msra.mxu0 0
        %1475 = vmatprep.subr.bf16.mxu0 0
        %1476 = vmatpush2.bf16.msra.mxu0 0
        %1477 = vmatprep.subr.bf16.mxu0 0
        %1478 = vmatpush2.bf16.msra.mxu0 0
        %1479 = vmatprep.subr.bf16.mxu0 0
        %1480 = vmatpush2.bf16.msra.mxu0 0
        %1481 = vmatprep.subr.bf16.mxu0 0
        %1482 = vmatpush2.bf16.msra.mxu0 0
        %1483 = vmatprep.subr.bf16.mxu0 0
        %1484 = vmatpush2.bf16.msra.mxu0 0
        %1485 = vmatprep.subr.bf16.mxu0 0
        %1486 = vmatpush2.bf16.msra.mxu0 0
        %1487 = vmatprep.mubr.bf16.mxu0 0
        %1488 = vmatmul.mubr.bf16.gmra.mxu0 %v1453
        %v1489 = vpop.f32.mrf.mxu0
        %v1490 = vadd.f32 0.0, %v1489
        %v1491 = vpop.f32.mrf.mxu0
        %v1492 = vpop.f32.mrf.mxu0
        %v1493 = vadd.f32 0.0, %v1492
        %v1494 = vpop.f32.mrf.mxu0
        %1495 = vdwg.mxu0
        %v1497 = vsel %vm847, %v1402, 0
        %1499 = vmatprep.subr.bf16.mxu0 0
        %1500 = vmatpush1.bf16.msra.mxu0 0
        %1501 = vmatprep.subr.bf16.mxu0 0
        %1502 = vmatpush1.bf16.msra.mxu0 0
        %1503 = vmatprep.subr.bf16.mxu0 0
        %1504 = vmatpush1.bf16.msra.mxu0 0
        %1505 = vmatprep.subr.bf16.mxu0 0
        %1506 = vmatpush1.bf16.msra.mxu0 0
        %1507 = vmatprep.subr.bf16.mxu0 0
        %1508 = vmatpush1.bf16.msra.mxu0 0
        %1509 = vmatprep.subr.bf16.mxu0 0
        %1510 = vmatpush1.bf16.msra.mxu0 0
        %1511 = vmatprep.subr.bf16.mxu0 0
        %1512 = vmatpush1.bf16.msra.mxu0 0
        %1513 = vmatprep.subr.bf16.mxu0 0
        %1514 = vmatpush1.bf16.msra.mxu0 %v841
        %1515 = vmatprep.subr.bf16.mxu0 0
        %1516 = vmatpush2.bf16.msra.mxu0 0
        %1517 = vmatprep.subr.bf16.mxu0 0
        %1518 = vmatpush2.bf16.msra.mxu0 0
        %1519 = vmatprep.subr.bf16.mxu0 0
        %1520 = vmatpush2.bf16.msra.mxu0 0
        %1521 = vmatprep.subr.bf16.mxu0 0
        %1522 = vmatpush2.bf16.msra.mxu0 0
        %1523 = vmatprep.subr.bf16.mxu0 0
        %1524 = vmatpush2.bf16.msra.mxu0 0
        %1525 = vmatprep.subr.bf16.mxu0 0
        %1526 = vmatpush2.bf16.msra.mxu0 0
        %1527 = vmatprep.subr.bf16.mxu0 0
        %1528 = vmatpush2.bf16.msra.mxu0 0
        %1529 = vmatprep.subr.bf16.mxu0 0
        %1530 = vmatpush2.bf16.msra.mxu0 0
        %1531 = vmatprep.mubr.bf16.mxu0 0
        %1532 = vmatmul.mubr.bf16.gmra.mxu0 %v1497
        %v1533 = vpop.f32.mrf.mxu0
        %v1534 = vadd.f32 0.0, %v1533
        %v1535 = vpop.f32.mrf.mxu0
        %v1536 = vpop.f32.mrf.mxu0
        %v1537 = vadd.f32 0.0, %v1536
        %v1538 = vpop.f32.mrf.mxu0
        %1539 = vdwg.mxu0
        %v1541 = vsel %vm847, %v1403, 0
        %1543 = vmatprep.subr.bf16.mxu0 0
        %1544 = vmatpush1.bf16.msra.mxu0 0
        %1545 = vmatprep.subr.bf16.mxu0 0
        %1546 = vmatpush1.bf16.msra.mxu0 0
        %1547 = vmatprep.subr.bf16.mxu0 0
        %1548 = vmatpush1.bf16.msra.mxu0 0
        %1549 = vmatprep.subr.bf16.mxu0 0
        %1550 = vmatpush1.bf16.msra.mxu0 0
        %1551 = vmatprep.subr.bf16.mxu0 0
        %1552 = vmatpush1.bf16.msra.mxu0 0
        %1553 = vmatprep.subr.bf16.mxu0 0
        %1554 = vmatpush1.bf16.msra.mxu0 0
        %1555 = vmatprep.subr.bf16.mxu0 0
        %1556 = vmatpush1.bf16.msra.mxu0 0
        %1557 = vmatprep.subr.bf16.mxu0 0
        %1558 = vmatpush1.bf16.msra.mxu0 %v842
        %1559 = vmatprep.subr.bf16.mxu0 0
        %1560 = vmatpush2.bf16.msra.mxu0 0
        %1561 = vmatprep.subr.bf16.mxu0 0
        %1562 = vmatpush2.bf16.msra.mxu0 0
        %1563 = vmatprep.subr.bf16.mxu0 0
        %1564 = vmatpush2.bf16.msra.mxu0 0
        %1565 = vmatprep.subr.bf16.mxu0 0
        %1566 = vmatpush2.bf16.msra.mxu0 0
        %1567 = vmatprep.subr.bf16.mxu0 0
        %1568 = vmatpush2.bf16.msra.mxu0 0
        %1569 = vmatprep.subr.bf16.mxu0 0
        %1570 = vmatpush2.bf16.msra.mxu0 0
        %1571 = vmatprep.subr.bf16.mxu0 0
        %1572 = vmatpush2.bf16.msra.mxu0 0
        %1573 = vmatprep.subr.bf16.mxu0 0
        %1574 = vmatpush2.bf16.msra.mxu0 0
        %1575 = vmatprep.mubr.bf16.mxu0 0
        %1576 = vmatmul.mubr.bf16.gmra.mxu0 %v1541
        %v1577 = vpop.f32.mrf.mxu0
        %v1578 = vadd.f32 0.0, %v1577
        %v1579 = vpop.f32.mrf.mxu0
        %v1580 = vpop.f32.mrf.mxu0
        %v1581 = vadd.f32 0.0, %v1580
        %v1582 = vpop.f32.mrf.mxu0
        %1583 = vdwg.mxu0
        %v1585 = vsel %vm847, %v1404, 0
        %1587 = vmatprep.subr.bf16.mxu0 0
        %1588 = vmatpush1.bf16.msra.mxu0 0
        %1589 = vmatprep.subr.bf16.mxu0 0
        %1590 = vmatpush1.bf16.msra.mxu0 0
        %1591 = vmatprep.subr.bf16.mxu0 0
        %1592 = vmatpush1.bf16.msra.mxu0 0
        %1593 = vmatprep.subr.bf16.mxu0 0
        %1594 = vmatpush1.bf16.msra.mxu0 0
        %1595 = vmatprep.subr.bf16.mxu0 0
        %1596 = vmatpush1.bf16.msra.mxu0 0
        %1597 = vmatprep.subr.bf16.mxu0 0
        %1598 = vmatpush1.bf16.msra.mxu0 0
        %1599 = vmatprep.subr.bf16.mxu0 0
        %1600 = vmatpush1.bf16.msra.mxu0 0
        %1601 = vmatprep.subr.bf16.mxu0 0
        %1602 = vmatpush1.bf16.msra.mxu0 %v843
        %1603 = vmatprep.subr.bf16.mxu0 0
        %1604 = vmatpush2.bf16.msra.mxu0 0
        %1605 = vmatprep.subr.bf16.mxu0 0
        %1606 = vmatpush2.bf16.msra.mxu0 0
        %1607 = vmatprep.subr.bf16.mxu0 0
        %1608 = vmatpush2.bf16.msra.mxu0 0
        %1609 = vmatprep.subr.bf16.mxu0 0
        %1610 = vmatpush2.bf16.msra.mxu0 0
        %1611 = vmatprep.subr.bf16.mxu0 0
        %1612 = vmatpush2.bf16.msra.mxu0 0
        %1613 = vmatprep.subr.bf16.mxu0 0
        %1614 = vmatpush2.bf16.msra.mxu0 0
        %1615 = vmatprep.subr.bf16.mxu0 0
        %1616 = vmatpush2.bf16.msra.mxu0 0
        %1617 = vmatprep.subr.bf16.mxu0 0
        %1618 = vmatpush2.bf16.msra.mxu0 0
        %1619 = vmatprep.mubr.bf16.mxu0 0
        %1620 = vmatmul.mubr.bf16.gmra.mxu0 %v1585
        %v1621 = vpop.f32.mrf.mxu0
        %v1622 = vadd.f32 0.0, %v1621
        %v1623 = vpop.f32.mrf.mxu0
        %v1624 = vpop.f32.mrf.mxu0
        %v1625 = vadd.f32 0.0, %v1624
        %v1626 = vpop.f32.mrf.mxu0
        %1627 = vdwg.mxu0
        %v1629 = vsel %vm847, %v1405, 0
        %1631 = vmatprep.subr.bf16.mxu0 0
        %1632 = vmatpush1.bf16.msra.mxu0 0
        %1633 = vmatprep.subr.bf16.mxu0 0
        %1634 = vmatpush1.bf16.msra.mxu0 0
        %1635 = vmatprep.subr.bf16.mxu0 0
        %1636 = vmatpush1.bf16.msra.mxu0 0
        %1637 = vmatprep.subr.bf16.mxu0 0
        %1638 = vmatpush1.bf16.msra.mxu0 0
        %1639 = vmatprep.subr.bf16.mxu0 0
        %1640 = vmatpush1.bf16.msra.mxu0 0
        %1641 = vmatprep.subr.bf16.mxu0 0
        %1642 = vmatpush1.bf16.msra.mxu0 0
        %1643 = vmatprep.subr.bf16.mxu0 0
        %1644 = vmatpush1.bf16.msra.mxu0 0
        %1645 = vmatprep.subr.bf16.mxu0 0
        %1646 = vmatpush1.bf16.msra.mxu0 %v844
        %1647 = vmatprep.subr.bf16.mxu0 0
        %1648 = vmatpush2.bf16.msra.mxu0 0
        %1649 = vmatprep.subr.bf16.mxu0 0
        %1650 = vmatpush2.bf16.msra.mxu0 0
        %1651 = vmatprep.subr.bf16.mxu0 0
        %1652 = vmatpush2.bf16.msra.mxu0 0
        %1653 = vmatprep.subr.bf16.mxu0 0
        %1654 = vmatpush2.bf16.msra.mxu0 0
        %1655 = vmatprep.subr.bf16.mxu0 0
        %1656 = vmatpush2.bf16.msra.mxu0 0
        %1657 = vmatprep.subr.bf16.mxu0 0
        %1658 = vmatpush2.bf16.msra.mxu0 0
        %1659 = vmatprep.subr.bf16.mxu0 0
        %1660 = vmatpush2.bf16.msra.mxu0 0
        %1661 = vmatprep.subr.bf16.mxu0 0
        %1662 = vmatpush2.bf16.msra.mxu0 0
        %1663 = vmatprep.mubr.bf16.mxu0 0
        %1664 = vmatmul.mubr.bf16.gmra.mxu0 %v1629
        %v1665 = vpop.f32.mrf.mxu0
        %v1666 = vadd.f32 0.0, %v1665
        %v1667 = vpop.f32.mrf.mxu0
        %v1668 = vpop.f32.mrf.mxu0
        %v1669 = vadd.f32 0.0, %v1668
        %v1670 = vpop.f32.mrf.mxu0
        %1671 = vdwg.mxu0
        %v1673 = vsel %vm847, %v1406, 0
        %1675 = vmatprep.subr.bf16.mxu0 0
        %1676 = vmatpush1.bf16.msra.mxu0 0
        %1677 = vmatprep.subr.bf16.mxu0 0
        %1678 = vmatpush1.bf16.msra.mxu0 0
        %1679 = vmatprep.subr.bf16.mxu0 0
        %1680 = vmatpush1.bf16.msra.mxu0 0
        %1681 = vmatprep.subr.bf16.mxu0 0
        %1682 = vmatpush1.bf16.msra.mxu0 0
        %1683 = vmatprep.subr.bf16.mxu0 0
        %1684 = vmatpush1.bf16.msra.mxu0 0
        %1685 = vmatprep.subr.bf16.mxu0 0
        %1686 = vmatpush1.bf16.msra.mxu0 0
        %1687 = vmatprep.subr.bf16.mxu0 0
        %1688 = vmatpush1.bf16.msra.mxu0 0
        %1689 = vmatprep.subr.bf16.mxu0 0
        %1690 = vmatpush1.bf16.msra.mxu0 %v845
        %1691 = vmatprep.subr.bf16.mxu0 0
        %1692 = vmatpush2.bf16.msra.mxu0 0
        %1693 = vmatprep.subr.bf16.mxu0 0
        %1694 = vmatpush2.bf16.msra.mxu0 0
        %1695 = vmatprep.subr.bf16.mxu0 0
        %1696 = vmatpush2.bf16.msra.mxu0 0
        %1697 = vmatprep.subr.bf16.mxu0 0
        %1698 = vmatpush2.bf16.msra.mxu0 0
        %1699 = vmatprep.subr.bf16.mxu0 0
        %1700 = vmatpush2.bf16.msra.mxu0 0
        %1701 = vmatprep.subr.bf16.mxu0 0
        %1702 = vmatpush2.bf16.msra.mxu0 0
        %1703 = vmatprep.subr.bf16.mxu0 0
        %1704 = vmatpush2.bf16.msra.mxu0 0
        %1705 = vmatprep.subr.bf16.mxu0 0
        %1706 = vmatpush2.bf16.msra.mxu0 0
        %1707 = vmatprep.mubr.bf16.mxu0 0
        %1708 = vmatmul.mubr.bf16.gmra.mxu0 %v1673
        %v1709 = vpop.f32.mrf.mxu0
        %v1710 = vadd.f32 0.0, %v1709
        %v1711 = vpop.f32.mrf.mxu0
        %v1712 = vpop.f32.mrf.mxu0
        %v1713 = vadd.f32 0.0, %v1712
        %v1714 = vpop.f32.mrf.mxu0
        %1715 = vdwg.mxu0
        %v1717 = vsel %vm847, %v1407, 0
        %1719 = vmatprep.subr.bf16.mxu0 0
        %1720 = vmatpush1.bf16.msra.mxu0 0
        %1721 = vmatprep.subr.bf16.mxu0 0
        %1722 = vmatpush1.bf16.msra.mxu0 0
        %1723 = vmatprep.subr.bf16.mxu0 0
        %1724 = vmatpush1.bf16.msra.mxu0 0
        %1725 = vmatprep.subr.bf16.mxu0 0
        %1726 = vmatpush1.bf16.msra.mxu0 0
        %1727 = vmatprep.subr.bf16.mxu0 0
        %1728 = vmatpush1.bf16.msra.mxu0 0
        %1729 = vmatprep.subr.bf16.mxu0 0
        %1730 = vmatpush1.bf16.msra.mxu0 0
        %1731 = vmatprep.subr.bf16.mxu0 0
        %1732 = vmatpush1.bf16.msra.mxu0 0
        %1733 = vmatprep.subr.bf16.mxu0 0
        %1734 = vmatpush1.bf16.msra.mxu0 %v846
        %1735 = vmatprep.subr.bf16.mxu0 0
        %1736 = vmatpush2.bf16.msra.mxu0 0
        %1737 = vmatprep.subr.bf16.mxu0 0
        %1738 = vmatpush2.bf16.msra.mxu0 0
        %1739 = vmatprep.subr.bf16.mxu0 0
        %1740 = vmatpush2.bf16.msra.mxu0 0
        %1741 = vmatprep.subr.bf16.mxu0 0
        %1742 = vmatpush2.bf16.msra.mxu0 0
        %1743 = vmatprep.subr.bf16.mxu0 0
        %1744 = vmatpush2.bf16.msra.mxu0 0
        %1745 = vmatprep.subr.bf16.mxu0 0
        %1746 = vmatpush2.bf16.msra.mxu0 0
        %1747 = vmatprep.subr.bf16.mxu0 0
        %1748 = vmatpush2.bf16.msra.mxu0 0
        %1749 = vmatprep.subr.bf16.mxu0 0
        %1750 = vmatpush2.bf16.msra.mxu0 0
        %1751 = vmatprep.mubr.bf16.mxu0 0
        %1752 = vmatmul.mubr.bf16.gmra.mxu0 %v1717
        %v1753 = vpop.f32.mrf.mxu0
        %v1754 = vadd.f32 0.0, %v1753
        %v1755 = vpop.f32.mrf.mxu0
        %v1756 = vpop.f32.mrf.mxu0
        %v1757 = vadd.f32 0.0, %v1756
        %v1758 = vpop.f32.mrf.mxu0
        %1759 = vdwg.mxu0
        %1761 = vrot.lane.b32.xlu0 %v823, 112
        %v1762 = vpop.permute.xlu0 %1761
        %1764 = vrot.lane.b32.xlu0 %v831, 112
        %v1765 = vpop.permute.xlu0 %1764
        %v1767 = vsel %vm847, %v1762, 0
        %v1770 = vsel %vm847, %v1765, 0
        %1772 = vmatprep.subr.bf16.mxu0 0
        %1773 = vmatpush1.bf16.xpose.msra.mxu0 0
        %1774 = vmatprep.subr.bf16.mxu0 0
        %1775 = vmatpush1.bf16.xpose.msra.mxu0 0
        %1776 = vmatprep.subr.bf16.mxu0 0
        %1777 = vmatpush1.bf16.xpose.msra.mxu0 0
        %1778 = vmatprep.subr.bf16.mxu0 0
        %1779 = vmatpush1.bf16.xpose.msra.mxu0 0
        %1780 = vmatprep.subr.bf16.mxu0 0
        %1781 = vmatpush1.bf16.xpose.msra.mxu0 0
        %1782 = vmatprep.subr.bf16.mxu0 0
        %1783 = vmatpush1.bf16.xpose.msra.mxu0 0
        %1784 = vmatprep.subr.bf16.mxu0 0
        %1785 = vmatpush1.bf16.xpose.msra.mxu0 0
        %1786 = vmatprep.subr.bf16.mxu0 0
        %1787 = vmatpush1.bf16.xpose.msra.mxu0 %v1770
        %1788 = vmatprep.subr.bf16.mxu0 0
        %1789 = vmatpush2.bf16.xpose.msra.mxu0 0
        %1790 = vmatprep.subr.bf16.mxu0 0
        %1791 = vmatpush2.bf16.xpose.msra.mxu0 0
        %1792 = vmatprep.subr.bf16.mxu0 0
        %1793 = vmatpush2.bf16.xpose.msra.mxu0 0
        %1794 = vmatprep.subr.bf16.mxu0 0
        %1795 = vmatpush2.bf16.xpose.msra.mxu0 0
        %1796 = vmatprep.subr.bf16.mxu0 0
        %1797 = vmatpush2.bf16.xpose.msra.mxu0 0
        %1798 = vmatprep.subr.bf16.mxu0 0
        %1799 = vmatpush2.bf16.xpose.msra.mxu0 0
        %1800 = vmatprep.subr.bf16.mxu0 0
        %1801 = vmatpush2.bf16.xpose.msra.mxu0 0
        %1802 = vmatprep.subr.bf16.mxu0 0
        %1803 = vmatpush2.bf16.xpose.msra.mxu0 0
        %1804 = vmatprep.mubr.bf16.mxu0 0
        %1805 = vmatmul.mubr.bf16.gmra.mxu0 %v1767
        %v1806 = vpop.f32.mrf.mxu0
        %v1807 = vadd.f32 0.0, %v1806
        %v1808 = vpop.f32.mrf.mxu0
        %v1809 = vpop.f32.mrf.mxu0
        %v1810 = vadd.f32 0.0, %v1809
        %v1811 = vpop.f32.mrf.mxu0
        %1812 = vdwg.mxu0
        %1814 = vrot.lane.b32.xlu0 %v824, 112
        %v1815 = vpop.permute.xlu0 %1814
        %1817 = vrot.lane.b32.xlu0 %v832, 112
        %v1818 = vpop.permute.xlu0 %1817
        %v1820 = vsel %vm847, %v1815, 0
        %v1823 = vsel %vm847, %v1818, 0
        %1825 = vmatprep.subr.bf16.mxu0 0
        %1826 = vmatpush1.bf16.xpose.msra.mxu0 0
        %1827 = vmatprep.subr.bf16.mxu0 0
        %1828 = vmatpush1.bf16.xpose.msra.mxu0 0
        %1829 = vmatprep.subr.bf16.mxu0 0
        %1830 = vmatpush1.bf16.xpose.msra.mxu0 0
        %1831 = vmatprep.subr.bf16.mxu0 0
        %1832 = vmatpush1.bf16.xpose.msra.mxu0 0
        %1833 = vmatprep.subr.bf16.mxu0 0
        %1834 = vmatpush1.bf16.xpose.msra.mxu0 0
        %1835 = vmatprep.subr.bf16.mxu0 0
        %1836 = vmatpush1.bf16.xpose.msra.mxu0 0
        %1837 = vmatprep.subr.bf16.mxu0 0
        %1838 = vmatpush1.bf16.xpose.msra.mxu0 0
        %1839 = vmatprep.subr.bf16.mxu0 0
        %1840 = vmatpush1.bf16.xpose.msra.mxu0 %v1823
        %1841 = vmatprep.subr.bf16.mxu0 0
        %1842 = vmatpush2.bf16.xpose.msra.mxu0 0
        %1843 = vmatprep.subr.bf16.mxu0 0
        %1844 = vmatpush2.bf16.xpose.msra.mxu0 0
        %1845 = vmatprep.subr.bf16.mxu0 0
        %1846 = vmatpush2.bf16.xpose.msra.mxu0 0
        %1847 = vmatprep.subr.bf16.mxu0 0
        %1848 = vmatpush2.bf16.xpose.msra.mxu0 0
        %1849 = vmatprep.subr.bf16.mxu0 0
        %1850 = vmatpush2.bf16.xpose.msra.mxu0 0
        %1851 = vmatprep.subr.bf16.mxu0 0
        %1852 = vmatpush2.bf16.xpose.msra.mxu0 0
        %1853 = vmatprep.subr.bf16.mxu0 0
        %1854 = vmatpush2.bf16.xpose.msra.mxu0 0
        %1855 = vmatprep.subr.bf16.mxu0 0
        %1856 = vmatpush2.bf16.xpose.msra.mxu0 0
        %1857 = vmatprep.mubr.bf16.mxu0 0
        %1858 = vmatmul.mubr.bf16.gmra.mxu0 %v1820
        %v1859 = vpop.f32.mrf.mxu0
        %v1860 = vadd.f32 0.0, %v1859
        %v1861 = vpop.f32.mrf.mxu0
        %v1862 = vpop.f32.mrf.mxu0
        %v1863 = vadd.f32 0.0, %v1862
        %v1864 = vpop.f32.mrf.mxu0
        %1865 = vdwg.mxu0
        %1867 = vrot.lane.b32.xlu0 %v825, 112
        %v1868 = vpop.permute.xlu0 %1867
        %1870 = vrot.lane.b32.xlu0 %v833, 112
        %v1871 = vpop.permute.xlu0 %1870
        %v1873 = vsel %vm847, %v1868, 0
        %v1876 = vsel %vm847, %v1871, 0
        %1878 = vmatprep.subr.bf16.mxu0 0
        %1879 = vmatpush1.bf16.xpose.msra.mxu0 0
        %1880 = vmatprep.subr.bf16.mxu0 0
        %1881 = vmatpush1.bf16.xpose.msra.mxu0 0
        %1882 = vmatprep.subr.bf16.mxu0 0
        %1883 = vmatpush1.bf16.xpose.msra.mxu0 0
        %1884 = vmatprep.subr.bf16.mxu0 0
        %1885 = vmatpush1.bf16.xpose.msra.mxu0 0
        %1886 = vmatprep.subr.bf16.mxu0 0
        %1887 = vmatpush1.bf16.xpose.msra.mxu0 0
        %1888 = vmatprep.subr.bf16.mxu0 0
        %1889 = vmatpush1.bf16.xpose.msra.mxu0 0
        %1890 = vmatprep.subr.bf16.mxu0 0
        %1891 = vmatpush1.bf16.xpose.msra.mxu0 0
        %1892 = vmatprep.subr.bf16.mxu0 0
        %1893 = vmatpush1.bf16.xpose.msra.mxu0 %v1876
        %1894 = vmatprep.subr.bf16.mxu0 0
        %1895 = vmatpush2.bf16.xpose.msra.mxu0 0
        %1896 = vmatprep.subr.bf16.mxu0 0
        %1897 = vmatpush2.bf16.xpose.msra.mxu0 0
        %1898 = vmatprep.subr.bf16.mxu0 0
        %1899 = vmatpush2.bf16.xpose.msra.mxu0 0
        %1900 = vmatprep.subr.bf16.mxu0 0
        %1901 = vmatpush2.bf16.xpose.msra.mxu0 0
        %1902 = vmatprep.subr.bf16.mxu0 0
        %1903 = vmatpush2.bf16.xpose.msra.mxu0 0
        %1904 = vmatprep.subr.bf16.mxu0 0
        %1905 = vmatpush2.bf16.xpose.msra.mxu0 0
        %1906 = vmatprep.subr.bf16.mxu0 0
        %1907 = vmatpush2.bf16.xpose.msra.mxu0 0
        %1908 = vmatprep.subr.bf16.mxu0 0
        %1909 = vmatpush2.bf16.xpose.msra.mxu0 0
        %1910 = vmatprep.mubr.bf16.mxu0 0
        %1911 = vmatmul.mubr.bf16.gmra.mxu0 %v1873
        %v1912 = vpop.f32.mrf.mxu0
        %v1913 = vadd.f32 0.0, %v1912
        %v1914 = vpop.f32.mrf.mxu0
        %v1915 = vpop.f32.mrf.mxu0
        %v1916 = vadd.f32 0.0, %v1915
        %v1917 = vpop.f32.mrf.mxu0
        %1918 = vdwg.mxu0
        %1920 = vrot.lane.b32.xlu0 %v826, 112
        %v1921 = vpop.permute.xlu0 %1920
        %1923 = vrot.lane.b32.xlu0 %v834, 112
        %v1924 = vpop.permute.xlu0 %1923
        %v1926 = vsel %vm847, %v1921, 0
        %v1929 = vsel %vm847, %v1924, 0
        %1931 = vmatprep.subr.bf16.mxu0 0
        %1932 = vmatpush1.bf16.xpose.msra.mxu0 0
        %1933 = vmatprep.subr.bf16.mxu0 0
        %1934 = vmatpush1.bf16.xpose.msra.mxu0 0
        %1935 = vmatprep.subr.bf16.mxu0 0
        %1936 = vmatpush1.bf16.xpose.msra.mxu0 0
        %1937 = vmatprep.subr.bf16.mxu0 0
        %1938 = vmatpush1.bf16.xpose.msra.mxu0 0
        %1939 = vmatprep.subr.bf16.mxu0 0
        %1940 = vmatpush1.bf16.xpose.msra.mxu0 0
        %1941 = vmatprep.subr.bf16.mxu0 0
        %1942 = vmatpush1.bf16.xpose.msra.mxu0 0
        %1943 = vmatprep.subr.bf16.mxu0 0
        %1944 = vmatpush1.bf16.xpose.msra.mxu0 0
        %1945 = vmatprep.subr.bf16.mxu0 0
        %1946 = vmatpush1.bf16.xpose.msra.mxu0 %v1929
        %1947 = vmatprep.subr.bf16.mxu0 0
        %1948 = vmatpush2.bf16.xpose.msra.mxu0 0
        %1949 = vmatprep.subr.bf16.mxu0 0
        %1950 = vmatpush2.bf16.xpose.msra.mxu0 0
        %1951 = vmatprep.subr.bf16.mxu0 0
        %1952 = vmatpush2.bf16.xpose.msra.mxu0 0
        %1953 = vmatprep.subr.bf16.mxu0 0
        %1954 = vmatpush2.bf16.xpose.msra.mxu0 0
        %1955 = vmatprep.subr.bf16.mxu0 0
        %1956 = vmatpush2.bf16.xpose.msra.mxu0 0
        %1957 = vmatprep.subr.bf16.mxu0 0
        %1958 = vmatpush2.bf16.xpose.msra.mxu0 0
        %1959 = vmatprep.subr.bf16.mxu0 0
        %1960 = vmatpush2.bf16.xpose.msra.mxu0 0
        %1961 = vmatprep.subr.bf16.mxu0 0
        %1962 = vmatpush2.bf16.xpose.msra.mxu0 0
        %1963 = vmatprep.mubr.bf16.mxu0 0
        %1964 = vmatmul.mubr.bf16.gmra.mxu0 %v1926
        %v1965 = vpop.f32.mrf.mxu0
        %v1966 = vadd.f32 0.0, %v1965
        %v1967 = vpop.f32.mrf.mxu0
        %v1968 = vpop.f32.mrf.mxu0
        %v1969 = vadd.f32 0.0, %v1968
        %v1970 = vpop.f32.mrf.mxu0
        %1971 = vdwg.mxu0
        %1973 = vrot.lane.b32.xlu0 %v827, 112
        %v1974 = vpop.permute.xlu0 %1973
        %1976 = vrot.lane.b32.xlu0 %v835, 112
        %v1977 = vpop.permute.xlu0 %1976
        %v1979 = vsel %vm847, %v1974, 0
        %v1982 = vsel %vm847, %v1977, 0
        %1984 = vmatprep.subr.bf16.mxu0 0
        %1985 = vmatpush1.bf16.xpose.msra.mxu0 0
        %1986 = vmatprep.subr.bf16.mxu0 0
        %1987 = vmatpush1.bf16.xpose.msra.mxu0 0
        %1988 = vmatprep.subr.bf16.mxu0 0
        %1989 = vmatpush1.bf16.xpose.msra.mxu0 0
        %1990 = vmatprep.subr.bf16.mxu0 0
        %1991 = vmatpush1.bf16.xpose.msra.mxu0 0
        %1992 = vmatprep.subr.bf16.mxu0 0
        %1993 = vmatpush1.bf16.xpose.msra.mxu0 0
        %1994 = vmatprep.subr.bf16.mxu0 0
        %1995 = vmatpush1.bf16.xpose.msra.mxu0 0
        %1996 = vmatprep.subr.bf16.mxu0 0
        %1997 = vmatpush1.bf16.xpose.msra.mxu0 0
        %1998 = vmatprep.subr.bf16.mxu0 0
        %1999 = vmatpush1.bf16.xpose.msra.mxu0 %v1982
        %2000 = vmatprep.subr.bf16.mxu0 0
        %2001 = vmatpush2.bf16.xpose.msra.mxu0 0
        %2002 = vmatprep.subr.bf16.mxu0 0
        %2003 = vmatpush2.bf16.xpose.msra.mxu0 0
        %2004 = vmatprep.subr.bf16.mxu0 0
        %2005 = vmatpush2.bf16.xpose.msra.mxu0 0
        %2006 = vmatprep.subr.bf16.mxu0 0
        %2007 = vmatpush2.bf16.xpose.msra.mxu0 0
        %2008 = vmatprep.subr.bf16.mxu0 0
        %2009 = vmatpush2.bf16.xpose.msra.mxu0 0
        %2010 = vmatprep.subr.bf16.mxu0 0
        %2011 = vmatpush2.bf16.xpose.msra.mxu0 0
        %2012 = vmatprep.subr.bf16.mxu0 0
        %2013 = vmatpush2.bf16.xpose.msra.mxu0 0
        %2014 = vmatprep.subr.bf16.mxu0 0
        %2015 = vmatpush2.bf16.xpose.msra.mxu0 0
        %2016 = vmatprep.mubr.bf16.mxu0 0
        %2017 = vmatmul.mubr.bf16.gmra.mxu0 %v1979
        %v2018 = vpop.f32.mrf.mxu0
        %v2019 = vadd.f32 0.0, %v2018
        %v2020 = vpop.f32.mrf.mxu0
        %v2021 = vpop.f32.mrf.mxu0
        %v2022 = vadd.f32 0.0, %v2021
        %v2023 = vpop.f32.mrf.mxu0
        %2024 = vdwg.mxu0
        %2026 = vrot.lane.b32.xlu0 %v828, 112
        %v2027 = vpop.permute.xlu0 %2026
        %2029 = vrot.lane.b32.xlu0 %v836, 112
        %v2030 = vpop.permute.xlu0 %2029
        %v2032 = vsel %vm847, %v2027, 0
        %v2035 = vsel %vm847, %v2030, 0
        %2037 = vmatprep.subr.bf16.mxu0 0
        %2038 = vmatpush1.bf16.xpose.msra.mxu0 0
        %2039 = vmatprep.subr.bf16.mxu0 0
        %2040 = vmatpush1.bf16.xpose.msra.mxu0 0
        %2041 = vmatprep.subr.bf16.mxu0 0
        %2042 = vmatpush1.bf16.xpose.msra.mxu0 0
        %2043 = vmatprep.subr.bf16.mxu0 0
        %2044 = vmatpush1.bf16.xpose.msra.mxu0 0
        %2045 = vmatprep.subr.bf16.mxu0 0
        %2046 = vmatpush1.bf16.xpose.msra.mxu0 0
        %2047 = vmatprep.subr.bf16.mxu0 0
        %2048 = vmatpush1.bf16.xpose.msra.mxu0 0
        %2049 = vmatprep.subr.bf16.mxu0 0
        %2050 = vmatpush1.bf16.xpose.msra.mxu0 0
        %2051 = vmatprep.subr.bf16.mxu0 0
        %2052 = vmatpush1.bf16.xpose.msra.mxu0 %v2035
        %2053 = vmatprep.subr.bf16.mxu0 0
        %2054 = vmatpush2.bf16.xpose.msra.mxu0 0
        %2055 = vmatprep.subr.bf16.mxu0 0
        %2056 = vmatpush2.bf16.xpose.msra.mxu0 0
        %2057 = vmatprep.subr.bf16.mxu0 0
        %2058 = vmatpush2.bf16.xpose.msra.mxu0 0
        %2059 = vmatprep.subr.bf16.mxu0 0
        %2060 = vmatpush2.bf16.xpose.msra.mxu0 0
        %2061 = vmatprep.subr.bf16.mxu0 0
        %2062 = vmatpush2.bf16.xpose.msra.mxu0 0
        %2063 = vmatprep.subr.bf16.mxu0 0
        %2064 = vmatpush2.bf16.xpose.msra.mxu0 0
        %2065 = vmatprep.subr.bf16.mxu0 0
        %2066 = vmatpush2.bf16.xpose.msra.mxu0 0
        %2067 = vmatprep.subr.bf16.mxu0 0
        %2068 = vmatpush2.bf16.xpose.msra.mxu0 0
        %2069 = vmatprep.mubr.bf16.mxu0 0
        %2070 = vmatmul.mubr.bf16.gmra.mxu0 %v2032
        %v2071 = vpop.f32.mrf.mxu0
        %v2072 = vadd.f32 0.0, %v2071
        %v2073 = vpop.f32.mrf.mxu0
        %v2074 = vpop.f32.mrf.mxu0
        %v2075 = vadd.f32 0.0, %v2074
        %v2076 = vpop.f32.mrf.mxu0
        %2077 = vdwg.mxu0
        %2079 = vrot.lane.b32.xlu0 %v829, 112
        %v2080 = vpop.permute.xlu0 %2079
        %2082 = vrot.lane.b32.xlu0 %v837, 112
        %v2083 = vpop.permute.xlu0 %2082
        %v2085 = vsel %vm847, %v2080, 0
        %v2088 = vsel %vm847, %v2083, 0
        %2090 = vmatprep.subr.bf16.mxu0 0
        %2091 = vmatpush1.bf16.xpose.msra.mxu0 0
        %2092 = vmatprep.subr.bf16.mxu0 0
        %2093 = vmatpush1.bf16.xpose.msra.mxu0 0
        %2094 = vmatprep.subr.bf16.mxu0 0
        %2095 = vmatpush1.bf16.xpose.msra.mxu0 0
        %2096 = vmatprep.subr.bf16.mxu0 0
        %2097 = vmatpush1.bf16.xpose.msra.mxu0 0
        %2098 = vmatprep.subr.bf16.mxu0 0
        %2099 = vmatpush1.bf16.xpose.msra.mxu0 0
        %2100 = vmatprep.subr.bf16.mxu0 0
        %2101 = vmatpush1.bf16.xpose.msra.mxu0 0
        %2102 = vmatprep.subr.bf16.mxu0 0
        %2103 = vmatpush1.bf16.xpose.msra.mxu0 0
        %2104 = vmatprep.subr.bf16.mxu0 0
        %2105 = vmatpush1.bf16.xpose.msra.mxu0 %v2088
        %2106 = vmatprep.subr.bf16.mxu0 0
        %2107 = vmatpush2.bf16.xpose.msra.mxu0 0
        %2108 = vmatprep.subr.bf16.mxu0 0
        %2109 = vmatpush2.bf16.xpose.msra.mxu0 0
        %2110 = vmatprep.subr.bf16.mxu0 0
        %2111 = vmatpush2.bf16.xpose.msra.mxu0 0
        %2112 = vmatprep.subr.bf16.mxu0 0
        %2113 = vmatpush2.bf16.xpose.msra.mxu0 0
        %2114 = vmatprep.subr.bf16.mxu0 0
        %2115 = vmatpush2.bf16.xpose.msra.mxu0 0
        %2116 = vmatprep.subr.bf16.mxu0 0
        %2117 = vmatpush2.bf16.xpose.msra.mxu0 0
        %2118 = vmatprep.subr.bf16.mxu0 0
        %2119 = vmatpush2.bf16.xpose.msra.mxu0 0
        %2120 = vmatprep.subr.bf16.mxu0 0
        %2121 = vmatpush2.bf16.xpose.msra.mxu0 0
        %2122 = vmatprep.mubr.bf16.mxu0 0
        %2123 = vmatmul.mubr.bf16.gmra.mxu0 %v2085
        %v2124 = vpop.f32.mrf.mxu0
        %v2125 = vadd.f32 0.0, %v2124
        %v2126 = vpop.f32.mrf.mxu0
        %v2127 = vpop.f32.mrf.mxu0
        %v2128 = vadd.f32 0.0, %v2127
        %v2129 = vpop.f32.mrf.mxu0
        %2130 = vdwg.mxu0
        %2132 = vrot.lane.b32.xlu0 %v830, 112
        %v2133 = vpop.permute.xlu0 %2132
        %2135 = vrot.lane.b32.xlu0 %v838, 112
        %v2136 = vpop.permute.xlu0 %2135
        %v2138 = vsel %vm847, %v2133, 0
        %v2141 = vsel %vm847, %v2136, 0
        %2143 = vmatprep.subr.bf16.mxu0 0
        %2144 = vmatpush1.bf16.xpose.msra.mxu0 0
        %2145 = vmatprep.subr.bf16.mxu0 0
        %2146 = vmatpush1.bf16.xpose.msra.mxu0 0
        %2147 = vmatprep.subr.bf16.mxu0 0
        %2148 = vmatpush1.bf16.xpose.msra.mxu0 0
        %2149 = vmatprep.subr.bf16.mxu0 0
        %2150 = vmatpush1.bf16.xpose.msra.mxu0 0
        %2151 = vmatprep.subr.bf16.mxu0 0
        %2152 = vmatpush1.bf16.xpose.msra.mxu0 0
        %2153 = vmatprep.subr.bf16.mxu0 0
        %2154 = vmatpush1.bf16.xpose.msra.mxu0 0
        %2155 = vmatprep.subr.bf16.mxu0 0
        %2156 = vmatpush1.bf16.xpose.msra.mxu0 0
        %2157 = vmatprep.subr.bf16.mxu0 0
        %2158 = vmatpush1.bf16.xpose.msra.mxu0 %v2141
        %2159 = vmatprep.subr.bf16.mxu0 0
        %2160 = vmatpush2.bf16.xpose.msra.mxu0 0
        %2161 = vmatprep.subr.bf16.mxu0 0
        %2162 = vmatpush2.bf16.xpose.msra.mxu0 0
        %2163 = vmatprep.subr.bf16.mxu0 0
        %2164 = vmatpush2.bf16.xpose.msra.mxu0 0
        %2165 = vmatprep.subr.bf16.mxu0 0
        %2166 = vmatpush2.bf16.xpose.msra.mxu0 0
        %2167 = vmatprep.subr.bf16.mxu0 0
        %2168 = vmatpush2.bf16.xpose.msra.mxu0 0
        %2169 = vmatprep.subr.bf16.mxu0 0
        %2170 = vmatpush2.bf16.xpose.msra.mxu0 0
        %2171 = vmatprep.subr.bf16.mxu0 0
        %2172 = vmatpush2.bf16.xpose.msra.mxu0 0
        %2173 = vmatprep.subr.bf16.mxu0 0
        %2174 = vmatpush2.bf16.xpose.msra.mxu0 0
        %2175 = vmatprep.mubr.bf16.mxu0 0
        %2176 = vmatmul.mubr.bf16.gmra.mxu0 %v2138
        %v2177 = vpop.f32.mrf.mxu0
        %v2178 = vadd.f32 0.0, %v2177
        %v2179 = vpop.f32.mrf.mxu0
        %v2180 = vpop.f32.mrf.mxu0
        %v2181 = vadd.f32 0.0, %v2180
        %v2182 = vpop.f32.mrf.mxu0
        %2183 = vdwg.mxu0
        %v2184 = vsel %vm847, %v1807, -inf
        %2185 = vmax.xlane.f32.xlu0 %v2184
        %v2186 = vpop.xlane.xlu0 %2185
        %v2187 = vsel %vm847, %v1810, -inf
        %2188 = vmax.xlane.f32.xlu0 %v2187
        %v2189 = vpop.xlane.xlu0 %2188
        %v2190 = vsel %vm847, %v1860, -inf
        %2191 = vmax.xlane.f32.xlu0 %v2190
        %v2192 = vpop.xlane.xlu0 %2191
        %v2193 = vsel %vm847, %v1863, -inf
        %2194 = vmax.xlane.f32.xlu0 %v2193
        %v2195 = vpop.xlane.xlu0 %2194
        %v2196 = vsel %vm847, %v1913, -inf
        %2197 = vmax.xlane.f32.xlu0 %v2196
        %v2198 = vpop.xlane.xlu0 %2197
        %v2199 = vsel %vm847, %v1916, -inf
        %2200 = vmax.xlane.f32.xlu0 %v2199
        %v2201 = vpop.xlane.xlu0 %2200
        %v2202 = vsel %vm847, %v1966, -inf
        %2203 = vmax.xlane.f32.xlu0 %v2202
        %v2204 = vpop.xlane.xlu0 %2203
        %v2205 = vsel %vm847, %v1969, -inf
        %2206 = vmax.xlane.f32.xlu0 %v2205
        %v2207 = vpop.xlane.xlu0 %2206
        %v2208 = vsel %vm847, %v2019, -inf
        %2209 = vmax.xlane.f32.xlu0 %v2208
        %v2210 = vpop.xlane.xlu0 %2209
        %v2211 = vsel %vm847, %v2022, -inf
        %2212 = vmax.xlane.f32.xlu0 %v2211
        %v2213 = vpop.xlane.xlu0 %2212
        %v2214 = vsel %vm847, %v2072, -inf
        %2215 = vmax.xlane.f32.xlu0 %v2214
        %v2216 = vpop.xlane.xlu0 %2215
        %v2217 = vsel %vm847, %v2075, -inf
        %2218 = vmax.xlane.f32.xlu0 %v2217
        %v2219 = vpop.xlane.xlu0 %2218
        %v2220 = vsel %vm847, %v2125, -inf
        %2221 = vmax.xlane.f32.xlu0 %v2220
        %v2222 = vpop.xlane.xlu0 %2221
        %v2223 = vsel %vm847, %v2128, -inf
        %2224 = vmax.xlane.f32.xlu0 %v2223
        %v2225 = vpop.xlane.xlu0 %2224
        %v2226 = vsel %vm847, %v2178, -inf
        %2227 = vmax.xlane.f32.xlu0 %v2226
        %v2228 = vpop.xlane.xlu0 %2227
        %v2229 = vsel %vm847, %v2181, -inf
        %2230 = vmax.xlane.f32.xlu0 %v2229
        %v2231 = vpop.xlane.xlu0 %2230
        %v2232 = vsub.f32 %v1807, %v2186
        %v2233 = vsub.f32 %v1810, %v2189
        %v2234 = vsub.f32 %v1860, %v2192
        %v2235 = vsub.f32 %v1863, %v2195
        %v2236 = vsub.f32 %v1913, %v2198
        %v2237 = vsub.f32 %v1916, %v2201
        %v2238 = vsub.f32 %v1966, %v2204
        %v2239 = vsub.f32 %v1969, %v2207
        %v2240 = vsub.f32 %v2019, %v2210
        %v2241 = vsub.f32 %v2022, %v2213
        %v2242 = vsub.f32 %v2072, %v2216
        %v2243 = vsub.f32 %v2075, %v2219
        %v2244 = vsub.f32 %v2125, %v2222
        %v2245 = vsub.f32 %v2128, %v2225
        %v2246 = vsub.f32 %v2178, %v2228
        %v2247 = vsub.f32 %v2181, %v2231
        %v2248 = vmul.f32 %v2232, 1.442695
        %v2249 = vpow.pop %v2248
        %v2250 = vmul.f32 %v2233, 1.442695
        %v2251 = vpow.pop %v2250
        %v2252 = vmul.f32 %v2234, 1.442695
        %v2253 = vpow.pop %v2252
        %v2254 = vmul.f32 %v2235, 1.442695
        %v2255 = vpow.pop %v2254
        %v2256 = vmul.f32 %v2236, 1.442695
        %v2257 = vpow.pop %v2256
        %v2258 = vmul.f32 %v2237, 1.442695
        %v2259 = vpow.pop %v2258
        %v2260 = vmul.f32 %v2238, 1.442695
        %v2261 = vpow.pop %v2260
        %v2262 = vmul.f32 %v2239, 1.442695
        %v2263 = vpow.pop %v2262
        %v2264 = vmul.f32 %v2240, 1.442695
        %v2265 = vpow.pop %v2264
        %v2266 = vmul.f32 %v2241, 1.442695
        %v2267 = vpow.pop %v2266
        %v2268 = vmul.f32 %v2242, 1.442695
        %v2269 = vpow.pop %v2268
        %v2270 = vmul.f32 %v2243, 1.442695
        %v2271 = vpow.pop %v2270
        %v2272 = vmul.f32 %v2244, 1.442695
        %v2273 = vpow.pop %v2272
        %v2274 = vmul.f32 %v2245, 1.442695
        %v2275 = vpow.pop %v2274
        %v2276 = vmul.f32 %v2246, 1.442695
        %v2277 = vpow.pop %v2276
        %v2278 = vmul.f32 %v2247, 1.442695
        %v2279 = vpow.pop %v2278
        %v2280 = vsel %vm847, %v2249, 0.0
        %2281 = vadd.xlane.f32.xlu0 %v2280
        %v2282 = vpop.xlane.xlu0 %2281
        %v2283 = vsel %vm847, %v2251, 0.0
        %2284 = vadd.xlane.f32.xlu0 %v2283
        %v2285 = vpop.xlane.xlu0 %2284
        %v2286 = vsel %vm847, %v2253, 0.0
        %2287 = vadd.xlane.f32.xlu0 %v2286
        %v2288 = vpop.xlane.xlu0 %2287
        %v2289 = vsel %vm847, %v2255, 0.0
        %2290 = vadd.xlane.f32.xlu0 %v2289
        %v2291 = vpop.xlane.xlu0 %2290
        %v2292 = vsel %vm847, %v2257, 0.0
        %2293 = vadd.xlane.f32.xlu0 %v2292
        %v2294 = vpop.xlane.xlu0 %2293
        %v2295 = vsel %vm847, %v2259, 0.0
        %2296 = vadd.xlane.f32.xlu0 %v2295
        %v2297 = vpop.xlane.xlu0 %2296
        %v2298 = vsel %vm847, %v2261, 0.0
        %2299 = vadd.xlane.f32.xlu0 %v2298
        %v2300 = vpop.xlane.xlu0 %2299
        %v2301 = vsel %vm847, %v2263, 0.0
        %2302 = vadd.xlane.f32.xlu0 %v2301
        %v2303 = vpop.xlane.xlu0 %2302
        %v2304 = vsel %vm847, %v2265, 0.0
        %2305 = vadd.xlane.f32.xlu0 %v2304
        %v2306 = vpop.xlane.xlu0 %2305
        %v2307 = vsel %vm847, %v2267, 0.0
        %2308 = vadd.xlane.f32.xlu0 %v2307
        %v2309 = vpop.xlane.xlu0 %2308
        %v2310 = vsel %vm847, %v2269, 0.0
        %2311 = vadd.xlane.f32.xlu0 %v2310
        %v2312 = vpop.xlane.xlu0 %2311
        %v2313 = vsel %vm847, %v2271, 0.0
        %2314 = vadd.xlane.f32.xlu0 %v2313
        %v2315 = vpop.xlane.xlu0 %2314
        %v2316 = vsel %vm847, %v2273, 0.0
        %2317 = vadd.xlane.f32.xlu0 %v2316
        %v2318 = vpop.xlane.xlu0 %2317
        %v2319 = vsel %vm847, %v2275, 0.0
        %2320 = vadd.xlane.f32.xlu0 %v2319
        %v2321 = vpop.xlane.xlu0 %2320
        %v2322 = vsel %vm847, %v2277, 0.0
        %2323 = vadd.xlane.f32.xlu0 %v2322
        %v2324 = vpop.xlane.xlu0 %2323
        %v2325 = vsel %vm847, %v2279, 0.0
        %2326 = vadd.xlane.f32.xlu0 %v2325
        %v2327 = vpop.xlane.xlu0 %2326
        %v2328 = vrcp.pop %v2282
        %v2329 = vmul.f32 %v2249, %v2328
        %v2330 = vrcp.pop %v2285
        %v2331 = vmul.f32 %v2251, %v2330
        %v2332 = vrcp.pop %v2288
        %v2333 = vmul.f32 %v2253, %v2332
        %v2334 = vrcp.pop %v2291
        %v2335 = vmul.f32 %v2255, %v2334
        %v2336 = vrcp.pop %v2294
        %v2337 = vmul.f32 %v2257, %v2336
        %v2338 = vrcp.pop %v2297
        %v2339 = vmul.f32 %v2259, %v2338
        %v2340 = vrcp.pop %v2300
        %v2341 = vmul.f32 %v2261, %v2340
        %v2342 = vrcp.pop %v2303
        %v2343 = vmul.f32 %v2263, %v2342
        %v2344 = vrcp.pop %v2306
        %v2345 = vmul.f32 %v2265, %v2344
        %v2346 = vrcp.pop %v2309
        %v2347 = vmul.f32 %v2267, %v2346
        %v2348 = vrcp.pop %v2312
        %v2349 = vmul.f32 %v2269, %v2348
        %v2350 = vrcp.pop %v2315
        %v2351 = vmul.f32 %v2271, %v2350
        %v2352 = vrcp.pop %v2318
        %v2353 = vmul.f32 %v2273, %v2352
        %v2354 = vrcp.pop %v2321
        %v2355 = vmul.f32 %v2275, %v2354
        %v2356 = vrcp.pop %v2324
        %v2357 = vmul.f32 %v2277, %v2356
        %v2358 = vrcp.pop %v2327
        %v2359 = vmul.f32 %v2279, %v2358
        %v2360 = vpack.c.bf16 %v2331, %v2329
        %v2361 = vpack.c.bf16 %v2335, %v2333
        %v2362 = vpack.c.bf16 %v2339, %v2337
        %v2363 = vpack.c.bf16 %v2343, %v2341
        %v2364 = vpack.c.bf16 %v2347, %v2345
        %v2365 = vpack.c.bf16 %v2351, %v2349
        %v2366 = vpack.c.bf16 %v2355, %v2353
        %v2367 = vpack.c.bf16 %v2359, %v2357
        %2369 = vrot.lane.b32.xlu0 %v839, 112
        %v2370 = vpop.permute.xlu0 %2369
        %v2373 = vsel %vm847, %v2360, 0
        %2375 = vmatprep.subr.bf16.mxu0 0
        %2376 = vmatpush1.bf16.msra.mxu0 0
        %2377 = vmatprep.subr.bf16.mxu0 0
        %2378 = vmatpush1.bf16.msra.mxu0 0
        %2379 = vmatprep.subr.bf16.mxu0 0
        %2380 = vmatpush1.bf16.msra.mxu0 0
        %2381 = vmatprep.subr.bf16.mxu0 0
        %2382 = vmatpush1.bf16.msra.mxu0 0
        %2383 = vmatprep.subr.bf16.mxu0 0
        %2384 = vmatpush1.bf16.msra.mxu0 0
        %2385 = vmatprep.subr.bf16.mxu0 0
        %2386 = vmatpush1.bf16.msra.mxu0 0
        %2387 = vmatprep.subr.bf16.mxu0 0
        %2388 = vmatpush1.bf16.msra.mxu0 0
        %2389 = vmatprep.subr.bf16.mxu0 0
        %2390 = vmatpush1.bf16.msra.mxu0 %v2370
        %2391 = vmatprep.subr.bf16.mxu0 0
        %2392 = vmatpush2.bf16.msra.mxu0 0
        %2393 = vmatprep.subr.bf16.mxu0 0
        %2394 = vmatpush2.bf16.msra.mxu0 0
        %2395 = vmatprep.subr.bf16.mxu0 0
        %2396 = vmatpush2.bf16.msra.mxu0 0
        %2397 = vmatprep.subr.bf16.mxu0 0
        %2398 = vmatpush2.bf16.msra.mxu0 0
        %2399 = vmatprep.subr.bf16.mxu0 0
        %2400 = vmatpush2.bf16.msra.mxu0 0
        %2401 = vmatprep.subr.bf16.mxu0 0
        %2402 = vmatpush2.bf16.msra.mxu0 0
        %2403 = vmatprep.subr.bf16.mxu0 0
        %2404 = vmatpush2.bf16.msra.mxu0 0
        %2405 = vmatprep.subr.bf16.mxu0 0
        %2406 = vmatpush2.bf16.msra.mxu0 0
        %2407 = vmatprep.mubr.bf16.mxu0 0
        %2408 = vmatmul.mubr.bf16.gmra.mxu0 %v2373
        %v2409 = vpop.f32.mrf.mxu0
        %v2410 = vadd.f32 0.0, %v2409
        %v2411 = vpop.f32.mrf.mxu0
        %v2412 = vpop.f32.mrf.mxu0
        %v2413 = vadd.f32 0.0, %v2412
        %v2414 = vpop.f32.mrf.mxu0
        %2415 = vdwg.mxu0
        %2417 = vrot.lane.b32.xlu0 %v840, 112
        %v2418 = vpop.permute.xlu0 %2417
        %v2421 = vsel %vm847, %v2361, 0
        %2423 = vmatprep.subr.bf16.mxu0 0
        %2424 = vmatpush1.bf16.msra.mxu0 0
        %2425 = vmatprep.subr.bf16.mxu0 0
        %2426 = vmatpush1.bf16.msra.mxu0 0
        %2427 = vmatprep.subr.bf16.mxu0 0
        %2428 = vmatpush1.bf16.msra.mxu0 0
        %2429 = vmatprep.subr.bf16.mxu0 0
        %2430 = vmatpush1.bf16.msra.mxu0 0
        %2431 = vmatprep.subr.bf16.mxu0 0
        %2432 = vmatpush1.bf16.msra.mxu0 0
        %2433 = vmatprep.subr.bf16.mxu0 0
        %2434 = vmatpush1.bf16.msra.mxu0 0
        %2435 = vmatprep.subr.bf16.mxu0 0
        %2436 = vmatpush1.bf16.msra.mxu0 0
        %2437 = vmatprep.subr.bf16.mxu0 0
        %2438 = vmatpush1.bf16.msra.mxu0 %v2418
        %2439 = vmatprep.subr.bf16.mxu0 0
        %2440 = vmatpush2.bf16.msra.mxu0 0
        %2441 = vmatprep.subr.bf16.mxu0 0
        %2442 = vmatpush2.bf16.msra.mxu0 0
        %2443 = vmatprep.subr.bf16.mxu0 0
        %2444 = vmatpush2.bf16.msra.mxu0 0
        %2445 = vmatprep.subr.bf16.mxu0 0
        %2446 = vmatpush2.bf16.msra.mxu0 0
        %2447 = vmatprep.subr.bf16.mxu0 0
        %2448 = vmatpush2.bf16.msra.mxu0 0
        %2449 = vmatprep.subr.bf16.mxu0 0
        %2450 = vmatpush2.bf16.msra.mxu0 0
        %2451 = vmatprep.subr.bf16.mxu0 0
        %2452 = vmatpush2.bf16.msra.mxu0 0
        %2453 = vmatprep.subr.bf16.mxu0 0
        %2454 = vmatpush2.bf16.msra.mxu0 0
        %2455 = vmatprep.mubr.bf16.mxu0 0
        %2456 = vmatmul.mubr.bf16.gmra.mxu0 %v2421
        %v2457 = vpop.f32.mrf.mxu0
        %v2458 = vadd.f32 0.0, %v2457
        %v2459 = vpop.f32.mrf.mxu0
        %v2460 = vpop.f32.mrf.mxu0
        %v2461 = vadd.f32 0.0, %v2460
        %v2462 = vpop.f32.mrf.mxu0
        %2463 = vdwg.mxu0
        %2465 = vrot.lane.b32.xlu0 %v841, 112
        %v2466 = vpop.permute.xlu0 %2465
        %v2469 = vsel %vm847, %v2362, 0
        %2471 = vmatprep.subr.bf16.mxu0 0
        %2472 = vmatpush1.bf16.msra.mxu0 0
        %2473 = vmatprep.subr.bf16.mxu0 0
        %2474 = vmatpush1.bf16.msra.mxu0 0
        %2475 = vmatprep.subr.bf16.mxu0 0
        %2476 = vmatpush1.bf16.msra.mxu0 0
        %2477 = vmatprep.subr.bf16.mxu0 0
        %2478 = vmatpush1.bf16.msra.mxu0 0
        %2479 = vmatprep.subr.bf16.mxu0 0
        %2480 = vmatpush1.bf16.msra.mxu0 0
        %2481 = vmatprep.subr.bf16.mxu0 0
        %2482 = vmatpush1.bf16.msra.mxu0 0
        %2483 = vmatprep.subr.bf16.mxu0 0
        %2484 = vmatpush1.bf16.msra.mxu0 0
        %2485 = vmatprep.subr.bf16.mxu0 0
        %2486 = vmatpush1.bf16.msra.mxu0 %v2466
        %2487 = vmatprep.subr.bf16.mxu0 0
        %2488 = vmatpush2.bf16.msra.mxu0 0
        %2489 = vmatprep.subr.bf16.mxu0 0
        %2490 = vmatpush2.bf16.msra.mxu0 0
        %2491 = vmatprep.subr.bf16.mxu0 0
        %2492 = vmatpush2.bf16.msra.mxu0 0
        %2493 = vmatprep.subr.bf16.mxu0 0
        %2494 = vmatpush2.bf16.msra.mxu0 0
        %2495 = vmatprep.subr.bf16.mxu0 0
        %2496 = vmatpush2.bf16.msra.mxu0 0
        %2497 = vmatprep.subr.bf16.mxu0 0
        %2498 = vmatpush2.bf16.msra.mxu0 0
        %2499 = vmatprep.subr.bf16.mxu0 0
        %2500 = vmatpush2.bf16.msra.mxu0 0
        %2501 = vmatprep.subr.bf16.mxu0 0
        %2502 = vmatpush2.bf16.msra.mxu0 0
        %2503 = vmatprep.mubr.bf16.mxu0 0
        %2504 = vmatmul.mubr.bf16.gmra.mxu0 %v2469
        %v2505 = vpop.f32.mrf.mxu0
        %v2506 = vadd.f32 0.0, %v2505
        %v2507 = vpop.f32.mrf.mxu0
        %v2508 = vpop.f32.mrf.mxu0
        %v2509 = vadd.f32 0.0, %v2508
        %v2510 = vpop.f32.mrf.mxu0
        %2511 = vdwg.mxu0
        %2513 = vrot.lane.b32.xlu0 %v842, 112
        %v2514 = vpop.permute.xlu0 %2513
        %v2517 = vsel %vm847, %v2363, 0
        %2519 = vmatprep.subr.bf16.mxu0 0
        %2520 = vmatpush1.bf16.msra.mxu0 0
        %2521 = vmatprep.subr.bf16.mxu0 0
        %2522 = vmatpush1.bf16.msra.mxu0 0
        %2523 = vmatprep.subr.bf16.mxu0 0
        %2524 = vmatpush1.bf16.msra.mxu0 0
        %2525 = vmatprep.subr.bf16.mxu0 0
        %2526 = vmatpush1.bf16.msra.mxu0 0
        %2527 = vmatprep.subr.bf16.mxu0 0
        %2528 = vmatpush1.bf16.msra.mxu0 0
        %2529 = vmatprep.subr.bf16.mxu0 0
        %2530 = vmatpush1.bf16.msra.mxu0 0
        %2531 = vmatprep.subr.bf16.mxu0 0
        %2532 = vmatpush1.bf16.msra.mxu0 0
        %2533 = vmatprep.subr.bf16.mxu0 0
        %2534 = vmatpush1.bf16.msra.mxu0 %v2514
        %2535 = vmatprep.subr.bf16.mxu0 0
        %2536 = vmatpush2.bf16.msra.mxu0 0
        %2537 = vmatprep.subr.bf16.mxu0 0
        %2538 = vmatpush2.bf16.msra.mxu0 0
        %2539 = vmatprep.subr.bf16.mxu0 0
        %2540 = vmatpush2.bf16.msra.mxu0 0
        %2541 = vmatprep.subr.bf16.mxu0 0
        %2542 = vmatpush2.bf16.msra.mxu0 0
        %2543 = vmatprep.subr.bf16.mxu0 0
        %2544 = vmatpush2.bf16.msra.mxu0 0
        %2545 = vmatprep.subr.bf16.mxu0 0
        %2546 = vmatpush2.bf16.msra.mxu0 0
        %2547 = vmatprep.subr.bf16.mxu0 0
        %2548 = vmatpush2.bf16.msra.mxu0 0
        %2549 = vmatprep.subr.bf16.mxu0 0
        %2550 = vmatpush2.bf16.msra.mxu0 0
        %2551 = vmatprep.mubr.bf16.mxu0 0
        %2552 = vmatmul.mubr.bf16.gmra.mxu0 %v2517
        %v2553 = vpop.f32.mrf.mxu0
        %v2554 = vadd.f32 0.0, %v2553
        %v2555 = vpop.f32.mrf.mxu0
        %v2556 = vpop.f32.mrf.mxu0
        %v2557 = vadd.f32 0.0, %v2556
        %v2558 = vpop.f32.mrf.mxu0
        %2559 = vdwg.mxu0
        %2561 = vrot.lane.b32.xlu0 %v843, 112
        %v2562 = vpop.permute.xlu0 %2561
        %v2565 = vsel %vm847, %v2364, 0
        %2567 = vmatprep.subr.bf16.mxu0 0
        %2568 = vmatpush1.bf16.msra.mxu0 0
        %2569 = vmatprep.subr.bf16.mxu0 0
        %2570 = vmatpush1.bf16.msra.mxu0 0
        %2571 = vmatprep.subr.bf16.mxu0 0
        %2572 = vmatpush1.bf16.msra.mxu0 0
        %2573 = vmatprep.subr.bf16.mxu0 0
        %2574 = vmatpush1.bf16.msra.mxu0 0
        %2575 = vmatprep.subr.bf16.mxu0 0
        %2576 = vmatpush1.bf16.msra.mxu0 0
        %2577 = vmatprep.subr.bf16.mxu0 0
        %2578 = vmatpush1.bf16.msra.mxu0 0
        %2579 = vmatprep.subr.bf16.mxu0 0
        %2580 = vmatpush1.bf16.msra.mxu0 0
        %2581 = vmatprep.subr.bf16.mxu0 0
        %2582 = vmatpush1.bf16.msra.mxu0 %v2562
        %2583 = vmatprep.subr.bf16.mxu0 0
        %2584 = vmatpush2.bf16.msra.mxu0 0
        %2585 = vmatprep.subr.bf16.mxu0 0
        %2586 = vmatpush2.bf16.msra.mxu0 0
        %2587 = vmatprep.subr.bf16.mxu0 0
        %2588 = vmatpush2.bf16.msra.mxu0 0
        %2589 = vmatprep.subr.bf16.mxu0 0
        %2590 = vmatpush2.bf16.msra.mxu0 0
        %2591 = vmatprep.subr.bf16.mxu0 0
        %2592 = vmatpush2.bf16.msra.mxu0 0
        %2593 = vmatprep.subr.bf16.mxu0 0
        %2594 = vmatpush2.bf16.msra.mxu0 0
        %2595 = vmatprep.subr.bf16.mxu0 0
        %2596 = vmatpush2.bf16.msra.mxu0 0
        %2597 = vmatprep.subr.bf16.mxu0 0
        %2598 = vmatpush2.bf16.msra.mxu0 0
        %2599 = vmatprep.mubr.bf16.mxu0 0
        %2600 = vmatmul.mubr.bf16.gmra.mxu0 %v2565
        %v2601 = vpop.f32.mrf.mxu0
        %v2602 = vadd.f32 0.0, %v2601
        %v2603 = vpop.f32.mrf.mxu0
        %v2604 = vpop.f32.mrf.mxu0
        %v2605 = vadd.f32 0.0, %v2604
        %v2606 = vpop.f32.mrf.mxu0
        %2607 = vdwg.mxu0
        %2609 = vrot.lane.b32.xlu0 %v844, 112
        %v2610 = vpop.permute.xlu0 %2609
        %v2613 = vsel %vm847, %v2365, 0
        %2615 = vmatprep.subr.bf16.mxu0 0
        %2616 = vmatpush1.bf16.msra.mxu0 0
        %2617 = vmatprep.subr.bf16.mxu0 0
        %2618 = vmatpush1.bf16.msra.mxu0 0
        %2619 = vmatprep.subr.bf16.mxu0 0
        %2620 = vmatpush1.bf16.msra.mxu0 0
        %2621 = vmatprep.subr.bf16.mxu0 0
        %2622 = vmatpush1.bf16.msra.mxu0 0
        %2623 = vmatprep.subr.bf16.mxu0 0
        %2624 = vmatpush1.bf16.msra.mxu0 0
        %2625 = vmatprep.subr.bf16.mxu0 0
        %2626 = vmatpush1.bf16.msra.mxu0 0
        %2627 = vmatprep.subr.bf16.mxu0 0
        %2628 = vmatpush1.bf16.msra.mxu0 0
        %2629 = vmatprep.subr.bf16.mxu0 0
        %2630 = vmatpush1.bf16.msra.mxu0 %v2610
        %2631 = vmatprep.subr.bf16.mxu0 0
        %2632 = vmatpush2.bf16.msra.mxu0 0
        %2633 = vmatprep.subr.bf16.mxu0 0
        %2634 = vmatpush2.bf16.msra.mxu0 0
        %2635 = vmatprep.subr.bf16.mxu0 0
        %2636 = vmatpush2.bf16.msra.mxu0 0
        %2637 = vmatprep.subr.bf16.mxu0 0
        %2638 = vmatpush2.bf16.msra.mxu0 0
        %2639 = vmatprep.subr.bf16.mxu0 0
        %2640 = vmatpush2.bf16.msra.mxu0 0
        %2641 = vmatprep.subr.bf16.mxu0 0
        %2642 = vmatpush2.bf16.msra.mxu0 0
        %2643 = vmatprep.subr.bf16.mxu0 0
        %2644 = vmatpush2.bf16.msra.mxu0 0
        %2645 = vmatprep.subr.bf16.mxu0 0
        %2646 = vmatpush2.bf16.msra.mxu0 0
        %2647 = vmatprep.mubr.bf16.mxu0 0
        %2648 = vmatmul.mubr.bf16.gmra.mxu0 %v2613
        %v2649 = vpop.f32.mrf.mxu0
        %v2650 = vadd.f32 0.0, %v2649
        %v2651 = vpop.f32.mrf.mxu0
        %v2652 = vpop.f32.mrf.mxu0
        %v2653 = vadd.f32 0.0, %v2652
        %v2654 = vpop.f32.mrf.mxu0
        %2655 = vdwg.mxu0
        %2657 = vrot.lane.b32.xlu0 %v845, 112
        %v2658 = vpop.permute.xlu0 %2657
        %v2661 = vsel %vm847, %v2366, 0
        %2663 = vmatprep.subr.bf16.mxu0 0
        %2664 = vmatpush1.bf16.msra.mxu0 0
        %2665 = vmatprep.subr.bf16.mxu0 0
        %2666 = vmatpush1.bf16.msra.mxu0 0
        %2667 = vmatprep.subr.bf16.mxu0 0
        %2668 = vmatpush1.bf16.msra.mxu0 0
        %2669 = vmatprep.subr.bf16.mxu0 0
        %2670 = vmatpush1.bf16.msra.mxu0 0
        %2671 = vmatprep.subr.bf16.mxu0 0
        %2672 = vmatpush1.bf16.msra.mxu0 0
        %2673 = vmatprep.subr.bf16.mxu0 0
        %2674 = vmatpush1.bf16.msra.mxu0 0
        %2675 = vmatprep.subr.bf16.mxu0 0
        %2676 = vmatpush1.bf16.msra.mxu0 0
        %2677 = vmatprep.subr.bf16.mxu0 0
        %2678 = vmatpush1.bf16.msra.mxu0 %v2658
        %2679 = vmatprep.subr.bf16.mxu0 0
        %2680 = vmatpush2.bf16.msra.mxu0 0
        %2681 = vmatprep.subr.bf16.mxu0 0
        %2682 = vmatpush2.bf16.msra.mxu0 0
        %2683 = vmatprep.subr.bf16.mxu0 0
        %2684 = vmatpush2.bf16.msra.mxu0 0
        %2685 = vmatprep.subr.bf16.mxu0 0
        %2686 = vmatpush2.bf16.msra.mxu0 0
        %2687 = vmatprep.subr.bf16.mxu0 0
        %2688 = vmatpush2.bf16.msra.mxu0 0
        %2689 = vmatprep.subr.bf16.mxu0 0
        %2690 = vmatpush2.bf16.msra.mxu0 0
        %2691 = vmatprep.subr.bf16.mxu0 0
        %2692 = vmatpush2.bf16.msra.mxu0 0
        %2693 = vmatprep.subr.bf16.mxu0 0
        %2694 = vmatpush2.bf16.msra.mxu0 0
        %2695 = vmatprep.mubr.bf16.mxu0 0
        %2696 = vmatmul.mubr.bf16.gmra.mxu0 %v2661
        %v2697 = vpop.f32.mrf.mxu0
        %v2698 = vadd.f32 0.0, %v2697
        %v2699 = vpop.f32.mrf.mxu0
        %v2700 = vpop.f32.mrf.mxu0
        %v2701 = vadd.f32 0.0, %v2700
        %v2702 = vpop.f32.mrf.mxu0
        %2703 = vdwg.mxu0
        %2705 = vrot.lane.b32.xlu0 %v846, 112
        %v2706 = vpop.permute.xlu0 %2705
        %v2709 = vsel %vm847, %v2367, 0
        %2711 = vmatprep.subr.bf16.mxu0 0
        %2712 = vmatpush1.bf16.msra.mxu0 0
        %2713 = vmatprep.subr.bf16.mxu0 0
        %2714 = vmatpush1.bf16.msra.mxu0 0
        %2715 = vmatprep.subr.bf16.mxu0 0
        %2716 = vmatpush1.bf16.msra.mxu0 0
        %2717 = vmatprep.subr.bf16.mxu0 0
        %2718 = vmatpush1.bf16.msra.mxu0 0
        %2719 = vmatprep.subr.bf16.mxu0 0
        %2720 = vmatpush1.bf16.msra.mxu0 0
        %2721 = vmatprep.subr.bf16.mxu0 0
        %2722 = vmatpush1.bf16.msra.mxu0 0
        %2723 = vmatprep.subr.bf16.mxu0 0
        %2724 = vmatpush1.bf16.msra.mxu0 0
        %2725 = vmatprep.subr.bf16.mxu0 0
        %2726 = vmatpush1.bf16.msra.mxu0 %v2706
        %2727 = vmatprep.subr.bf16.mxu0 0
        %2728 = vmatpush2.bf16.msra.mxu0 0
        %2729 = vmatprep.subr.bf16.mxu0 0
        %2730 = vmatpush2.bf16.msra.mxu0 0
        %2731 = vmatprep.subr.bf16.mxu0 0
        %2732 = vmatpush2.bf16.msra.mxu0 0
        %2733 = vmatprep.subr.bf16.mxu0 0
        %2734 = vmatpush2.bf16.msra.mxu0 0
        %2735 = vmatprep.subr.bf16.mxu0 0
        %2736 = vmatpush2.bf16.msra.mxu0 0
        %2737 = vmatprep.subr.bf16.mxu0 0
        %2738 = vmatpush2.bf16.msra.mxu0 0
        %2739 = vmatprep.subr.bf16.mxu0 0
        %2740 = vmatpush2.bf16.msra.mxu0 0
        %2741 = vmatprep.subr.bf16.mxu0 0
        %2742 = vmatpush2.bf16.msra.mxu0 0
        %2743 = vmatprep.mubr.bf16.mxu0 0
        %2744 = vmatmul.mubr.bf16.gmra.mxu0 %v2709
        %v2745 = vpop.f32.mrf.mxu0
        %v2746 = vadd.f32 0.0, %v2745
        %v2747 = vpop.f32.mrf.mxu0
        %v2748 = vpop.f32.mrf.mxu0
        %v2749 = vadd.f32 0.0, %v2748
        %v2750 = vpop.f32.mrf.mxu0
        %2751 = vdwg.mxu0
        %2752 = vrot.lane.b32.xlu0 %v823, 96
        %v2753 = vpop.permute.xlu0 %2752
        %2754 = vrot.lane.b32.xlu0 %v831, 96
        %v2755 = vpop.permute.xlu0 %2754
        %v2757 = vsel %vm847, %v2753, 0
        %v2760 = vsel %vm847, %v2755, 0
        %2762 = vmatprep.subr.bf16.mxu0 0
        %2763 = vmatpush1.bf16.xpose.msra.mxu0 0
        %2764 = vmatprep.subr.bf16.mxu0 0
        %2765 = vmatpush1.bf16.xpose.msra.mxu0 0
        %2766 = vmatprep.subr.bf16.mxu0 0
        %2767 = vmatpush1.bf16.xpose.msra.mxu0 0
        %2768 = vmatprep.subr.bf16.mxu0 0
        %2769 = vmatpush1.bf16.xpose.msra.mxu0 0
        %2770 = vmatprep.subr.bf16.mxu0 0
        %2771 = vmatpush1.bf16.xpose.msra.mxu0 0
        %2772 = vmatprep.subr.bf16.mxu0 0
        %2773 = vmatpush1.bf16.xpose.msra.mxu0 0
        %2774 = vmatprep.subr.bf16.mxu0 0
        %2775 = vmatpush1.bf16.xpose.msra.mxu0 0
        %2776 = vmatprep.subr.bf16.mxu0 0
        %2777 = vmatpush1.bf16.xpose.msra.mxu0 %v2760
        %2778 = vmatprep.subr.bf16.mxu0 0
        %2779 = vmatpush2.bf16.xpose.msra.mxu0 0
        %2780 = vmatprep.subr.bf16.mxu0 0
        %2781 = vmatpush2.bf16.xpose.msra.mxu0 0
        %2782 = vmatprep.subr.bf16.mxu0 0
        %2783 = vmatpush2.bf16.xpose.msra.mxu0 0
        %2784 = vmatprep.subr.bf16.mxu0 0
        %2785 = vmatpush2.bf16.xpose.msra.mxu0 0
        %2786 = vmatprep.subr.bf16.mxu0 0
        %2787 = vmatpush2.bf16.xpose.msra.mxu0 0
        %2788 = vmatprep.subr.bf16.mxu0 0
        %2789 = vmatpush2.bf16.xpose.msra.mxu0 0
        %2790 = vmatprep.subr.bf16.mxu0 0
        %2791 = vmatpush2.bf16.xpose.msra.mxu0 0
        %2792 = vmatprep.subr.bf16.mxu0 0
        %2793 = vmatpush2.bf16.xpose.msra.mxu0 0
        %2794 = vmatprep.mubr.bf16.mxu0 0
        %2795 = vmatmul.mubr.bf16.gmra.mxu0 %v2757
        %v2796 = vpop.f32.mrf.mxu0
        %v2797 = vadd.f32 0.0, %v2796
        %v2798 = vpop.f32.mrf.mxu0
        %v2799 = vpop.f32.mrf.mxu0
        %v2800 = vadd.f32 0.0, %v2799
        %v2801 = vpop.f32.mrf.mxu0
        %2802 = vdwg.mxu0
        %2803 = vrot.lane.b32.xlu0 %v824, 96
        %v2804 = vpop.permute.xlu0 %2803
        %2805 = vrot.lane.b32.xlu0 %v832, 96
        %v2806 = vpop.permute.xlu0 %2805
        %v2808 = vsel %vm847, %v2804, 0
        %v2811 = vsel %vm847, %v2806, 0
        %2813 = vmatprep.subr.bf16.mxu0 0
        %2814 = vmatpush1.bf16.xpose.msra.mxu0 0
        %2815 = vmatprep.subr.bf16.mxu0 0
        %2816 = vmatpush1.bf16.xpose.msra.mxu0 0
        %2817 = vmatprep.subr.bf16.mxu0 0
        %2818 = vmatpush1.bf16.xpose.msra.mxu0 0
        %2819 = vmatprep.subr.bf16.mxu0 0
        %2820 = vmatpush1.bf16.xpose.msra.mxu0 0
        %2821 = vmatprep.subr.bf16.mxu0 0
        %2822 = vmatpush1.bf16.xpose.msra.mxu0 0
        %2823 = vmatprep.subr.bf16.mxu0 0
        %2824 = vmatpush1.bf16.xpose.msra.mxu0 0
        %2825 = vmatprep.subr.bf16.mxu0 0
        %2826 = vmatpush1.bf16.xpose.msra.mxu0 0
        %2827 = vmatprep.subr.bf16.mxu0 0
        %2828 = vmatpush1.bf16.xpose.msra.mxu0 %v2811
        %2829 = vmatprep.subr.bf16.mxu0 0
        %2830 = vmatpush2.bf16.xpose.msra.mxu0 0
        %2831 = vmatprep.subr.bf16.mxu0 0
        %2832 = vmatpush2.bf16.xpose.msra.mxu0 0
        %2833 = vmatprep.subr.bf16.mxu0 0
        %2834 = vmatpush2.bf16.xpose.msra.mxu0 0
        %2835 = vmatprep.subr.bf16.mxu0 0
        %2836 = vmatpush2.bf16.xpose.msra.mxu0 0
        %2837 = vmatprep.subr.bf16.mxu0 0
        %2838 = vmatpush2.bf16.xpose.msra.mxu0 0
        %2839 = vmatprep.subr.bf16.mxu0 0
        %2840 = vmatpush2.bf16.xpose.msra.mxu0 0
        %2841 = vmatprep.subr.bf16.mxu0 0
        %2842 = vmatpush2.bf16.xpose.msra.mxu0 0
        %2843 = vmatprep.subr.bf16.mxu0 0
        %2844 = vmatpush2.bf16.xpose.msra.mxu0 0
        %2845 = vmatprep.mubr.bf16.mxu0 0
        %2846 = vmatmul.mubr.bf16.gmra.mxu0 %v2808
        %v2847 = vpop.f32.mrf.mxu0
        %v2848 = vadd.f32 0.0, %v2847
        %v2849 = vpop.f32.mrf.mxu0
        %v2850 = vpop.f32.mrf.mxu0
        %v2851 = vadd.f32 0.0, %v2850
        %v2852 = vpop.f32.mrf.mxu0
        %2853 = vdwg.mxu0
        %2854 = vrot.lane.b32.xlu0 %v825, 96
        %v2855 = vpop.permute.xlu0 %2854
        %2856 = vrot.lane.b32.xlu0 %v833, 96
        %v2857 = vpop.permute.xlu0 %2856
        %v2859 = vsel %vm847, %v2855, 0
        %v2862 = vsel %vm847, %v2857, 0
        %2864 = vmatprep.subr.bf16.mxu0 0
        %2865 = vmatpush1.bf16.xpose.msra.mxu0 0
        %2866 = vmatprep.subr.bf16.mxu0 0
        %2867 = vmatpush1.bf16.xpose.msra.mxu0 0
        %2868 = vmatprep.subr.bf16.mxu0 0
        %2869 = vmatpush1.bf16.xpose.msra.mxu0 0
        %2870 = vmatprep.subr.bf16.mxu0 0
        %2871 = vmatpush1.bf16.xpose.msra.mxu0 0
        %2872 = vmatprep.subr.bf16.mxu0 0
        %2873 = vmatpush1.bf16.xpose.msra.mxu0 0
        %2874 = vmatprep.subr.bf16.mxu0 0
        %2875 = vmatpush1.bf16.xpose.msra.mxu0 0
        %2876 = vmatprep.subr.bf16.mxu0 0
        %2877 = vmatpush1.bf16.xpose.msra.mxu0 0
        %2878 = vmatprep.subr.bf16.mxu0 0
        %2879 = vmatpush1.bf16.xpose.msra.mxu0 %v2862
        %2880 = vmatprep.subr.bf16.mxu0 0
        %2881 = vmatpush2.bf16.xpose.msra.mxu0 0
        %2882 = vmatprep.subr.bf16.mxu0 0
        %2883 = vmatpush2.bf16.xpose.msra.mxu0 0
        %2884 = vmatprep.subr.bf16.mxu0 0
        %2885 = vmatpush2.bf16.xpose.msra.mxu0 0
        %2886 = vmatprep.subr.bf16.mxu0 0
        %2887 = vmatpush2.bf16.xpose.msra.mxu0 0
        %2888 = vmatprep.subr.bf16.mxu0 0
        %2889 = vmatpush2.bf16.xpose.msra.mxu0 0
        %2890 = vmatprep.subr.bf16.mxu0 0
        %2891 = vmatpush2.bf16.xpose.msra.mxu0 0
        %2892 = vmatprep.subr.bf16.mxu0 0
        %2893 = vmatpush2.bf16.xpose.msra.mxu0 0
        %2894 = vmatprep.subr.bf16.mxu0 0
        %2895 = vmatpush2.bf16.xpose.msra.mxu0 0
        %2896 = vmatprep.mubr.bf16.mxu0 0
        %2897 = vmatmul.mubr.bf16.gmra.mxu0 %v2859
        %v2898 = vpop.f32.mrf.mxu0
        %v2899 = vadd.f32 0.0, %v2898
        %v2900 = vpop.f32.mrf.mxu0
        %v2901 = vpop.f32.mrf.mxu0
        %v2902 = vadd.f32 0.0, %v2901
        %v2903 = vpop.f32.mrf.mxu0
        %2904 = vdwg.mxu0
        %2905 = vrot.lane.b32.xlu0 %v826, 96
        %v2906 = vpop.permute.xlu0 %2905
        %2907 = vrot.lane.b32.xlu0 %v834, 96
        %v2908 = vpop.permute.xlu0 %2907
        %v2910 = vsel %vm847, %v2906, 0
        %v2913 = vsel %vm847, %v2908, 0
        %2915 = vmatprep.subr.bf16.mxu0 0
        %2916 = vmatpush1.bf16.xpose.msra.mxu0 0
        %2917 = vmatprep.subr.bf16.mxu0 0
        %2918 = vmatpush1.bf16.xpose.msra.mxu0 0
        %2919 = vmatprep.subr.bf16.mxu0 0
        %2920 = vmatpush1.bf16.xpose.msra.mxu0 0
        %2921 = vmatprep.subr.bf16.mxu0 0
        %2922 = vmatpush1.bf16.xpose.msra.mxu0 0
        %2923 = vmatprep.subr.bf16.mxu0 0
        %2924 = vmatpush1.bf16.xpose.msra.mxu0 0
        %2925 = vmatprep.subr.bf16.mxu0 0
        %2926 = vmatpush1.bf16.xpose.msra.mxu0 0
        %2927 = vmatprep.subr.bf16.mxu0 0
        %2928 = vmatpush1.bf16.xpose.msra.mxu0 0
        %2929 = vmatprep.subr.bf16.mxu0 0
        %2930 = vmatpush1.bf16.xpose.msra.mxu0 %v2913
        %2931 = vmatprep.subr.bf16.mxu0 0
        %2932 = vmatpush2.bf16.xpose.msra.mxu0 0
        %2933 = vmatprep.subr.bf16.mxu0 0
        %2934 = vmatpush2.bf16.xpose.msra.mxu0 0
        %2935 = vmatprep.subr.bf16.mxu0 0
        %2936 = vmatpush2.bf16.xpose.msra.mxu0 0
        %2937 = vmatprep.subr.bf16.mxu0 0
        %2938 = vmatpush2.bf16.xpose.msra.mxu0 0
        %2939 = vmatprep.subr.bf16.mxu0 0
        %2940 = vmatpush2.bf16.xpose.msra.mxu0 0
        %2941 = vmatprep.subr.bf16.mxu0 0
        %2942 = vmatpush2.bf16.xpose.msra.mxu0 0
        %2943 = vmatprep.subr.bf16.mxu0 0
        %2944 = vmatpush2.bf16.xpose.msra.mxu0 0
        %2945 = vmatprep.subr.bf16.mxu0 0
        %2946 = vmatpush2.bf16.xpose.msra.mxu0 0
        %2947 = vmatprep.mubr.bf16.mxu0 0
        %2948 = vmatmul.mubr.bf16.gmra.mxu0 %v2910
        %v2949 = vpop.f32.mrf.mxu0
        %v2950 = vadd.f32 0.0, %v2949
        %v2951 = vpop.f32.mrf.mxu0
        %v2952 = vpop.f32.mrf.mxu0
        %v2953 = vadd.f32 0.0, %v2952
        %v2954 = vpop.f32.mrf.mxu0
        %2955 = vdwg.mxu0
        %2956 = vrot.lane.b32.xlu0 %v827, 96
        %v2957 = vpop.permute.xlu0 %2956
        %2958 = vrot.lane.b32.xlu0 %v835, 96
        %v2959 = vpop.permute.xlu0 %2958
        %v2961 = vsel %vm847, %v2957, 0
        %v2964 = vsel %vm847, %v2959, 0
        %2966 = vmatprep.subr.bf16.mxu0 0
        %2967 = vmatpush1.bf16.xpose.msra.mxu0 0
        %2968 = vmatprep.subr.bf16.mxu0 0
        %2969 = vmatpush1.bf16.xpose.msra.mxu0 0
        %2970 = vmatprep.subr.bf16.mxu0 0
        %2971 = vmatpush1.bf16.xpose.msra.mxu0 0
        %2972 = vmatprep.subr.bf16.mxu0 0
        %2973 = vmatpush1.bf16.xpose.msra.mxu0 0
        %2974 = vmatprep.subr.bf16.mxu0 0
        %2975 = vmatpush1.bf16.xpose.msra.mxu0 0
        %2976 = vmatprep.subr.bf16.mxu0 0
        %2977 = vmatpush1.bf16.xpose.msra.mxu0 0
        %2978 = vmatprep.subr.bf16.mxu0 0
        %2979 = vmatpush1.bf16.xpose.msra.mxu0 0
        %2980 = vmatprep.subr.bf16.mxu0 0
        %2981 = vmatpush1.bf16.xpose.msra.mxu0 %v2964
        %2982 = vmatprep.subr.bf16.mxu0 0
        %2983 = vmatpush2.bf16.xpose.msra.mxu0 0
        %2984 = vmatprep.subr.bf16.mxu0 0
        %2985 = vmatpush2.bf16.xpose.msra.mxu0 0
        %2986 = vmatprep.subr.bf16.mxu0 0
        %2987 = vmatpush2.bf16.xpose.msra.mxu0 0
        %2988 = vmatprep.subr.bf16.mxu0 0
        %2989 = vmatpush2.bf16.xpose.msra.mxu0 0
        %2990 = vmatprep.subr.bf16.mxu0 0
        %2991 = vmatpush2.bf16.xpose.msra.mxu0 0
        %2992 = vmatprep.subr.bf16.mxu0 0
        %2993 = vmatpush2.bf16.xpose.msra.mxu0 0
        %2994 = vmatprep.subr.bf16.mxu0 0
        %2995 = vmatpush2.bf16.xpose.msra.mxu0 0
        %2996 = vmatprep.subr.bf16.mxu0 0
        %2997 = vmatpush2.bf16.xpose.msra.mxu0 0
        %2998 = vmatprep.mubr.bf16.mxu0 0
        %2999 = vmatmul.mubr.bf16.gmra.mxu0 %v2961
        %v3000 = vpop.f32.mrf.mxu0
        %v3001 = vadd.f32 0.0, %v3000
        %v3002 = vpop.f32.mrf.mxu0
        %v3003 = vpop.f32.mrf.mxu0
        %v3004 = vadd.f32 0.0, %v3003
        %v3005 = vpop.f32.mrf.mxu0
        %3006 = vdwg.mxu0
        %3007 = vrot.lane.b32.xlu0 %v828, 96
        %v3008 = vpop.permute.xlu0 %3007
        %3009 = vrot.lane.b32.xlu0 %v836, 96
        %v3010 = vpop.permute.xlu0 %3009
        %v3012 = vsel %vm847, %v3008, 0
        %v3015 = vsel %vm847, %v3010, 0
        %3017 = vmatprep.subr.bf16.mxu0 0
        %3018 = vmatpush1.bf16.xpose.msra.mxu0 0
        %3019 = vmatprep.subr.bf16.mxu0 0
        %3020 = vmatpush1.bf16.xpose.msra.mxu0 0
        %3021 = vmatprep.subr.bf16.mxu0 0
        %3022 = vmatpush1.bf16.xpose.msra.mxu0 0
        %3023 = vmatprep.subr.bf16.mxu0 0
        %3024 = vmatpush1.bf16.xpose.msra.mxu0 0
        %3025 = vmatprep.subr.bf16.mxu0 0
        %3026 = vmatpush1.bf16.xpose.msra.mxu0 0
        %3027 = vmatprep.subr.bf16.mxu0 0
        %3028 = vmatpush1.bf16.xpose.msra.mxu0 0
        %3029 = vmatprep.subr.bf16.mxu0 0
        %3030 = vmatpush1.bf16.xpose.msra.mxu0 0
        %3031 = vmatprep.subr.bf16.mxu0 0
        %3032 = vmatpush1.bf16.xpose.msra.mxu0 %v3015
        %3033 = vmatprep.subr.bf16.mxu0 0
        %3034 = vmatpush2.bf16.xpose.msra.mxu0 0
        %3035 = vmatprep.subr.bf16.mxu0 0
        %3036 = vmatpush2.bf16.xpose.msra.mxu0 0
        %3037 = vmatprep.subr.bf16.mxu0 0
        %3038 = vmatpush2.bf16.xpose.msra.mxu0 0
        %3039 = vmatprep.subr.bf16.mxu0 0
        %3040 = vmatpush2.bf16.xpose.msra.mxu0 0
        %3041 = vmatprep.subr.bf16.mxu0 0
        %3042 = vmatpush2.bf16.xpose.msra.mxu0 0
        %3043 = vmatprep.subr.bf16.mxu0 0
        %3044 = vmatpush2.bf16.xpose.msra.mxu0 0
        %3045 = vmatprep.subr.bf16.mxu0 0
        %3046 = vmatpush2.bf16.xpose.msra.mxu0 0
        %3047 = vmatprep.subr.bf16.mxu0 0
        %3048 = vmatpush2.bf16.xpose.msra.mxu0 0
        %3049 = vmatprep.mubr.bf16.mxu0 0
        %3050 = vmatmul.mubr.bf16.gmra.mxu0 %v3012
        %v3051 = vpop.f32.mrf.mxu0
        %v3052 = vadd.f32 0.0, %v3051
        %v3053 = vpop.f32.mrf.mxu0
        %v3054 = vpop.f32.mrf.mxu0
        %v3055 = vadd.f32 0.0, %v3054
        %v3056 = vpop.f32.mrf.mxu0
        %3057 = vdwg.mxu0
        %3058 = vrot.lane.b32.xlu0 %v829, 96
        %v3059 = vpop.permute.xlu0 %3058
        %3060 = vrot.lane.b32.xlu0 %v837, 96
        %v3061 = vpop.permute.xlu0 %3060
        %v3063 = vsel %vm847, %v3059, 0
        %v3066 = vsel %vm847, %v3061, 0
        %3068 = vmatprep.subr.bf16.mxu0 0
        %3069 = vmatpush1.bf16.xpose.msra.mxu0 0
        %3070 = vmatprep.subr.bf16.mxu0 0
        %3071 = vmatpush1.bf16.xpose.msra.mxu0 0
        %3072 = vmatprep.subr.bf16.mxu0 0
        %3073 = vmatpush1.bf16.xpose.msra.mxu0 0
        %3074 = vmatprep.subr.bf16.mxu0 0
        %3075 = vmatpush1.bf16.xpose.msra.mxu0 0
        %3076 = vmatprep.subr.bf16.mxu0 0
        %3077 = vmatpush1.bf16.xpose.msra.mxu0 0
        %3078 = vmatprep.subr.bf16.mxu0 0
        %3079 = vmatpush1.bf16.xpose.msra.mxu0 0
        %3080 = vmatprep.subr.bf16.mxu0 0
        %3081 = vmatpush1.bf16.xpose.msra.mxu0 0
        %3082 = vmatprep.subr.bf16.mxu0 0
        %3083 = vmatpush1.bf16.xpose.msra.mxu0 %v3066
        %3084 = vmatprep.subr.bf16.mxu0 0
        %3085 = vmatpush2.bf16.xpose.msra.mxu0 0
        %3086 = vmatprep.subr.bf16.mxu0 0
        %3087 = vmatpush2.bf16.xpose.msra.mxu0 0
        %3088 = vmatprep.subr.bf16.mxu0 0
        %3089 = vmatpush2.bf16.xpose.msra.mxu0 0
        %3090 = vmatprep.subr.bf16.mxu0 0
        %3091 = vmatpush2.bf16.xpose.msra.mxu0 0
        %3092 = vmatprep.subr.bf16.mxu0 0
        %3093 = vmatpush2.bf16.xpose.msra.mxu0 0
        %3094 = vmatprep.subr.bf16.mxu0 0
        %3095 = vmatpush2.bf16.xpose.msra.mxu0 0
        %3096 = vmatprep.subr.bf16.mxu0 0
        %3097 = vmatpush2.bf16.xpose.msra.mxu0 0
        %3098 = vmatprep.subr.bf16.mxu0 0
        %3099 = vmatpush2.bf16.xpose.msra.mxu0 0
        %3100 = vmatprep.mubr.bf16.mxu0 0
        %3101 = vmatmul.mubr.bf16.gmra.mxu0 %v3063
        %v3102 = vpop.f32.mrf.mxu0
        %v3103 = vadd.f32 0.0, %v3102
        %v3104 = vpop.f32.mrf.mxu0
        %v3105 = vpop.f32.mrf.mxu0
        %v3106 = vadd.f32 0.0, %v3105
        %v3107 = vpop.f32.mrf.mxu0
        %3108 = vdwg.mxu0
        %3109 = vrot.lane.b32.xlu0 %v830, 96
        %v3110 = vpop.permute.xlu0 %3109
        %3111 = vrot.lane.b32.xlu0 %v838, 96
        %v3112 = vpop.permute.xlu0 %3111
        %v3114 = vsel %vm847, %v3110, 0
        %v3117 = vsel %vm847, %v3112, 0
        %3119 = vmatprep.subr.bf16.mxu0 0
        %3120 = vmatpush1.bf16.xpose.msra.mxu0 0
        %3121 = vmatprep.subr.bf16.mxu0 0
        %3122 = vmatpush1.bf16.xpose.msra.mxu0 0
        %3123 = vmatprep.subr.bf16.mxu0 0
        %3124 = vmatpush1.bf16.xpose.msra.mxu0 0
        %3125 = vmatprep.subr.bf16.mxu0 0
        %3126 = vmatpush1.bf16.xpose.msra.mxu0 0
        %3127 = vmatprep.subr.bf16.mxu0 0
        %3128 = vmatpush1.bf16.xpose.msra.mxu0 0
        %3129 = vmatprep.subr.bf16.mxu0 0
        %3130 = vmatpush1.bf16.xpose.msra.mxu0 0
        %3131 = vmatprep.subr.bf16.mxu0 0
        %3132 = vmatpush1.bf16.xpose.msra.mxu0 0
        %3133 = vmatprep.subr.bf16.mxu0 0
        %3134 = vmatpush1.bf16.xpose.msra.mxu0 %v3117
        %3135 = vmatprep.subr.bf16.mxu0 0
        %3136 = vmatpush2.bf16.xpose.msra.mxu0 0
        %3137 = vmatprep.subr.bf16.mxu0 0
        %3138 = vmatpush2.bf16.xpose.msra.mxu0 0
        %3139 = vmatprep.subr.bf16.mxu0 0
        %3140 = vmatpush2.bf16.xpose.msra.mxu0 0
        %3141 = vmatprep.subr.bf16.mxu0 0
        %3142 = vmatpush2.bf16.xpose.msra.mxu0 0
        %3143 = vmatprep.subr.bf16.mxu0 0
        %3144 = vmatpush2.bf16.xpose.msra.mxu0 0
        %3145 = vmatprep.subr.bf16.mxu0 0
        %3146 = vmatpush2.bf16.xpose.msra.mxu0 0
        %3147 = vmatprep.subr.bf16.mxu0 0
        %3148 = vmatpush2.bf16.xpose.msra.mxu0 0
        %3149 = vmatprep.subr.bf16.mxu0 0
        %3150 = vmatpush2.bf16.xpose.msra.mxu0 0
        %3151 = vmatprep.mubr.bf16.mxu0 0
        %3152 = vmatmul.mubr.bf16.gmra.mxu0 %v3114
        %v3153 = vpop.f32.mrf.mxu0
        %v3154 = vadd.f32 0.0, %v3153
        %v3155 = vpop.f32.mrf.mxu0
        %v3156 = vpop.f32.mrf.mxu0
        %v3157 = vadd.f32 0.0, %v3156
        %v3158 = vpop.f32.mrf.mxu0
        %3159 = vdwg.mxu0
        %v3160 = vsel %vm847, %v2797, -inf
        %3161 = vmax.xlane.f32.xlu0 %v3160
        %v3162 = vpop.xlane.xlu0 %3161
        %v3163 = vsel %vm847, %v2800, -inf
        %3164 = vmax.xlane.f32.xlu0 %v3163
        %v3165 = vpop.xlane.xlu0 %3164
        %v3166 = vsel %vm847, %v2848, -inf
        %3167 = vmax.xlane.f32.xlu0 %v3166
        %v3168 = vpop.xlane.xlu0 %3167
        %v3169 = vsel %vm847, %v2851, -inf
        %3170 = vmax.xlane.f32.xlu0 %v3169
        %v3171 = vpop.xlane.xlu0 %3170
        %v3172 = vsel %vm847, %v2899, -inf
        %3173 = vmax.xlane.f32.xlu0 %v3172
        %v3174 = vpop.xlane.xlu0 %3173
        %v3175 = vsel %vm847, %v2902, -inf
        %3176 = vmax.xlane.f32.xlu0 %v3175
        %v3177 = vpop.xlane.xlu0 %3176
        %v3178 = vsel %vm847, %v2950, -inf
        %3179 = vmax.xlane.f32.xlu0 %v3178
        %v3180 = vpop.xlane.xlu0 %3179
        %v3181 = vsel %vm847, %v2953, -inf
        %3182 = vmax.xlane.f32.xlu0 %v3181
        %v3183 = vpop.xlane.xlu0 %3182
        %v3184 = vsel %vm847, %v3001, -inf
        %3185 = vmax.xlane.f32.xlu0 %v3184
        %v3186 = vpop.xlane.xlu0 %3185
        %v3187 = vsel %vm847, %v3004, -inf
        %3188 = vmax.xlane.f32.xlu0 %v3187
        %v3189 = vpop.xlane.xlu0 %3188
        %v3190 = vsel %vm847, %v3052, -inf
        %3191 = vmax.xlane.f32.xlu0 %v3190
        %v3192 = vpop.xlane.xlu0 %3191
        %v3193 = vsel %vm847, %v3055, -inf
        %3194 = vmax.xlane.f32.xlu0 %v3193
        %v3195 = vpop.xlane.xlu0 %3194
        %v3196 = vsel %vm847, %v3103, -inf
        %3197 = vmax.xlane.f32.xlu0 %v3196
        %v3198 = vpop.xlane.xlu0 %3197
        %v3199 = vsel %vm847, %v3106, -inf
        %3200 = vmax.xlane.f32.xlu0 %v3199
        %v3201 = vpop.xlane.xlu0 %3200
        %v3202 = vsel %vm847, %v3154, -inf
        %3203 = vmax.xlane.f32.xlu0 %v3202
        %v3204 = vpop.xlane.xlu0 %3203
        %v3205 = vsel %vm847, %v3157, -inf
        %3206 = vmax.xlane.f32.xlu0 %v3205
        %v3207 = vpop.xlane.xlu0 %3206
        %v3208 = vsub.f32 %v2797, %v3162
        %v3209 = vsub.f32 %v2800, %v3165
        %v3210 = vsub.f32 %v2848, %v3168
        %v3211 = vsub.f32 %v2851, %v3171
        %v3212 = vsub.f32 %v2899, %v3174
        %v3213 = vsub.f32 %v2902, %v3177
        %v3214 = vsub.f32 %v2950, %v3180
        %v3215 = vsub.f32 %v2953, %v3183
        %v3216 = vsub.f32 %v3001, %v3186
        %v3217 = vsub.f32 %v3004, %v3189
        %v3218 = vsub.f32 %v3052, %v3192
        %v3219 = vsub.f32 %v3055, %v3195
        %v3220 = vsub.f32 %v3103, %v3198
        %v3221 = vsub.f32 %v3106, %v3201
        %v3222 = vsub.f32 %v3154, %v3204
        %v3223 = vsub.f32 %v3157, %v3207
        %v3224 = vmul.f32 %v3208, 1.442695
        %v3225 = vpow.pop %v3224
        %v3226 = vmul.f32 %v3209, 1.442695
        %v3227 = vpow.pop %v3226
        %v3228 = vmul.f32 %v3210, 1.442695
        %v3229 = vpow.pop %v3228
        %v3230 = vmul.f32 %v3211, 1.442695
        %v3231 = vpow.pop %v3230
        %v3232 = vmul.f32 %v3212, 1.442695
        %v3233 = vpow.pop %v3232
        %v3234 = vmul.f32 %v3213, 1.442695
        %v3235 = vpow.pop %v3234
        %v3236 = vmul.f32 %v3214, 1.442695
        %v3237 = vpow.pop %v3236
        %v3238 = vmul.f32 %v3215, 1.442695
        %v3239 = vpow.pop %v3238
        %v3240 = vmul.f32 %v3216, 1.442695
        %v3241 = vpow.pop %v3240
        %v3242 = vmul.f32 %v3217, 1.442695
        %v3243 = vpow.pop %v3242
        %v3244 = vmul.f32 %v3218, 1.442695
        %v3245 = vpow.pop %v3244
        %v3246 = vmul.f32 %v3219, 1.442695
        %v3247 = vpow.pop %v3246
        %v3248 = vmul.f32 %v3220, 1.442695
        %v3249 = vpow.pop %v3248
        %v3250 = vmul.f32 %v3221, 1.442695
        %v3251 = vpow.pop %v3250
        %v3252 = vmul.f32 %v3222, 1.442695
        %v3253 = vpow.pop %v3252
        %v3254 = vmul.f32 %v3223, 1.442695
        %v3255 = vpow.pop %v3254
        %v3256 = vsel %vm847, %v3225, 0.0
        %3257 = vadd.xlane.f32.xlu0 %v3256
        %v3258 = vpop.xlane.xlu0 %3257
        %v3259 = vsel %vm847, %v3227, 0.0
        %3260 = vadd.xlane.f32.xlu0 %v3259
        %v3261 = vpop.xlane.xlu0 %3260
        %v3262 = vsel %vm847, %v3229, 0.0
        %3263 = vadd.xlane.f32.xlu0 %v3262
        %v3264 = vpop.xlane.xlu0 %3263
        %v3265 = vsel %vm847, %v3231, 0.0
        %3266 = vadd.xlane.f32.xlu0 %v3265
        %v3267 = vpop.xlane.xlu0 %3266
        %v3268 = vsel %vm847, %v3233, 0.0
        %3269 = vadd.xlane.f32.xlu0 %v3268
        %v3270 = vpop.xlane.xlu0 %3269
        %v3271 = vsel %vm847, %v3235, 0.0
        %3272 = vadd.xlane.f32.xlu0 %v3271
        %v3273 = vpop.xlane.xlu0 %3272
        %v3274 = vsel %vm847, %v3237, 0.0
        %3275 = vadd.xlane.f32.xlu0 %v3274
        %v3276 = vpop.xlane.xlu0 %3275
        %v3277 = vsel %vm847, %v3239, 0.0
        %3278 = vadd.xlane.f32.xlu0 %v3277
        %v3279 = vpop.xlane.xlu0 %3278
        %v3280 = vsel %vm847, %v3241, 0.0
        %3281 = vadd.xlane.f32.xlu0 %v3280
        %v3282 = vpop.xlane.xlu0 %3281
        %v3283 = vsel %vm847, %v3243, 0.0
        %3284 = vadd.xlane.f32.xlu0 %v3283
        %v3285 = vpop.xlane.xlu0 %3284
        %v3286 = vsel %vm847, %v3245, 0.0
        %3287 = vadd.xlane.f32.xlu0 %v3286
        %v3288 = vpop.xlane.xlu0 %3287
        %v3289 = vsel %vm847, %v3247, 0.0
        %3290 = vadd.xlane.f32.xlu0 %v3289
        %v3291 = vpop.xlane.xlu0 %3290
        %v3292 = vsel %vm847, %v3249, 0.0
        %3293 = vadd.xlane.f32.xlu0 %v3292
        %v3294 = vpop.xlane.xlu0 %3293
        %v3295 = vsel %vm847, %v3251, 0.0
        %3296 = vadd.xlane.f32.xlu0 %v3295
        %v3297 = vpop.xlane.xlu0 %3296
        %v3298 = vsel %vm847, %v3253, 0.0
        %3299 = vadd.xlane.f32.xlu0 %v3298
        %v3300 = vpop.xlane.xlu0 %3299
        %v3301 = vsel %vm847, %v3255, 0.0
        %3302 = vadd.xlane.f32.xlu0 %v3301
        %v3303 = vpop.xlane.xlu0 %3302
        %v3304 = vrcp.pop %v3258
        %v3305 = vmul.f32 %v3225, %v3304
        %v3306 = vrcp.pop %v3261
        %v3307 = vmul.f32 %v3227, %v3306
        %v3308 = vrcp.pop %v3264
        %v3309 = vmul.f32 %v3229, %v3308
        %v3310 = vrcp.pop %v3267
        %v3311 = vmul.f32 %v3231, %v3310
        %v3312 = vrcp.pop %v3270
        %v3313 = vmul.f32 %v3233, %v3312
        %v3314 = vrcp.pop %v3273
        %v3315 = vmul.f32 %v3235, %v3314
        %v3316 = vrcp.pop %v3276
        %v3317 = vmul.f32 %v3237, %v3316
        %v3318 = vrcp.pop %v3279
        %v3319 = vmul.f32 %v3239, %v3318
        %v3320 = vrcp.pop %v3282
        %v3321 = vmul.f32 %v3241, %v3320
        %v3322 = vrcp.pop %v3285
        %v3323 = vmul.f32 %v3243, %v3322
        %v3324 = vrcp.pop %v3288
        %v3325 = vmul.f32 %v3245, %v3324
        %v3326 = vrcp.pop %v3291
        %v3327 = vmul.f32 %v3247, %v3326
        %v3328 = vrcp.pop %v3294
        %v3329 = vmul.f32 %v3249, %v3328
        %v3330 = vrcp.pop %v3297
        %v3331 = vmul.f32 %v3251, %v3330
        %v3332 = vrcp.pop %v3300
        %v3333 = vmul.f32 %v3253, %v3332
        %v3334 = vrcp.pop %v3303
        %v3335 = vmul.f32 %v3255, %v3334
        %v3336 = vpack.c.bf16 %v3307, %v3305
        %v3337 = vpack.c.bf16 %v3311, %v3309
        %v3338 = vpack.c.bf16 %v3315, %v3313
        %v3339 = vpack.c.bf16 %v3319, %v3317
        %v3340 = vpack.c.bf16 %v3323, %v3321
        %v3341 = vpack.c.bf16 %v3327, %v3325
        %v3342 = vpack.c.bf16 %v3331, %v3329
        %v3343 = vpack.c.bf16 %v3335, %v3333
        %3344 = vrot.lane.b32.xlu0 %v839, 96
        %v3345 = vpop.permute.xlu0 %3344
        %v3348 = vsel %vm847, %v3336, 0
        %3350 = vmatprep.subr.bf16.mxu0 0
        %3351 = vmatpush1.bf16.msra.mxu0 0
        %3352 = vmatprep.subr.bf16.mxu0 0
        %3353 = vmatpush1.bf16.msra.mxu0 0
        %3354 = vmatprep.subr.bf16.mxu0 0
        %3355 = vmatpush1.bf16.msra.mxu0 0
        %3356 = vmatprep.subr.bf16.mxu0 0
        %3357 = vmatpush1.bf16.msra.mxu0 0
        %3358 = vmatprep.subr.bf16.mxu0 0
        %3359 = vmatpush1.bf16.msra.mxu0 0
        %3360 = vmatprep.subr.bf16.mxu0 0
        %3361 = vmatpush1.bf16.msra.mxu0 0
        %3362 = vmatprep.subr.bf16.mxu0 0
        %3363 = vmatpush1.bf16.msra.mxu0 0
        %3364 = vmatprep.subr.bf16.mxu0 0
        %3365 = vmatpush1.bf16.msra.mxu0 %v3345
        %3366 = vmatprep.subr.bf16.mxu0 0
        %3367 = vmatpush2.bf16.msra.mxu0 0
        %3368 = vmatprep.subr.bf16.mxu0 0
        %3369 = vmatpush2.bf16.msra.mxu0 0
        %3370 = vmatprep.subr.bf16.mxu0 0
        %3371 = vmatpush2.bf16.msra.mxu0 0
        %3372 = vmatprep.subr.bf16.mxu0 0
        %3373 = vmatpush2.bf16.msra.mxu0 0
        %3374 = vmatprep.subr.bf16.mxu0 0
        %3375 = vmatpush2.bf16.msra.mxu0 0
        %3376 = vmatprep.subr.bf16.mxu0 0
        %3377 = vmatpush2.bf16.msra.mxu0 0
        %3378 = vmatprep.subr.bf16.mxu0 0
        %3379 = vmatpush2.bf16.msra.mxu0 0
        %3380 = vmatprep.subr.bf16.mxu0 0
        %3381 = vmatpush2.bf16.msra.mxu0 0
        %3382 = vmatprep.mubr.bf16.mxu0 0
        %3383 = vmatmul.mubr.bf16.gmra.mxu0 %v3348
        %v3384 = vpop.f32.mrf.mxu0
        %v3385 = vadd.f32 0.0, %v3384
        %v3386 = vpop.f32.mrf.mxu0
        %v3387 = vpop.f32.mrf.mxu0
        %v3388 = vadd.f32 0.0, %v3387
        %v3389 = vpop.f32.mrf.mxu0
        %3390 = vdwg.mxu0
        %3391 = vrot.lane.b32.xlu0 %v840, 96
        %v3392 = vpop.permute.xlu0 %3391
        %v3395 = vsel %vm847, %v3337, 0
        %3397 = vmatprep.subr.bf16.mxu0 0
        %3398 = vmatpush1.bf16.msra.mxu0 0
        %3399 = vmatprep.subr.bf16.mxu0 0
        %3400 = vmatpush1.bf16.msra.mxu0 0
        %3401 = vmatprep.subr.bf16.mxu0 0
        %3402 = vmatpush1.bf16.msra.mxu0 0
        %3403 = vmatprep.subr.bf16.mxu0 0
        %3404 = vmatpush1.bf16.msra.mxu0 0
        %3405 = vmatprep.subr.bf16.mxu0 0
        %3406 = vmatpush1.bf16.msra.mxu0 0
        %3407 = vmatprep.subr.bf16.mxu0 0
        %3408 = vmatpush1.bf16.msra.mxu0 0
        %3409 = vmatprep.subr.bf16.mxu0 0
        %3410 = vmatpush1.bf16.msra.mxu0 0
        %3411 = vmatprep.subr.bf16.mxu0 0
        %3412 = vmatpush1.bf16.msra.mxu0 %v3392
        %3413 = vmatprep.subr.bf16.mxu0 0
        %3414 = vmatpush2.bf16.msra.mxu0 0
        %3415 = vmatprep.subr.bf16.mxu0 0
        %3416 = vmatpush2.bf16.msra.mxu0 0
        %3417 = vmatprep.subr.bf16.mxu0 0
        %3418 = vmatpush2.bf16.msra.mxu0 0
        %3419 = vmatprep.subr.bf16.mxu0 0
        %3420 = vmatpush2.bf16.msra.mxu0 0
        %3421 = vmatprep.subr.bf16.mxu0 0
        %3422 = vmatpush2.bf16.msra.mxu0 0
        %3423 = vmatprep.subr.bf16.mxu0 0
        %3424 = vmatpush2.bf16.msra.mxu0 0
        %3425 = vmatprep.subr.bf16.mxu0 0
        %3426 = vmatpush2.bf16.msra.mxu0 0
        %3427 = vmatprep.subr.bf16.mxu0 0
        %3428 = vmatpush2.bf16.msra.mxu0 0
        %3429 = vmatprep.mubr.bf16.mxu0 0
        %3430 = vmatmul.mubr.bf16.gmra.mxu0 %v3395
        %v3431 = vpop.f32.mrf.mxu0
        %v3432 = vadd.f32 0.0, %v3431
        %v3433 = vpop.f32.mrf.mxu0
        %v3434 = vpop.f32.mrf.mxu0
        %v3435 = vadd.f32 0.0, %v3434
        %v3436 = vpop.f32.mrf.mxu0
        %3437 = vdwg.mxu0
        %3438 = vrot.lane.b32.xlu0 %v841, 96
        %v3439 = vpop.permute.xlu0 %3438
        %v3442 = vsel %vm847, %v3338, 0
        %3444 = vmatprep.subr.bf16.mxu0 0
        %3445 = vmatpush1.bf16.msra.mxu0 0
        %3446 = vmatprep.subr.bf16.mxu0 0
        %3447 = vmatpush1.bf16.msra.mxu0 0
        %3448 = vmatprep.subr.bf16.mxu0 0
        %3449 = vmatpush1.bf16.msra.mxu0 0
        %3450 = vmatprep.subr.bf16.mxu0 0
        %3451 = vmatpush1.bf16.msra.mxu0 0
        %3452 = vmatprep.subr.bf16.mxu0 0
        %3453 = vmatpush1.bf16.msra.mxu0 0
        %3454 = vmatprep.subr.bf16.mxu0 0
        %3455 = vmatpush1.bf16.msra.mxu0 0
        %3456 = vmatprep.subr.bf16.mxu0 0
        %3457 = vmatpush1.bf16.msra.mxu0 0
        %3458 = vmatprep.subr.bf16.mxu0 0
        %3459 = vmatpush1.bf16.msra.mxu0 %v3439
        %3460 = vmatprep.subr.bf16.mxu0 0
        %3461 = vmatpush2.bf16.msra.mxu0 0
        %3462 = vmatprep.subr.bf16.mxu0 0
        %3463 = vmatpush2.bf16.msra.mxu0 0
        %3464 = vmatprep.subr.bf16.mxu0 0
        %3465 = vmatpush2.bf16.msra.mxu0 0
        %3466 = vmatprep.subr.bf16.mxu0 0
        %3467 = vmatpush2.bf16.msra.mxu0 0
        %3468 = vmatprep.subr.bf16.mxu0 0
        %3469 = vmatpush2.bf16.msra.mxu0 0
        %3470 = vmatprep.subr.bf16.mxu0 0
        %3471 = vmatpush2.bf16.msra.mxu0 0
        %3472 = vmatprep.subr.bf16.mxu0 0
        %3473 = vmatpush2.bf16.msra.mxu0 0
        %3474 = vmatprep.subr.bf16.mxu0 0
        %3475 = vmatpush2.bf16.msra.mxu0 0
        %3476 = vmatprep.mubr.bf16.mxu0 0
        %3477 = vmatmul.mubr.bf16.gmra.mxu0 %v3442
        %v3478 = vpop.f32.mrf.mxu0
        %v3479 = vadd.f32 0.0, %v3478
        %v3480 = vpop.f32.mrf.mxu0
        %v3481 = vpop.f32.mrf.mxu0
        %v3482 = vadd.f32 0.0, %v3481
        %v3483 = vpop.f32.mrf.mxu0
        %3484 = vdwg.mxu0
        %3485 = vrot.lane.b32.xlu0 %v842, 96
        %v3486 = vpop.permute.xlu0 %3485
        %v3489 = vsel %vm847, %v3339, 0
        %3491 = vmatprep.subr.bf16.mxu0 0
        %3492 = vmatpush1.bf16.msra.mxu0 0
        %3493 = vmatprep.subr.bf16.mxu0 0
        %3494 = vmatpush1.bf16.msra.mxu0 0
        %3495 = vmatprep.subr.bf16.mxu0 0
        %3496 = vmatpush1.bf16.msra.mxu0 0
        %3497 = vmatprep.subr.bf16.mxu0 0
        %3498 = vmatpush1.bf16.msra.mxu0 0
        %3499 = vmatprep.subr.bf16.mxu0 0
        %3500 = vmatpush1.bf16.msra.mxu0 0
        %3501 = vmatprep.subr.bf16.mxu0 0
        %3502 = vmatpush1.bf16.msra.mxu0 0
        %3503 = vmatprep.subr.bf16.mxu0 0
        %3504 = vmatpush1.bf16.msra.mxu0 0
        %3505 = vmatprep.subr.bf16.mxu0 0
        %3506 = vmatpush1.bf16.msra.mxu0 %v3486
        %3507 = vmatprep.subr.bf16.mxu0 0
        %3508 = vmatpush2.bf16.msra.mxu0 0
        %3509 = vmatprep.subr.bf16.mxu0 0
        %3510 = vmatpush2.bf16.msra.mxu0 0
        %3511 = vmatprep.subr.bf16.mxu0 0
        %3512 = vmatpush2.bf16.msra.mxu0 0
        %3513 = vmatprep.subr.bf16.mxu0 0
        %3514 = vmatpush2.bf16.msra.mxu0 0
        %3515 = vmatprep.subr.bf16.mxu0 0
        %3516 = vmatpush2.bf16.msra.mxu0 0
        %3517 = vmatprep.subr.bf16.mxu0 0
        %3518 = vmatpush2.bf16.msra.mxu0 0
        %3519 = vmatprep.subr.bf16.mxu0 0
        %3520 = vmatpush2.bf16.msra.mxu0 0
        %3521 = vmatprep.subr.bf16.mxu0 0
        %3522 = vmatpush2.bf16.msra.mxu0 0
        %3523 = vmatprep.mubr.bf16.mxu0 0
        %3524 = vmatmul.mubr.bf16.gmra.mxu0 %v3489
        %v3525 = vpop.f32.mrf.mxu0
        %v3526 = vadd.f32 0.0, %v3525
        %v3527 = vpop.f32.mrf.mxu0
        %v3528 = vpop.f32.mrf.mxu0
        %v3529 = vadd.f32 0.0, %v3528
        %v3530 = vpop.f32.mrf.mxu0
        %3531 = vdwg.mxu0
        %3532 = vrot.lane.b32.xlu0 %v843, 96
        %v3533 = vpop.permute.xlu0 %3532
        %v3536 = vsel %vm847, %v3340, 0
        %3538 = vmatprep.subr.bf16.mxu0 0
        %3539 = vmatpush1.bf16.msra.mxu0 0
        %3540 = vmatprep.subr.bf16.mxu0 0
        %3541 = vmatpush1.bf16.msra.mxu0 0
        %3542 = vmatprep.subr.bf16.mxu0 0
        %3543 = vmatpush1.bf16.msra.mxu0 0
        %3544 = vmatprep.subr.bf16.mxu0 0
        %3545 = vmatpush1.bf16.msra.mxu0 0
        %3546 = vmatprep.subr.bf16.mxu0 0
        %3547 = vmatpush1.bf16.msra.mxu0 0
        %3548 = vmatprep.subr.bf16.mxu0 0
        %3549 = vmatpush1.bf16.msra.mxu0 0
        %3550 = vmatprep.subr.bf16.mxu0 0
        %3551 = vmatpush1.bf16.msra.mxu0 0
        %3552 = vmatprep.subr.bf16.mxu0 0
        %3553 = vmatpush1.bf16.msra.mxu0 %v3533
        %3554 = vmatprep.subr.bf16.mxu0 0
        %3555 = vmatpush2.bf16.msra.mxu0 0
        %3556 = vmatprep.subr.bf16.mxu0 0
        %3557 = vmatpush2.bf16.msra.mxu0 0
        %3558 = vmatprep.subr.bf16.mxu0 0
        %3559 = vmatpush2.bf16.msra.mxu0 0
        %3560 = vmatprep.subr.bf16.mxu0 0
        %3561 = vmatpush2.bf16.msra.mxu0 0
        %3562 = vmatprep.subr.bf16.mxu0 0
        %3563 = vmatpush2.bf16.msra.mxu0 0
        %3564 = vmatprep.subr.bf16.mxu0 0
        %3565 = vmatpush2.bf16.msra.mxu0 0
        %3566 = vmatprep.subr.bf16.mxu0 0
        %3567 = vmatpush2.bf16.msra.mxu0 0
        %3568 = vmatprep.subr.bf16.mxu0 0
        %3569 = vmatpush2.bf16.msra.mxu0 0
        %3570 = vmatprep.mubr.bf16.mxu0 0
        %3571 = vmatmul.mubr.bf16.gmra.mxu0 %v3536
        %v3572 = vpop.f32.mrf.mxu0
        %v3573 = vadd.f32 0.0, %v3572
        %v3574 = vpop.f32.mrf.mxu0
        %v3575 = vpop.f32.mrf.mxu0
        %v3576 = vadd.f32 0.0, %v3575
        %v3577 = vpop.f32.mrf.mxu0
        %3578 = vdwg.mxu0
        %3579 = vrot.lane.b32.xlu0 %v844, 96
        %v3580 = vpop.permute.xlu0 %3579
        %v3583 = vsel %vm847, %v3341, 0
        %3585 = vmatprep.subr.bf16.mxu0 0
        %3586 = vmatpush1.bf16.msra.mxu0 0
        %3587 = vmatprep.subr.bf16.mxu0 0
        %3588 = vmatpush1.bf16.msra.mxu0 0
        %3589 = vmatprep.subr.bf16.mxu0 0
        %3590 = vmatpush1.bf16.msra.mxu0 0
        %3591 = vmatprep.subr.bf16.mxu0 0
        %3592 = vmatpush1.bf16.msra.mxu0 0
        %3593 = vmatprep.subr.bf16.mxu0 0
        %3594 = vmatpush1.bf16.msra.mxu0 0
        %3595 = vmatprep.subr.bf16.mxu0 0
        %3596 = vmatpush1.bf16.msra.mxu0 0
        %3597 = vmatprep.subr.bf16.mxu0 0
        %3598 = vmatpush1.bf16.msra.mxu0 0
        %3599 = vmatprep.subr.bf16.mxu0 0
        %3600 = vmatpush1.bf16.msra.mxu0 %v3580
        %3601 = vmatprep.subr.bf16.mxu0 0
        %3602 = vmatpush2.bf16.msra.mxu0 0
        %3603 = vmatprep.subr.bf16.mxu0 0
        %3604 = vmatpush2.bf16.msra.mxu0 0
        %3605 = vmatprep.subr.bf16.mxu0 0
        %3606 = vmatpush2.bf16.msra.mxu0 0
        %3607 = vmatprep.subr.bf16.mxu0 0
        %3608 = vmatpush2.bf16.msra.mxu0 0
        %3609 = vmatprep.subr.bf16.mxu0 0
        %3610 = vmatpush2.bf16.msra.mxu0 0
        %3611 = vmatprep.subr.bf16.mxu0 0
        %3612 = vmatpush2.bf16.msra.mxu0 0
        %3613 = vmatprep.subr.bf16.mxu0 0
        %3614 = vmatpush2.bf16.msra.mxu0 0
        %3615 = vmatprep.subr.bf16.mxu0 0
        %3616 = vmatpush2.bf16.msra.mxu0 0
        %3617 = vmatprep.mubr.bf16.mxu0 0
        %3618 = vmatmul.mubr.bf16.gmra.mxu0 %v3583
        %v3619 = vpop.f32.mrf.mxu0
        %v3620 = vadd.f32 0.0, %v3619
        %v3621 = vpop.f32.mrf.mxu0
        %v3622 = vpop.f32.mrf.mxu0
        %v3623 = vadd.f32 0.0, %v3622
        %v3624 = vpop.f32.mrf.mxu0
        %3625 = vdwg.mxu0
        %3626 = vrot.lane.b32.xlu0 %v845, 96
        %v3627 = vpop.permute.xlu0 %3626
        %v3630 = vsel %vm847, %v3342, 0
        %3632 = vmatprep.subr.bf16.mxu0 0
        %3633 = vmatpush1.bf16.msra.mxu0 0
        %3634 = vmatprep.subr.bf16.mxu0 0
        %3635 = vmatpush1.bf16.msra.mxu0 0
        %3636 = vmatprep.subr.bf16.mxu0 0
        %3637 = vmatpush1.bf16.msra.mxu0 0
        %3638 = vmatprep.subr.bf16.mxu0 0
        %3639 = vmatpush1.bf16.msra.mxu0 0
        %3640 = vmatprep.subr.bf16.mxu0 0
        %3641 = vmatpush1.bf16.msra.mxu0 0
        %3642 = vmatprep.subr.bf16.mxu0 0
        %3643 = vmatpush1.bf16.msra.mxu0 0
        %3644 = vmatprep.subr.bf16.mxu0 0
        %3645 = vmatpush1.bf16.msra.mxu0 0
        %3646 = vmatprep.subr.bf16.mxu0 0
        %3647 = vmatpush1.bf16.msra.mxu0 %v3627
        %3648 = vmatprep.subr.bf16.mxu0 0
        %3649 = vmatpush2.bf16.msra.mxu0 0
        %3650 = vmatprep.subr.bf16.mxu0 0
        %3651 = vmatpush2.bf16.msra.mxu0 0
        %3652 = vmatprep.subr.bf16.mxu0 0
        %3653 = vmatpush2.bf16.msra.mxu0 0
        %3654 = vmatprep.subr.bf16.mxu0 0
        %3655 = vmatpush2.bf16.msra.mxu0 0
        %3656 = vmatprep.subr.bf16.mxu0 0
        %3657 = vmatpush2.bf16.msra.mxu0 0
        %3658 = vmatprep.subr.bf16.mxu0 0
        %3659 = vmatpush2.bf16.msra.mxu0 0
        %3660 = vmatprep.subr.bf16.mxu0 0
        %3661 = vmatpush2.bf16.msra.mxu0 0
        %3662 = vmatprep.subr.bf16.mxu0 0
        %3663 = vmatpush2.bf16.msra.mxu0 0
        %3664 = vmatprep.mubr.bf16.mxu0 0
        %3665 = vmatmul.mubr.bf16.gmra.mxu0 %v3630
        %v3666 = vpop.f32.mrf.mxu0
        %v3667 = vadd.f32 0.0, %v3666
        %v3668 = vpop.f32.mrf.mxu0
        %v3669 = vpop.f32.mrf.mxu0
        %v3670 = vadd.f32 0.0, %v3669
        %v3671 = vpop.f32.mrf.mxu0
        %3672 = vdwg.mxu0
        %3673 = vrot.lane.b32.xlu0 %v846, 96
        %v3674 = vpop.permute.xlu0 %3673
        %v3677 = vsel %vm847, %v3343, 0
        %3679 = vmatprep.subr.bf16.mxu0 0
        %3680 = vmatpush1.bf16.msra.mxu0 0
        %3681 = vmatprep.subr.bf16.mxu0 0
        %3682 = vmatpush1.bf16.msra.mxu0 0
        %3683 = vmatprep.subr.bf16.mxu0 0
        %3684 = vmatpush1.bf16.msra.mxu0 0
        %3685 = vmatprep.subr.bf16.mxu0 0
        %3686 = vmatpush1.bf16.msra.mxu0 0
        %3687 = vmatprep.subr.bf16.mxu0 0
        %3688 = vmatpush1.bf16.msra.mxu0 0
        %3689 = vmatprep.subr.bf16.mxu0 0
        %3690 = vmatpush1.bf16.msra.mxu0 0
        %3691 = vmatprep.subr.bf16.mxu0 0
        %3692 = vmatpush1.bf16.msra.mxu0 0
        %3693 = vmatprep.subr.bf16.mxu0 0
        %3694 = vmatpush1.bf16.msra.mxu0 %v3674
        %3695 = vmatprep.subr.bf16.mxu0 0
        %3696 = vmatpush2.bf16.msra.mxu0 0
        %3697 = vmatprep.subr.bf16.mxu0 0
        %3698 = vmatpush2.bf16.msra.mxu0 0
        %3699 = vmatprep.subr.bf16.mxu0 0
        %3700 = vmatpush2.bf16.msra.mxu0 0
        %3701 = vmatprep.subr.bf16.mxu0 0
        %3702 = vmatpush2.bf16.msra.mxu0 0
        %3703 = vmatprep.subr.bf16.mxu0 0
        %3704 = vmatpush2.bf16.msra.mxu0 0
        %3705 = vmatprep.subr.bf16.mxu0 0
        %3706 = vmatpush2.bf16.msra.mxu0 0
        %3707 = vmatprep.subr.bf16.mxu0 0
        %3708 = vmatpush2.bf16.msra.mxu0 0
        %3709 = vmatprep.subr.bf16.mxu0 0
        %3710 = vmatpush2.bf16.msra.mxu0 0
        %3711 = vmatprep.mubr.bf16.mxu0 0
        %3712 = vmatmul.mubr.bf16.gmra.mxu0 %v3677
        %v3713 = vpop.f32.mrf.mxu0
        %v3714 = vadd.f32 0.0, %v3713
        %v3715 = vpop.f32.mrf.mxu0
        %v3716 = vpop.f32.mrf.mxu0
        %v3717 = vadd.f32 0.0, %v3716
        %v3718 = vpop.f32.mrf.mxu0
        %3719 = vdwg.mxu0
        %3720 = vrot.lane.b32.xlu0 %v823, 80
        %v3721 = vpop.permute.xlu0 %3720
        %3722 = vrot.lane.b32.xlu0 %v831, 80
        %v3723 = vpop.permute.xlu0 %3722
        %v3725 = vsel %vm847, %v3721, 0
        %v3728 = vsel %vm847, %v3723, 0
        %3730 = vmatprep.subr.bf16.mxu0 0
        %3731 = vmatpush1.bf16.xpose.msra.mxu0 0
        %3732 = vmatprep.subr.bf16.mxu0 0
        %3733 = vmatpush1.bf16.xpose.msra.mxu0 0
        %3734 = vmatprep.subr.bf16.mxu0 0
        %3735 = vmatpush1.bf16.xpose.msra.mxu0 0
        %3736 = vmatprep.subr.bf16.mxu0 0
        %3737 = vmatpush1.bf16.xpose.msra.mxu0 0
        %3738 = vmatprep.subr.bf16.mxu0 0
        %3739 = vmatpush1.bf16.xpose.msra.mxu0 0
        %3740 = vmatprep.subr.bf16.mxu0 0
        %3741 = vmatpush1.bf16.xpose.msra.mxu0 0
        %3742 = vmatprep.subr.bf16.mxu0 0
        %3743 = vmatpush1.bf16.xpose.msra.mxu0 0
        %3744 = vmatprep.subr.bf16.mxu0 0
        %3745 = vmatpush1.bf16.xpose.msra.mxu0 %v3728
        %3746 = vmatprep.subr.bf16.mxu0 0
        %3747 = vmatpush2.bf16.xpose.msra.mxu0 0
        %3748 = vmatprep.subr.bf16.mxu0 0
        %3749 = vmatpush2.bf16.xpose.msra.mxu0 0
        %3750 = vmatprep.subr.bf16.mxu0 0
        %3751 = vmatpush2.bf16.xpose.msra.mxu0 0
        %3752 = vmatprep.subr.bf16.mxu0 0
        %3753 = vmatpush2.bf16.xpose.msra.mxu0 0
        %3754 = vmatprep.subr.bf16.mxu0 0
        %3755 = vmatpush2.bf16.xpose.msra.mxu0 0
        %3756 = vmatprep.subr.bf16.mxu0 0
        %3757 = vmatpush2.bf16.xpose.msra.mxu0 0
        %3758 = vmatprep.subr.bf16.mxu0 0
        %3759 = vmatpush2.bf16.xpose.msra.mxu0 0
        %3760 = vmatprep.subr.bf16.mxu0 0
        %3761 = vmatpush2.bf16.xpose.msra.mxu0 0
        %3762 = vmatprep.mubr.bf16.mxu0 0
        %3763 = vmatmul.mubr.bf16.gmra.mxu0 %v3725
        %v3764 = vpop.f32.mrf.mxu0
        %v3765 = vadd.f32 0.0, %v3764
        %v3766 = vpop.f32.mrf.mxu0
        %v3767 = vpop.f32.mrf.mxu0
        %v3768 = vadd.f32 0.0, %v3767
        %v3769 = vpop.f32.mrf.mxu0
        %3770 = vdwg.mxu0
        %3771 = vrot.lane.b32.xlu0 %v824, 80
        %v3772 = vpop.permute.xlu0 %3771
        %3773 = vrot.lane.b32.xlu0 %v832, 80
        %v3774 = vpop.permute.xlu0 %3773
        %v3776 = vsel %vm847, %v3772, 0
        %v3779 = vsel %vm847, %v3774, 0
        %3781 = vmatprep.subr.bf16.mxu0 0
        %3782 = vmatpush1.bf16.xpose.msra.mxu0 0
        %3783 = vmatprep.subr.bf16.mxu0 0
        %3784 = vmatpush1.bf16.xpose.msra.mxu0 0
        %3785 = vmatprep.subr.bf16.mxu0 0
        %3786 = vmatpush1.bf16.xpose.msra.mxu0 0
        %3787 = vmatprep.subr.bf16.mxu0 0
        %3788 = vmatpush1.bf16.xpose.msra.mxu0 0
        %3789 = vmatprep.subr.bf16.mxu0 0
        %3790 = vmatpush1.bf16.xpose.msra.mxu0 0
        %3791 = vmatprep.subr.bf16.mxu0 0
        %3792 = vmatpush1.bf16.xpose.msra.mxu0 0
        %3793 = vmatprep.subr.bf16.mxu0 0
        %3794 = vmatpush1.bf16.xpose.msra.mxu0 0
        %3795 = vmatprep.subr.bf16.mxu0 0
        %3796 = vmatpush1.bf16.xpose.msra.mxu0 %v3779
        %3797 = vmatprep.subr.bf16.mxu0 0
        %3798 = vmatpush2.bf16.xpose.msra.mxu0 0
        %3799 = vmatprep.subr.bf16.mxu0 0
        %3800 = vmatpush2.bf16.xpose.msra.mxu0 0
        %3801 = vmatprep.subr.bf16.mxu0 0
        %3802 = vmatpush2.bf16.xpose.msra.mxu0 0
        %3803 = vmatprep.subr.bf16.mxu0 0
        %3804 = vmatpush2.bf16.xpose.msra.mxu0 0
        %3805 = vmatprep.subr.bf16.mxu0 0
        %3806 = vmatpush2.bf16.xpose.msra.mxu0 0
        %3807 = vmatprep.subr.bf16.mxu0 0
        %3808 = vmatpush2.bf16.xpose.msra.mxu0 0
        %3809 = vmatprep.subr.bf16.mxu0 0
        %3810 = vmatpush2.bf16.xpose.msra.mxu0 0
        %3811 = vmatprep.subr.bf16.mxu0 0
        %3812 = vmatpush2.bf16.xpose.msra.mxu0 0
        %3813 = vmatprep.mubr.bf16.mxu0 0
        %3814 = vmatmul.mubr.bf16.gmra.mxu0 %v3776
        %v3815 = vpop.f32.mrf.mxu0
        %v3816 = vadd.f32 0.0, %v3815
        %v3817 = vpop.f32.mrf.mxu0
        %v3818 = vpop.f32.mrf.mxu0
        %v3819 = vadd.f32 0.0, %v3818
        %v3820 = vpop.f32.mrf.mxu0
        %3821 = vdwg.mxu0
        %3822 = vrot.lane.b32.xlu0 %v825, 80
        %v3823 = vpop.permute.xlu0 %3822
        %3824 = vrot.lane.b32.xlu0 %v833, 80
        %v3825 = vpop.permute.xlu0 %3824
        %v3827 = vsel %vm847, %v3823, 0
        %v3830 = vsel %vm847, %v3825, 0
        %3832 = vmatprep.subr.bf16.mxu0 0
        %3833 = vmatpush1.bf16.xpose.msra.mxu0 0
        %3834 = vmatprep.subr.bf16.mxu0 0
        %3835 = vmatpush1.bf16.xpose.msra.mxu0 0
        %3836 = vmatprep.subr.bf16.mxu0 0
        %3837 = vmatpush1.bf16.xpose.msra.mxu0 0
        %3838 = vmatprep.subr.bf16.mxu0 0
        %3839 = vmatpush1.bf16.xpose.msra.mxu0 0
        %3840 = vmatprep.subr.bf16.mxu0 0
        %3841 = vmatpush1.bf16.xpose.msra.mxu0 0
        %3842 = vmatprep.subr.bf16.mxu0 0
        %3843 = vmatpush1.bf16.xpose.msra.mxu0 0
        %3844 = vmatprep.subr.bf16.mxu0 0
        %3845 = vmatpush1.bf16.xpose.msra.mxu0 0
        %3846 = vmatprep.subr.bf16.mxu0 0
        %3847 = vmatpush1.bf16.xpose.msra.mxu0 %v3830
        %3848 = vmatprep.subr.bf16.mxu0 0
        %3849 = vmatpush2.bf16.xpose.msra.mxu0 0
        %3850 = vmatprep.subr.bf16.mxu0 0
        %3851 = vmatpush2.bf16.xpose.msra.mxu0 0
        %3852 = vmatprep.subr.bf16.mxu0 0
        %3853 = vmatpush2.bf16.xpose.msra.mxu0 0
        %3854 = vmatprep.subr.bf16.mxu0 0
        %3855 = vmatpush2.bf16.xpose.msra.mxu0 0
        %3856 = vmatprep.subr.bf16.mxu0 0
        %3857 = vmatpush2.bf16.xpose.msra.mxu0 0
        %3858 = vmatprep.subr.bf16.mxu0 0
        %3859 = vmatpush2.bf16.xpose.msra.mxu0 0
        %3860 = vmatprep.subr.bf16.mxu0 0
        %3861 = vmatpush2.bf16.xpose.msra.mxu0 0
        %3862 = vmatprep.subr.bf16.mxu0 0
        %3863 = vmatpush2.bf16.xpose.msra.mxu0 0
        %3864 = vmatprep.mubr.bf16.mxu0 0
        %3865 = vmatmul.mubr.bf16.gmra.mxu0 %v3827
        %v3866 = vpop.f32.mrf.mxu0
        %v3867 = vadd.f32 0.0, %v3866
        %v3868 = vpop.f32.mrf.mxu0
        %v3869 = vpop.f32.mrf.mxu0
        %v3870 = vadd.f32 0.0, %v3869
        %v3871 = vpop.f32.mrf.mxu0
        %3872 = vdwg.mxu0
        %3873 = vrot.lane.b32.xlu0 %v826, 80
        %v3874 = vpop.permute.xlu0 %3873
        %3875 = vrot.lane.b32.xlu0 %v834, 80
        %v3876 = vpop.permute.xlu0 %3875
        %v3878 = vsel %vm847, %v3874, 0
        %v3881 = vsel %vm847, %v3876, 0
        %3883 = vmatprep.subr.bf16.mxu0 0
        %3884 = vmatpush1.bf16.xpose.msra.mxu0 0
        %3885 = vmatprep.subr.bf16.mxu0 0
        %3886 = vmatpush1.bf16.xpose.msra.mxu0 0
        %3887 = vmatprep.subr.bf16.mxu0 0
        %3888 = vmatpush1.bf16.xpose.msra.mxu0 0
        %3889 = vmatprep.subr.bf16.mxu0 0
        %3890 = vmatpush1.bf16.xpose.msra.mxu0 0
        %3891 = vmatprep.subr.bf16.mxu0 0
        %3892 = vmatpush1.bf16.xpose.msra.mxu0 0
        %3893 = vmatprep.subr.bf16.mxu0 0
        %3894 = vmatpush1.bf16.xpose.msra.mxu0 0
        %3895 = vmatprep.subr.bf16.mxu0 0
        %3896 = vmatpush1.bf16.xpose.msra.mxu0 0
        %3897 = vmatprep.subr.bf16.mxu0 0
        %3898 = vmatpush1.bf16.xpose.msra.mxu0 %v3881
        %3899 = vmatprep.subr.bf16.mxu0 0
        %3900 = vmatpush2.bf16.xpose.msra.mxu0 0
        %3901 = vmatprep.subr.bf16.mxu0 0
        %3902 = vmatpush2.bf16.xpose.msra.mxu0 0
        %3903 = vmatprep.subr.bf16.mxu0 0
        %3904 = vmatpush2.bf16.xpose.msra.mxu0 0
        %3905 = vmatprep.subr.bf16.mxu0 0
        %3906 = vmatpush2.bf16.xpose.msra.mxu0 0
        %3907 = vmatprep.subr.bf16.mxu0 0
        %3908 = vmatpush2.bf16.xpose.msra.mxu0 0
        %3909 = vmatprep.subr.bf16.mxu0 0
        %3910 = vmatpush2.bf16.xpose.msra.mxu0 0
        %3911 = vmatprep.subr.bf16.mxu0 0
        %3912 = vmatpush2.bf16.xpose.msra.mxu0 0
        %3913 = vmatprep.subr.bf16.mxu0 0
        %3914 = vmatpush2.bf16.xpose.msra.mxu0 0
        %3915 = vmatprep.mubr.bf16.mxu0 0
        %3916 = vmatmul.mubr.bf16.gmra.mxu0 %v3878
        %v3917 = vpop.f32.mrf.mxu0
        %v3918 = vadd.f32 0.0, %v3917
        %v3919 = vpop.f32.mrf.mxu0
        %v3920 = vpop.f32.mrf.mxu0
        %v3921 = vadd.f32 0.0, %v3920
        %v3922 = vpop.f32.mrf.mxu0
        %3923 = vdwg.mxu0
        %3924 = vrot.lane.b32.xlu0 %v827, 80
        %v3925 = vpop.permute.xlu0 %3924
        %3926 = vrot.lane.b32.xlu0 %v835, 80
        %v3927 = vpop.permute.xlu0 %3926
        %v3929 = vsel %vm847, %v3925, 0
        %v3932 = vsel %vm847, %v3927, 0
        %3934 = vmatprep.subr.bf16.mxu0 0
        %3935 = vmatpush1.bf16.xpose.msra.mxu0 0
        %3936 = vmatprep.subr.bf16.mxu0 0
        %3937 = vmatpush1.bf16.xpose.msra.mxu0 0
        %3938 = vmatprep.subr.bf16.mxu0 0
        %3939 = vmatpush1.bf16.xpose.msra.mxu0 0
        %3940 = vmatprep.subr.bf16.mxu0 0
        %3941 = vmatpush1.bf16.xpose.msra.mxu0 0
        %3942 = vmatprep.subr.bf16.mxu0 0
        %3943 = vmatpush1.bf16.xpose.msra.mxu0 0
        %3944 = vmatprep.subr.bf16.mxu0 0
        %3945 = vmatpush1.bf16.xpose.msra.mxu0 0
        %3946 = vmatprep.subr.bf16.mxu0 0
        %3947 = vmatpush1.bf16.xpose.msra.mxu0 0
        %3948 = vmatprep.subr.bf16.mxu0 0
        %3949 = vmatpush1.bf16.xpose.msra.mxu0 %v3932
        %3950 = vmatprep.subr.bf16.mxu0 0
        %3951 = vmatpush2.bf16.xpose.msra.mxu0 0
        %3952 = vmatprep.subr.bf16.mxu0 0
        %3953 = vmatpush2.bf16.xpose.msra.mxu0 0
        %3954 = vmatprep.subr.bf16.mxu0 0
        %3955 = vmatpush2.bf16.xpose.msra.mxu0 0
        %3956 = vmatprep.subr.bf16.mxu0 0
        %3957 = vmatpush2.bf16.xpose.msra.mxu0 0
        %3958 = vmatprep.subr.bf16.mxu0 0
        %3959 = vmatpush2.bf16.xpose.msra.mxu0 0
        %3960 = vmatprep.subr.bf16.mxu0 0
        %3961 = vmatpush2.bf16.xpose.msra.mxu0 0
        %3962 = vmatprep.subr.bf16.mxu0 0
        %3963 = vmatpush2.bf16.xpose.msra.mxu0 0
        %3964 = vmatprep.subr.bf16.mxu0 0
        %3965 = vmatpush2.bf16.xpose.msra.mxu0 0
        %3966 = vmatprep.mubr.bf16.mxu0 0
        %3967 = vmatmul.mubr.bf16.gmra.mxu0 %v3929
        %v3968 = vpop.f32.mrf.mxu0
        %v3969 = vadd.f32 0.0, %v3968
        %v3970 = vpop.f32.mrf.mxu0
        %v3971 = vpop.f32.mrf.mxu0
        %v3972 = vadd.f32 0.0, %v3971
        %v3973 = vpop.f32.mrf.mxu0
        %3974 = vdwg.mxu0
        %3975 = vrot.lane.b32.xlu0 %v828, 80
        %v3976 = vpop.permute.xlu0 %3975
        %3977 = vrot.lane.b32.xlu0 %v836, 80
        %v3978 = vpop.permute.xlu0 %3977
        %v3980 = vsel %vm847, %v3976, 0
        %v3983 = vsel %vm847, %v3978, 0
        %3985 = vmatprep.subr.bf16.mxu0 0
        %3986 = vmatpush1.bf16.xpose.msra.mxu0 0
        %3987 = vmatprep.subr.bf16.mxu0 0
        %3988 = vmatpush1.bf16.xpose.msra.mxu0 0
        %3989 = vmatprep.subr.bf16.mxu0 0
        %3990 = vmatpush1.bf16.xpose.msra.mxu0 0
        %3991 = vmatprep.subr.bf16.mxu0 0
        %3992 = vmatpush1.bf16.xpose.msra.mxu0 0
        %3993 = vmatprep.subr.bf16.mxu0 0
        %3994 = vmatpush1.bf16.xpose.msra.mxu0 0
        %3995 = vmatprep.subr.bf16.mxu0 0
        %3996 = vmatpush1.bf16.xpose.msra.mxu0 0
        %3997 = vmatprep.subr.bf16.mxu0 0
        %3998 = vmatpush1.bf16.xpose.msra.mxu0 0
        %3999 = vmatprep.subr.bf16.mxu0 0
        %4000 = vmatpush1.bf16.xpose.msra.mxu0 %v3983
        %4001 = vmatprep.subr.bf16.mxu0 0
        %4002 = vmatpush2.bf16.xpose.msra.mxu0 0
        %4003 = vmatprep.subr.bf16.mxu0 0
        %4004 = vmatpush2.bf16.xpose.msra.mxu0 0
        %4005 = vmatprep.subr.bf16.mxu0 0
        %4006 = vmatpush2.bf16.xpose.msra.mxu0 0
        %4007 = vmatprep.subr.bf16.mxu0 0
        %4008 = vmatpush2.bf16.xpose.msra.mxu0 0
        %4009 = vmatprep.subr.bf16.mxu0 0
        %4010 = vmatpush2.bf16.xpose.msra.mxu0 0
        %4011 = vmatprep.subr.bf16.mxu0 0
        %4012 = vmatpush2.bf16.xpose.msra.mxu0 0
        %4013 = vmatprep.subr.bf16.mxu0 0
        %4014 = vmatpush2.bf16.xpose.msra.mxu0 0
        %4015 = vmatprep.subr.bf16.mxu0 0
        %4016 = vmatpush2.bf16.xpose.msra.mxu0 0
        %4017 = vmatprep.mubr.bf16.mxu0 0
        %4018 = vmatmul.mubr.bf16.gmra.mxu0 %v3980
        %v4019 = vpop.f32.mrf.mxu0
        %v4020 = vadd.f32 0.0, %v4019
        %v4021 = vpop.f32.mrf.mxu0
        %v4022 = vpop.f32.mrf.mxu0
        %v4023 = vadd.f32 0.0, %v4022
        %v4024 = vpop.f32.mrf.mxu0
        %4025 = vdwg.mxu0
        %4026 = vrot.lane.b32.xlu0 %v829, 80
        %v4027 = vpop.permute.xlu0 %4026
        %4028 = vrot.lane.b32.xlu0 %v837, 80
        %v4029 = vpop.permute.xlu0 %4028
        %v4031 = vsel %vm847, %v4027, 0
        %v4034 = vsel %vm847, %v4029, 0
        %4036 = vmatprep.subr.bf16.mxu0 0
        %4037 = vmatpush1.bf16.xpose.msra.mxu0 0
        %4038 = vmatprep.subr.bf16.mxu0 0
        %4039 = vmatpush1.bf16.xpose.msra.mxu0 0
        %4040 = vmatprep.subr.bf16.mxu0 0
        %4041 = vmatpush1.bf16.xpose.msra.mxu0 0
        %4042 = vmatprep.subr.bf16.mxu0 0
        %4043 = vmatpush1.bf16.xpose.msra.mxu0 0
        %4044 = vmatprep.subr.bf16.mxu0 0
        %4045 = vmatpush1.bf16.xpose.msra.mxu0 0
        %4046 = vmatprep.subr.bf16.mxu0 0
        %4047 = vmatpush1.bf16.xpose.msra.mxu0 0
        %4048 = vmatprep.subr.bf16.mxu0 0
        %4049 = vmatpush1.bf16.xpose.msra.mxu0 0
        %4050 = vmatprep.subr.bf16.mxu0 0
        %4051 = vmatpush1.bf16.xpose.msra.mxu0 %v4034
        %4052 = vmatprep.subr.bf16.mxu0 0
        %4053 = vmatpush2.bf16.xpose.msra.mxu0 0
        %4054 = vmatprep.subr.bf16.mxu0 0
        %4055 = vmatpush2.bf16.xpose.msra.mxu0 0
        %4056 = vmatprep.subr.bf16.mxu0 0
        %4057 = vmatpush2.bf16.xpose.msra.mxu0 0
        %4058 = vmatprep.subr.bf16.mxu0 0
        %4059 = vmatpush2.bf16.xpose.msra.mxu0 0
        %4060 = vmatprep.subr.bf16.mxu0 0
        %4061 = vmatpush2.bf16.xpose.msra.mxu0 0
        %4062 = vmatprep.subr.bf16.mxu0 0
        %4063 = vmatpush2.bf16.xpose.msra.mxu0 0
        %4064 = vmatprep.subr.bf16.mxu0 0
        %4065 = vmatpush2.bf16.xpose.msra.mxu0 0
        %4066 = vmatprep.subr.bf16.mxu0 0
        %4067 = vmatpush2.bf16.xpose.msra.mxu0 0
        %4068 = vmatprep.mubr.bf16.mxu0 0
        %4069 = vmatmul.mubr.bf16.gmra.mxu0 %v4031
        %v4070 = vpop.f32.mrf.mxu0
        %v4071 = vadd.f32 0.0, %v4070
        %v4072 = vpop.f32.mrf.mxu0
        %v4073 = vpop.f32.mrf.mxu0
        %v4074 = vadd.f32 0.0, %v4073
        %v4075 = vpop.f32.mrf.mxu0
        %4076 = vdwg.mxu0
        %4077 = vrot.lane.b32.xlu0 %v830, 80
        %v4078 = vpop.permute.xlu0 %4077
        %4079 = vrot.lane.b32.xlu0 %v838, 80
        %v4080 = vpop.permute.xlu0 %4079
        %v4082 = vsel %vm847, %v4078, 0
        %v4085 = vsel %vm847, %v4080, 0
        %4087 = vmatprep.subr.bf16.mxu0 0
        %4088 = vmatpush1.bf16.xpose.msra.mxu0 0
        %4089 = vmatprep.subr.bf16.mxu0 0
        %4090 = vmatpush1.bf16.xpose.msra.mxu0 0
        %4091 = vmatprep.subr.bf16.mxu0 0
        %4092 = vmatpush1.bf16.xpose.msra.mxu0 0
        %4093 = vmatprep.subr.bf16.mxu0 0
        %4094 = vmatpush1.bf16.xpose.msra.mxu0 0
        %4095 = vmatprep.subr.bf16.mxu0 0
        %4096 = vmatpush1.bf16.xpose.msra.mxu0 0
        %4097 = vmatprep.subr.bf16.mxu0 0
        %4098 = vmatpush1.bf16.xpose.msra.mxu0 0
        %4099 = vmatprep.subr.bf16.mxu0 0
        %4100 = vmatpush1.bf16.xpose.msra.mxu0 0
        %4101 = vmatprep.subr.bf16.mxu0 0
        %4102 = vmatpush1.bf16.xpose.msra.mxu0 %v4085
        %4103 = vmatprep.subr.bf16.mxu0 0
        %4104 = vmatpush2.bf16.xpose.msra.mxu0 0
        %4105 = vmatprep.subr.bf16.mxu0 0
        %4106 = vmatpush2.bf16.xpose.msra.mxu0 0
        %4107 = vmatprep.subr.bf16.mxu0 0
        %4108 = vmatpush2.bf16.xpose.msra.mxu0 0
        %4109 = vmatprep.subr.bf16.mxu0 0
        %4110 = vmatpush2.bf16.xpose.msra.mxu0 0
        %4111 = vmatprep.subr.bf16.mxu0 0
        %4112 = vmatpush2.bf16.xpose.msra.mxu0 0
        %4113 = vmatprep.subr.bf16.mxu0 0
        %4114 = vmatpush2.bf16.xpose.msra.mxu0 0
        %4115 = vmatprep.subr.bf16.mxu0 0
        %4116 = vmatpush2.bf16.xpose.msra.mxu0 0
        %4117 = vmatprep.subr.bf16.mxu0 0
        %4118 = vmatpush2.bf16.xpose.msra.mxu0 0
        %4119 = vmatprep.mubr.bf16.mxu0 0
        %4120 = vmatmul.mubr.bf16.gmra.mxu0 %v4082
        %v4121 = vpop.f32.mrf.mxu0
        %v4122 = vadd.f32 0.0, %v4121
        %v4123 = vpop.f32.mrf.mxu0
        %v4124 = vpop.f32.mrf.mxu0
        %v4125 = vadd.f32 0.0, %v4124
        %v4126 = vpop.f32.mrf.mxu0
        %4127 = vdwg.mxu0
        %v4128 = vsel %vm847, %v3765, -inf
        %4129 = vmax.xlane.f32.xlu0 %v4128
        %v4130 = vpop.xlane.xlu0 %4129
        %v4131 = vsel %vm847, %v3768, -inf
        %4132 = vmax.xlane.f32.xlu0 %v4131
        %v4133 = vpop.xlane.xlu0 %4132
        %v4134 = vsel %vm847, %v3816, -inf
        %4135 = vmax.xlane.f32.xlu0 %v4134
        %v4136 = vpop.xlane.xlu0 %4135
        %v4137 = vsel %vm847, %v3819, -inf
        %4138 = vmax.xlane.f32.xlu0 %v4137
        %v4139 = vpop.xlane.xlu0 %4138
        %v4140 = vsel %vm847, %v3867, -inf
        %4141 = vmax.xlane.f32.xlu0 %v4140
        %v4142 = vpop.xlane.xlu0 %4141
        %v4143 = vsel %vm847, %v3870, -inf
        %4144 = vmax.xlane.f32.xlu0 %v4143
        %v4145 = vpop.xlane.xlu0 %4144
        %v4146 = vsel %vm847, %v3918, -inf
        %4147 = vmax.xlane.f32.xlu0 %v4146
        %v4148 = vpop.xlane.xlu0 %4147
        %v4149 = vsel %vm847, %v3921, -inf
        %4150 = vmax.xlane.f32.xlu0 %v4149
        %v4151 = vpop.xlane.xlu0 %4150
        %v4152 = vsel %vm847, %v3969, -inf
        %4153 = vmax.xlane.f32.xlu0 %v4152
        %v4154 = vpop.xlane.xlu0 %4153
        %v4155 = vsel %vm847, %v3972, -inf
        %4156 = vmax.xlane.f32.xlu0 %v4155
        %v4157 = vpop.xlane.xlu0 %4156
        %v4158 = vsel %vm847, %v4020, -inf
        %4159 = vmax.xlane.f32.xlu0 %v4158
        %v4160 = vpop.xlane.xlu0 %4159
        %v4161 = vsel %vm847, %v4023, -inf
        %4162 = vmax.xlane.f32.xlu0 %v4161
        %v4163 = vpop.xlane.xlu0 %4162
        %v4164 = vsel %vm847, %v4071, -inf
        %4165 = vmax.xlane.f32.xlu0 %v4164
        %v4166 = vpop.xlane.xlu0 %4165
        %v4167 = vsel %vm847, %v4074, -inf
        %4168 = vmax.xlane.f32.xlu0 %v4167
        %v4169 = vpop.xlane.xlu0 %4168
        %v4170 = vsel %vm847, %v4122, -inf
        %4171 = vmax.xlane.f32.xlu0 %v4170
        %v4172 = vpop.xlane.xlu0 %4171
        %v4173 = vsel %vm847, %v4125, -inf
        %4174 = vmax.xlane.f32.xlu0 %v4173
        %v4175 = vpop.xlane.xlu0 %4174
        %v4176 = vsub.f32 %v3765, %v4130
        %v4177 = vsub.f32 %v3768, %v4133
        %v4178 = vsub.f32 %v3816, %v4136
        %v4179 = vsub.f32 %v3819, %v4139
        %v4180 = vsub.f32 %v3867, %v4142
        %v4181 = vsub.f32 %v3870, %v4145
        %v4182 = vsub.f32 %v3918, %v4148
        %v4183 = vsub.f32 %v3921, %v4151
        %v4184 = vsub.f32 %v3969, %v4154
        %v4185 = vsub.f32 %v3972, %v4157
        %v4186 = vsub.f32 %v4020, %v4160
        %v4187 = vsub.f32 %v4023, %v4163
        %v4188 = vsub.f32 %v4071, %v4166
        %v4189 = vsub.f32 %v4074, %v4169
        %v4190 = vsub.f32 %v4122, %v4172
        %v4191 = vsub.f32 %v4125, %v4175
        %v4192 = vmul.f32 %v4176, 1.442695
        %v4193 = vpow.pop %v4192
        %v4194 = vmul.f32 %v4177, 1.442695
        %v4195 = vpow.pop %v4194
        %v4196 = vmul.f32 %v4178, 1.442695
        %v4197 = vpow.pop %v4196
        %v4198 = vmul.f32 %v4179, 1.442695
        %v4199 = vpow.pop %v4198
        %v4200 = vmul.f32 %v4180, 1.442695
        %v4201 = vpow.pop %v4200
        %v4202 = vmul.f32 %v4181, 1.442695
        %v4203 = vpow.pop %v4202
        %v4204 = vmul.f32 %v4182, 1.442695
        %v4205 = vpow.pop %v4204
        %v4206 = vmul.f32 %v4183, 1.442695
        %v4207 = vpow.pop %v4206
        %v4208 = vmul.f32 %v4184, 1.442695
        %v4209 = vpow.pop %v4208
        %v4210 = vmul.f32 %v4185, 1.442695
        %v4211 = vpow.pop %v4210
        %v4212 = vmul.f32 %v4186, 1.442695
        %v4213 = vpow.pop %v4212
        %v4214 = vmul.f32 %v4187, 1.442695
        %v4215 = vpow.pop %v4214
        %v4216 = vmul.f32 %v4188, 1.442695
        %v4217 = vpow.pop %v4216
        %v4218 = vmul.f32 %v4189, 1.442695
        %v4219 = vpow.pop %v4218
        %v4220 = vmul.f32 %v4190, 1.442695
        %v4221 = vpow.pop %v4220
        %v4222 = vmul.f32 %v4191, 1.442695
        %v4223 = vpow.pop %v4222
        %v4224 = vsel %vm847, %v4193, 0.0
        %4225 = vadd.xlane.f32.xlu0 %v4224
        %v4226 = vpop.xlane.xlu0 %4225
        %v4227 = vsel %vm847, %v4195, 0.0
        %4228 = vadd.xlane.f32.xlu0 %v4227
        %v4229 = vpop.xlane.xlu0 %4228
        %v4230 = vsel %vm847, %v4197, 0.0
        %4231 = vadd.xlane.f32.xlu0 %v4230
        %v4232 = vpop.xlane.xlu0 %4231
        %v4233 = vsel %vm847, %v4199, 0.0
        %4234 = vadd.xlane.f32.xlu0 %v4233
        %v4235 = vpop.xlane.xlu0 %4234
        %v4236 = vsel %vm847, %v4201, 0.0
        %4237 = vadd.xlane.f32.xlu0 %v4236
        %v4238 = vpop.xlane.xlu0 %4237
        %v4239 = vsel %vm847, %v4203, 0.0
        %4240 = vadd.xlane.f32.xlu0 %v4239
        %v4241 = vpop.xlane.xlu0 %4240
        %v4242 = vsel %vm847, %v4205, 0.0
        %4243 = vadd.xlane.f32.xlu0 %v4242
        %v4244 = vpop.xlane.xlu0 %4243
        %v4245 = vsel %vm847, %v4207, 0.0
        %4246 = vadd.xlane.f32.xlu0 %v4245
        %v4247 = vpop.xlane.xlu0 %4246
        %v4248 = vsel %vm847, %v4209, 0.0
        %4249 = vadd.xlane.f32.xlu0 %v4248
        %v4250 = vpop.xlane.xlu0 %4249
        %v4251 = vsel %vm847, %v4211, 0.0
        %4252 = vadd.xlane.f32.xlu0 %v4251
        %v4253 = vpop.xlane.xlu0 %4252
        %v4254 = vsel %vm847, %v4213, 0.0
        %4255 = vadd.xlane.f32.xlu0 %v4254
        %v4256 = vpop.xlane.xlu0 %4255
        %v4257 = vsel %vm847, %v4215, 0.0
        %4258 = vadd.xlane.f32.xlu0 %v4257
        %v4259 = vpop.xlane.xlu0 %4258
        %v4260 = vsel %vm847, %v4217, 0.0
        %4261 = vadd.xlane.f32.xlu0 %v4260
        %v4262 = vpop.xlane.xlu0 %4261
        %v4263 = vsel %vm847, %v4219, 0.0
        %4264 = vadd.xlane.f32.xlu0 %v4263
        %v4265 = vpop.xlane.xlu0 %4264
        %v4266 = vsel %vm847, %v4221, 0.0
        %4267 = vadd.xlane.f32.xlu0 %v4266
        %v4268 = vpop.xlane.xlu0 %4267
        %v4269 = vsel %vm847, %v4223, 0.0
        %4270 = vadd.xlane.f32.xlu0 %v4269
        %v4271 = vpop.xlane.xlu0 %4270
        %v4272 = vrcp.pop %v4226
        %v4273 = vmul.f32 %v4193, %v4272
        %v4274 = vrcp.pop %v4229
        %v4275 = vmul.f32 %v4195, %v4274
        %v4276 = vrcp.pop %v4232
        %v4277 = vmul.f32 %v4197, %v4276
        %v4278 = vrcp.pop %v4235
        %v4279 = vmul.f32 %v4199, %v4278
        %v4280 = vrcp.pop %v4238
        %v4281 = vmul.f32 %v4201, %v4280
        %v4282 = vrcp.pop %v4241
        %v4283 = vmul.f32 %v4203, %v4282
        %v4284 = vrcp.pop %v4244
        %v4285 = vmul.f32 %v4205, %v4284
        %v4286 = vrcp.pop %v4247
        %v4287 = vmul.f32 %v4207, %v4286
        %v4288 = vrcp.pop %v4250
        %v4289 = vmul.f32 %v4209, %v4288
        %v4290 = vrcp.pop %v4253
        %v4291 = vmul.f32 %v4211, %v4290
        %v4292 = vrcp.pop %v4256
        %v4293 = vmul.f32 %v4213, %v4292
        %v4294 = vrcp.pop %v4259
        %v4295 = vmul.f32 %v4215, %v4294
        %v4296 = vrcp.pop %v4262
        %v4297 = vmul.f32 %v4217, %v4296
        %v4298 = vrcp.pop %v4265
        %v4299 = vmul.f32 %v4219, %v4298
        %v4300 = vrcp.pop %v4268
        %v4301 = vmul.f32 %v4221, %v4300
        %v4302 = vrcp.pop %v4271
        %v4303 = vmul.f32 %v4223, %v4302
        %v4304 = vpack.c.bf16 %v4275, %v4273
        %v4305 = vpack.c.bf16 %v4279, %v4277
        %v4306 = vpack.c.bf16 %v4283, %v4281
        %v4307 = vpack.c.bf16 %v4287, %v4285
        %v4308 = vpack.c.bf16 %v4291, %v4289
        %v4309 = vpack.c.bf16 %v4295, %v4293
        %v4310 = vpack.c.bf16 %v4299, %v4297
        %v4311 = vpack.c.bf16 %v4303, %v4301
        %4312 = vrot.lane.b32.xlu0 %v839, 80
        %v4313 = vpop.permute.xlu0 %4312
        %v4316 = vsel %vm847, %v4304, 0
        %4318 = vmatprep.subr.bf16.mxu0 0
        %4319 = vmatpush1.bf16.msra.mxu0 0
        %4320 = vmatprep.subr.bf16.mxu0 0
        %4321 = vmatpush1.bf16.msra.mxu0 0
        %4322 = vmatprep.subr.bf16.mxu0 0
        %4323 = vmatpush1.bf16.msra.mxu0 0
        %4324 = vmatprep.subr.bf16.mxu0 0
        %4325 = vmatpush1.bf16.msra.mxu0 0
        %4326 = vmatprep.subr.bf16.mxu0 0
        %4327 = vmatpush1.bf16.msra.mxu0 0
        %4328 = vmatprep.subr.bf16.mxu0 0
        %4329 = vmatpush1.bf16.msra.mxu0 0
        %4330 = vmatprep.subr.bf16.mxu0 0
        %4331 = vmatpush1.bf16.msra.mxu0 0
        %4332 = vmatprep.subr.bf16.mxu0 0
        %4333 = vmatpush1.bf16.msra.mxu0 %v4313
        %4334 = vmatprep.subr.bf16.mxu0 0
        %4335 = vmatpush2.bf16.msra.mxu0 0
        %4336 = vmatprep.subr.bf16.mxu0 0
        %4337 = vmatpush2.bf16.msra.mxu0 0
        %4338 = vmatprep.subr.bf16.mxu0 0
        %4339 = vmatpush2.bf16.msra.mxu0 0
        %4340 = vmatprep.subr.bf16.mxu0 0
        %4341 = vmatpush2.bf16.msra.mxu0 0
        %4342 = vmatprep.subr.bf16.mxu0 0
        %4343 = vmatpush2.bf16.msra.mxu0 0
        %4344 = vmatprep.subr.bf16.mxu0 0
        %4345 = vmatpush2.bf16.msra.mxu0 0
        %4346 = vmatprep.subr.bf16.mxu0 0
        %4347 = vmatpush2.bf16.msra.mxu0 0
        %4348 = vmatprep.subr.bf16.mxu0 0
        %4349 = vmatpush2.bf16.msra.mxu0 0
        %4350 = vmatprep.mubr.bf16.mxu0 0
        %4351 = vmatmul.mubr.bf16.gmra.mxu0 %v4316
        %v4352 = vpop.f32.mrf.mxu0
        %v4353 = vadd.f32 0.0, %v4352
        %v4354 = vpop.f32.mrf.mxu0
        %v4355 = vpop.f32.mrf.mxu0
        %v4356 = vadd.f32 0.0, %v4355
        %v4357 = vpop.f32.mrf.mxu0
        %4358 = vdwg.mxu0
        %4359 = vrot.lane.b32.xlu0 %v840, 80
        %v4360 = vpop.permute.xlu0 %4359
        %v4363 = vsel %vm847, %v4305, 0
        %4365 = vmatprep.subr.bf16.mxu0 0
        %4366 = vmatpush1.bf16.msra.mxu0 0
        %4367 = vmatprep.subr.bf16.mxu0 0
        %4368 = vmatpush1.bf16.msra.mxu0 0
        %4369 = vmatprep.subr.bf16.mxu0 0
        %4370 = vmatpush1.bf16.msra.mxu0 0
        %4371 = vmatprep.subr.bf16.mxu0 0
        %4372 = vmatpush1.bf16.msra.mxu0 0
        %4373 = vmatprep.subr.bf16.mxu0 0
        %4374 = vmatpush1.bf16.msra.mxu0 0
        %4375 = vmatprep.subr.bf16.mxu0 0
        %4376 = vmatpush1.bf16.msra.mxu0 0
        %4377 = vmatprep.subr.bf16.mxu0 0
        %4378 = vmatpush1.bf16.msra.mxu0 0
        %4379 = vmatprep.subr.bf16.mxu0 0
        %4380 = vmatpush1.bf16.msra.mxu0 %v4360
        %4381 = vmatprep.subr.bf16.mxu0 0
        %4382 = vmatpush2.bf16.msra.mxu0 0
        %4383 = vmatprep.subr.bf16.mxu0 0
        %4384 = vmatpush2.bf16.msra.mxu0 0
        %4385 = vmatprep.subr.bf16.mxu0 0
        %4386 = vmatpush2.bf16.msra.mxu0 0
        %4387 = vmatprep.subr.bf16.mxu0 0
        %4388 = vmatpush2.bf16.msra.mxu0 0
        %4389 = vmatprep.subr.bf16.mxu0 0
        %4390 = vmatpush2.bf16.msra.mxu0 0
        %4391 = vmatprep.subr.bf16.mxu0 0
        %4392 = vmatpush2.bf16.msra.mxu0 0
        %4393 = vmatprep.subr.bf16.mxu0 0
        %4394 = vmatpush2.bf16.msra.mxu0 0
        %4395 = vmatprep.subr.bf16.mxu0 0
        %4396 = vmatpush2.bf16.msra.mxu0 0
        %4397 = vmatprep.mubr.bf16.mxu0 0
        %4398 = vmatmul.mubr.bf16.gmra.mxu0 %v4363
        %v4399 = vpop.f32.mrf.mxu0
        %v4400 = vadd.f32 0.0, %v4399
        %v4401 = vpop.f32.mrf.mxu0
        %v4402 = vpop.f32.mrf.mxu0
        %v4403 = vadd.f32 0.0, %v4402
        %v4404 = vpop.f32.mrf.mxu0
        %4405 = vdwg.mxu0
        %4406 = vrot.lane.b32.xlu0 %v841, 80
        %v4407 = vpop.permute.xlu0 %4406
        %v4410 = vsel %vm847, %v4306, 0
        %4412 = vmatprep.subr.bf16.mxu0 0
        %4413 = vmatpush1.bf16.msra.mxu0 0
        %4414 = vmatprep.subr.bf16.mxu0 0
        %4415 = vmatpush1.bf16.msra.mxu0 0
        %4416 = vmatprep.subr.bf16.mxu0 0
        %4417 = vmatpush1.bf16.msra.mxu0 0
        %4418 = vmatprep.subr.bf16.mxu0 0
        %4419 = vmatpush1.bf16.msra.mxu0 0
        %4420 = vmatprep.subr.bf16.mxu0 0
        %4421 = vmatpush1.bf16.msra.mxu0 0
        %4422 = vmatprep.subr.bf16.mxu0 0
        %4423 = vmatpush1.bf16.msra.mxu0 0
        %4424 = vmatprep.subr.bf16.mxu0 0
        %4425 = vmatpush1.bf16.msra.mxu0 0
        %4426 = vmatprep.subr.bf16.mxu0 0
        %4427 = vmatpush1.bf16.msra.mxu0 %v4407
        %4428 = vmatprep.subr.bf16.mxu0 0
        %4429 = vmatpush2.bf16.msra.mxu0 0
        %4430 = vmatprep.subr.bf16.mxu0 0
        %4431 = vmatpush2.bf16.msra.mxu0 0
        %4432 = vmatprep.subr.bf16.mxu0 0
        %4433 = vmatpush2.bf16.msra.mxu0 0
        %4434 = vmatprep.subr.bf16.mxu0 0
        %4435 = vmatpush2.bf16.msra.mxu0 0
        %4436 = vmatprep.subr.bf16.mxu0 0
        %4437 = vmatpush2.bf16.msra.mxu0 0
        %4438 = vmatprep.subr.bf16.mxu0 0
        %4439 = vmatpush2.bf16.msra.mxu0 0
        %4440 = vmatprep.subr.bf16.mxu0 0
        %4441 = vmatpush2.bf16.msra.mxu0 0
        %4442 = vmatprep.subr.bf16.mxu0 0
        %4443 = vmatpush2.bf16.msra.mxu0 0
        %4444 = vmatprep.mubr.bf16.mxu0 0
        %4445 = vmatmul.mubr.bf16.gmra.mxu0 %v4410
        %v4446 = vpop.f32.mrf.mxu0
        %v4447 = vadd.f32 0.0, %v4446
        %v4448 = vpop.f32.mrf.mxu0
        %v4449 = vpop.f32.mrf.mxu0
        %v4450 = vadd.f32 0.0, %v4449
        %v4451 = vpop.f32.mrf.mxu0
        %4452 = vdwg.mxu0
        %4453 = vrot.lane.b32.xlu0 %v842, 80
        %v4454 = vpop.permute.xlu0 %4453
        %v4457 = vsel %vm847, %v4307, 0
        %4459 = vmatprep.subr.bf16.mxu0 0
        %4460 = vmatpush1.bf16.msra.mxu0 0
        %4461 = vmatprep.subr.bf16.mxu0 0
        %4462 = vmatpush1.bf16.msra.mxu0 0
        %4463 = vmatprep.subr.bf16.mxu0 0
        %4464 = vmatpush1.bf16.msra.mxu0 0
        %4465 = vmatprep.subr.bf16.mxu0 0
        %4466 = vmatpush1.bf16.msra.mxu0 0
        %4467 = vmatprep.subr.bf16.mxu0 0
        %4468 = vmatpush1.bf16.msra.mxu0 0
        %4469 = vmatprep.subr.bf16.mxu0 0
        %4470 = vmatpush1.bf16.msra.mxu0 0
        %4471 = vmatprep.subr.bf16.mxu0 0
        %4472 = vmatpush1.bf16.msra.mxu0 0
        %4473 = vmatprep.subr.bf16.mxu0 0
        %4474 = vmatpush1.bf16.msra.mxu0 %v4454
        %4475 = vmatprep.subr.bf16.mxu0 0
        %4476 = vmatpush2.bf16.msra.mxu0 0
        %4477 = vmatprep.subr.bf16.mxu0 0
        %4478 = vmatpush2.bf16.msra.mxu0 0
        %4479 = vmatprep.subr.bf16.mxu0 0
        %4480 = vmatpush2.bf16.msra.mxu0 0
        %4481 = vmatprep.subr.bf16.mxu0 0
        %4482 = vmatpush2.bf16.msra.mxu0 0
        %4483 = vmatprep.subr.bf16.mxu0 0
        %4484 = vmatpush2.bf16.msra.mxu0 0
        %4485 = vmatprep.subr.bf16.mxu0 0
        %4486 = vmatpush2.bf16.msra.mxu0 0
        %4487 = vmatprep.subr.bf16.mxu0 0
        %4488 = vmatpush2.bf16.msra.mxu0 0
        %4489 = vmatprep.subr.bf16.mxu0 0
        %4490 = vmatpush2.bf16.msra.mxu0 0
        %4491 = vmatprep.mubr.bf16.mxu0 0
        %4492 = vmatmul.mubr.bf16.gmra.mxu0 %v4457
        %v4493 = vpop.f32.mrf.mxu0
        %v4494 = vadd.f32 0.0, %v4493
        %v4495 = vpop.f32.mrf.mxu0
        %v4496 = vpop.f32.mrf.mxu0
        %v4497 = vadd.f32 0.0, %v4496
        %v4498 = vpop.f32.mrf.mxu0
        %4499 = vdwg.mxu0
        %4500 = vrot.lane.b32.xlu0 %v843, 80
        %v4501 = vpop.permute.xlu0 %4500
        %v4504 = vsel %vm847, %v4308, 0
        %4506 = vmatprep.subr.bf16.mxu0 0
        %4507 = vmatpush1.bf16.msra.mxu0 0
        %4508 = vmatprep.subr.bf16.mxu0 0
        %4509 = vmatpush1.bf16.msra.mxu0 0
        %4510 = vmatprep.subr.bf16.mxu0 0
        %4511 = vmatpush1.bf16.msra.mxu0 0
        %4512 = vmatprep.subr.bf16.mxu0 0
        %4513 = vmatpush1.bf16.msra.mxu0 0
        %4514 = vmatprep.subr.bf16.mxu0 0
        %4515 = vmatpush1.bf16.msra.mxu0 0
        %4516 = vmatprep.subr.bf16.mxu0 0
        %4517 = vmatpush1.bf16.msra.mxu0 0
        %4518 = vmatprep.subr.bf16.mxu0 0
        %4519 = vmatpush1.bf16.msra.mxu0 0
        %4520 = vmatprep.subr.bf16.mxu0 0
        %4521 = vmatpush1.bf16.msra.mxu0 %v4501
        %4522 = vmatprep.subr.bf16.mxu0 0
        %4523 = vmatpush2.bf16.msra.mxu0 0
        %4524 = vmatprep.subr.bf16.mxu0 0
        %4525 = vmatpush2.bf16.msra.mxu0 0
        %4526 = vmatprep.subr.bf16.mxu0 0
        %4527 = vmatpush2.bf16.msra.mxu0 0
        %4528 = vmatprep.subr.bf16.mxu0 0
        %4529 = vmatpush2.bf16.msra.mxu0 0
        %4530 = vmatprep.subr.bf16.mxu0 0
        %4531 = vmatpush2.bf16.msra.mxu0 0
        %4532 = vmatprep.subr.bf16.mxu0 0
        %4533 = vmatpush2.bf16.msra.mxu0 0
        %4534 = vmatprep.subr.bf16.mxu0 0
        %4535 = vmatpush2.bf16.msra.mxu0 0
        %4536 = vmatprep.subr.bf16.mxu0 0
        %4537 = vmatpush2.bf16.msra.mxu0 0
        %4538 = vmatprep.mubr.bf16.mxu0 0
        %4539 = vmatmul.mubr.bf16.gmra.mxu0 %v4504
        %v4540 = vpop.f32.mrf.mxu0
        %v4541 = vadd.f32 0.0, %v4540
        %v4542 = vpop.f32.mrf.mxu0
        %v4543 = vpop.f32.mrf.mxu0
        %v4544 = vadd.f32 0.0, %v4543
        %v4545 = vpop.f32.mrf.mxu0
        %4546 = vdwg.mxu0
        %4547 = vrot.lane.b32.xlu0 %v844, 80
        %v4548 = vpop.permute.xlu0 %4547
        %v4551 = vsel %vm847, %v4309, 0
        %4553 = vmatprep.subr.bf16.mxu0 0
        %4554 = vmatpush1.bf16.msra.mxu0 0
        %4555 = vmatprep.subr.bf16.mxu0 0
        %4556 = vmatpush1.bf16.msra.mxu0 0
        %4557 = vmatprep.subr.bf16.mxu0 0
        %4558 = vmatpush1.bf16.msra.mxu0 0
        %4559 = vmatprep.subr.bf16.mxu0 0
        %4560 = vmatpush1.bf16.msra.mxu0 0
        %4561 = vmatprep.subr.bf16.mxu0 0
        %4562 = vmatpush1.bf16.msra.mxu0 0
        %4563 = vmatprep.subr.bf16.mxu0 0
        %4564 = vmatpush1.bf16.msra.mxu0 0
        %4565 = vmatprep.subr.bf16.mxu0 0
        %4566 = vmatpush1.bf16.msra.mxu0 0
        %4567 = vmatprep.subr.bf16.mxu0 0
        %4568 = vmatpush1.bf16.msra.mxu0 %v4548
        %4569 = vmatprep.subr.bf16.mxu0 0
        %4570 = vmatpush2.bf16.msra.mxu0 0
        %4571 = vmatprep.subr.bf16.mxu0 0
        %4572 = vmatpush2.bf16.msra.mxu0 0
        %4573 = vmatprep.subr.bf16.mxu0 0
        %4574 = vmatpush2.bf16.msra.mxu0 0
        %4575 = vmatprep.subr.bf16.mxu0 0
        %4576 = vmatpush2.bf16.msra.mxu0 0
        %4577 = vmatprep.subr.bf16.mxu0 0
        %4578 = vmatpush2.bf16.msra.mxu0 0
        %4579 = vmatprep.subr.bf16.mxu0 0
        %4580 = vmatpush2.bf16.msra.mxu0 0
        %4581 = vmatprep.subr.bf16.mxu0 0
        %4582 = vmatpush2.bf16.msra.mxu0 0
        %4583 = vmatprep.subr.bf16.mxu0 0
        %4584 = vmatpush2.bf16.msra.mxu0 0
        %4585 = vmatprep.mubr.bf16.mxu0 0
        %4586 = vmatmul.mubr.bf16.gmra.mxu0 %v4551
        %v4587 = vpop.f32.mrf.mxu0
        %v4588 = vadd.f32 0.0, %v4587
        %v4589 = vpop.f32.mrf.mxu0
        %v4590 = vpop.f32.mrf.mxu0
        %v4591 = vadd.f32 0.0, %v4590
        %v4592 = vpop.f32.mrf.mxu0
        %4593 = vdwg.mxu0
        %4594 = vrot.lane.b32.xlu0 %v845, 80
        %v4595 = vpop.permute.xlu0 %4594
        %v4598 = vsel %vm847, %v4310, 0
        %4600 = vmatprep.subr.bf16.mxu0 0
        %4601 = vmatpush1.bf16.msra.mxu0 0
        %4602 = vmatprep.subr.bf16.mxu0 0
        %4603 = vmatpush1.bf16.msra.mxu0 0
        %4604 = vmatprep.subr.bf16.mxu0 0
        %4605 = vmatpush1.bf16.msra.mxu0 0
        %4606 = vmatprep.subr.bf16.mxu0 0
        %4607 = vmatpush1.bf16.msra.mxu0 0
        %4608 = vmatprep.subr.bf16.mxu0 0
        %4609 = vmatpush1.bf16.msra.mxu0 0
        %4610 = vmatprep.subr.bf16.mxu0 0
        %4611 = vmatpush1.bf16.msra.mxu0 0
        %4612 = vmatprep.subr.bf16.mxu0 0
        %4613 = vmatpush1.bf16.msra.mxu0 0
        %4614 = vmatprep.subr.bf16.mxu0 0
        %4615 = vmatpush1.bf16.msra.mxu0 %v4595
        %4616 = vmatprep.subr.bf16.mxu0 0
        %4617 = vmatpush2.bf16.msra.mxu0 0
        %4618 = vmatprep.subr.bf16.mxu0 0
        %4619 = vmatpush2.bf16.msra.mxu0 0
        %4620 = vmatprep.subr.bf16.mxu0 0
        %4621 = vmatpush2.bf16.msra.mxu0 0
        %4622 = vmatprep.subr.bf16.mxu0 0
        %4623 = vmatpush2.bf16.msra.mxu0 0
        %4624 = vmatprep.subr.bf16.mxu0 0
        %4625 = vmatpush2.bf16.msra.mxu0 0
        %4626 = vmatprep.subr.bf16.mxu0 0
        %4627 = vmatpush2.bf16.msra.mxu0 0
        %4628 = vmatprep.subr.bf16.mxu0 0
        %4629 = vmatpush2.bf16.msra.mxu0 0
        %4630 = vmatprep.subr.bf16.mxu0 0
        %4631 = vmatpush2.bf16.msra.mxu0 0
        %4632 = vmatprep.mubr.bf16.mxu0 0
        %4633 = vmatmul.mubr.bf16.gmra.mxu0 %v4598
        %v4634 = vpop.f32.mrf.mxu0
        %v4635 = vadd.f32 0.0, %v4634
        %v4636 = vpop.f32.mrf.mxu0
        %v4637 = vpop.f32.mrf.mxu0
        %v4638 = vadd.f32 0.0, %v4637
        %v4639 = vpop.f32.mrf.mxu0
        %4640 = vdwg.mxu0
        %4641 = vrot.lane.b32.xlu0 %v846, 80
        %v4642 = vpop.permute.xlu0 %4641
        %v4645 = vsel %vm847, %v4311, 0
        %4647 = vmatprep.subr.bf16.mxu0 0
        %4648 = vmatpush1.bf16.msra.mxu0 0
        %4649 = vmatprep.subr.bf16.mxu0 0
        %4650 = vmatpush1.bf16.msra.mxu0 0
        %4651 = vmatprep.subr.bf16.mxu0 0
        %4652 = vmatpush1.bf16.msra.mxu0 0
        %4653 = vmatprep.subr.bf16.mxu0 0
        %4654 = vmatpush1.bf16.msra.mxu0 0
        %4655 = vmatprep.subr.bf16.mxu0 0
        %4656 = vmatpush1.bf16.msra.mxu0 0
        %4657 = vmatprep.subr.bf16.mxu0 0
        %4658 = vmatpush1.bf16.msra.mxu0 0
        %4659 = vmatprep.subr.bf16.mxu0 0
        %4660 = vmatpush1.bf16.msra.mxu0 0
        %4661 = vmatprep.subr.bf16.mxu0 0
        %4662 = vmatpush1.bf16.msra.mxu0 %v4642
        %4663 = vmatprep.subr.bf16.mxu0 0
        %4664 = vmatpush2.bf16.msra.mxu0 0
        %4665 = vmatprep.subr.bf16.mxu0 0
        %4666 = vmatpush2.bf16.msra.mxu0 0
        %4667 = vmatprep.subr.bf16.mxu0 0
        %4668 = vmatpush2.bf16.msra.mxu0 0
        %4669 = vmatprep.subr.bf16.mxu0 0
        %4670 = vmatpush2.bf16.msra.mxu0 0
        %4671 = vmatprep.subr.bf16.mxu0 0
        %4672 = vmatpush2.bf16.msra.mxu0 0
        %4673 = vmatprep.subr.bf16.mxu0 0
        %4674 = vmatpush2.bf16.msra.mxu0 0
        %4675 = vmatprep.subr.bf16.mxu0 0
        %4676 = vmatpush2.bf16.msra.mxu0 0
        %4677 = vmatprep.subr.bf16.mxu0 0
        %4678 = vmatpush2.bf16.msra.mxu0 0
        %4679 = vmatprep.mubr.bf16.mxu0 0
        %4680 = vmatmul.mubr.bf16.gmra.mxu0 %v4645
        %v4681 = vpop.f32.mrf.mxu0
        %v4682 = vadd.f32 0.0, %v4681
        %v4683 = vpop.f32.mrf.mxu0
        %v4684 = vpop.f32.mrf.mxu0
        %v4685 = vadd.f32 0.0, %v4684
        %v4686 = vpop.f32.mrf.mxu0
        %4687 = vdwg.mxu0
        %4688 = vrot.lane.b32.xlu0 %v823, 64
        %v4689 = vpop.permute.xlu0 %4688
        %4690 = vrot.lane.b32.xlu0 %v831, 64
        %v4691 = vpop.permute.xlu0 %4690
        %v4693 = vsel %vm847, %v4689, 0
        %v4696 = vsel %vm847, %v4691, 0
        %4698 = vmatprep.subr.bf16.mxu0 0
        %4699 = vmatpush1.bf16.xpose.msra.mxu0 0
        %4700 = vmatprep.subr.bf16.mxu0 0
        %4701 = vmatpush1.bf16.xpose.msra.mxu0 0
        %4702 = vmatprep.subr.bf16.mxu0 0
        %4703 = vmatpush1.bf16.xpose.msra.mxu0 0
        %4704 = vmatprep.subr.bf16.mxu0 0
        %4705 = vmatpush1.bf16.xpose.msra.mxu0 0
        %4706 = vmatprep.subr.bf16.mxu0 0
        %4707 = vmatpush1.bf16.xpose.msra.mxu0 0
        %4708 = vmatprep.subr.bf16.mxu0 0
        %4709 = vmatpush1.bf16.xpose.msra.mxu0 0
        %4710 = vmatprep.subr.bf16.mxu0 0
        %4711 = vmatpush1.bf16.xpose.msra.mxu0 0
        %4712 = vmatprep.subr.bf16.mxu0 0
        %4713 = vmatpush1.bf16.xpose.msra.mxu0 %v4696
        %4714 = vmatprep.subr.bf16.mxu0 0
        %4715 = vmatpush2.bf16.xpose.msra.mxu0 0
        %4716 = vmatprep.subr.bf16.mxu0 0
        %4717 = vmatpush2.bf16.xpose.msra.mxu0 0
        %4718 = vmatprep.subr.bf16.mxu0 0
        %4719 = vmatpush2.bf16.xpose.msra.mxu0 0
        %4720 = vmatprep.subr.bf16.mxu0 0
        %4721 = vmatpush2.bf16.xpose.msra.mxu0 0
        %4722 = vmatprep.subr.bf16.mxu0 0
        %4723 = vmatpush2.bf16.xpose.msra.mxu0 0
        %4724 = vmatprep.subr.bf16.mxu0 0
        %4725 = vmatpush2.bf16.xpose.msra.mxu0 0
        %4726 = vmatprep.subr.bf16.mxu0 0
        %4727 = vmatpush2.bf16.xpose.msra.mxu0 0
        %4728 = vmatprep.subr.bf16.mxu0 0
        %4729 = vmatpush2.bf16.xpose.msra.mxu0 0
        %4730 = vmatprep.mubr.bf16.mxu0 0
        %4731 = vmatmul.mubr.bf16.gmra.mxu0 %v4693
        %v4732 = vpop.f32.mrf.mxu0
        %v4733 = vadd.f32 0.0, %v4732
        %v4734 = vpop.f32.mrf.mxu0
        %v4735 = vpop.f32.mrf.mxu0
        %v4736 = vadd.f32 0.0, %v4735
        %v4737 = vpop.f32.mrf.mxu0
        %4738 = vdwg.mxu0
        %4739 = vrot.lane.b32.xlu0 %v824, 64
        %v4740 = vpop.permute.xlu0 %4739
        %4741 = vrot.lane.b32.xlu0 %v832, 64
        %v4742 = vpop.permute.xlu0 %4741
        %v4744 = vsel %vm847, %v4740, 0
        %v4747 = vsel %vm847, %v4742, 0
        %4749 = vmatprep.subr.bf16.mxu0 0
        %4750 = vmatpush1.bf16.xpose.msra.mxu0 0
        %4751 = vmatprep.subr.bf16.mxu0 0
        %4752 = vmatpush1.bf16.xpose.msra.mxu0 0
        %4753 = vmatprep.subr.bf16.mxu0 0
        %4754 = vmatpush1.bf16.xpose.msra.mxu0 0
        %4755 = vmatprep.subr.bf16.mxu0 0
        %4756 = vmatpush1.bf16.xpose.msra.mxu0 0
        %4757 = vmatprep.subr.bf16.mxu0 0
        %4758 = vmatpush1.bf16.xpose.msra.mxu0 0
        %4759 = vmatprep.subr.bf16.mxu0 0
        %4760 = vmatpush1.bf16.xpose.msra.mxu0 0
        %4761 = vmatprep.subr.bf16.mxu0 0
        %4762 = vmatpush1.bf16.xpose.msra.mxu0 0
        %4763 = vmatprep.subr.bf16.mxu0 0
        %4764 = vmatpush1.bf16.xpose.msra.mxu0 %v4747
        %4765 = vmatprep.subr.bf16.mxu0 0
        %4766 = vmatpush2.bf16.xpose.msra.mxu0 0
        %4767 = vmatprep.subr.bf16.mxu0 0
        %4768 = vmatpush2.bf16.xpose.msra.mxu0 0
        %4769 = vmatprep.subr.bf16.mxu0 0
        %4770 = vmatpush2.bf16.xpose.msra.mxu0 0
        %4771 = vmatprep.subr.bf16.mxu0 0
        %4772 = vmatpush2.bf16.xpose.msra.mxu0 0
        %4773 = vmatprep.subr.bf16.mxu0 0
        %4774 = vmatpush2.bf16.xpose.msra.mxu0 0
        %4775 = vmatprep.subr.bf16.mxu0 0
        %4776 = vmatpush2.bf16.xpose.msra.mxu0 0
        %4777 = vmatprep.subr.bf16.mxu0 0
        %4778 = vmatpush2.bf16.xpose.msra.mxu0 0
        %4779 = vmatprep.subr.bf16.mxu0 0
        %4780 = vmatpush2.bf16.xpose.msra.mxu0 0
        %4781 = vmatprep.mubr.bf16.mxu0 0
        %4782 = vmatmul.mubr.bf16.gmra.mxu0 %v4744
        %v4783 = vpop.f32.mrf.mxu0
        %v4784 = vadd.f32 0.0, %v4783
        %v4785 = vpop.f32.mrf.mxu0
        %v4786 = vpop.f32.mrf.mxu0
        %v4787 = vadd.f32 0.0, %v4786
        %v4788 = vpop.f32.mrf.mxu0
        %4789 = vdwg.mxu0
        %4790 = vrot.lane.b32.xlu0 %v825, 64
        %v4791 = vpop.permute.xlu0 %4790
        %4792 = vrot.lane.b32.xlu0 %v833, 64
        %v4793 = vpop.permute.xlu0 %4792
        %v4795 = vsel %vm847, %v4791, 0
        %v4798 = vsel %vm847, %v4793, 0
        %4800 = vmatprep.subr.bf16.mxu0 0
        %4801 = vmatpush1.bf16.xpose.msra.mxu0 0
        %4802 = vmatprep.subr.bf16.mxu0 0
        %4803 = vmatpush1.bf16.xpose.msra.mxu0 0
        %4804 = vmatprep.subr.bf16.mxu0 0
        %4805 = vmatpush1.bf16.xpose.msra.mxu0 0
        %4806 = vmatprep.subr.bf16.mxu0 0
        %4807 = vmatpush1.bf16.xpose.msra.mxu0 0
        %4808 = vmatprep.subr.bf16.mxu0 0
        %4809 = vmatpush1.bf16.xpose.msra.mxu0 0
        %4810 = vmatprep.subr.bf16.mxu0 0
        %4811 = vmatpush1.bf16.xpose.msra.mxu0 0
        %4812 = vmatprep.subr.bf16.mxu0 0
        %4813 = vmatpush1.bf16.xpose.msra.mxu0 0
        %4814 = vmatprep.subr.bf16.mxu0 0
        %4815 = vmatpush1.bf16.xpose.msra.mxu0 %v4798
        %4816 = vmatprep.subr.bf16.mxu0 0
        %4817 = vmatpush2.bf16.xpose.msra.mxu0 0
        %4818 = vmatprep.subr.bf16.mxu0 0
        %4819 = vmatpush2.bf16.xpose.msra.mxu0 0
        %4820 = vmatprep.subr.bf16.mxu0 0
        %4821 = vmatpush2.bf16.xpose.msra.mxu0 0
        %4822 = vmatprep.subr.bf16.mxu0 0
        %4823 = vmatpush2.bf16.xpose.msra.mxu0 0
        %4824 = vmatprep.subr.bf16.mxu0 0
        %4825 = vmatpush2.bf16.xpose.msra.mxu0 0
        %4826 = vmatprep.subr.bf16.mxu0 0
        %4827 = vmatpush2.bf16.xpose.msra.mxu0 0
        %4828 = vmatprep.subr.bf16.mxu0 0
        %4829 = vmatpush2.bf16.xpose.msra.mxu0 0
        %4830 = vmatprep.subr.bf16.mxu0 0
        %4831 = vmatpush2.bf16.xpose.msra.mxu0 0
        %4832 = vmatprep.mubr.bf16.mxu0 0
        %4833 = vmatmul.mubr.bf16.gmra.mxu0 %v4795
        %v4834 = vpop.f32.mrf.mxu0
        %v4835 = vadd.f32 0.0, %v4834
        %v4836 = vpop.f32.mrf.mxu0
        %v4837 = vpop.f32.mrf.mxu0
        %v4838 = vadd.f32 0.0, %v4837
        %v4839 = vpop.f32.mrf.mxu0
        %4840 = vdwg.mxu0
        %4841 = vrot.lane.b32.xlu0 %v826, 64
        %v4842 = vpop.permute.xlu0 %4841
        %4843 = vrot.lane.b32.xlu0 %v834, 64
        %v4844 = vpop.permute.xlu0 %4843
        %v4846 = vsel %vm847, %v4842, 0
        %v4849 = vsel %vm847, %v4844, 0
        %4851 = vmatprep.subr.bf16.mxu0 0
        %4852 = vmatpush1.bf16.xpose.msra.mxu0 0
        %4853 = vmatprep.subr.bf16.mxu0 0
        %4854 = vmatpush1.bf16.xpose.msra.mxu0 0
        %4855 = vmatprep.subr.bf16.mxu0 0
        %4856 = vmatpush1.bf16.xpose.msra.mxu0 0
        %4857 = vmatprep.subr.bf16.mxu0 0
        %4858 = vmatpush1.bf16.xpose.msra.mxu0 0
        %4859 = vmatprep.subr.bf16.mxu0 0
        %4860 = vmatpush1.bf16.xpose.msra.mxu0 0
        %4861 = vmatprep.subr.bf16.mxu0 0
        %4862 = vmatpush1.bf16.xpose.msra.mxu0 0
        %4863 = vmatprep.subr.bf16.mxu0 0
        %4864 = vmatpush1.bf16.xpose.msra.mxu0 0
        %4865 = vmatprep.subr.bf16.mxu0 0
        %4866 = vmatpush1.bf16.xpose.msra.mxu0 %v4849
        %4867 = vmatprep.subr.bf16.mxu0 0
        %4868 = vmatpush2.bf16.xpose.msra.mxu0 0
        %4869 = vmatprep.subr.bf16.mxu0 0
        %4870 = vmatpush2.bf16.xpose.msra.mxu0 0
        %4871 = vmatprep.subr.bf16.mxu0 0
        %4872 = vmatpush2.bf16.xpose.msra.mxu0 0
        %4873 = vmatprep.subr.bf16.mxu0 0
        %4874 = vmatpush2.bf16.xpose.msra.mxu0 0
        %4875 = vmatprep.subr.bf16.mxu0 0
        %4876 = vmatpush2.bf16.xpose.msra.mxu0 0
        %4877 = vmatprep.subr.bf16.mxu0 0
        %4878 = vmatpush2.bf16.xpose.msra.mxu0 0
        %4879 = vmatprep.subr.bf16.mxu0 0
        %4880 = vmatpush2.bf16.xpose.msra.mxu0 0
        %4881 = vmatprep.subr.bf16.mxu0 0
        %4882 = vmatpush2.bf16.xpose.msra.mxu0 0
        %4883 = vmatprep.mubr.bf16.mxu0 0
        %4884 = vmatmul.mubr.bf16.gmra.mxu0 %v4846
        %v4885 = vpop.f32.mrf.mxu0
        %v4886 = vadd.f32 0.0, %v4885
        %v4887 = vpop.f32.mrf.mxu0
        %v4888 = vpop.f32.mrf.mxu0
        %v4889 = vadd.f32 0.0, %v4888
        %v4890 = vpop.f32.mrf.mxu0
        %4891 = vdwg.mxu0
        %4892 = vrot.lane.b32.xlu0 %v827, 64
        %v4893 = vpop.permute.xlu0 %4892
        %4894 = vrot.lane.b32.xlu0 %v835, 64
        %v4895 = vpop.permute.xlu0 %4894
        %v4897 = vsel %vm847, %v4893, 0
        %v4900 = vsel %vm847, %v4895, 0
        %4902 = vmatprep.subr.bf16.mxu0 0
        %4903 = vmatpush1.bf16.xpose.msra.mxu0 0
        %4904 = vmatprep.subr.bf16.mxu0 0
        %4905 = vmatpush1.bf16.xpose.msra.mxu0 0
        %4906 = vmatprep.subr.bf16.mxu0 0
        %4907 = vmatpush1.bf16.xpose.msra.mxu0 0
        %4908 = vmatprep.subr.bf16.mxu0 0
        %4909 = vmatpush1.bf16.xpose.msra.mxu0 0
        %4910 = vmatprep.subr.bf16.mxu0 0
        %4911 = vmatpush1.bf16.xpose.msra.mxu0 0
        %4912 = vmatprep.subr.bf16.mxu0 0
        %4913 = vmatpush1.bf16.xpose.msra.mxu0 0
        %4914 = vmatprep.subr.bf16.mxu0 0
        %4915 = vmatpush1.bf16.xpose.msra.mxu0 0
        %4916 = vmatprep.subr.bf16.mxu0 0
        %4917 = vmatpush1.bf16.xpose.msra.mxu0 %v4900
        %4918 = vmatprep.subr.bf16.mxu0 0
        %4919 = vmatpush2.bf16.xpose.msra.mxu0 0
        %4920 = vmatprep.subr.bf16.mxu0 0
        %4921 = vmatpush2.bf16.xpose.msra.mxu0 0
        %4922 = vmatprep.subr.bf16.mxu0 0
        %4923 = vmatpush2.bf16.xpose.msra.mxu0 0
        %4924 = vmatprep.subr.bf16.mxu0 0
        %4925 = vmatpush2.bf16.xpose.msra.mxu0 0
        %4926 = vmatprep.subr.bf16.mxu0 0
        %4927 = vmatpush2.bf16.xpose.msra.mxu0 0
        %4928 = vmatprep.subr.bf16.mxu0 0
        %4929 = vmatpush2.bf16.xpose.msra.mxu0 0
        %4930 = vmatprep.subr.bf16.mxu0 0
        %4931 = vmatpush2.bf16.xpose.msra.mxu0 0
        %4932 = vmatprep.subr.bf16.mxu0 0
        %4933 = vmatpush2.bf16.xpose.msra.mxu0 0
        %4934 = vmatprep.mubr.bf16.mxu0 0
        %4935 = vmatmul.mubr.bf16.gmra.mxu0 %v4897
        %v4936 = vpop.f32.mrf.mxu0
        %v4937 = vadd.f32 0.0, %v4936
        %v4938 = vpop.f32.mrf.mxu0
        %v4939 = vpop.f32.mrf.mxu0
        %v4940 = vadd.f32 0.0, %v4939
        %v4941 = vpop.f32.mrf.mxu0
        %4942 = vdwg.mxu0
        %4943 = vrot.lane.b32.xlu0 %v828, 64
        %v4944 = vpop.permute.xlu0 %4943
        %4945 = vrot.lane.b32.xlu0 %v836, 64
        %v4946 = vpop.permute.xlu0 %4945
        %v4948 = vsel %vm847, %v4944, 0
        %v4951 = vsel %vm847, %v4946, 0
        %4953 = vmatprep.subr.bf16.mxu0 0
        %4954 = vmatpush1.bf16.xpose.msra.mxu0 0
        %4955 = vmatprep.subr.bf16.mxu0 0
        %4956 = vmatpush1.bf16.xpose.msra.mxu0 0
        %4957 = vmatprep.subr.bf16.mxu0 0
        %4958 = vmatpush1.bf16.xpose.msra.mxu0 0
        %4959 = vmatprep.subr.bf16.mxu0 0
        %4960 = vmatpush1.bf16.xpose.msra.mxu0 0
        %4961 = vmatprep.subr.bf16.mxu0 0
        %4962 = vmatpush1.bf16.xpose.msra.mxu0 0
        %4963 = vmatprep.subr.bf16.mxu0 0
        %4964 = vmatpush1.bf16.xpose.msra.mxu0 0
        %4965 = vmatprep.subr.bf16.mxu0 0
        %4966 = vmatpush1.bf16.xpose.msra.mxu0 0
        %4967 = vmatprep.subr.bf16.mxu0 0
        %4968 = vmatpush1.bf16.xpose.msra.mxu0 %v4951
        %4969 = vmatprep.subr.bf16.mxu0 0
        %4970 = vmatpush2.bf16.xpose.msra.mxu0 0
        %4971 = vmatprep.subr.bf16.mxu0 0
        %4972 = vmatpush2.bf16.xpose.msra.mxu0 0
        %4973 = vmatprep.subr.bf16.mxu0 0
        %4974 = vmatpush2.bf16.xpose.msra.mxu0 0
        %4975 = vmatprep.subr.bf16.mxu0 0
        %4976 = vmatpush2.bf16.xpose.msra.mxu0 0
        %4977 = vmatprep.subr.bf16.mxu0 0
        %4978 = vmatpush2.bf16.xpose.msra.mxu0 0
        %4979 = vmatprep.subr.bf16.mxu0 0
        %4980 = vmatpush2.bf16.xpose.msra.mxu0 0
        %4981 = vmatprep.subr.bf16.mxu0 0
        %4982 = vmatpush2.bf16.xpose.msra.mxu0 0
        %4983 = vmatprep.subr.bf16.mxu0 0
        %4984 = vmatpush2.bf16.xpose.msra.mxu0 0
        %4985 = vmatprep.mubr.bf16.mxu0 0
        %4986 = vmatmul.mubr.bf16.gmra.mxu0 %v4948
        %v4987 = vpop.f32.mrf.mxu0
        %v4988 = vadd.f32 0.0, %v4987
        %v4989 = vpop.f32.mrf.mxu0
        %v4990 = vpop.f32.mrf.mxu0
        %v4991 = vadd.f32 0.0, %v4990
        %v4992 = vpop.f32.mrf.mxu0
        %4993 = vdwg.mxu0
        %4994 = vrot.lane.b32.xlu0 %v829, 64
        %v4995 = vpop.permute.xlu0 %4994
        %4996 = vrot.lane.b32.xlu0 %v837, 64
        %v4997 = vpop.permute.xlu0 %4996
        %v4999 = vsel %vm847, %v4995, 0
        %v5002 = vsel %vm847, %v4997, 0
        %5004 = vmatprep.subr.bf16.mxu0 0
        %5005 = vmatpush1.bf16.xpose.msra.mxu0 0
        %5006 = vmatprep.subr.bf16.mxu0 0
        %5007 = vmatpush1.bf16.xpose.msra.mxu0 0
        %5008 = vmatprep.subr.bf16.mxu0 0
        %5009 = vmatpush1.bf16.xpose.msra.mxu0 0
        %5010 = vmatprep.subr.bf16.mxu0 0
        %5011 = vmatpush1.bf16.xpose.msra.mxu0 0
        %5012 = vmatprep.subr.bf16.mxu0 0
        %5013 = vmatpush1.bf16.xpose.msra.mxu0 0
        %5014 = vmatprep.subr.bf16.mxu0 0
        %5015 = vmatpush1.bf16.xpose.msra.mxu0 0
        %5016 = vmatprep.subr.bf16.mxu0 0
        %5017 = vmatpush1.bf16.xpose.msra.mxu0 0
        %5018 = vmatprep.subr.bf16.mxu0 0
        %5019 = vmatpush1.bf16.xpose.msra.mxu0 %v5002
        %5020 = vmatprep.subr.bf16.mxu0 0
        %5021 = vmatpush2.bf16.xpose.msra.mxu0 0
        %5022 = vmatprep.subr.bf16.mxu0 0
        %5023 = vmatpush2.bf16.xpose.msra.mxu0 0
        %5024 = vmatprep.subr.bf16.mxu0 0
        %5025 = vmatpush2.bf16.xpose.msra.mxu0 0
        %5026 = vmatprep.subr.bf16.mxu0 0
        %5027 = vmatpush2.bf16.xpose.msra.mxu0 0
        %5028 = vmatprep.subr.bf16.mxu0 0
        %5029 = vmatpush2.bf16.xpose.msra.mxu0 0
        %5030 = vmatprep.subr.bf16.mxu0 0
        %5031 = vmatpush2.bf16.xpose.msra.mxu0 0
        %5032 = vmatprep.subr.bf16.mxu0 0
        %5033 = vmatpush2.bf16.xpose.msra.mxu0 0
        %5034 = vmatprep.subr.bf16.mxu0 0
        %5035 = vmatpush2.bf16.xpose.msra.mxu0 0
        %5036 = vmatprep.mubr.bf16.mxu0 0
        %5037 = vmatmul.mubr.bf16.gmra.mxu0 %v4999
        %v5038 = vpop.f32.mrf.mxu0
        %v5039 = vadd.f32 0.0, %v5038
        %v5040 = vpop.f32.mrf.mxu0
        %v5041 = vpop.f32.mrf.mxu0
        %v5042 = vadd.f32 0.0, %v5041
        %v5043 = vpop.f32.mrf.mxu0
        %5044 = vdwg.mxu0
        %5045 = vrot.lane.b32.xlu0 %v830, 64
        %v5046 = vpop.permute.xlu0 %5045
        %5047 = vrot.lane.b32.xlu0 %v838, 64
        %v5048 = vpop.permute.xlu0 %5047
        %v5050 = vsel %vm847, %v5046, 0
        %v5053 = vsel %vm847, %v5048, 0
        %5055 = vmatprep.subr.bf16.mxu0 0
        %5056 = vmatpush1.bf16.xpose.msra.mxu0 0
        %5057 = vmatprep.subr.bf16.mxu0 0
        %5058 = vmatpush1.bf16.xpose.msra.mxu0 0
        %5059 = vmatprep.subr.bf16.mxu0 0
        %5060 = vmatpush1.bf16.xpose.msra.mxu0 0
        %5061 = vmatprep.subr.bf16.mxu0 0
        %5062 = vmatpush1.bf16.xpose.msra.mxu0 0
        %5063 = vmatprep.subr.bf16.mxu0 0
        %5064 = vmatpush1.bf16.xpose.msra.mxu0 0
        %5065 = vmatprep.subr.bf16.mxu0 0
        %5066 = vmatpush1.bf16.xpose.msra.mxu0 0
        %5067 = vmatprep.subr.bf16.mxu0 0
        %5068 = vmatpush1.bf16.xpose.msra.mxu0 0
        %5069 = vmatprep.subr.bf16.mxu0 0
        %5070 = vmatpush1.bf16.xpose.msra.mxu0 %v5053
        %5071 = vmatprep.subr.bf16.mxu0 0
        %5072 = vmatpush2.bf16.xpose.msra.mxu0 0
        %5073 = vmatprep.subr.bf16.mxu0 0
        %5074 = vmatpush2.bf16.xpose.msra.mxu0 0
        %5075 = vmatprep.subr.bf16.mxu0 0
        %5076 = vmatpush2.bf16.xpose.msra.mxu0 0
        %5077 = vmatprep.subr.bf16.mxu0 0
        %5078 = vmatpush2.bf16.xpose.msra.mxu0 0
        %5079 = vmatprep.subr.bf16.mxu0 0
        %5080 = vmatpush2.bf16.xpose.msra.mxu0 0
        %5081 = vmatprep.subr.bf16.mxu0 0
        %5082 = vmatpush2.bf16.xpose.msra.mxu0 0
        %5083 = vmatprep.subr.bf16.mxu0 0
        %5084 = vmatpush2.bf16.xpose.msra.mxu0 0
        %5085 = vmatprep.subr.bf16.mxu0 0
        %5086 = vmatpush2.bf16.xpose.msra.mxu0 0
        %5087 = vmatprep.mubr.bf16.mxu0 0
        %5088 = vmatmul.mubr.bf16.gmra.mxu0 %v5050
        %v5089 = vpop.f32.mrf.mxu0
        %v5090 = vadd.f32 0.0, %v5089
        %v5091 = vpop.f32.mrf.mxu0
        %v5092 = vpop.f32.mrf.mxu0
        %v5093 = vadd.f32 0.0, %v5092
        %v5094 = vpop.f32.mrf.mxu0
        %5095 = vdwg.mxu0
        %v5096 = vsel %vm847, %v4733, -inf
        %5097 = vmax.xlane.f32.xlu0 %v5096
        %v5098 = vpop.xlane.xlu0 %5097
        %v5099 = vsel %vm847, %v4736, -inf
        %5100 = vmax.xlane.f32.xlu0 %v5099
        %v5101 = vpop.xlane.xlu0 %5100
        %v5102 = vsel %vm847, %v4784, -inf
        %5103 = vmax.xlane.f32.xlu0 %v5102
        %v5104 = vpop.xlane.xlu0 %5103
        %v5105 = vsel %vm847, %v4787, -inf
        %5106 = vmax.xlane.f32.xlu0 %v5105
        %v5107 = vpop.xlane.xlu0 %5106
        %v5108 = vsel %vm847, %v4835, -inf
        %5109 = vmax.xlane.f32.xlu0 %v5108
        %v5110 = vpop.xlane.xlu0 %5109
        %v5111 = vsel %vm847, %v4838, -inf
        %5112 = vmax.xlane.f32.xlu0 %v5111
        %v5113 = vpop.xlane.xlu0 %5112
        %v5114 = vsel %vm847, %v4886, -inf
        %5115 = vmax.xlane.f32.xlu0 %v5114
        %v5116 = vpop.xlane.xlu0 %5115
        %v5117 = vsel %vm847, %v4889, -inf
        %5118 = vmax.xlane.f32.xlu0 %v5117
        %v5119 = vpop.xlane.xlu0 %5118
        %v5120 = vsel %vm847, %v4937, -inf
        %5121 = vmax.xlane.f32.xlu0 %v5120
        %v5122 = vpop.xlane.xlu0 %5121
        %v5123 = vsel %vm847, %v4940, -inf
        %5124 = vmax.xlane.f32.xlu0 %v5123
        %v5125 = vpop.xlane.xlu0 %5124
        %v5126 = vsel %vm847, %v4988, -inf
        %5127 = vmax.xlane.f32.xlu0 %v5126
        %v5128 = vpop.xlane.xlu0 %5127
        %v5129 = vsel %vm847, %v4991, -inf
        %5130 = vmax.xlane.f32.xlu0 %v5129
        %v5131 = vpop.xlane.xlu0 %5130
        %v5132 = vsel %vm847, %v5039, -inf
        %5133 = vmax.xlane.f32.xlu0 %v5132
        %v5134 = vpop.xlane.xlu0 %5133
        %v5135 = vsel %vm847, %v5042, -inf
        %5136 = vmax.xlane.f32.xlu0 %v5135
        %v5137 = vpop.xlane.xlu0 %5136
        %v5138 = vsel %vm847, %v5090, -inf
        %5139 = vmax.xlane.f32.xlu0 %v5138
        %v5140 = vpop.xlane.xlu0 %5139
        %v5141 = vsel %vm847, %v5093, -inf
        %5142 = vmax.xlane.f32.xlu0 %v5141
        %v5143 = vpop.xlane.xlu0 %5142
        %v5144 = vsub.f32 %v4733, %v5098
        %v5145 = vsub.f32 %v4736, %v5101
        %v5146 = vsub.f32 %v4784, %v5104
        %v5147 = vsub.f32 %v4787, %v5107
        %v5148 = vsub.f32 %v4835, %v5110
        %v5149 = vsub.f32 %v4838, %v5113
        %v5150 = vsub.f32 %v4886, %v5116
        %v5151 = vsub.f32 %v4889, %v5119
        %v5152 = vsub.f32 %v4937, %v5122
        %v5153 = vsub.f32 %v4940, %v5125
        %v5154 = vsub.f32 %v4988, %v5128
        %v5155 = vsub.f32 %v4991, %v5131
        %v5156 = vsub.f32 %v5039, %v5134
        %v5157 = vsub.f32 %v5042, %v5137
        %v5158 = vsub.f32 %v5090, %v5140
        %v5159 = vsub.f32 %v5093, %v5143
        %v5160 = vmul.f32 %v5144, 1.442695
        %v5161 = vpow.pop %v5160
        %v5162 = vmul.f32 %v5145, 1.442695
        %v5163 = vpow.pop %v5162
        %v5164 = vmul.f32 %v5146, 1.442695
        %v5165 = vpow.pop %v5164
        %v5166 = vmul.f32 %v5147, 1.442695
        %v5167 = vpow.pop %v5166
        %v5168 = vmul.f32 %v5148, 1.442695
        %v5169 = vpow.pop %v5168
        %v5170 = vmul.f32 %v5149, 1.442695
        %v5171 = vpow.pop %v5170
        %v5172 = vmul.f32 %v5150, 1.442695
        %v5173 = vpow.pop %v5172
        %v5174 = vmul.f32 %v5151, 1.442695
        %v5175 = vpow.pop %v5174
        %v5176 = vmul.f32 %v5152, 1.442695
        %v5177 = vpow.pop %v5176
        %v5178 = vmul.f32 %v5153, 1.442695
        %v5179 = vpow.pop %v5178
        %v5180 = vmul.f32 %v5154, 1.442695
        %v5181 = vpow.pop %v5180
        %v5182 = vmul.f32 %v5155, 1.442695
        %v5183 = vpow.pop %v5182
        %v5184 = vmul.f32 %v5156, 1.442695
        %v5185 = vpow.pop %v5184
        %v5186 = vmul.f32 %v5157, 1.442695
        %v5187 = vpow.pop %v5186
        %v5188 = vmul.f32 %v5158, 1.442695
        %v5189 = vpow.pop %v5188
        %v5190 = vmul.f32 %v5159, 1.442695
        %v5191 = vpow.pop %v5190
        %v5192 = vsel %vm847, %v5161, 0.0
        %5193 = vadd.xlane.f32.xlu0 %v5192
        %v5194 = vpop.xlane.xlu0 %5193
        %v5195 = vsel %vm847, %v5163, 0.0
        %5196 = vadd.xlane.f32.xlu0 %v5195
        %v5197 = vpop.xlane.xlu0 %5196
        %v5198 = vsel %vm847, %v5165, 0.0
        %5199 = vadd.xlane.f32.xlu0 %v5198
        %v5200 = vpop.xlane.xlu0 %5199
        %v5201 = vsel %vm847, %v5167, 0.0
        %5202 = vadd.xlane.f32.xlu0 %v5201
        %v5203 = vpop.xlane.xlu0 %5202
        %v5204 = vsel %vm847, %v5169, 0.0
        %5205 = vadd.xlane.f32.xlu0 %v5204
        %v5206 = vpop.xlane.xlu0 %5205
        %v5207 = vsel %vm847, %v5171, 0.0
        %5208 = vadd.xlane.f32.xlu0 %v5207
        %v5209 = vpop.xlane.xlu0 %5208
        %v5210 = vsel %vm847, %v5173, 0.0
        %5211 = vadd.xlane.f32.xlu0 %v5210
        %v5212 = vpop.xlane.xlu0 %5211
        %v5213 = vsel %vm847, %v5175, 0.0
        %5214 = vadd.xlane.f32.xlu0 %v5213
        %v5215 = vpop.xlane.xlu0 %5214
        %v5216 = vsel %vm847, %v5177, 0.0
        %5217 = vadd.xlane.f32.xlu0 %v5216
        %v5218 = vpop.xlane.xlu0 %5217
        %v5219 = vsel %vm847, %v5179, 0.0
        %5220 = vadd.xlane.f32.xlu0 %v5219
        %v5221 = vpop.xlane.xlu0 %5220
        %v5222 = vsel %vm847, %v5181, 0.0
        %5223 = vadd.xlane.f32.xlu0 %v5222
        %v5224 = vpop.xlane.xlu0 %5223
        %v5225 = vsel %vm847, %v5183, 0.0
        %5226 = vadd.xlane.f32.xlu0 %v5225
        %v5227 = vpop.xlane.xlu0 %5226
        %v5228 = vsel %vm847, %v5185, 0.0
        %5229 = vadd.xlane.f32.xlu0 %v5228
        %v5230 = vpop.xlane.xlu0 %5229
        %v5231 = vsel %vm847, %v5187, 0.0
        %5232 = vadd.xlane.f32.xlu0 %v5231
        %v5233 = vpop.xlane.xlu0 %5232
        %v5234 = vsel %vm847, %v5189, 0.0
        %5235 = vadd.xlane.f32.xlu0 %v5234
        %v5236 = vpop.xlane.xlu0 %5235
        %v5237 = vsel %vm847, %v5191, 0.0
        %5238 = vadd.xlane.f32.xlu0 %v5237
        %v5239 = vpop.xlane.xlu0 %5238
        %v5240 = vrcp.pop %v5194
        %v5241 = vmul.f32 %v5161, %v5240
        %v5242 = vrcp.pop %v5197
        %v5243 = vmul.f32 %v5163, %v5242
        %v5244 = vrcp.pop %v5200
        %v5245 = vmul.f32 %v5165, %v5244
        %v5246 = vrcp.pop %v5203
        %v5247 = vmul.f32 %v5167, %v5246
        %v5248 = vrcp.pop %v5206
        %v5249 = vmul.f32 %v5169, %v5248
        %v5250 = vrcp.pop %v5209
        %v5251 = vmul.f32 %v5171, %v5250
        %v5252 = vrcp.pop %v5212
        %v5253 = vmul.f32 %v5173, %v5252
        %v5254 = vrcp.pop %v5215
        %v5255 = vmul.f32 %v5175, %v5254
        %v5256 = vrcp.pop %v5218
        %v5257 = vmul.f32 %v5177, %v5256
        %v5258 = vrcp.pop %v5221
        %v5259 = vmul.f32 %v5179, %v5258
        %v5260 = vrcp.pop %v5224
        %v5261 = vmul.f32 %v5181, %v5260
        %v5262 = vrcp.pop %v5227
        %v5263 = vmul.f32 %v5183, %v5262
        %v5264 = vrcp.pop %v5230
        %v5265 = vmul.f32 %v5185, %v5264
        %v5266 = vrcp.pop %v5233
        %v5267 = vmul.f32 %v5187, %v5266
        %v5268 = vrcp.pop %v5236
        %v5269 = vmul.f32 %v5189, %v5268
        %v5270 = vrcp.pop %v5239
        %v5271 = vmul.f32 %v5191, %v5270
        %v5272 = vpack.c.bf16 %v5243, %v5241
        %v5273 = vpack.c.bf16 %v5247, %v5245
        %v5274 = vpack.c.bf16 %v5251, %v5249
        %v5275 = vpack.c.bf16 %v5255, %v5253
        %v5276 = vpack.c.bf16 %v5259, %v5257
        %v5277 = vpack.c.bf16 %v5263, %v5261
        %v5278 = vpack.c.bf16 %v5267, %v5265
        %v5279 = vpack.c.bf16 %v5271, %v5269
        %5280 = vrot.lane.b32.xlu0 %v839, 64
        %v5281 = vpop.permute.xlu0 %5280
        %v5284 = vsel %vm847, %v5272, 0
        %5286 = vmatprep.subr.bf16.mxu0 0
        %5287 = vmatpush1.bf16.msra.mxu0 0
        %5288 = vmatprep.subr.bf16.mxu0 0
        %5289 = vmatpush1.bf16.msra.mxu0 0
        %5290 = vmatprep.subr.bf16.mxu0 0
        %5291 = vmatpush1.bf16.msra.mxu0 0
        %5292 = vmatprep.subr.bf16.mxu0 0
        %5293 = vmatpush1.bf16.msra.mxu0 0
        %5294 = vmatprep.subr.bf16.mxu0 0
        %5295 = vmatpush1.bf16.msra.mxu0 0
        %5296 = vmatprep.subr.bf16.mxu0 0
        %5297 = vmatpush1.bf16.msra.mxu0 0
        %5298 = vmatprep.subr.bf16.mxu0 0
        %5299 = vmatpush1.bf16.msra.mxu0 0
        %5300 = vmatprep.subr.bf16.mxu0 0
        %5301 = vmatpush1.bf16.msra.mxu0 %v5281
        %5302 = vmatprep.subr.bf16.mxu0 0
        %5303 = vmatpush2.bf16.msra.mxu0 0
        %5304 = vmatprep.subr.bf16.mxu0 0
        %5305 = vmatpush2.bf16.msra.mxu0 0
        %5306 = vmatprep.subr.bf16.mxu0 0
        %5307 = vmatpush2.bf16.msra.mxu0 0
        %5308 = vmatprep.subr.bf16.mxu0 0
        %5309 = vmatpush2.bf16.msra.mxu0 0
        %5310 = vmatprep.subr.bf16.mxu0 0
        %5311 = vmatpush2.bf16.msra.mxu0 0
        %5312 = vmatprep.subr.bf16.mxu0 0
        %5313 = vmatpush2.bf16.msra.mxu0 0
        %5314 = vmatprep.subr.bf16.mxu0 0
        %5315 = vmatpush2.bf16.msra.mxu0 0
        %5316 = vmatprep.subr.bf16.mxu0 0
        %5317 = vmatpush2.bf16.msra.mxu0 0
        %5318 = vmatprep.mubr.bf16.mxu0 0
        %5319 = vmatmul.mubr.bf16.gmra.mxu0 %v5284
        %v5320 = vpop.f32.mrf.mxu0
        %v5321 = vadd.f32 0.0, %v5320
        %v5322 = vpop.f32.mrf.mxu0
        %v5323 = vpop.f32.mrf.mxu0
        %v5324 = vadd.f32 0.0, %v5323
        %v5325 = vpop.f32.mrf.mxu0
        %5326 = vdwg.mxu0
        %5327 = vrot.lane.b32.xlu0 %v840, 64
        %v5328 = vpop.permute.xlu0 %5327
        %v5331 = vsel %vm847, %v5273, 0
        %5333 = vmatprep.subr.bf16.mxu0 0
        %5334 = vmatpush1.bf16.msra.mxu0 0
        %5335 = vmatprep.subr.bf16.mxu0 0
        %5336 = vmatpush1.bf16.msra.mxu0 0
        %5337 = vmatprep.subr.bf16.mxu0 0
        %5338 = vmatpush1.bf16.msra.mxu0 0
        %5339 = vmatprep.subr.bf16.mxu0 0
        %5340 = vmatpush1.bf16.msra.mxu0 0
        %5341 = vmatprep.subr.bf16.mxu0 0
        %5342 = vmatpush1.bf16.msra.mxu0 0
        %5343 = vmatprep.subr.bf16.mxu0 0
        %5344 = vmatpush1.bf16.msra.mxu0 0
        %5345 = vmatprep.subr.bf16.mxu0 0
        %5346 = vmatpush1.bf16.msra.mxu0 0
        %5347 = vmatprep.subr.bf16.mxu0 0
        %5348 = vmatpush1.bf16.msra.mxu0 %v5328
        %5349 = vmatprep.subr.bf16.mxu0 0
        %5350 = vmatpush2.bf16.msra.mxu0 0
        %5351 = vmatprep.subr.bf16.mxu0 0
        %5352 = vmatpush2.bf16.msra.mxu0 0
        %5353 = vmatprep.subr.bf16.mxu0 0
        %5354 = vmatpush2.bf16.msra.mxu0 0
        %5355 = vmatprep.subr.bf16.mxu0 0
        %5356 = vmatpush2.bf16.msra.mxu0 0
        %5357 = vmatprep.subr.bf16.mxu0 0
        %5358 = vmatpush2.bf16.msra.mxu0 0
        %5359 = vmatprep.subr.bf16.mxu0 0
        %5360 = vmatpush2.bf16.msra.mxu0 0
        %5361 = vmatprep.subr.bf16.mxu0 0
        %5362 = vmatpush2.bf16.msra.mxu0 0
        %5363 = vmatprep.subr.bf16.mxu0 0
        %5364 = vmatpush2.bf16.msra.mxu0 0
        %5365 = vmatprep.mubr.bf16.mxu0 0
        %5366 = vmatmul.mubr.bf16.gmra.mxu0 %v5331
        %v5367 = vpop.f32.mrf.mxu0
        %v5368 = vadd.f32 0.0, %v5367
        %v5369 = vpop.f32.mrf.mxu0
        %v5370 = vpop.f32.mrf.mxu0
        %v5371 = vadd.f32 0.0, %v5370
        %v5372 = vpop.f32.mrf.mxu0
        %5373 = vdwg.mxu0
        %5374 = vrot.lane.b32.xlu0 %v841, 64
        %v5375 = vpop.permute.xlu0 %5374
        %v5378 = vsel %vm847, %v5274, 0
        %5380 = vmatprep.subr.bf16.mxu0 0
        %5381 = vmatpush1.bf16.msra.mxu0 0
        %5382 = vmatprep.subr.bf16.mxu0 0
        %5383 = vmatpush1.bf16.msra.mxu0 0
        %5384 = vmatprep.subr.bf16.mxu0 0
        %5385 = vmatpush1.bf16.msra.mxu0 0
        %5386 = vmatprep.subr.bf16.mxu0 0
        %5387 = vmatpush1.bf16.msra.mxu0 0
        %5388 = vmatprep.subr.bf16.mxu0 0
        %5389 = vmatpush1.bf16.msra.mxu0 0
        %5390 = vmatprep.subr.bf16.mxu0 0
        %5391 = vmatpush1.bf16.msra.mxu0 0
        %5392 = vmatprep.subr.bf16.mxu0 0
        %5393 = vmatpush1.bf16.msra.mxu0 0
        %5394 = vmatprep.subr.bf16.mxu0 0
        %5395 = vmatpush1.bf16.msra.mxu0 %v5375
        %5396 = vmatprep.subr.bf16.mxu0 0
        %5397 = vmatpush2.bf16.msra.mxu0 0
        %5398 = vmatprep.subr.bf16.mxu0 0
        %5399 = vmatpush2.bf16.msra.mxu0 0
        %5400 = vmatprep.subr.bf16.mxu0 0
        %5401 = vmatpush2.bf16.msra.mxu0 0
        %5402 = vmatprep.subr.bf16.mxu0 0
        %5403 = vmatpush2.bf16.msra.mxu0 0
        %5404 = vmatprep.subr.bf16.mxu0 0
        %5405 = vmatpush2.bf16.msra.mxu0 0
        %5406 = vmatprep.subr.bf16.mxu0 0
        %5407 = vmatpush2.bf16.msra.mxu0 0
        %5408 = vmatprep.subr.bf16.mxu0 0
        %5409 = vmatpush2.bf16.msra.mxu0 0
        %5410 = vmatprep.subr.bf16.mxu0 0
        %5411 = vmatpush2.bf16.msra.mxu0 0
        %5412 = vmatprep.mubr.bf16.mxu0 0
        %5413 = vmatmul.mubr.bf16.gmra.mxu0 %v5378
        %v5414 = vpop.f32.mrf.mxu0
        %v5415 = vadd.f32 0.0, %v5414
        %v5416 = vpop.f32.mrf.mxu0
        %v5417 = vpop.f32.mrf.mxu0
        %v5418 = vadd.f32 0.0, %v5417
        %v5419 = vpop.f32.mrf.mxu0
        %5420 = vdwg.mxu0
        %5421 = vrot.lane.b32.xlu0 %v842, 64
        %v5422 = vpop.permute.xlu0 %5421
        %v5425 = vsel %vm847, %v5275, 0
        %5427 = vmatprep.subr.bf16.mxu0 0
        %5428 = vmatpush1.bf16.msra.mxu0 0
        %5429 = vmatprep.subr.bf16.mxu0 0
        %5430 = vmatpush1.bf16.msra.mxu0 0
        %5431 = vmatprep.subr.bf16.mxu0 0
        %5432 = vmatpush1.bf16.msra.mxu0 0
        %5433 = vmatprep.subr.bf16.mxu0 0
        %5434 = vmatpush1.bf16.msra.mxu0 0
        %5435 = vmatprep.subr.bf16.mxu0 0
        %5436 = vmatpush1.bf16.msra.mxu0 0
        %5437 = vmatprep.subr.bf16.mxu0 0
        %5438 = vmatpush1.bf16.msra.mxu0 0
        %5439 = vmatprep.subr.bf16.mxu0 0
        %5440 = vmatpush1.bf16.msra.mxu0 0
        %5441 = vmatprep.subr.bf16.mxu0 0
        %5442 = vmatpush1.bf16.msra.mxu0 %v5422
        %5443 = vmatprep.subr.bf16.mxu0 0
        %5444 = vmatpush2.bf16.msra.mxu0 0
        %5445 = vmatprep.subr.bf16.mxu0 0
        %5446 = vmatpush2.bf16.msra.mxu0 0
        %5447 = vmatprep.subr.bf16.mxu0 0
        %5448 = vmatpush2.bf16.msra.mxu0 0
        %5449 = vmatprep.subr.bf16.mxu0 0
        %5450 = vmatpush2.bf16.msra.mxu0 0
        %5451 = vmatprep.subr.bf16.mxu0 0
        %5452 = vmatpush2.bf16.msra.mxu0 0
        %5453 = vmatprep.subr.bf16.mxu0 0
        %5454 = vmatpush2.bf16.msra.mxu0 0
        %5455 = vmatprep.subr.bf16.mxu0 0
        %5456 = vmatpush2.bf16.msra.mxu0 0
        %5457 = vmatprep.subr.bf16.mxu0 0
        %5458 = vmatpush2.bf16.msra.mxu0 0
        %5459 = vmatprep.mubr.bf16.mxu0 0
        %5460 = vmatmul.mubr.bf16.gmra.mxu0 %v5425
        %v5461 = vpop.f32.mrf.mxu0
        %v5462 = vadd.f32 0.0, %v5461
        %v5463 = vpop.f32.mrf.mxu0
        %v5464 = vpop.f32.mrf.mxu0
        %v5465 = vadd.f32 0.0, %v5464
        %v5466 = vpop.f32.mrf.mxu0
        %5467 = vdwg.mxu0
        %5468 = vrot.lane.b32.xlu0 %v843, 64
        %v5469 = vpop.permute.xlu0 %5468
        %v5472 = vsel %vm847, %v5276, 0
        %5474 = vmatprep.subr.bf16.mxu0 0
        %5475 = vmatpush1.bf16.msra.mxu0 0
        %5476 = vmatprep.subr.bf16.mxu0 0
        %5477 = vmatpush1.bf16.msra.mxu0 0
        %5478 = vmatprep.subr.bf16.mxu0 0
        %5479 = vmatpush1.bf16.msra.mxu0 0
        %5480 = vmatprep.subr.bf16.mxu0 0
        %5481 = vmatpush1.bf16.msra.mxu0 0
        %5482 = vmatprep.subr.bf16.mxu0 0
        %5483 = vmatpush1.bf16.msra.mxu0 0
        %5484 = vmatprep.subr.bf16.mxu0 0
        %5485 = vmatpush1.bf16.msra.mxu0 0
        %5486 = vmatprep.subr.bf16.mxu0 0
        %5487 = vmatpush1.bf16.msra.mxu0 0
        %5488 = vmatprep.subr.bf16.mxu0 0
        %5489 = vmatpush1.bf16.msra.mxu0 %v5469
        %5490 = vmatprep.subr.bf16.mxu0 0
        %5491 = vmatpush2.bf16.msra.mxu0 0
        %5492 = vmatprep.subr.bf16.mxu0 0
        %5493 = vmatpush2.bf16.msra.mxu0 0
        %5494 = vmatprep.subr.bf16.mxu0 0
        %5495 = vmatpush2.bf16.msra.mxu0 0
        %5496 = vmatprep.subr.bf16.mxu0 0
        %5497 = vmatpush2.bf16.msra.mxu0 0
        %5498 = vmatprep.subr.bf16.mxu0 0
        %5499 = vmatpush2.bf16.msra.mxu0 0
        %5500 = vmatprep.subr.bf16.mxu0 0
        %5501 = vmatpush2.bf16.msra.mxu0 0
        %5502 = vmatprep.subr.bf16.mxu0 0
        %5503 = vmatpush2.bf16.msra.mxu0 0
        %5504 = vmatprep.subr.bf16.mxu0 0
        %5505 = vmatpush2.bf16.msra.mxu0 0
        %5506 = vmatprep.mubr.bf16.mxu0 0
        %5507 = vmatmul.mubr.bf16.gmra.mxu0 %v5472
        %v5508 = vpop.f32.mrf.mxu0
        %v5509 = vadd.f32 0.0, %v5508
        %v5510 = vpop.f32.mrf.mxu0
        %v5511 = vpop.f32.mrf.mxu0
        %v5512 = vadd.f32 0.0, %v5511
        %v5513 = vpop.f32.mrf.mxu0
        %5514 = vdwg.mxu0
        %5515 = vrot.lane.b32.xlu0 %v844, 64
        %v5516 = vpop.permute.xlu0 %5515
        %v5519 = vsel %vm847, %v5277, 0
        %5521 = vmatprep.subr.bf16.mxu0 0
        %5522 = vmatpush1.bf16.msra.mxu0 0
        %5523 = vmatprep.subr.bf16.mxu0 0
        %5524 = vmatpush1.bf16.msra.mxu0 0
        %5525 = vmatprep.subr.bf16.mxu0 0
        %5526 = vmatpush1.bf16.msra.mxu0 0
        %5527 = vmatprep.subr.bf16.mxu0 0
        %5528 = vmatpush1.bf16.msra.mxu0 0
        %5529 = vmatprep.subr.bf16.mxu0 0
        %5530 = vmatpush1.bf16.msra.mxu0 0
        %5531 = vmatprep.subr.bf16.mxu0 0
        %5532 = vmatpush1.bf16.msra.mxu0 0
        %5533 = vmatprep.subr.bf16.mxu0 0
        %5534 = vmatpush1.bf16.msra.mxu0 0
        %5535 = vmatprep.subr.bf16.mxu0 0
        %5536 = vmatpush1.bf16.msra.mxu0 %v5516
        %5537 = vmatprep.subr.bf16.mxu0 0
        %5538 = vmatpush2.bf16.msra.mxu0 0
        %5539 = vmatprep.subr.bf16.mxu0 0
        %5540 = vmatpush2.bf16.msra.mxu0 0
        %5541 = vmatprep.subr.bf16.mxu0 0
        %5542 = vmatpush2.bf16.msra.mxu0 0
        %5543 = vmatprep.subr.bf16.mxu0 0
        %5544 = vmatpush2.bf16.msra.mxu0 0
        %5545 = vmatprep.subr.bf16.mxu0 0
        %5546 = vmatpush2.bf16.msra.mxu0 0
        %5547 = vmatprep.subr.bf16.mxu0 0
        %5548 = vmatpush2.bf16.msra.mxu0 0
        %5549 = vmatprep.subr.bf16.mxu0 0
        %5550 = vmatpush2.bf16.msra.mxu0 0
        %5551 = vmatprep.subr.bf16.mxu0 0
        %5552 = vmatpush2.bf16.msra.mxu0 0
        %5553 = vmatprep.mubr.bf16.mxu0 0
        %5554 = vmatmul.mubr.bf16.gmra.mxu0 %v5519
        %v5555 = vpop.f32.mrf.mxu0
        %v5556 = vadd.f32 0.0, %v5555
        %v5557 = vpop.f32.mrf.mxu0
        %v5558 = vpop.f32.mrf.mxu0
        %v5559 = vadd.f32 0.0, %v5558
        %v5560 = vpop.f32.mrf.mxu0
        %5561 = vdwg.mxu0
        %5562 = vrot.lane.b32.xlu0 %v845, 64
        %v5563 = vpop.permute.xlu0 %5562
        %v5566 = vsel %vm847, %v5278, 0
        %5568 = vmatprep.subr.bf16.mxu0 0
        %5569 = vmatpush1.bf16.msra.mxu0 0
        %5570 = vmatprep.subr.bf16.mxu0 0
        %5571 = vmatpush1.bf16.msra.mxu0 0
        %5572 = vmatprep.subr.bf16.mxu0 0
        %5573 = vmatpush1.bf16.msra.mxu0 0
        %5574 = vmatprep.subr.bf16.mxu0 0
        %5575 = vmatpush1.bf16.msra.mxu0 0
        %5576 = vmatprep.subr.bf16.mxu0 0
        %5577 = vmatpush1.bf16.msra.mxu0 0
        %5578 = vmatprep.subr.bf16.mxu0 0
        %5579 = vmatpush1.bf16.msra.mxu0 0
        %5580 = vmatprep.subr.bf16.mxu0 0
        %5581 = vmatpush1.bf16.msra.mxu0 0
        %5582 = vmatprep.subr.bf16.mxu0 0
        %5583 = vmatpush1.bf16.msra.mxu0 %v5563
        %5584 = vmatprep.subr.bf16.mxu0 0
        %5585 = vmatpush2.bf16.msra.mxu0 0
        %5586 = vmatprep.subr.bf16.mxu0 0
        %5587 = vmatpush2.bf16.msra.mxu0 0
        %5588 = vmatprep.subr.bf16.mxu0 0
        %5589 = vmatpush2.bf16.msra.mxu0 0
        %5590 = vmatprep.subr.bf16.mxu0 0
        %5591 = vmatpush2.bf16.msra.mxu0 0
        %5592 = vmatprep.subr.bf16.mxu0 0
        %5593 = vmatpush2.bf16.msra.mxu0 0
        %5594 = vmatprep.subr.bf16.mxu0 0
        %5595 = vmatpush2.bf16.msra.mxu0 0
        %5596 = vmatprep.subr.bf16.mxu0 0
        %5597 = vmatpush2.bf16.msra.mxu0 0
        %5598 = vmatprep.subr.bf16.mxu0 0
        %5599 = vmatpush2.bf16.msra.mxu0 0
        %5600 = vmatprep.mubr.bf16.mxu0 0
        %5601 = vmatmul.mubr.bf16.gmra.mxu0 %v5566
        %v5602 = vpop.f32.mrf.mxu0
        %v5603 = vadd.f32 0.0, %v5602
        %v5604 = vpop.f32.mrf.mxu0
        %v5605 = vpop.f32.mrf.mxu0
        %v5606 = vadd.f32 0.0, %v5605
        %v5607 = vpop.f32.mrf.mxu0
        %5608 = vdwg.mxu0
        %5609 = vrot.lane.b32.xlu0 %v846, 64
        %v5610 = vpop.permute.xlu0 %5609
        %v5613 = vsel %vm847, %v5279, 0
        %5615 = vmatprep.subr.bf16.mxu0 0
        %5616 = vmatpush1.bf16.msra.mxu0 0
        %5617 = vmatprep.subr.bf16.mxu0 0
        %5618 = vmatpush1.bf16.msra.mxu0 0
        %5619 = vmatprep.subr.bf16.mxu0 0
        %5620 = vmatpush1.bf16.msra.mxu0 0
        %5621 = vmatprep.subr.bf16.mxu0 0
        %5622 = vmatpush1.bf16.msra.mxu0 0
        %5623 = vmatprep.subr.bf16.mxu0 0
        %5624 = vmatpush1.bf16.msra.mxu0 0
        %5625 = vmatprep.subr.bf16.mxu0 0
        %5626 = vmatpush1.bf16.msra.mxu0 0
        %5627 = vmatprep.subr.bf16.mxu0 0
        %5628 = vmatpush1.bf16.msra.mxu0 0
        %5629 = vmatprep.subr.bf16.mxu0 0
        %5630 = vmatpush1.bf16.msra.mxu0 %v5610
        %5631 = vmatprep.subr.bf16.mxu0 0
        %5632 = vmatpush2.bf16.msra.mxu0 0
        %5633 = vmatprep.subr.bf16.mxu0 0
        %5634 = vmatpush2.bf16.msra.mxu0 0
        %5635 = vmatprep.subr.bf16.mxu0 0
        %5636 = vmatpush2.bf16.msra.mxu0 0
        %5637 = vmatprep.subr.bf16.mxu0 0
        %5638 = vmatpush2.bf16.msra.mxu0 0
        %5639 = vmatprep.subr.bf16.mxu0 0
        %5640 = vmatpush2.bf16.msra.mxu0 0
        %5641 = vmatprep.subr.bf16.mxu0 0
        %5642 = vmatpush2.bf16.msra.mxu0 0
        %5643 = vmatprep.subr.bf16.mxu0 0
        %5644 = vmatpush2.bf16.msra.mxu0 0
        %5645 = vmatprep.subr.bf16.mxu0 0
        %5646 = vmatpush2.bf16.msra.mxu0 0
        %5647 = vmatprep.mubr.bf16.mxu0 0
        %5648 = vmatmul.mubr.bf16.gmra.mxu0 %v5613
        %v5649 = vpop.f32.mrf.mxu0
        %v5650 = vadd.f32 0.0, %v5649
        %v5651 = vpop.f32.mrf.mxu0
        %v5652 = vpop.f32.mrf.mxu0
        %v5653 = vadd.f32 0.0, %v5652
        %v5654 = vpop.f32.mrf.mxu0
        %5655 = vdwg.mxu0
        %5656 = vrot.lane.b32.xlu0 %v823, 48
        %v5657 = vpop.permute.xlu0 %5656
        %5658 = vrot.lane.b32.xlu0 %v831, 48
        %v5659 = vpop.permute.xlu0 %5658
        %v5661 = vsel %vm847, %v5657, 0
        %v5664 = vsel %vm847, %v5659, 0
        %5666 = vmatprep.subr.bf16.mxu0 0
        %5667 = vmatpush1.bf16.xpose.msra.mxu0 0
        %5668 = vmatprep.subr.bf16.mxu0 0
        %5669 = vmatpush1.bf16.xpose.msra.mxu0 0
        %5670 = vmatprep.subr.bf16.mxu0 0
        %5671 = vmatpush1.bf16.xpose.msra.mxu0 0
        %5672 = vmatprep.subr.bf16.mxu0 0
        %5673 = vmatpush1.bf16.xpose.msra.mxu0 0
        %5674 = vmatprep.subr.bf16.mxu0 0
        %5675 = vmatpush1.bf16.xpose.msra.mxu0 0
        %5676 = vmatprep.subr.bf16.mxu0 0
        %5677 = vmatpush1.bf16.xpose.msra.mxu0 0
        %5678 = vmatprep.subr.bf16.mxu0 0
        %5679 = vmatpush1.bf16.xpose.msra.mxu0 0
        %5680 = vmatprep.subr.bf16.mxu0 0
        %5681 = vmatpush1.bf16.xpose.msra.mxu0 %v5664
        %5682 = vmatprep.subr.bf16.mxu0 0
        %5683 = vmatpush2.bf16.xpose.msra.mxu0 0
        %5684 = vmatprep.subr.bf16.mxu0 0
        %5685 = vmatpush2.bf16.xpose.msra.mxu0 0
        %5686 = vmatprep.subr.bf16.mxu0 0
        %5687 = vmatpush2.bf16.xpose.msra.mxu0 0
        %5688 = vmatprep.subr.bf16.mxu0 0
        %5689 = vmatpush2.bf16.xpose.msra.mxu0 0
        %5690 = vmatprep.subr.bf16.mxu0 0
        %5691 = vmatpush2.bf16.xpose.msra.mxu0 0
        %5692 = vmatprep.subr.bf16.mxu0 0
        %5693 = vmatpush2.bf16.xpose.msra.mxu0 0
        %5694 = vmatprep.subr.bf16.mxu0 0
        %5695 = vmatpush2.bf16.xpose.msra.mxu0 0
        %5696 = vmatprep.subr.bf16.mxu0 0
        %5697 = vmatpush2.bf16.xpose.msra.mxu0 0
        %5698 = vmatprep.mubr.bf16.mxu0 0
        %5699 = vmatmul.mubr.bf16.gmra.mxu0 %v5661
        %v5700 = vpop.f32.mrf.mxu0
        %v5701 = vadd.f32 0.0, %v5700
        %v5702 = vpop.f32.mrf.mxu0
        %v5703 = vpop.f32.mrf.mxu0
        %v5704 = vadd.f32 0.0, %v5703
        %v5705 = vpop.f32.mrf.mxu0
        %5706 = vdwg.mxu0
        %5707 = vrot.lane.b32.xlu0 %v824, 48
        %v5708 = vpop.permute.xlu0 %5707
        %5709 = vrot.lane.b32.xlu0 %v832, 48
        %v5710 = vpop.permute.xlu0 %5709
        %v5712 = vsel %vm847, %v5708, 0
        %v5715 = vsel %vm847, %v5710, 0
        %5717 = vmatprep.subr.bf16.mxu0 0
        %5718 = vmatpush1.bf16.xpose.msra.mxu0 0
        %5719 = vmatprep.subr.bf16.mxu0 0
        %5720 = vmatpush1.bf16.xpose.msra.mxu0 0
        %5721 = vmatprep.subr.bf16.mxu0 0
        %5722 = vmatpush1.bf16.xpose.msra.mxu0 0
        %5723 = vmatprep.subr.bf16.mxu0 0
        %5724 = vmatpush1.bf16.xpose.msra.mxu0 0
        %5725 = vmatprep.subr.bf16.mxu0 0
        %5726 = vmatpush1.bf16.xpose.msra.mxu0 0
        %5727 = vmatprep.subr.bf16.mxu0 0
        %5728 = vmatpush1.bf16.xpose.msra.mxu0 0
        %5729 = vmatprep.subr.bf16.mxu0 0
        %5730 = vmatpush1.bf16.xpose.msra.mxu0 0
        %5731 = vmatprep.subr.bf16.mxu0 0
        %5732 = vmatpush1.bf16.xpose.msra.mxu0 %v5715
        %5733 = vmatprep.subr.bf16.mxu0 0
        %5734 = vmatpush2.bf16.xpose.msra.mxu0 0
        %5735 = vmatprep.subr.bf16.mxu0 0
        %5736 = vmatpush2.bf16.xpose.msra.mxu0 0
        %5737 = vmatprep.subr.bf16.mxu0 0
        %5738 = vmatpush2.bf16.xpose.msra.mxu0 0
        %5739 = vmatprep.subr.bf16.mxu0 0
        %5740 = vmatpush2.bf16.xpose.msra.mxu0 0
        %5741 = vmatprep.subr.bf16.mxu0 0
        %5742 = vmatpush2.bf16.xpose.msra.mxu0 0
        %5743 = vmatprep.subr.bf16.mxu0 0
        %5744 = vmatpush2.bf16.xpose.msra.mxu0 0
        %5745 = vmatprep.subr.bf16.mxu0 0
        %5746 = vmatpush2.bf16.xpose.msra.mxu0 0
        %5747 = vmatprep.subr.bf16.mxu0 0
        %5748 = vmatpush2.bf16.xpose.msra.mxu0 0
        %5749 = vmatprep.mubr.bf16.mxu0 0
        %5750 = vmatmul.mubr.bf16.gmra.mxu0 %v5712
        %v5751 = vpop.f32.mrf.mxu0
        %v5752 = vadd.f32 0.0, %v5751
        %v5753 = vpop.f32.mrf.mxu0
        %v5754 = vpop.f32.mrf.mxu0
        %v5755 = vadd.f32 0.0, %v5754
        %v5756 = vpop.f32.mrf.mxu0
        %5757 = vdwg.mxu0
        %5758 = vrot.lane.b32.xlu0 %v825, 48
        %v5759 = vpop.permute.xlu0 %5758
        %5760 = vrot.lane.b32.xlu0 %v833, 48
        %v5761 = vpop.permute.xlu0 %5760
        %v5763 = vsel %vm847, %v5759, 0
        %v5766 = vsel %vm847, %v5761, 0
        %5768 = vmatprep.subr.bf16.mxu0 0
        %5769 = vmatpush1.bf16.xpose.msra.mxu0 0
        %5770 = vmatprep.subr.bf16.mxu0 0
        %5771 = vmatpush1.bf16.xpose.msra.mxu0 0
        %5772 = vmatprep.subr.bf16.mxu0 0
        %5773 = vmatpush1.bf16.xpose.msra.mxu0 0
        %5774 = vmatprep.subr.bf16.mxu0 0
        %5775 = vmatpush1.bf16.xpose.msra.mxu0 0
        %5776 = vmatprep.subr.bf16.mxu0 0
        %5777 = vmatpush1.bf16.xpose.msra.mxu0 0
        %5778 = vmatprep.subr.bf16.mxu0 0
        %5779 = vmatpush1.bf16.xpose.msra.mxu0 0
        %5780 = vmatprep.subr.bf16.mxu0 0
        %5781 = vmatpush1.bf16.xpose.msra.mxu0 0
        %5782 = vmatprep.subr.bf16.mxu0 0
        %5783 = vmatpush1.bf16.xpose.msra.mxu0 %v5766
        %5784 = vmatprep.subr.bf16.mxu0 0
        %5785 = vmatpush2.bf16.xpose.msra.mxu0 0
        %5786 = vmatprep.subr.bf16.mxu0 0
        %5787 = vmatpush2.bf16.xpose.msra.mxu0 0
        %5788 = vmatprep.subr.bf16.mxu0 0
        %5789 = vmatpush2.bf16.xpose.msra.mxu0 0
        %5790 = vmatprep.subr.bf16.mxu0 0
        %5791 = vmatpush2.bf16.xpose.msra.mxu0 0
        %5792 = vmatprep.subr.bf16.mxu0 0
        %5793 = vmatpush2.bf16.xpose.msra.mxu0 0
        %5794 = vmatprep.subr.bf16.mxu0 0
        %5795 = vmatpush2.bf16.xpose.msra.mxu0 0
        %5796 = vmatprep.subr.bf16.mxu0 0
        %5797 = vmatpush2.bf16.xpose.msra.mxu0 0
        %5798 = vmatprep.subr.bf16.mxu0 0
        %5799 = vmatpush2.bf16.xpose.msra.mxu0 0
        %5800 = vmatprep.mubr.bf16.mxu0 0
        %5801 = vmatmul.mubr.bf16.gmra.mxu0 %v5763
        %v5802 = vpop.f32.mrf.mxu0
        %v5803 = vadd.f32 0.0, %v5802
        %v5804 = vpop.f32.mrf.mxu0
        %v5805 = vpop.f32.mrf.mxu0
        %v5806 = vadd.f32 0.0, %v5805
        %v5807 = vpop.f32.mrf.mxu0
        %5808 = vdwg.mxu0
        %5809 = vrot.lane.b32.xlu0 %v826, 48
        %v5810 = vpop.permute.xlu0 %5809
        %5811 = vrot.lane.b32.xlu0 %v834, 48
        %v5812 = vpop.permute.xlu0 %5811
        %v5814 = vsel %vm847, %v5810, 0
        %v5817 = vsel %vm847, %v5812, 0
        %5819 = vmatprep.subr.bf16.mxu0 0
        %5820 = vmatpush1.bf16.xpose.msra.mxu0 0
        %5821 = vmatprep.subr.bf16.mxu0 0
        %5822 = vmatpush1.bf16.xpose.msra.mxu0 0
        %5823 = vmatprep.subr.bf16.mxu0 0
        %5824 = vmatpush1.bf16.xpose.msra.mxu0 0
        %5825 = vmatprep.subr.bf16.mxu0 0
        %5826 = vmatpush1.bf16.xpose.msra.mxu0 0
        %5827 = vmatprep.subr.bf16.mxu0 0
        %5828 = vmatpush1.bf16.xpose.msra.mxu0 0
        %5829 = vmatprep.subr.bf16.mxu0 0
        %5830 = vmatpush1.bf16.xpose.msra.mxu0 0
        %5831 = vmatprep.subr.bf16.mxu0 0
        %5832 = vmatpush1.bf16.xpose.msra.mxu0 0
        %5833 = vmatprep.subr.bf16.mxu0 0
        %5834 = vmatpush1.bf16.xpose.msra.mxu0 %v5817
        %5835 = vmatprep.subr.bf16.mxu0 0
        %5836 = vmatpush2.bf16.xpose.msra.mxu0 0
        %5837 = vmatprep.subr.bf16.mxu0 0
        %5838 = vmatpush2.bf16.xpose.msra.mxu0 0
        %5839 = vmatprep.subr.bf16.mxu0 0
        %5840 = vmatpush2.bf16.xpose.msra.mxu0 0
        %5841 = vmatprep.subr.bf16.mxu0 0
        %5842 = vmatpush2.bf16.xpose.msra.mxu0 0
        %5843 = vmatprep.subr.bf16.mxu0 0
        %5844 = vmatpush2.bf16.xpose.msra.mxu0 0
        %5845 = vmatprep.subr.bf16.mxu0 0
        %5846 = vmatpush2.bf16.xpose.msra.mxu0 0
        %5847 = vmatprep.subr.bf16.mxu0 0
        %5848 = vmatpush2.bf16.xpose.msra.mxu0 0
        %5849 = vmatprep.subr.bf16.mxu0 0
        %5850 = vmatpush2.bf16.xpose.msra.mxu0 0
        %5851 = vmatprep.mubr.bf16.mxu0 0
        %5852 = vmatmul.mubr.bf16.gmra.mxu0 %v5814
        %v5853 = vpop.f32.mrf.mxu0
        %v5854 = vadd.f32 0.0, %v5853
        %v5855 = vpop.f32.mrf.mxu0
        %v5856 = vpop.f32.mrf.mxu0
        %v5857 = vadd.f32 0.0, %v5856
        %v5858 = vpop.f32.mrf.mxu0
        %5859 = vdwg.mxu0
        %5860 = vrot.lane.b32.xlu0 %v827, 48
        %v5861 = vpop.permute.xlu0 %5860
        %5862 = vrot.lane.b32.xlu0 %v835, 48
        %v5863 = vpop.permute.xlu0 %5862
        %v5865 = vsel %vm847, %v5861, 0
        %v5868 = vsel %vm847, %v5863, 0
        %5870 = vmatprep.subr.bf16.mxu0 0
        %5871 = vmatpush1.bf16.xpose.msra.mxu0 0
        %5872 = vmatprep.subr.bf16.mxu0 0
        %5873 = vmatpush1.bf16.xpose.msra.mxu0 0
        %5874 = vmatprep.subr.bf16.mxu0 0
        %5875 = vmatpush1.bf16.xpose.msra.mxu0 0
        %5876 = vmatprep.subr.bf16.mxu0 0
        %5877 = vmatpush1.bf16.xpose.msra.mxu0 0
        %5878 = vmatprep.subr.bf16.mxu0 0
        %5879 = vmatpush1.bf16.xpose.msra.mxu0 0
        %5880 = vmatprep.subr.bf16.mxu0 0
        %5881 = vmatpush1.bf16.xpose.msra.mxu0 0
        %5882 = vmatprep.subr.bf16.mxu0 0
        %5883 = vmatpush1.bf16.xpose.msra.mxu0 0
        %5884 = vmatprep.subr.bf16.mxu0 0
        %5885 = vmatpush1.bf16.xpose.msra.mxu0 %v5868
        %5886 = vmatprep.subr.bf16.mxu0 0
        %5887 = vmatpush2.bf16.xpose.msra.mxu0 0
        %5888 = vmatprep.subr.bf16.mxu0 0
        %5889 = vmatpush2.bf16.xpose.msra.mxu0 0
        %5890 = vmatprep.subr.bf16.mxu0 0
        %5891 = vmatpush2.bf16.xpose.msra.mxu0 0
        %5892 = vmatprep.subr.bf16.mxu0 0
        %5893 = vmatpush2.bf16.xpose.msra.mxu0 0
        %5894 = vmatprep.subr.bf16.mxu0 0
        %5895 = vmatpush2.bf16.xpose.msra.mxu0 0
        %5896 = vmatprep.subr.bf16.mxu0 0
        %5897 = vmatpush2.bf16.xpose.msra.mxu0 0
        %5898 = vmatprep.subr.bf16.mxu0 0
        %5899 = vmatpush2.bf16.xpose.msra.mxu0 0
        %5900 = vmatprep.subr.bf16.mxu0 0
        %5901 = vmatpush2.bf16.xpose.msra.mxu0 0
        %5902 = vmatprep.mubr.bf16.mxu0 0
        %5903 = vmatmul.mubr.bf16.gmra.mxu0 %v5865
        %v5904 = vpop.f32.mrf.mxu0
        %v5905 = vadd.f32 0.0, %v5904
        %v5906 = vpop.f32.mrf.mxu0
        %v5907 = vpop.f32.mrf.mxu0
        %v5908 = vadd.f32 0.0, %v5907
        %v5909 = vpop.f32.mrf.mxu0
        %5910 = vdwg.mxu0
        %5911 = vrot.lane.b32.xlu0 %v828, 48
        %v5912 = vpop.permute.xlu0 %5911
        %5913 = vrot.lane.b32.xlu0 %v836, 48
        %v5914 = vpop.permute.xlu0 %5913
        %v5916 = vsel %vm847, %v5912, 0
        %v5919 = vsel %vm847, %v5914, 0
        %5921 = vmatprep.subr.bf16.mxu0 0
        %5922 = vmatpush1.bf16.xpose.msra.mxu0 0
        %5923 = vmatprep.subr.bf16.mxu0 0
        %5924 = vmatpush1.bf16.xpose.msra.mxu0 0
        %5925 = vmatprep.subr.bf16.mxu0 0
        %5926 = vmatpush1.bf16.xpose.msra.mxu0 0
        %5927 = vmatprep.subr.bf16.mxu0 0
        %5928 = vmatpush1.bf16.xpose.msra.mxu0 0
        %5929 = vmatprep.subr.bf16.mxu0 0
        %5930 = vmatpush1.bf16.xpose.msra.mxu0 0
        %5931 = vmatprep.subr.bf16.mxu0 0
        %5932 = vmatpush1.bf16.xpose.msra.mxu0 0
        %5933 = vmatprep.subr.bf16.mxu0 0
        %5934 = vmatpush1.bf16.xpose.msra.mxu0 0
        %5935 = vmatprep.subr.bf16.mxu0 0
        %5936 = vmatpush1.bf16.xpose.msra.mxu0 %v5919
        %5937 = vmatprep.subr.bf16.mxu0 0
        %5938 = vmatpush2.bf16.xpose.msra.mxu0 0
        %5939 = vmatprep.subr.bf16.mxu0 0
        %5940 = vmatpush2.bf16.xpose.msra.mxu0 0
        %5941 = vmatprep.subr.bf16.mxu0 0
        %5942 = vmatpush2.bf16.xpose.msra.mxu0 0
        %5943 = vmatprep.subr.bf16.mxu0 0
        %5944 = vmatpush2.bf16.xpose.msra.mxu0 0
        %5945 = vmatprep.subr.bf16.mxu0 0
        %5946 = vmatpush2.bf16.xpose.msra.mxu0 0
        %5947 = vmatprep.subr.bf16.mxu0 0
        %5948 = vmatpush2.bf16.xpose.msra.mxu0 0
        %5949 = vmatprep.subr.bf16.mxu0 0
        %5950 = vmatpush2.bf16.xpose.msra.mxu0 0
        %5951 = vmatprep.subr.bf16.mxu0 0
        %5952 = vmatpush2.bf16.xpose.msra.mxu0 0
        %5953 = vmatprep.mubr.bf16.mxu0 0
        %5954 = vmatmul.mubr.bf16.gmra.mxu0 %v5916
        %v5955 = vpop.f32.mrf.mxu0
        %v5956 = vadd.f32 0.0, %v5955
        %v5957 = vpop.f32.mrf.mxu0
        %v5958 = vpop.f32.mrf.mxu0
        %v5959 = vadd.f32 0.0, %v5958
        %v5960 = vpop.f32.mrf.mxu0
        %5961 = vdwg.mxu0
        %5962 = vrot.lane.b32.xlu0 %v829, 48
        %v5963 = vpop.permute.xlu0 %5962
        %5964 = vrot.lane.b32.xlu0 %v837, 48
        %v5965 = vpop.permute.xlu0 %5964
        %v5967 = vsel %vm847, %v5963, 0
        %v5970 = vsel %vm847, %v5965, 0
        %5972 = vmatprep.subr.bf16.mxu0 0
        %5973 = vmatpush1.bf16.xpose.msra.mxu0 0
        %5974 = vmatprep.subr.bf16.mxu0 0
        %5975 = vmatpush1.bf16.xpose.msra.mxu0 0
        %5976 = vmatprep.subr.bf16.mxu0 0
        %5977 = vmatpush1.bf16.xpose.msra.mxu0 0
        %5978 = vmatprep.subr.bf16.mxu0 0
        %5979 = vmatpush1.bf16.xpose.msra.mxu0 0
        %5980 = vmatprep.subr.bf16.mxu0 0
        %5981 = vmatpush1.bf16.xpose.msra.mxu0 0
        %5982 = vmatprep.subr.bf16.mxu0 0
        %5983 = vmatpush1.bf16.xpose.msra.mxu0 0
        %5984 = vmatprep.subr.bf16.mxu0 0
        %5985 = vmatpush1.bf16.xpose.msra.mxu0 0
        %5986 = vmatprep.subr.bf16.mxu0 0
        %5987 = vmatpush1.bf16.xpose.msra.mxu0 %v5970
        %5988 = vmatprep.subr.bf16.mxu0 0
        %5989 = vmatpush2.bf16.xpose.msra.mxu0 0
        %5990 = vmatprep.subr.bf16.mxu0 0
        %5991 = vmatpush2.bf16.xpose.msra.mxu0 0
        %5992 = vmatprep.subr.bf16.mxu0 0
        %5993 = vmatpush2.bf16.xpose.msra.mxu0 0
        %5994 = vmatprep.subr.bf16.mxu0 0
        %5995 = vmatpush2.bf16.xpose.msra.mxu0 0
        %5996 = vmatprep.subr.bf16.mxu0 0
        %5997 = vmatpush2.bf16.xpose.msra.mxu0 0
        %5998 = vmatprep.subr.bf16.mxu0 0
        %5999 = vmatpush2.bf16.xpose.msra.mxu0 0
        %6000 = vmatprep.subr.bf16.mxu0 0
        %6001 = vmatpush2.bf16.xpose.msra.mxu0 0
        %6002 = vmatprep.subr.bf16.mxu0 0
        %6003 = vmatpush2.bf16.xpose.msra.mxu0 0
        %6004 = vmatprep.mubr.bf16.mxu0 0
        %6005 = vmatmul.mubr.bf16.gmra.mxu0 %v5967
        %v6006 = vpop.f32.mrf.mxu0
        %v6007 = vadd.f32 0.0, %v6006
        %v6008 = vpop.f32.mrf.mxu0
        %v6009 = vpop.f32.mrf.mxu0
        %v6010 = vadd.f32 0.0, %v6009
        %v6011 = vpop.f32.mrf.mxu0
        %6012 = vdwg.mxu0
        %6013 = vrot.lane.b32.xlu0 %v830, 48
        %v6014 = vpop.permute.xlu0 %6013
        %6015 = vrot.lane.b32.xlu0 %v838, 48
        %v6016 = vpop.permute.xlu0 %6015
        %v6018 = vsel %vm847, %v6014, 0
        %v6021 = vsel %vm847, %v6016, 0
        %6023 = vmatprep.subr.bf16.mxu0 0
        %6024 = vmatpush1.bf16.xpose.msra.mxu0 0
        %6025 = vmatprep.subr.bf16.mxu0 0
        %6026 = vmatpush1.bf16.xpose.msra.mxu0 0
        %6027 = vmatprep.subr.bf16.mxu0 0
        %6028 = vmatpush1.bf16.xpose.msra.mxu0 0
        %6029 = vmatprep.subr.bf16.mxu0 0
        %6030 = vmatpush1.bf16.xpose.msra.mxu0 0
        %6031 = vmatprep.subr.bf16.mxu0 0
        %6032 = vmatpush1.bf16.xpose.msra.mxu0 0
        %6033 = vmatprep.subr.bf16.mxu0 0
        %6034 = vmatpush1.bf16.xpose.msra.mxu0 0
        %6035 = vmatprep.subr.bf16.mxu0 0
        %6036 = vmatpush1.bf16.xpose.msra.mxu0 0
        %6037 = vmatprep.subr.bf16.mxu0 0
        %6038 = vmatpush1.bf16.xpose.msra.mxu0 %v6021
        %6039 = vmatprep.subr.bf16.mxu0 0
        %6040 = vmatpush2.bf16.xpose.msra.mxu0 0
        %6041 = vmatprep.subr.bf16.mxu0 0
        %6042 = vmatpush2.bf16.xpose.msra.mxu0 0
        %6043 = vmatprep.subr.bf16.mxu0 0
        %6044 = vmatpush2.bf16.xpose.msra.mxu0 0
        %6045 = vmatprep.subr.bf16.mxu0 0
        %6046 = vmatpush2.bf16.xpose.msra.mxu0 0
        %6047 = vmatprep.subr.bf16.mxu0 0
        %6048 = vmatpush2.bf16.xpose.msra.mxu0 0
        %6049 = vmatprep.subr.bf16.mxu0 0
        %6050 = vmatpush2.bf16.xpose.msra.mxu0 0
        %6051 = vmatprep.subr.bf16.mxu0 0
        %6052 = vmatpush2.bf16.xpose.msra.mxu0 0
        %6053 = vmatprep.subr.bf16.mxu0 0
        %6054 = vmatpush2.bf16.xpose.msra.mxu0 0
        %6055 = vmatprep.mubr.bf16.mxu0 0
        %6056 = vmatmul.mubr.bf16.gmra.mxu0 %v6018
        %v6057 = vpop.f32.mrf.mxu0
        %v6058 = vadd.f32 0.0, %v6057
        %v6059 = vpop.f32.mrf.mxu0
        %v6060 = vpop.f32.mrf.mxu0
        %v6061 = vadd.f32 0.0, %v6060
        %v6062 = vpop.f32.mrf.mxu0
        %6063 = vdwg.mxu0
        %v6064 = vsel %vm847, %v5701, -inf
        %6065 = vmax.xlane.f32.xlu0 %v6064
        %v6066 = vpop.xlane.xlu0 %6065
        %v6067 = vsel %vm847, %v5704, -inf
        %6068 = vmax.xlane.f32.xlu0 %v6067
        %v6069 = vpop.xlane.xlu0 %6068
        %v6070 = vsel %vm847, %v5752, -inf
        %6071 = vmax.xlane.f32.xlu0 %v6070
        %v6072 = vpop.xlane.xlu0 %6071
        %v6073 = vsel %vm847, %v5755, -inf
        %6074 = vmax.xlane.f32.xlu0 %v6073
        %v6075 = vpop.xlane.xlu0 %6074
        %v6076 = vsel %vm847, %v5803, -inf
        %6077 = vmax.xlane.f32.xlu0 %v6076
        %v6078 = vpop.xlane.xlu0 %6077
        %v6079 = vsel %vm847, %v5806, -inf
        %6080 = vmax.xlane.f32.xlu0 %v6079
        %v6081 = vpop.xlane.xlu0 %6080
        %v6082 = vsel %vm847, %v5854, -inf
        %6083 = vmax.xlane.f32.xlu0 %v6082
        %v6084 = vpop.xlane.xlu0 %6083
        %v6085 = vsel %vm847, %v5857, -inf
        %6086 = vmax.xlane.f32.xlu0 %v6085
        %v6087 = vpop.xlane.xlu0 %6086
        %v6088 = vsel %vm847, %v5905, -inf
        %6089 = vmax.xlane.f32.xlu0 %v6088
        %v6090 = vpop.xlane.xlu0 %6089
        %v6091 = vsel %vm847, %v5908, -inf
        %6092 = vmax.xlane.f32.xlu0 %v6091
        %v6093 = vpop.xlane.xlu0 %6092
        %v6094 = vsel %vm847, %v5956, -inf
        %6095 = vmax.xlane.f32.xlu0 %v6094
        %v6096 = vpop.xlane.xlu0 %6095
        %v6097 = vsel %vm847, %v5959, -inf
        %6098 = vmax.xlane.f32.xlu0 %v6097
        %v6099 = vpop.xlane.xlu0 %6098
        %v6100 = vsel %vm847, %v6007, -inf
        %6101 = vmax.xlane.f32.xlu0 %v6100
        %v6102 = vpop.xlane.xlu0 %6101
        %v6103 = vsel %vm847, %v6010, -inf
        %6104 = vmax.xlane.f32.xlu0 %v6103
        %v6105 = vpop.xlane.xlu0 %6104
        %v6106 = vsel %vm847, %v6058, -inf
        %6107 = vmax.xlane.f32.xlu0 %v6106
        %v6108 = vpop.xlane.xlu0 %6107
        %v6109 = vsel %vm847, %v6061, -inf
        %6110 = vmax.xlane.f32.xlu0 %v6109
        %v6111 = vpop.xlane.xlu0 %6110
        %v6112 = vsub.f32 %v5701, %v6066
        %v6113 = vsub.f32 %v5704, %v6069
        %v6114 = vsub.f32 %v5752, %v6072
        %v6115 = vsub.f32 %v5755, %v6075
        %v6116 = vsub.f32 %v5803, %v6078
        %v6117 = vsub.f32 %v5806, %v6081
        %v6118 = vsub.f32 %v5854, %v6084
        %v6119 = vsub.f32 %v5857, %v6087
        %v6120 = vsub.f32 %v5905, %v6090
        %v6121 = vsub.f32 %v5908, %v6093
        %v6122 = vsub.f32 %v5956, %v6096
        %v6123 = vsub.f32 %v5959, %v6099
        %v6124 = vsub.f32 %v6007, %v6102
        %v6125 = vsub.f32 %v6010, %v6105
        %v6126 = vsub.f32 %v6058, %v6108
        %v6127 = vsub.f32 %v6061, %v6111
        %v6128 = vmul.f32 %v6112, 1.442695
        %v6129 = vpow.pop %v6128
        %v6130 = vmul.f32 %v6113, 1.442695
        %v6131 = vpow.pop %v6130
        %v6132 = vmul.f32 %v6114, 1.442695
        %v6133 = vpow.pop %v6132
        %v6134 = vmul.f32 %v6115, 1.442695
        %v6135 = vpow.pop %v6134
        %v6136 = vmul.f32 %v6116, 1.442695
        %v6137 = vpow.pop %v6136
        %v6138 = vmul.f32 %v6117, 1.442695
        %v6139 = vpow.pop %v6138
        %v6140 = vmul.f32 %v6118, 1.442695
        %v6141 = vpow.pop %v6140
        %v6142 = vmul.f32 %v6119, 1.442695
        %v6143 = vpow.pop %v6142
        %v6144 = vmul.f32 %v6120, 1.442695
        %v6145 = vpow.pop %v6144
        %v6146 = vmul.f32 %v6121, 1.442695
        %v6147 = vpow.pop %v6146
        %v6148 = vmul.f32 %v6122, 1.442695
        %v6149 = vpow.pop %v6148
        %v6150 = vmul.f32 %v6123, 1.442695
        %v6151 = vpow.pop %v6150
        %v6152 = vmul.f32 %v6124, 1.442695
        %v6153 = vpow.pop %v6152
        %v6154 = vmul.f32 %v6125, 1.442695
        %v6155 = vpow.pop %v6154
        %v6156 = vmul.f32 %v6126, 1.442695
        %v6157 = vpow.pop %v6156
        %v6158 = vmul.f32 %v6127, 1.442695
        %v6159 = vpow.pop %v6158
        %v6160 = vsel %vm847, %v6129, 0.0
        %6161 = vadd.xlane.f32.xlu0 %v6160
        %v6162 = vpop.xlane.xlu0 %6161
        %v6163 = vsel %vm847, %v6131, 0.0
        %6164 = vadd.xlane.f32.xlu0 %v6163
        %v6165 = vpop.xlane.xlu0 %6164
        %v6166 = vsel %vm847, %v6133, 0.0
        %6167 = vadd.xlane.f32.xlu0 %v6166
        %v6168 = vpop.xlane.xlu0 %6167
        %v6169 = vsel %vm847, %v6135, 0.0
        %6170 = vadd.xlane.f32.xlu0 %v6169
        %v6171 = vpop.xlane.xlu0 %6170
        %v6172 = vsel %vm847, %v6137, 0.0
        %6173 = vadd.xlane.f32.xlu0 %v6172
        %v6174 = vpop.xlane.xlu0 %6173
        %v6175 = vsel %vm847, %v6139, 0.0
        %6176 = vadd.xlane.f32.xlu0 %v6175
        %v6177 = vpop.xlane.xlu0 %6176
        %v6178 = vsel %vm847, %v6141, 0.0
        %6179 = vadd.xlane.f32.xlu0 %v6178
        %v6180 = vpop.xlane.xlu0 %6179
        %v6181 = vsel %vm847, %v6143, 0.0
        %6182 = vadd.xlane.f32.xlu0 %v6181
        %v6183 = vpop.xlane.xlu0 %6182
        %v6184 = vsel %vm847, %v6145, 0.0
        %6185 = vadd.xlane.f32.xlu0 %v6184
        %v6186 = vpop.xlane.xlu0 %6185
        %v6187 = vsel %vm847, %v6147, 0.0
        %6188 = vadd.xlane.f32.xlu0 %v6187
        %v6189 = vpop.xlane.xlu0 %6188
        %v6190 = vsel %vm847, %v6149, 0.0
        %6191 = vadd.xlane.f32.xlu0 %v6190
        %v6192 = vpop.xlane.xlu0 %6191
        %v6193 = vsel %vm847, %v6151, 0.0
        %6194 = vadd.xlane.f32.xlu0 %v6193
        %v6195 = vpop.xlane.xlu0 %6194
        %v6196 = vsel %vm847, %v6153, 0.0
        %6197 = vadd.xlane.f32.xlu0 %v6196
        %v6198 = vpop.xlane.xlu0 %6197
        %v6199 = vsel %vm847, %v6155, 0.0
        %6200 = vadd.xlane.f32.xlu0 %v6199
        %v6201 = vpop.xlane.xlu0 %6200
        %v6202 = vsel %vm847, %v6157, 0.0
        %6203 = vadd.xlane.f32.xlu0 %v6202
        %v6204 = vpop.xlane.xlu0 %6203
        %v6205 = vsel %vm847, %v6159, 0.0
        %6206 = vadd.xlane.f32.xlu0 %v6205
        %v6207 = vpop.xlane.xlu0 %6206
        %v6208 = vrcp.pop %v6162
        %v6209 = vmul.f32 %v6129, %v6208
        %v6210 = vrcp.pop %v6165
        %v6211 = vmul.f32 %v6131, %v6210
        %v6212 = vrcp.pop %v6168
        %v6213 = vmul.f32 %v6133, %v6212
        %v6214 = vrcp.pop %v6171
        %v6215 = vmul.f32 %v6135, %v6214
        %v6216 = vrcp.pop %v6174
        %v6217 = vmul.f32 %v6137, %v6216
        %v6218 = vrcp.pop %v6177
        %v6219 = vmul.f32 %v6139, %v6218
        %v6220 = vrcp.pop %v6180
        %v6221 = vmul.f32 %v6141, %v6220
        %v6222 = vrcp.pop %v6183
        %v6223 = vmul.f32 %v6143, %v6222
        %v6224 = vrcp.pop %v6186
        %v6225 = vmul.f32 %v6145, %v6224
        %v6226 = vrcp.pop %v6189
        %v6227 = vmul.f32 %v6147, %v6226
        %v6228 = vrcp.pop %v6192
        %v6229 = vmul.f32 %v6149, %v6228
        %v6230 = vrcp.pop %v6195
        %v6231 = vmul.f32 %v6151, %v6230
        %v6232 = vrcp.pop %v6198
        %v6233 = vmul.f32 %v6153, %v6232
        %v6234 = vrcp.pop %v6201
        %v6235 = vmul.f32 %v6155, %v6234
        %v6236 = vrcp.pop %v6204
        %v6237 = vmul.f32 %v6157, %v6236
        %v6238 = vrcp.pop %v6207
        %v6239 = vmul.f32 %v6159, %v6238
        %v6240 = vpack.c.bf16 %v6211, %v6209
        %v6241 = vpack.c.bf16 %v6215, %v6213
        %v6242 = vpack.c.bf16 %v6219, %v6217
        %v6243 = vpack.c.bf16 %v6223, %v6221
        %v6244 = vpack.c.bf16 %v6227, %v6225
        %v6245 = vpack.c.bf16 %v6231, %v6229
        %v6246 = vpack.c.bf16 %v6235, %v6233
        %v6247 = vpack.c.bf16 %v6239, %v6237
        %6248 = vrot.lane.b32.xlu0 %v839, 48
        %v6249 = vpop.permute.xlu0 %6248
        %v6252 = vsel %vm847, %v6240, 0
        %6254 = vmatprep.subr.bf16.mxu0 0
        %6255 = vmatpush1.bf16.msra.mxu0 0
        %6256 = vmatprep.subr.bf16.mxu0 0
        %6257 = vmatpush1.bf16.msra.mxu0 0
        %6258 = vmatprep.subr.bf16.mxu0 0
        %6259 = vmatpush1.bf16.msra.mxu0 0
        %6260 = vmatprep.subr.bf16.mxu0 0
        %6261 = vmatpush1.bf16.msra.mxu0 0
        %6262 = vmatprep.subr.bf16.mxu0 0
        %6263 = vmatpush1.bf16.msra.mxu0 0
        %6264 = vmatprep.subr.bf16.mxu0 0
        %6265 = vmatpush1.bf16.msra.mxu0 0
        %6266 = vmatprep.subr.bf16.mxu0 0
        %6267 = vmatpush1.bf16.msra.mxu0 0
        %6268 = vmatprep.subr.bf16.mxu0 0
        %6269 = vmatpush1.bf16.msra.mxu0 %v6249
        %6270 = vmatprep.subr.bf16.mxu0 0
        %6271 = vmatpush2.bf16.msra.mxu0 0
        %6272 = vmatprep.subr.bf16.mxu0 0
        %6273 = vmatpush2.bf16.msra.mxu0 0
        %6274 = vmatprep.subr.bf16.mxu0 0
        %6275 = vmatpush2.bf16.msra.mxu0 0
        %6276 = vmatprep.subr.bf16.mxu0 0
        %6277 = vmatpush2.bf16.msra.mxu0 0
        %6278 = vmatprep.subr.bf16.mxu0 0
        %6279 = vmatpush2.bf16.msra.mxu0 0
        %6280 = vmatprep.subr.bf16.mxu0 0
        %6281 = vmatpush2.bf16.msra.mxu0 0
        %6282 = vmatprep.subr.bf16.mxu0 0
        %6283 = vmatpush2.bf16.msra.mxu0 0
        %6284 = vmatprep.subr.bf16.mxu0 0
        %6285 = vmatpush2.bf16.msra.mxu0 0
        %6286 = vmatprep.mubr.bf16.mxu0 0
        %6287 = vmatmul.mubr.bf16.gmra.mxu0 %v6252
        %v6288 = vpop.f32.mrf.mxu0
        %v6289 = vadd.f32 0.0, %v6288
        %v6290 = vpop.f32.mrf.mxu0
        %v6291 = vpop.f32.mrf.mxu0
        %v6292 = vadd.f32 0.0, %v6291
        %v6293 = vpop.f32.mrf.mxu0
        %6294 = vdwg.mxu0
        %6295 = vrot.lane.b32.xlu0 %v840, 48
        %v6296 = vpop.permute.xlu0 %6295
        %v6299 = vsel %vm847, %v6241, 0
        %6301 = vmatprep.subr.bf16.mxu0 0
        %6302 = vmatpush1.bf16.msra.mxu0 0
        %6303 = vmatprep.subr.bf16.mxu0 0
        %6304 = vmatpush1.bf16.msra.mxu0 0
        %6305 = vmatprep.subr.bf16.mxu0 0
        %6306 = vmatpush1.bf16.msra.mxu0 0
        %6307 = vmatprep.subr.bf16.mxu0 0
        %6308 = vmatpush1.bf16.msra.mxu0 0
        %6309 = vmatprep.subr.bf16.mxu0 0
        %6310 = vmatpush1.bf16.msra.mxu0 0
        %6311 = vmatprep.subr.bf16.mxu0 0
        %6312 = vmatpush1.bf16.msra.mxu0 0
        %6313 = vmatprep.subr.bf16.mxu0 0
        %6314 = vmatpush1.bf16.msra.mxu0 0
        %6315 = vmatprep.subr.bf16.mxu0 0
        %6316 = vmatpush1.bf16.msra.mxu0 %v6296
        %6317 = vmatprep.subr.bf16.mxu0 0
        %6318 = vmatpush2.bf16.msra.mxu0 0
        %6319 = vmatprep.subr.bf16.mxu0 0
        %6320 = vmatpush2.bf16.msra.mxu0 0
        %6321 = vmatprep.subr.bf16.mxu0 0
        %6322 = vmatpush2.bf16.msra.mxu0 0
        %6323 = vmatprep.subr.bf16.mxu0 0
        %6324 = vmatpush2.bf16.msra.mxu0 0
        %6325 = vmatprep.subr.bf16.mxu0 0
        %6326 = vmatpush2.bf16.msra.mxu0 0
        %6327 = vmatprep.subr.bf16.mxu0 0
        %6328 = vmatpush2.bf16.msra.mxu0 0
        %6329 = vmatprep.subr.bf16.mxu0 0
        %6330 = vmatpush2.bf16.msra.mxu0 0
        %6331 = vmatprep.subr.bf16.mxu0 0
        %6332 = vmatpush2.bf16.msra.mxu0 0
        %6333 = vmatprep.mubr.bf16.mxu0 0
        %6334 = vmatmul.mubr.bf16.gmra.mxu0 %v6299
        %v6335 = vpop.f32.mrf.mxu0
        %v6336 = vadd.f32 0.0, %v6335
        %v6337 = vpop.f32.mrf.mxu0
        %v6338 = vpop.f32.mrf.mxu0
        %v6339 = vadd.f32 0.0, %v6338
        %v6340 = vpop.f32.mrf.mxu0
        %6341 = vdwg.mxu0
        %6342 = vrot.lane.b32.xlu0 %v841, 48
        %v6343 = vpop.permute.xlu0 %6342
        %v6346 = vsel %vm847, %v6242, 0
        %6348 = vmatprep.subr.bf16.mxu0 0
        %6349 = vmatpush1.bf16.msra.mxu0 0
        %6350 = vmatprep.subr.bf16.mxu0 0
        %6351 = vmatpush1.bf16.msra.mxu0 0
        %6352 = vmatprep.subr.bf16.mxu0 0
        %6353 = vmatpush1.bf16.msra.mxu0 0
        %6354 = vmatprep.subr.bf16.mxu0 0
        %6355 = vmatpush1.bf16.msra.mxu0 0
        %6356 = vmatprep.subr.bf16.mxu0 0
        %6357 = vmatpush1.bf16.msra.mxu0 0
        %6358 = vmatprep.subr.bf16.mxu0 0
        %6359 = vmatpush1.bf16.msra.mxu0 0
        %6360 = vmatprep.subr.bf16.mxu0 0
        %6361 = vmatpush1.bf16.msra.mxu0 0
        %6362 = vmatprep.subr.bf16.mxu0 0
        %6363 = vmatpush1.bf16.msra.mxu0 %v6343
        %6364 = vmatprep.subr.bf16.mxu0 0
        %6365 = vmatpush2.bf16.msra.mxu0 0
        %6366 = vmatprep.subr.bf16.mxu0 0
        %6367 = vmatpush2.bf16.msra.mxu0 0
        %6368 = vmatprep.subr.bf16.mxu0 0
        %6369 = vmatpush2.bf16.msra.mxu0 0
        %6370 = vmatprep.subr.bf16.mxu0 0
        %6371 = vmatpush2.bf16.msra.mxu0 0
        %6372 = vmatprep.subr.bf16.mxu0 0
        %6373 = vmatpush2.bf16.msra.mxu0 0
        %6374 = vmatprep.subr.bf16.mxu0 0
        %6375 = vmatpush2.bf16.msra.mxu0 0
        %6376 = vmatprep.subr.bf16.mxu0 0
        %6377 = vmatpush2.bf16.msra.mxu0 0
        %6378 = vmatprep.subr.bf16.mxu0 0
        %6379 = vmatpush2.bf16.msra.mxu0 0
        %6380 = vmatprep.mubr.bf16.mxu0 0
        %6381 = vmatmul.mubr.bf16.gmra.mxu0 %v6346
        %v6382 = vpop.f32.mrf.mxu0
        %v6383 = vadd.f32 0.0, %v6382
        %v6384 = vpop.f32.mrf.mxu0
        %v6385 = vpop.f32.mrf.mxu0
        %v6386 = vadd.f32 0.0, %v6385
        %v6387 = vpop.f32.mrf.mxu0
        %6388 = vdwg.mxu0
        %6389 = vrot.lane.b32.xlu0 %v842, 48
        %v6390 = vpop.permute.xlu0 %6389
        %v6393 = vsel %vm847, %v6243, 0
        %6395 = vmatprep.subr.bf16.mxu0 0
        %6396 = vmatpush1.bf16.msra.mxu0 0
        %6397 = vmatprep.subr.bf16.mxu0 0
        %6398 = vmatpush1.bf16.msra.mxu0 0
        %6399 = vmatprep.subr.bf16.mxu0 0
        %6400 = vmatpush1.bf16.msra.mxu0 0
        %6401 = vmatprep.subr.bf16.mxu0 0
        %6402 = vmatpush1.bf16.msra.mxu0 0
        %6403 = vmatprep.subr.bf16.mxu0 0
        %6404 = vmatpush1.bf16.msra.mxu0 0
        %6405 = vmatprep.subr.bf16.mxu0 0
        %6406 = vmatpush1.bf16.msra.mxu0 0
        %6407 = vmatprep.subr.bf16.mxu0 0
        %6408 = vmatpush1.bf16.msra.mxu0 0
        %6409 = vmatprep.subr.bf16.mxu0 0
        %6410 = vmatpush1.bf16.msra.mxu0 %v6390
        %6411 = vmatprep.subr.bf16.mxu0 0
        %6412 = vmatpush2.bf16.msra.mxu0 0
        %6413 = vmatprep.subr.bf16.mxu0 0
        %6414 = vmatpush2.bf16.msra.mxu0 0
        %6415 = vmatprep.subr.bf16.mxu0 0
        %6416 = vmatpush2.bf16.msra.mxu0 0
        %6417 = vmatprep.subr.bf16.mxu0 0
        %6418 = vmatpush2.bf16.msra.mxu0 0
        %6419 = vmatprep.subr.bf16.mxu0 0
        %6420 = vmatpush2.bf16.msra.mxu0 0
        %6421 = vmatprep.subr.bf16.mxu0 0
        %6422 = vmatpush2.bf16.msra.mxu0 0
        %6423 = vmatprep.subr.bf16.mxu0 0
        %6424 = vmatpush2.bf16.msra.mxu0 0
        %6425 = vmatprep.subr.bf16.mxu0 0
        %6426 = vmatpush2.bf16.msra.mxu0 0
        %6427 = vmatprep.mubr.bf16.mxu0 0
        %6428 = vmatmul.mubr.bf16.gmra.mxu0 %v6393
        %v6429 = vpop.f32.mrf.mxu0
        %v6430 = vadd.f32 0.0, %v6429
        %v6431 = vpop.f32.mrf.mxu0
        %v6432 = vpop.f32.mrf.mxu0
        %v6433 = vadd.f32 0.0, %v6432
        %v6434 = vpop.f32.mrf.mxu0
        %6435 = vdwg.mxu0
        %6436 = vrot.lane.b32.xlu0 %v843, 48
        %v6437 = vpop.permute.xlu0 %6436
        %v6440 = vsel %vm847, %v6244, 0
        %6442 = vmatprep.subr.bf16.mxu0 0
        %6443 = vmatpush1.bf16.msra.mxu0 0
        %6444 = vmatprep.subr.bf16.mxu0 0
        %6445 = vmatpush1.bf16.msra.mxu0 0
        %6446 = vmatprep.subr.bf16.mxu0 0
        %6447 = vmatpush1.bf16.msra.mxu0 0
        %6448 = vmatprep.subr.bf16.mxu0 0
        %6449 = vmatpush1.bf16.msra.mxu0 0
        %6450 = vmatprep.subr.bf16.mxu0 0
        %6451 = vmatpush1.bf16.msra.mxu0 0
        %6452 = vmatprep.subr.bf16.mxu0 0
        %6453 = vmatpush1.bf16.msra.mxu0 0
        %6454 = vmatprep.subr.bf16.mxu0 0
        %6455 = vmatpush1.bf16.msra.mxu0 0
        %6456 = vmatprep.subr.bf16.mxu0 0
        %6457 = vmatpush1.bf16.msra.mxu0 %v6437
        %6458 = vmatprep.subr.bf16.mxu0 0
        %6459 = vmatpush2.bf16.msra.mxu0 0
        %6460 = vmatprep.subr.bf16.mxu0 0
        %6461 = vmatpush2.bf16.msra.mxu0 0
        %6462 = vmatprep.subr.bf16.mxu0 0
        %6463 = vmatpush2.bf16.msra.mxu0 0
        %6464 = vmatprep.subr.bf16.mxu0 0
        %6465 = vmatpush2.bf16.msra.mxu0 0
        %6466 = vmatprep.subr.bf16.mxu0 0
        %6467 = vmatpush2.bf16.msra.mxu0 0
        %6468 = vmatprep.subr.bf16.mxu0 0
        %6469 = vmatpush2.bf16.msra.mxu0 0
        %6470 = vmatprep.subr.bf16.mxu0 0
        %6471 = vmatpush2.bf16.msra.mxu0 0
        %6472 = vmatprep.subr.bf16.mxu0 0
        %6473 = vmatpush2.bf16.msra.mxu0 0
        %6474 = vmatprep.mubr.bf16.mxu0 0
        %6475 = vmatmul.mubr.bf16.gmra.mxu0 %v6440
        %v6476 = vpop.f32.mrf.mxu0
        %v6477 = vadd.f32 0.0, %v6476
        %v6478 = vpop.f32.mrf.mxu0
        %v6479 = vpop.f32.mrf.mxu0
        %v6480 = vadd.f32 0.0, %v6479
        %v6481 = vpop.f32.mrf.mxu0
        %6482 = vdwg.mxu0
        %6483 = vrot.lane.b32.xlu0 %v844, 48
        %v6484 = vpop.permute.xlu0 %6483
        %v6487 = vsel %vm847, %v6245, 0
        %6489 = vmatprep.subr.bf16.mxu0 0
        %6490 = vmatpush1.bf16.msra.mxu0 0
        %6491 = vmatprep.subr.bf16.mxu0 0
        %6492 = vmatpush1.bf16.msra.mxu0 0
        %6493 = vmatprep.subr.bf16.mxu0 0
        %6494 = vmatpush1.bf16.msra.mxu0 0
        %6495 = vmatprep.subr.bf16.mxu0 0
        %6496 = vmatpush1.bf16.msra.mxu0 0
        %6497 = vmatprep.subr.bf16.mxu0 0
        %6498 = vmatpush1.bf16.msra.mxu0 0
        %6499 = vmatprep.subr.bf16.mxu0 0
        %6500 = vmatpush1.bf16.msra.mxu0 0
        %6501 = vmatprep.subr.bf16.mxu0 0
        %6502 = vmatpush1.bf16.msra.mxu0 0
        %6503 = vmatprep.subr.bf16.mxu0 0
        %6504 = vmatpush1.bf16.msra.mxu0 %v6484
        %6505 = vmatprep.subr.bf16.mxu0 0
        %6506 = vmatpush2.bf16.msra.mxu0 0
        %6507 = vmatprep.subr.bf16.mxu0 0
        %6508 = vmatpush2.bf16.msra.mxu0 0
        %6509 = vmatprep.subr.bf16.mxu0 0
        %6510 = vmatpush2.bf16.msra.mxu0 0
        %6511 = vmatprep.subr.bf16.mxu0 0
        %6512 = vmatpush2.bf16.msra.mxu0 0
        %6513 = vmatprep.subr.bf16.mxu0 0
        %6514 = vmatpush2.bf16.msra.mxu0 0
        %6515 = vmatprep.subr.bf16.mxu0 0
        %6516 = vmatpush2.bf16.msra.mxu0 0
        %6517 = vmatprep.subr.bf16.mxu0 0
        %6518 = vmatpush2.bf16.msra.mxu0 0
        %6519 = vmatprep.subr.bf16.mxu0 0
        %6520 = vmatpush2.bf16.msra.mxu0 0
        %6521 = vmatprep.mubr.bf16.mxu0 0
        %6522 = vmatmul.mubr.bf16.gmra.mxu0 %v6487
        %v6523 = vpop.f32.mrf.mxu0
        %v6524 = vadd.f32 0.0, %v6523
        %v6525 = vpop.f32.mrf.mxu0
        %v6526 = vpop.f32.mrf.mxu0
        %v6527 = vadd.f32 0.0, %v6526
        %v6528 = vpop.f32.mrf.mxu0
        %6529 = vdwg.mxu0
        %6530 = vrot.lane.b32.xlu0 %v845, 48
        %v6531 = vpop.permute.xlu0 %6530
        %v6534 = vsel %vm847, %v6246, 0
        %6536 = vmatprep.subr.bf16.mxu0 0
        %6537 = vmatpush1.bf16.msra.mxu0 0
        %6538 = vmatprep.subr.bf16.mxu0 0
        %6539 = vmatpush1.bf16.msra.mxu0 0
        %6540 = vmatprep.subr.bf16.mxu0 0
        %6541 = vmatpush1.bf16.msra.mxu0 0
        %6542 = vmatprep.subr.bf16.mxu0 0
        %6543 = vmatpush1.bf16.msra.mxu0 0
        %6544 = vmatprep.subr.bf16.mxu0 0
        %6545 = vmatpush1.bf16.msra.mxu0 0
        %6546 = vmatprep.subr.bf16.mxu0 0
        %6547 = vmatpush1.bf16.msra.mxu0 0
        %6548 = vmatprep.subr.bf16.mxu0 0
        %6549 = vmatpush1.bf16.msra.mxu0 0
        %6550 = vmatprep.subr.bf16.mxu0 0
        %6551 = vmatpush1.bf16.msra.mxu0 %v6531
        %6552 = vmatprep.subr.bf16.mxu0 0
        %6553 = vmatpush2.bf16.msra.mxu0 0
        %6554 = vmatprep.subr.bf16.mxu0 0
        %6555 = vmatpush2.bf16.msra.mxu0 0
        %6556 = vmatprep.subr.bf16.mxu0 0
        %6557 = vmatpush2.bf16.msra.mxu0 0
        %6558 = vmatprep.subr.bf16.mxu0 0
        %6559 = vmatpush2.bf16.msra.mxu0 0
        %6560 = vmatprep.subr.bf16.mxu0 0
        %6561 = vmatpush2.bf16.msra.mxu0 0
        %6562 = vmatprep.subr.bf16.mxu0 0
        %6563 = vmatpush2.bf16.msra.mxu0 0
        %6564 = vmatprep.subr.bf16.mxu0 0
        %6565 = vmatpush2.bf16.msra.mxu0 0
        %6566 = vmatprep.subr.bf16.mxu0 0
        %6567 = vmatpush2.bf16.msra.mxu0 0
        %6568 = vmatprep.mubr.bf16.mxu0 0
        %6569 = vmatmul.mubr.bf16.gmra.mxu0 %v6534
        %v6570 = vpop.f32.mrf.mxu0
        %v6571 = vadd.f32 0.0, %v6570
        %v6572 = vpop.f32.mrf.mxu0
        %v6573 = vpop.f32.mrf.mxu0
        %v6574 = vadd.f32 0.0, %v6573
        %v6575 = vpop.f32.mrf.mxu0
        %6576 = vdwg.mxu0
        %6577 = vrot.lane.b32.xlu0 %v846, 48
        %v6578 = vpop.permute.xlu0 %6577
        %v6581 = vsel %vm847, %v6247, 0
        %6583 = vmatprep.subr.bf16.mxu0 0
        %6584 = vmatpush1.bf16.msra.mxu0 0
        %6585 = vmatprep.subr.bf16.mxu0 0
        %6586 = vmatpush1.bf16.msra.mxu0 0
        %6587 = vmatprep.subr.bf16.mxu0 0
        %6588 = vmatpush1.bf16.msra.mxu0 0
        %6589 = vmatprep.subr.bf16.mxu0 0
        %6590 = vmatpush1.bf16.msra.mxu0 0
        %6591 = vmatprep.subr.bf16.mxu0 0
        %6592 = vmatpush1.bf16.msra.mxu0 0
        %6593 = vmatprep.subr.bf16.mxu0 0
        %6594 = vmatpush1.bf16.msra.mxu0 0
        %6595 = vmatprep.subr.bf16.mxu0 0
        %6596 = vmatpush1.bf16.msra.mxu0 0
        %6597 = vmatprep.subr.bf16.mxu0 0
        %6598 = vmatpush1.bf16.msra.mxu0 %v6578
        %6599 = vmatprep.subr.bf16.mxu0 0
        %6600 = vmatpush2.bf16.msra.mxu0 0
        %6601 = vmatprep.subr.bf16.mxu0 0
        %6602 = vmatpush2.bf16.msra.mxu0 0
        %6603 = vmatprep.subr.bf16.mxu0 0
        %6604 = vmatpush2.bf16.msra.mxu0 0
        %6605 = vmatprep.subr.bf16.mxu0 0
        %6606 = vmatpush2.bf16.msra.mxu0 0
        %6607 = vmatprep.subr.bf16.mxu0 0
        %6608 = vmatpush2.bf16.msra.mxu0 0
        %6609 = vmatprep.subr.bf16.mxu0 0
        %6610 = vmatpush2.bf16.msra.mxu0 0
        %6611 = vmatprep.subr.bf16.mxu0 0
        %6612 = vmatpush2.bf16.msra.mxu0 0
        %6613 = vmatprep.subr.bf16.mxu0 0
        %6614 = vmatpush2.bf16.msra.mxu0 0
        %6615 = vmatprep.mubr.bf16.mxu0 0
        %6616 = vmatmul.mubr.bf16.gmra.mxu0 %v6581
        %v6617 = vpop.f32.mrf.mxu0
        %v6618 = vadd.f32 0.0, %v6617
        %v6619 = vpop.f32.mrf.mxu0
        %v6620 = vpop.f32.mrf.mxu0
        %v6621 = vadd.f32 0.0, %v6620
        %v6622 = vpop.f32.mrf.mxu0
        %6623 = vdwg.mxu0
        %6624 = vrot.lane.b32.xlu0 %v823, 32
        %v6625 = vpop.permute.xlu0 %6624
        %6626 = vrot.lane.b32.xlu0 %v831, 32
        %v6627 = vpop.permute.xlu0 %6626
        %v6629 = vsel %vm847, %v6625, 0
        %v6632 = vsel %vm847, %v6627, 0
        %6634 = vmatprep.subr.bf16.mxu0 0
        %6635 = vmatpush1.bf16.xpose.msra.mxu0 0
        %6636 = vmatprep.subr.bf16.mxu0 0
        %6637 = vmatpush1.bf16.xpose.msra.mxu0 0
        %6638 = vmatprep.subr.bf16.mxu0 0
        %6639 = vmatpush1.bf16.xpose.msra.mxu0 0
        %6640 = vmatprep.subr.bf16.mxu0 0
        %6641 = vmatpush1.bf16.xpose.msra.mxu0 0
        %6642 = vmatprep.subr.bf16.mxu0 0
        %6643 = vmatpush1.bf16.xpose.msra.mxu0 0
        %6644 = vmatprep.subr.bf16.mxu0 0
        %6645 = vmatpush1.bf16.xpose.msra.mxu0 0
        %6646 = vmatprep.subr.bf16.mxu0 0
        %6647 = vmatpush1.bf16.xpose.msra.mxu0 0
        %6648 = vmatprep.subr.bf16.mxu0 0
        %6649 = vmatpush1.bf16.xpose.msra.mxu0 %v6632
        %6650 = vmatprep.subr.bf16.mxu0 0
        %6651 = vmatpush2.bf16.xpose.msra.mxu0 0
        %6652 = vmatprep.subr.bf16.mxu0 0
        %6653 = vmatpush2.bf16.xpose.msra.mxu0 0
        %6654 = vmatprep.subr.bf16.mxu0 0
        %6655 = vmatpush2.bf16.xpose.msra.mxu0 0
        %6656 = vmatprep.subr.bf16.mxu0 0
        %6657 = vmatpush2.bf16.xpose.msra.mxu0 0
        %6658 = vmatprep.subr.bf16.mxu0 0
        %6659 = vmatpush2.bf16.xpose.msra.mxu0 0
        %6660 = vmatprep.subr.bf16.mxu0 0
        %6661 = vmatpush2.bf16.xpose.msra.mxu0 0
        %6662 = vmatprep.subr.bf16.mxu0 0
        %6663 = vmatpush2.bf16.xpose.msra.mxu0 0
        %6664 = vmatprep.subr.bf16.mxu0 0
        %6665 = vmatpush2.bf16.xpose.msra.mxu0 0
        %6666 = vmatprep.mubr.bf16.mxu0 0
        %6667 = vmatmul.mubr.bf16.gmra.mxu0 %v6629
        %v6668 = vpop.f32.mrf.mxu0
        %v6669 = vadd.f32 0.0, %v6668
        %v6670 = vpop.f32.mrf.mxu0
        %v6671 = vpop.f32.mrf.mxu0
        %v6672 = vadd.f32 0.0, %v6671
        %v6673 = vpop.f32.mrf.mxu0
        %6674 = vdwg.mxu0
        %6675 = vrot.lane.b32.xlu0 %v824, 32
        %v6676 = vpop.permute.xlu0 %6675
        %6677 = vrot.lane.b32.xlu0 %v832, 32
        %v6678 = vpop.permute.xlu0 %6677
        %v6680 = vsel %vm847, %v6676, 0
        %v6683 = vsel %vm847, %v6678, 0
        %6685 = vmatprep.subr.bf16.mxu0 0
        %6686 = vmatpush1.bf16.xpose.msra.mxu0 0
        %6687 = vmatprep.subr.bf16.mxu0 0
        %6688 = vmatpush1.bf16.xpose.msra.mxu0 0
        %6689 = vmatprep.subr.bf16.mxu0 0
        %6690 = vmatpush1.bf16.xpose.msra.mxu0 0
        %6691 = vmatprep.subr.bf16.mxu0 0
        %6692 = vmatpush1.bf16.xpose.msra.mxu0 0
        %6693 = vmatprep.subr.bf16.mxu0 0
        %6694 = vmatpush1.bf16.xpose.msra.mxu0 0
        %6695 = vmatprep.subr.bf16.mxu0 0
        %6696 = vmatpush1.bf16.xpose.msra.mxu0 0
        %6697 = vmatprep.subr.bf16.mxu0 0
        %6698 = vmatpush1.bf16.xpose.msra.mxu0 0
        %6699 = vmatprep.subr.bf16.mxu0 0
        %6700 = vmatpush1.bf16.xpose.msra.mxu0 %v6683
        %6701 = vmatprep.subr.bf16.mxu0 0
        %6702 = vmatpush2.bf16.xpose.msra.mxu0 0
        %6703 = vmatprep.subr.bf16.mxu0 0
        %6704 = vmatpush2.bf16.xpose.msra.mxu0 0
        %6705 = vmatprep.subr.bf16.mxu0 0
        %6706 = vmatpush2.bf16.xpose.msra.mxu0 0
        %6707 = vmatprep.subr.bf16.mxu0 0
        %6708 = vmatpush2.bf16.xpose.msra.mxu0 0
        %6709 = vmatprep.subr.bf16.mxu0 0
        %6710 = vmatpush2.bf16.xpose.msra.mxu0 0
        %6711 = vmatprep.subr.bf16.mxu0 0
        %6712 = vmatpush2.bf16.xpose.msra.mxu0 0
        %6713 = vmatprep.subr.bf16.mxu0 0
        %6714 = vmatpush2.bf16.xpose.msra.mxu0 0
        %6715 = vmatprep.subr.bf16.mxu0 0
        %6716 = vmatpush2.bf16.xpose.msra.mxu0 0
        %6717 = vmatprep.mubr.bf16.mxu0 0
        %6718 = vmatmul.mubr.bf16.gmra.mxu0 %v6680
        %v6719 = vpop.f32.mrf.mxu0
        %v6720 = vadd.f32 0.0, %v6719
        %v6721 = vpop.f32.mrf.mxu0
        %v6722 = vpop.f32.mrf.mxu0
        %v6723 = vadd.f32 0.0, %v6722
        %v6724 = vpop.f32.mrf.mxu0
        %6725 = vdwg.mxu0
        %6726 = vrot.lane.b32.xlu0 %v825, 32
        %v6727 = vpop.permute.xlu0 %6726
        %6728 = vrot.lane.b32.xlu0 %v833, 32
        %v6729 = vpop.permute.xlu0 %6728
        %v6731 = vsel %vm847, %v6727, 0
        %v6734 = vsel %vm847, %v6729, 0
        %6736 = vmatprep.subr.bf16.mxu0 0
        %6737 = vmatpush1.bf16.xpose.msra.mxu0 0
        %6738 = vmatprep.subr.bf16.mxu0 0
        %6739 = vmatpush1.bf16.xpose.msra.mxu0 0
        %6740 = vmatprep.subr.bf16.mxu0 0
        %6741 = vmatpush1.bf16.xpose.msra.mxu0 0
        %6742 = vmatprep.subr.bf16.mxu0 0
        %6743 = vmatpush1.bf16.xpose.msra.mxu0 0
        %6744 = vmatprep.subr.bf16.mxu0 0
        %6745 = vmatpush1.bf16.xpose.msra.mxu0 0
        %6746 = vmatprep.subr.bf16.mxu0 0
        %6747 = vmatpush1.bf16.xpose.msra.mxu0 0
        %6748 = vmatprep.subr.bf16.mxu0 0
        %6749 = vmatpush1.bf16.xpose.msra.mxu0 0
        %6750 = vmatprep.subr.bf16.mxu0 0
        %6751 = vmatpush1.bf16.xpose.msra.mxu0 %v6734
        %6752 = vmatprep.subr.bf16.mxu0 0
        %6753 = vmatpush2.bf16.xpose.msra.mxu0 0
        %6754 = vmatprep.subr.bf16.mxu0 0
        %6755 = vmatpush2.bf16.xpose.msra.mxu0 0
        %6756 = vmatprep.subr.bf16.mxu0 0
        %6757 = vmatpush2.bf16.xpose.msra.mxu0 0
        %6758 = vmatprep.subr.bf16.mxu0 0
        %6759 = vmatpush2.bf16.xpose.msra.mxu0 0
        %6760 = vmatprep.subr.bf16.mxu0 0
        %6761 = vmatpush2.bf16.xpose.msra.mxu0 0
        %6762 = vmatprep.subr.bf16.mxu0 0
        %6763 = vmatpush2.bf16.xpose.msra.mxu0 0
        %6764 = vmatprep.subr.bf16.mxu0 0
        %6765 = vmatpush2.bf16.xpose.msra.mxu0 0
        %6766 = vmatprep.subr.bf16.mxu0 0
        %6767 = vmatpush2.bf16.xpose.msra.mxu0 0
        %6768 = vmatprep.mubr.bf16.mxu0 0
        %6769 = vmatmul.mubr.bf16.gmra.mxu0 %v6731
        %v6770 = vpop.f32.mrf.mxu0
        %v6771 = vadd.f32 0.0, %v6770
        %v6772 = vpop.f32.mrf.mxu0
        %v6773 = vpop.f32.mrf.mxu0
        %v6774 = vadd.f32 0.0, %v6773
        %v6775 = vpop.f32.mrf.mxu0
        %6776 = vdwg.mxu0
        %6777 = vrot.lane.b32.xlu0 %v826, 32
        %v6778 = vpop.permute.xlu0 %6777
        %6779 = vrot.lane.b32.xlu0 %v834, 32
        %v6780 = vpop.permute.xlu0 %6779
        %v6782 = vsel %vm847, %v6778, 0
        %v6785 = vsel %vm847, %v6780, 0
        %6787 = vmatprep.subr.bf16.mxu0 0
        %6788 = vmatpush1.bf16.xpose.msra.mxu0 0
        %6789 = vmatprep.subr.bf16.mxu0 0
        %6790 = vmatpush1.bf16.xpose.msra.mxu0 0
        %6791 = vmatprep.subr.bf16.mxu0 0
        %6792 = vmatpush1.bf16.xpose.msra.mxu0 0
        %6793 = vmatprep.subr.bf16.mxu0 0
        %6794 = vmatpush1.bf16.xpose.msra.mxu0 0
        %6795 = vmatprep.subr.bf16.mxu0 0
        %6796 = vmatpush1.bf16.xpose.msra.mxu0 0
        %6797 = vmatprep.subr.bf16.mxu0 0
        %6798 = vmatpush1.bf16.xpose.msra.mxu0 0
        %6799 = vmatprep.subr.bf16.mxu0 0
        %6800 = vmatpush1.bf16.xpose.msra.mxu0 0
        %6801 = vmatprep.subr.bf16.mxu0 0
        %6802 = vmatpush1.bf16.xpose.msra.mxu0 %v6785
        %6803 = vmatprep.subr.bf16.mxu0 0
        %6804 = vmatpush2.bf16.xpose.msra.mxu0 0
        %6805 = vmatprep.subr.bf16.mxu0 0
        %6806 = vmatpush2.bf16.xpose.msra.mxu0 0
        %6807 = vmatprep.subr.bf16.mxu0 0
        %6808 = vmatpush2.bf16.xpose.msra.mxu0 0
        %6809 = vmatprep.subr.bf16.mxu0 0
        %6810 = vmatpush2.bf16.xpose.msra.mxu0 0
        %6811 = vmatprep.subr.bf16.mxu0 0
        %6812 = vmatpush2.bf16.xpose.msra.mxu0 0
        %6813 = vmatprep.subr.bf16.mxu0 0
        %6814 = vmatpush2.bf16.xpose.msra.mxu0 0
        %6815 = vmatprep.subr.bf16.mxu0 0
        %6816 = vmatpush2.bf16.xpose.msra.mxu0 0
        %6817 = vmatprep.subr.bf16.mxu0 0
        %6818 = vmatpush2.bf16.xpose.msra.mxu0 0
        %6819 = vmatprep.mubr.bf16.mxu0 0
        %6820 = vmatmul.mubr.bf16.gmra.mxu0 %v6782
        %v6821 = vpop.f32.mrf.mxu0
        %v6822 = vadd.f32 0.0, %v6821
        %v6823 = vpop.f32.mrf.mxu0
        %v6824 = vpop.f32.mrf.mxu0
        %v6825 = vadd.f32 0.0, %v6824
        %v6826 = vpop.f32.mrf.mxu0
        %6827 = vdwg.mxu0
        %6828 = vrot.lane.b32.xlu0 %v827, 32
        %v6829 = vpop.permute.xlu0 %6828
        %6830 = vrot.lane.b32.xlu0 %v835, 32
        %v6831 = vpop.permute.xlu0 %6830
        %v6833 = vsel %vm847, %v6829, 0
        %v6836 = vsel %vm847, %v6831, 0
        %6838 = vmatprep.subr.bf16.mxu0 0
        %6839 = vmatpush1.bf16.xpose.msra.mxu0 0
        %6840 = vmatprep.subr.bf16.mxu0 0
        %6841 = vmatpush1.bf16.xpose.msra.mxu0 0
        %6842 = vmatprep.subr.bf16.mxu0 0
        %6843 = vmatpush1.bf16.xpose.msra.mxu0 0
        %6844 = vmatprep.subr.bf16.mxu0 0
        %6845 = vmatpush1.bf16.xpose.msra.mxu0 0
        %6846 = vmatprep.subr.bf16.mxu0 0
        %6847 = vmatpush1.bf16.xpose.msra.mxu0 0
        %6848 = vmatprep.subr.bf16.mxu0 0
        %6849 = vmatpush1.bf16.xpose.msra.mxu0 0
        %6850 = vmatprep.subr.bf16.mxu0 0
        %6851 = vmatpush1.bf16.xpose.msra.mxu0 0
        %6852 = vmatprep.subr.bf16.mxu0 0
        %6853 = vmatpush1.bf16.xpose.msra.mxu0 %v6836
        %6854 = vmatprep.subr.bf16.mxu0 0
        %6855 = vmatpush2.bf16.xpose.msra.mxu0 0
        %6856 = vmatprep.subr.bf16.mxu0 0
        %6857 = vmatpush2.bf16.xpose.msra.mxu0 0
        %6858 = vmatprep.subr.bf16.mxu0 0
        %6859 = vmatpush2.bf16.xpose.msra.mxu0 0
        %6860 = vmatprep.subr.bf16.mxu0 0
        %6861 = vmatpush2.bf16.xpose.msra.mxu0 0
        %6862 = vmatprep.subr.bf16.mxu0 0
        %6863 = vmatpush2.bf16.xpose.msra.mxu0 0
        %6864 = vmatprep.subr.bf16.mxu0 0
        %6865 = vmatpush2.bf16.xpose.msra.mxu0 0
        %6866 = vmatprep.subr.bf16.mxu0 0
        %6867 = vmatpush2.bf16.xpose.msra.mxu0 0
        %6868 = vmatprep.subr.bf16.mxu0 0
        %6869 = vmatpush2.bf16.xpose.msra.mxu0 0
        %6870 = vmatprep.mubr.bf16.mxu0 0
        %6871 = vmatmul.mubr.bf16.gmra.mxu0 %v6833
        %v6872 = vpop.f32.mrf.mxu0
        %v6873 = vadd.f32 0.0, %v6872
        %v6874 = vpop.f32.mrf.mxu0
        %v6875 = vpop.f32.mrf.mxu0
        %v6876 = vadd.f32 0.0, %v6875
        %v6877 = vpop.f32.mrf.mxu0
        %6878 = vdwg.mxu0
        %6879 = vrot.lane.b32.xlu0 %v828, 32
        %v6880 = vpop.permute.xlu0 %6879
        %6881 = vrot.lane.b32.xlu0 %v836, 32
        %v6882 = vpop.permute.xlu0 %6881
        %v6884 = vsel %vm847, %v6880, 0
        %v6887 = vsel %vm847, %v6882, 0
        %6889 = vmatprep.subr.bf16.mxu0 0
        %6890 = vmatpush1.bf16.xpose.msra.mxu0 0
        %6891 = vmatprep.subr.bf16.mxu0 0
        %6892 = vmatpush1.bf16.xpose.msra.mxu0 0
        %6893 = vmatprep.subr.bf16.mxu0 0
        %6894 = vmatpush1.bf16.xpose.msra.mxu0 0
        %6895 = vmatprep.subr.bf16.mxu0 0
        %6896 = vmatpush1.bf16.xpose.msra.mxu0 0
        %6897 = vmatprep.subr.bf16.mxu0 0
        %6898 = vmatpush1.bf16.xpose.msra.mxu0 0
        %6899 = vmatprep.subr.bf16.mxu0 0
        %6900 = vmatpush1.bf16.xpose.msra.mxu0 0
        %6901 = vmatprep.subr.bf16.mxu0 0
        %6902 = vmatpush1.bf16.xpose.msra.mxu0 0
        %6903 = vmatprep.subr.bf16.mxu0 0
        %6904 = vmatpush1.bf16.xpose.msra.mxu0 %v6887
        %6905 = vmatprep.subr.bf16.mxu0 0
        %6906 = vmatpush2.bf16.xpose.msra.mxu0 0
        %6907 = vmatprep.subr.bf16.mxu0 0
        %6908 = vmatpush2.bf16.xpose.msra.mxu0 0
        %6909 = vmatprep.subr.bf16.mxu0 0
        %6910 = vmatpush2.bf16.xpose.msra.mxu0 0
        %6911 = vmatprep.subr.bf16.mxu0 0
        %6912 = vmatpush2.bf16.xpose.msra.mxu0 0
        %6913 = vmatprep.subr.bf16.mxu0 0
        %6914 = vmatpush2.bf16.xpose.msra.mxu0 0
        %6915 = vmatprep.subr.bf16.mxu0 0
        %6916 = vmatpush2.bf16.xpose.msra.mxu0 0
        %6917 = vmatprep.subr.bf16.mxu0 0
        %6918 = vmatpush2.bf16.xpose.msra.mxu0 0
        %6919 = vmatprep.subr.bf16.mxu0 0
        %6920 = vmatpush2.bf16.xpose.msra.mxu0 0
        %6921 = vmatprep.mubr.bf16.mxu0 0
        %6922 = vmatmul.mubr.bf16.gmra.mxu0 %v6884
        %v6923 = vpop.f32.mrf.mxu0
        %v6924 = vadd.f32 0.0, %v6923
        %v6925 = vpop.f32.mrf.mxu0
        %v6926 = vpop.f32.mrf.mxu0
        %v6927 = vadd.f32 0.0, %v6926
        %v6928 = vpop.f32.mrf.mxu0
        %6929 = vdwg.mxu0
        %6930 = vrot.lane.b32.xlu0 %v829, 32
        %v6931 = vpop.permute.xlu0 %6930
        %6932 = vrot.lane.b32.xlu0 %v837, 32
        %v6933 = vpop.permute.xlu0 %6932
        %v6935 = vsel %vm847, %v6931, 0
        %v6938 = vsel %vm847, %v6933, 0
        %6940 = vmatprep.subr.bf16.mxu0 0
        %6941 = vmatpush1.bf16.xpose.msra.mxu0 0
        %6942 = vmatprep.subr.bf16.mxu0 0
        %6943 = vmatpush1.bf16.xpose.msra.mxu0 0
        %6944 = vmatprep.subr.bf16.mxu0 0
        %6945 = vmatpush1.bf16.xpose.msra.mxu0 0
        %6946 = vmatprep.subr.bf16.mxu0 0
        %6947 = vmatpush1.bf16.xpose.msra.mxu0 0
        %6948 = vmatprep.subr.bf16.mxu0 0
        %6949 = vmatpush1.bf16.xpose.msra.mxu0 0
        %6950 = vmatprep.subr.bf16.mxu0 0
        %6951 = vmatpush1.bf16.xpose.msra.mxu0 0
        %6952 = vmatprep.subr.bf16.mxu0 0
        %6953 = vmatpush1.bf16.xpose.msra.mxu0 0
        %6954 = vmatprep.subr.bf16.mxu0 0
        %6955 = vmatpush1.bf16.xpose.msra.mxu0 %v6938
        %6956 = vmatprep.subr.bf16.mxu0 0
        %6957 = vmatpush2.bf16.xpose.msra.mxu0 0
        %6958 = vmatprep.subr.bf16.mxu0 0
        %6959 = vmatpush2.bf16.xpose.msra.mxu0 0
        %6960 = vmatprep.subr.bf16.mxu0 0
        %6961 = vmatpush2.bf16.xpose.msra.mxu0 0
        %6962 = vmatprep.subr.bf16.mxu0 0
        %6963 = vmatpush2.bf16.xpose.msra.mxu0 0
        %6964 = vmatprep.subr.bf16.mxu0 0
        %6965 = vmatpush2.bf16.xpose.msra.mxu0 0
        %6966 = vmatprep.subr.bf16.mxu0 0
        %6967 = vmatpush2.bf16.xpose.msra.mxu0 0
        %6968 = vmatprep.subr.bf16.mxu0 0
        %6969 = vmatpush2.bf16.xpose.msra.mxu0 0
        %6970 = vmatprep.subr.bf16.mxu0 0
        %6971 = vmatpush2.bf16.xpose.msra.mxu0 0
        %6972 = vmatprep.mubr.bf16.mxu0 0
        %6973 = vmatmul.mubr.bf16.gmra.mxu0 %v6935
        %v6974 = vpop.f32.mrf.mxu0
        %v6975 = vadd.f32 0.0, %v6974
        %v6976 = vpop.f32.mrf.mxu0
        %v6977 = vpop.f32.mrf.mxu0
        %v6978 = vadd.f32 0.0, %v6977
        %v6979 = vpop.f32.mrf.mxu0
        %6980 = vdwg.mxu0
        %6981 = vrot.lane.b32.xlu0 %v830, 32
        %v6982 = vpop.permute.xlu0 %6981
        %6983 = vrot.lane.b32.xlu0 %v838, 32
        %v6984 = vpop.permute.xlu0 %6983
        %v6986 = vsel %vm847, %v6982, 0
        %v6989 = vsel %vm847, %v6984, 0
        %6991 = vmatprep.subr.bf16.mxu0 0
        %6992 = vmatpush1.bf16.xpose.msra.mxu0 0
        %6993 = vmatprep.subr.bf16.mxu0 0
        %6994 = vmatpush1.bf16.xpose.msra.mxu0 0
        %6995 = vmatprep.subr.bf16.mxu0 0
        %6996 = vmatpush1.bf16.xpose.msra.mxu0 0
        %6997 = vmatprep.subr.bf16.mxu0 0
        %6998 = vmatpush1.bf16.xpose.msra.mxu0 0
        %6999 = vmatprep.subr.bf16.mxu0 0
        %7000 = vmatpush1.bf16.xpose.msra.mxu0 0
        %7001 = vmatprep.subr.bf16.mxu0 0
        %7002 = vmatpush1.bf16.xpose.msra.mxu0 0
        %7003 = vmatprep.subr.bf16.mxu0 0
        %7004 = vmatpush1.bf16.xpose.msra.mxu0 0
        %7005 = vmatprep.subr.bf16.mxu0 0
        %7006 = vmatpush1.bf16.xpose.msra.mxu0 %v6989
        %7007 = vmatprep.subr.bf16.mxu0 0
        %7008 = vmatpush2.bf16.xpose.msra.mxu0 0
        %7009 = vmatprep.subr.bf16.mxu0 0
        %7010 = vmatpush2.bf16.xpose.msra.mxu0 0
        %7011 = vmatprep.subr.bf16.mxu0 0
        %7012 = vmatpush2.bf16.xpose.msra.mxu0 0
        %7013 = vmatprep.subr.bf16.mxu0 0
        %7014 = vmatpush2.bf16.xpose.msra.mxu0 0
        %7015 = vmatprep.subr.bf16.mxu0 0
        %7016 = vmatpush2.bf16.xpose.msra.mxu0 0
        %7017 = vmatprep.subr.bf16.mxu0 0
        %7018 = vmatpush2.bf16.xpose.msra.mxu0 0
        %7019 = vmatprep.subr.bf16.mxu0 0
        %7020 = vmatpush2.bf16.xpose.msra.mxu0 0
        %7021 = vmatprep.subr.bf16.mxu0 0
        %7022 = vmatpush2.bf16.xpose.msra.mxu0 0
        %7023 = vmatprep.mubr.bf16.mxu0 0
        %7024 = vmatmul.mubr.bf16.gmra.mxu0 %v6986
        %v7025 = vpop.f32.mrf.mxu0
        %v7026 = vadd.f32 0.0, %v7025
        %v7027 = vpop.f32.mrf.mxu0
        %v7028 = vpop.f32.mrf.mxu0
        %v7029 = vadd.f32 0.0, %v7028
        %v7030 = vpop.f32.mrf.mxu0
        %7031 = vdwg.mxu0
        %v7032 = vsel %vm847, %v6669, -inf
        %7033 = vmax.xlane.f32.xlu0 %v7032
        %v7034 = vpop.xlane.xlu0 %7033
        %v7035 = vsel %vm847, %v6672, -inf
        %7036 = vmax.xlane.f32.xlu0 %v7035
        %v7037 = vpop.xlane.xlu0 %7036
        %v7038 = vsel %vm847, %v6720, -inf
        %7039 = vmax.xlane.f32.xlu0 %v7038
        %v7040 = vpop.xlane.xlu0 %7039
        %v7041 = vsel %vm847, %v6723, -inf
        %7042 = vmax.xlane.f32.xlu0 %v7041
        %v7043 = vpop.xlane.xlu0 %7042
        %v7044 = vsel %vm847, %v6771, -inf
        %7045 = vmax.xlane.f32.xlu0 %v7044
        %v7046 = vpop.xlane.xlu0 %7045
        %v7047 = vsel %vm847, %v6774, -inf
        %7048 = vmax.xlane.f32.xlu0 %v7047
        %v7049 = vpop.xlane.xlu0 %7048
        %v7050 = vsel %vm847, %v6822, -inf
        %7051 = vmax.xlane.f32.xlu0 %v7050
        %v7052 = vpop.xlane.xlu0 %7051
        %v7053 = vsel %vm847, %v6825, -inf
        %7054 = vmax.xlane.f32.xlu0 %v7053
        %v7055 = vpop.xlane.xlu0 %7054
        %v7056 = vsel %vm847, %v6873, -inf
        %7057 = vmax.xlane.f32.xlu0 %v7056
        %v7058 = vpop.xlane.xlu0 %7057
        %v7059 = vsel %vm847, %v6876, -inf
        %7060 = vmax.xlane.f32.xlu0 %v7059
        %v7061 = vpop.xlane.xlu0 %7060
        %v7062 = vsel %vm847, %v6924, -inf
        %7063 = vmax.xlane.f32.xlu0 %v7062
        %v7064 = vpop.xlane.xlu0 %7063
        %v7065 = vsel %vm847, %v6927, -inf
        %7066 = vmax.xlane.f32.xlu0 %v7065
        %v7067 = vpop.xlane.xlu0 %7066
        %v7068 = vsel %vm847, %v6975, -inf
        %7069 = vmax.xlane.f32.xlu0 %v7068
        %v7070 = vpop.xlane.xlu0 %7069
        %v7071 = vsel %vm847, %v6978, -inf
        %7072 = vmax.xlane.f32.xlu0 %v7071
        %v7073 = vpop.xlane.xlu0 %7072
        %v7074 = vsel %vm847, %v7026, -inf
        %7075 = vmax.xlane.f32.xlu0 %v7074
        %v7076 = vpop.xlane.xlu0 %7075
        %v7077 = vsel %vm847, %v7029, -inf
        %7078 = vmax.xlane.f32.xlu0 %v7077
        %v7079 = vpop.xlane.xlu0 %7078
        %v7080 = vsub.f32 %v6669, %v7034
        %v7081 = vsub.f32 %v6672, %v7037
        %v7082 = vsub.f32 %v6720, %v7040
        %v7083 = vsub.f32 %v6723, %v7043
        %v7084 = vsub.f32 %v6771, %v7046
        %v7085 = vsub.f32 %v6774, %v7049
        %v7086 = vsub.f32 %v6822, %v7052
        %v7087 = vsub.f32 %v6825, %v7055
        %v7088 = vsub.f32 %v6873, %v7058
        %v7089 = vsub.f32 %v6876, %v7061
        %v7090 = vsub.f32 %v6924, %v7064
        %v7091 = vsub.f32 %v6927, %v7067
        %v7092 = vsub.f32 %v6975, %v7070
        %v7093 = vsub.f32 %v6978, %v7073
        %v7094 = vsub.f32 %v7026, %v7076
        %v7095 = vsub.f32 %v7029, %v7079
        %v7096 = vmul.f32 %v7080, 1.442695
        %v7097 = vpow.pop %v7096
        %v7098 = vmul.f32 %v7081, 1.442695
        %v7099 = vpow.pop %v7098
        %v7100 = vmul.f32 %v7082, 1.442695
        %v7101 = vpow.pop %v7100
        %v7102 = vmul.f32 %v7083, 1.442695
        %v7103 = vpow.pop %v7102
        %v7104 = vmul.f32 %v7084, 1.442695
        %v7105 = vpow.pop %v7104
        %v7106 = vmul.f32 %v7085, 1.442695
        %v7107 = vpow.pop %v7106
        %v7108 = vmul.f32 %v7086, 1.442695
        %v7109 = vpow.pop %v7108
        %v7110 = vmul.f32 %v7087, 1.442695
        %v7111 = vpow.pop %v7110
        %v7112 = vmul.f32 %v7088, 1.442695
        %v7113 = vpow.pop %v7112
        %v7114 = vmul.f32 %v7089, 1.442695
        %v7115 = vpow.pop %v7114
        %v7116 = vmul.f32 %v7090, 1.442695
        %v7117 = vpow.pop %v7116
        %v7118 = vmul.f32 %v7091, 1.442695
        %v7119 = vpow.pop %v7118
        %v7120 = vmul.f32 %v7092, 1.442695
        %v7121 = vpow.pop %v7120
        %v7122 = vmul.f32 %v7093, 1.442695
        %v7123 = vpow.pop %v7122
        %v7124 = vmul.f32 %v7094, 1.442695
        %v7125 = vpow.pop %v7124
        %v7126 = vmul.f32 %v7095, 1.442695
        %v7127 = vpow.pop %v7126
        %v7128 = vsel %vm847, %v7097, 0.0
        %7129 = vadd.xlane.f32.xlu0 %v7128
        %v7130 = vpop.xlane.xlu0 %7129
        %v7131 = vsel %vm847, %v7099, 0.0
        %7132 = vadd.xlane.f32.xlu0 %v7131
        %v7133 = vpop.xlane.xlu0 %7132
        %v7134 = vsel %vm847, %v7101, 0.0
        %7135 = vadd.xlane.f32.xlu0 %v7134
        %v7136 = vpop.xlane.xlu0 %7135
        %v7137 = vsel %vm847, %v7103, 0.0
        %7138 = vadd.xlane.f32.xlu0 %v7137
        %v7139 = vpop.xlane.xlu0 %7138
        %v7140 = vsel %vm847, %v7105, 0.0
        %7141 = vadd.xlane.f32.xlu0 %v7140
        %v7142 = vpop.xlane.xlu0 %7141
        %v7143 = vsel %vm847, %v7107, 0.0
        %7144 = vadd.xlane.f32.xlu0 %v7143
        %v7145 = vpop.xlane.xlu0 %7144
        %v7146 = vsel %vm847, %v7109, 0.0
        %7147 = vadd.xlane.f32.xlu0 %v7146
        %v7148 = vpop.xlane.xlu0 %7147
        %v7149 = vsel %vm847, %v7111, 0.0
        %7150 = vadd.xlane.f32.xlu0 %v7149
        %v7151 = vpop.xlane.xlu0 %7150
        %v7152 = vsel %vm847, %v7113, 0.0
        %7153 = vadd.xlane.f32.xlu0 %v7152
        %v7154 = vpop.xlane.xlu0 %7153
        %v7155 = vsel %vm847, %v7115, 0.0
        %7156 = vadd.xlane.f32.xlu0 %v7155
        %v7157 = vpop.xlane.xlu0 %7156
        %v7158 = vsel %vm847, %v7117, 0.0
        %7159 = vadd.xlane.f32.xlu0 %v7158
        %v7160 = vpop.xlane.xlu0 %7159
        %v7161 = vsel %vm847, %v7119, 0.0
        %7162 = vadd.xlane.f32.xlu0 %v7161
        %v7163 = vpop.xlane.xlu0 %7162
        %v7164 = vsel %vm847, %v7121, 0.0
        %7165 = vadd.xlane.f32.xlu0 %v7164
        %v7166 = vpop.xlane.xlu0 %7165
        %v7167 = vsel %vm847, %v7123, 0.0
        %7168 = vadd.xlane.f32.xlu0 %v7167
        %v7169 = vpop.xlane.xlu0 %7168
        %v7170 = vsel %vm847, %v7125, 0.0
        %7171 = vadd.xlane.f32.xlu0 %v7170
        %v7172 = vpop.xlane.xlu0 %7171
        %v7173 = vsel %vm847, %v7127, 0.0
        %7174 = vadd.xlane.f32.xlu0 %v7173
        %v7175 = vpop.xlane.xlu0 %7174
        %v7176 = vrcp.pop %v7130
        %v7177 = vmul.f32 %v7097, %v7176
        %v7178 = vrcp.pop %v7133
        %v7179 = vmul.f32 %v7099, %v7178
        %v7180 = vrcp.pop %v7136
        %v7181 = vmul.f32 %v7101, %v7180
        %v7182 = vrcp.pop %v7139
        %v7183 = vmul.f32 %v7103, %v7182
        %v7184 = vrcp.pop %v7142
        %v7185 = vmul.f32 %v7105, %v7184
        %v7186 = vrcp.pop %v7145
        %v7187 = vmul.f32 %v7107, %v7186
        %v7188 = vrcp.pop %v7148
        %v7189 = vmul.f32 %v7109, %v7188
        %v7190 = vrcp.pop %v7151
        %v7191 = vmul.f32 %v7111, %v7190
        %v7192 = vrcp.pop %v7154
        %v7193 = vmul.f32 %v7113, %v7192
        %v7194 = vrcp.pop %v7157
        %v7195 = vmul.f32 %v7115, %v7194
        %v7196 = vrcp.pop %v7160
        %v7197 = vmul.f32 %v7117, %v7196
        %v7198 = vrcp.pop %v7163
        %v7199 = vmul.f32 %v7119, %v7198
        %v7200 = vrcp.pop %v7166
        %v7201 = vmul.f32 %v7121, %v7200
        %v7202 = vrcp.pop %v7169
        %v7203 = vmul.f32 %v7123, %v7202
        %v7204 = vrcp.pop %v7172
        %v7205 = vmul.f32 %v7125, %v7204
        %v7206 = vrcp.pop %v7175
        %v7207 = vmul.f32 %v7127, %v7206
        %v7208 = vpack.c.bf16 %v7179, %v7177
        %v7209 = vpack.c.bf16 %v7183, %v7181
        %v7210 = vpack.c.bf16 %v7187, %v7185
        %v7211 = vpack.c.bf16 %v7191, %v7189
        %v7212 = vpack.c.bf16 %v7195, %v7193
        %v7213 = vpack.c.bf16 %v7199, %v7197
        %v7214 = vpack.c.bf16 %v7203, %v7201
        %v7215 = vpack.c.bf16 %v7207, %v7205
        %7216 = vrot.lane.b32.xlu0 %v839, 32
        %v7217 = vpop.permute.xlu0 %7216
        %v7220 = vsel %vm847, %v7208, 0
        %7222 = vmatprep.subr.bf16.mxu0 0
        %7223 = vmatpush1.bf16.msra.mxu0 0
        %7224 = vmatprep.subr.bf16.mxu0 0
        %7225 = vmatpush1.bf16.msra.mxu0 0
        %7226 = vmatprep.subr.bf16.mxu0 0
        %7227 = vmatpush1.bf16.msra.mxu0 0
        %7228 = vmatprep.subr.bf16.mxu0 0
        %7229 = vmatpush1.bf16.msra.mxu0 0
        %7230 = vmatprep.subr.bf16.mxu0 0
        %7231 = vmatpush1.bf16.msra.mxu0 0
        %7232 = vmatprep.subr.bf16.mxu0 0
        %7233 = vmatpush1.bf16.msra.mxu0 0
        %7234 = vmatprep.subr.bf16.mxu0 0
        %7235 = vmatpush1.bf16.msra.mxu0 0
        %7236 = vmatprep.subr.bf16.mxu0 0
        %7237 = vmatpush1.bf16.msra.mxu0 %v7217
        %7238 = vmatprep.subr.bf16.mxu0 0
        %7239 = vmatpush2.bf16.msra.mxu0 0
        %7240 = vmatprep.subr.bf16.mxu0 0
        %7241 = vmatpush2.bf16.msra.mxu0 0
        %7242 = vmatprep.subr.bf16.mxu0 0
        %7243 = vmatpush2.bf16.msra.mxu0 0
        %7244 = vmatprep.subr.bf16.mxu0 0
        %7245 = vmatpush2.bf16.msra.mxu0 0
        %7246 = vmatprep.subr.bf16.mxu0 0
        %7247 = vmatpush2.bf16.msra.mxu0 0
        %7248 = vmatprep.subr.bf16.mxu0 0
        %7249 = vmatpush2.bf16.msra.mxu0 0
        %7250 = vmatprep.subr.bf16.mxu0 0
        %7251 = vmatpush2.bf16.msra.mxu0 0
        %7252 = vmatprep.subr.bf16.mxu0 0
        %7253 = vmatpush2.bf16.msra.mxu0 0
        %7254 = vmatprep.mubr.bf16.mxu0 0
        %7255 = vmatmul.mubr.bf16.gmra.mxu0 %v7220
        %v7256 = vpop.f32.mrf.mxu0
        %v7257 = vadd.f32 0.0, %v7256
        %v7258 = vpop.f32.mrf.mxu0
        %v7259 = vpop.f32.mrf.mxu0
        %v7260 = vadd.f32 0.0, %v7259
        %v7261 = vpop.f32.mrf.mxu0
        %7262 = vdwg.mxu0
        %7263 = vrot.lane.b32.xlu0 %v840, 32
        %v7264 = vpop.permute.xlu0 %7263
        %v7267 = vsel %vm847, %v7209, 0
        %7269 = vmatprep.subr.bf16.mxu0 0
        %7270 = vmatpush1.bf16.msra.mxu0 0
        %7271 = vmatprep.subr.bf16.mxu0 0
        %7272 = vmatpush1.bf16.msra.mxu0 0
        %7273 = vmatprep.subr.bf16.mxu0 0
        %7274 = vmatpush1.bf16.msra.mxu0 0
        %7275 = vmatprep.subr.bf16.mxu0 0
        %7276 = vmatpush1.bf16.msra.mxu0 0
        %7277 = vmatprep.subr.bf16.mxu0 0
        %7278 = vmatpush1.bf16.msra.mxu0 0
        %7279 = vmatprep.subr.bf16.mxu0 0
        %7280 = vmatpush1.bf16.msra.mxu0 0
        %7281 = vmatprep.subr.bf16.mxu0 0
        %7282 = vmatpush1.bf16.msra.mxu0 0
        %7283 = vmatprep.subr.bf16.mxu0 0
        %7284 = vmatpush1.bf16.msra.mxu0 %v7264
        %7285 = vmatprep.subr.bf16.mxu0 0
        %7286 = vmatpush2.bf16.msra.mxu0 0
        %7287 = vmatprep.subr.bf16.mxu0 0
        %7288 = vmatpush2.bf16.msra.mxu0 0
        %7289 = vmatprep.subr.bf16.mxu0 0
        %7290 = vmatpush2.bf16.msra.mxu0 0
        %7291 = vmatprep.subr.bf16.mxu0 0
        %7292 = vmatpush2.bf16.msra.mxu0 0
        %7293 = vmatprep.subr.bf16.mxu0 0
        %7294 = vmatpush2.bf16.msra.mxu0 0
        %7295 = vmatprep.subr.bf16.mxu0 0
        %7296 = vmatpush2.bf16.msra.mxu0 0
        %7297 = vmatprep.subr.bf16.mxu0 0
        %7298 = vmatpush2.bf16.msra.mxu0 0
        %7299 = vmatprep.subr.bf16.mxu0 0
        %7300 = vmatpush2.bf16.msra.mxu0 0
        %7301 = vmatprep.mubr.bf16.mxu0 0
        %7302 = vmatmul.mubr.bf16.gmra.mxu0 %v7267
        %v7303 = vpop.f32.mrf.mxu0
        %v7304 = vadd.f32 0.0, %v7303
        %v7305 = vpop.f32.mrf.mxu0
        %v7306 = vpop.f32.mrf.mxu0
        %v7307 = vadd.f32 0.0, %v7306
        %v7308 = vpop.f32.mrf.mxu0
        %7309 = vdwg.mxu0
        %7310 = vrot.lane.b32.xlu0 %v841, 32
        %v7311 = vpop.permute.xlu0 %7310
        %v7314 = vsel %vm847, %v7210, 0
        %7316 = vmatprep.subr.bf16.mxu0 0
        %7317 = vmatpush1.bf16.msra.mxu0 0
        %7318 = vmatprep.subr.bf16.mxu0 0
        %7319 = vmatpush1.bf16.msra.mxu0 0
        %7320 = vmatprep.subr.bf16.mxu0 0
        %7321 = vmatpush1.bf16.msra.mxu0 0
        %7322 = vmatprep.subr.bf16.mxu0 0
        %7323 = vmatpush1.bf16.msra.mxu0 0
        %7324 = vmatprep.subr.bf16.mxu0 0
        %7325 = vmatpush1.bf16.msra.mxu0 0
        %7326 = vmatprep.subr.bf16.mxu0 0
        %7327 = vmatpush1.bf16.msra.mxu0 0
        %7328 = vmatprep.subr.bf16.mxu0 0
        %7329 = vmatpush1.bf16.msra.mxu0 0
        %7330 = vmatprep.subr.bf16.mxu0 0
        %7331 = vmatpush1.bf16.msra.mxu0 %v7311
        %7332 = vmatprep.subr.bf16.mxu0 0
        %7333 = vmatpush2.bf16.msra.mxu0 0
        %7334 = vmatprep.subr.bf16.mxu0 0
        %7335 = vmatpush2.bf16.msra.mxu0 0
        %7336 = vmatprep.subr.bf16.mxu0 0
        %7337 = vmatpush2.bf16.msra.mxu0 0
        %7338 = vmatprep.subr.bf16.mxu0 0
        %7339 = vmatpush2.bf16.msra.mxu0 0
        %7340 = vmatprep.subr.bf16.mxu0 0
        %7341 = vmatpush2.bf16.msra.mxu0 0
        %7342 = vmatprep.subr.bf16.mxu0 0
        %7343 = vmatpush2.bf16.msra.mxu0 0
        %7344 = vmatprep.subr.bf16.mxu0 0
        %7345 = vmatpush2.bf16.msra.mxu0 0
        %7346 = vmatprep.subr.bf16.mxu0 0
        %7347 = vmatpush2.bf16.msra.mxu0 0
        %7348 = vmatprep.mubr.bf16.mxu0 0
        %7349 = vmatmul.mubr.bf16.gmra.mxu0 %v7314
        %v7350 = vpop.f32.mrf.mxu0
        %v7351 = vadd.f32 0.0, %v7350
        %v7352 = vpop.f32.mrf.mxu0
        %v7353 = vpop.f32.mrf.mxu0
        %v7354 = vadd.f32 0.0, %v7353
        %v7355 = vpop.f32.mrf.mxu0
        %7356 = vdwg.mxu0
        %7357 = vrot.lane.b32.xlu0 %v842, 32
        %v7358 = vpop.permute.xlu0 %7357
        %v7361 = vsel %vm847, %v7211, 0
        %7363 = vmatprep.subr.bf16.mxu0 0
        %7364 = vmatpush1.bf16.msra.mxu0 0
        %7365 = vmatprep.subr.bf16.mxu0 0
        %7366 = vmatpush1.bf16.msra.mxu0 0
        %7367 = vmatprep.subr.bf16.mxu0 0
        %7368 = vmatpush1.bf16.msra.mxu0 0
        %7369 = vmatprep.subr.bf16.mxu0 0
        %7370 = vmatpush1.bf16.msra.mxu0 0
        %7371 = vmatprep.subr.bf16.mxu0 0
        %7372 = vmatpush1.bf16.msra.mxu0 0
        %7373 = vmatprep.subr.bf16.mxu0 0
        %7374 = vmatpush1.bf16.msra.mxu0 0
        %7375 = vmatprep.subr.bf16.mxu0 0
        %7376 = vmatpush1.bf16.msra.mxu0 0
        %7377 = vmatprep.subr.bf16.mxu0 0
        %7378 = vmatpush1.bf16.msra.mxu0 %v7358
        %7379 = vmatprep.subr.bf16.mxu0 0
        %7380 = vmatpush2.bf16.msra.mxu0 0
        %7381 = vmatprep.subr.bf16.mxu0 0
        %7382 = vmatpush2.bf16.msra.mxu0 0
        %7383 = vmatprep.subr.bf16.mxu0 0
        %7384 = vmatpush2.bf16.msra.mxu0 0
        %7385 = vmatprep.subr.bf16.mxu0 0
        %7386 = vmatpush2.bf16.msra.mxu0 0
        %7387 = vmatprep.subr.bf16.mxu0 0
        %7388 = vmatpush2.bf16.msra.mxu0 0
        %7389 = vmatprep.subr.bf16.mxu0 0
        %7390 = vmatpush2.bf16.msra.mxu0 0
        %7391 = vmatprep.subr.bf16.mxu0 0
        %7392 = vmatpush2.bf16.msra.mxu0 0
        %7393 = vmatprep.subr.bf16.mxu0 0
        %7394 = vmatpush2.bf16.msra.mxu0 0
        %7395 = vmatprep.mubr.bf16.mxu0 0
        %7396 = vmatmul.mubr.bf16.gmra.mxu0 %v7361
        %v7397 = vpop.f32.mrf.mxu0
        %v7398 = vadd.f32 0.0, %v7397
        %v7399 = vpop.f32.mrf.mxu0
        %v7400 = vpop.f32.mrf.mxu0
        %v7401 = vadd.f32 0.0, %v7400
        %v7402 = vpop.f32.mrf.mxu0
        %7403 = vdwg.mxu0
        %7404 = vrot.lane.b32.xlu0 %v843, 32
        %v7405 = vpop.permute.xlu0 %7404
        %v7408 = vsel %vm847, %v7212, 0
        %7410 = vmatprep.subr.bf16.mxu0 0
        %7411 = vmatpush1.bf16.msra.mxu0 0
        %7412 = vmatprep.subr.bf16.mxu0 0
        %7413 = vmatpush1.bf16.msra.mxu0 0
        %7414 = vmatprep.subr.bf16.mxu0 0
        %7415 = vmatpush1.bf16.msra.mxu0 0
        %7416 = vmatprep.subr.bf16.mxu0 0
        %7417 = vmatpush1.bf16.msra.mxu0 0
        %7418 = vmatprep.subr.bf16.mxu0 0
        %7419 = vmatpush1.bf16.msra.mxu0 0
        %7420 = vmatprep.subr.bf16.mxu0 0
        %7421 = vmatpush1.bf16.msra.mxu0 0
        %7422 = vmatprep.subr.bf16.mxu0 0
        %7423 = vmatpush1.bf16.msra.mxu0 0
        %7424 = vmatprep.subr.bf16.mxu0 0
        %7425 = vmatpush1.bf16.msra.mxu0 %v7405
        %7426 = vmatprep.subr.bf16.mxu0 0
        %7427 = vmatpush2.bf16.msra.mxu0 0
        %7428 = vmatprep.subr.bf16.mxu0 0
        %7429 = vmatpush2.bf16.msra.mxu0 0
        %7430 = vmatprep.subr.bf16.mxu0 0
        %7431 = vmatpush2.bf16.msra.mxu0 0
        %7432 = vmatprep.subr.bf16.mxu0 0
        %7433 = vmatpush2.bf16.msra.mxu0 0
        %7434 = vmatprep.subr.bf16.mxu0 0
        %7435 = vmatpush2.bf16.msra.mxu0 0
        %7436 = vmatprep.subr.bf16.mxu0 0
        %7437 = vmatpush2.bf16.msra.mxu0 0
        %7438 = vmatprep.subr.bf16.mxu0 0
        %7439 = vmatpush2.bf16.msra.mxu0 0
        %7440 = vmatprep.subr.bf16.mxu0 0
        %7441 = vmatpush2.bf16.msra.mxu0 0
        %7442 = vmatprep.mubr.bf16.mxu0 0
        %7443 = vmatmul.mubr.bf16.gmra.mxu0 %v7408
        %v7444 = vpop.f32.mrf.mxu0
        %v7445 = vadd.f32 0.0, %v7444
        %v7446 = vpop.f32.mrf.mxu0
        %v7447 = vpop.f32.mrf.mxu0
        %v7448 = vadd.f32 0.0, %v7447
        %v7449 = vpop.f32.mrf.mxu0
        %7450 = vdwg.mxu0
        %7451 = vrot.lane.b32.xlu0 %v844, 32
        %v7452 = vpop.permute.xlu0 %7451
        %v7455 = vsel %vm847, %v7213, 0
        %7457 = vmatprep.subr.bf16.mxu0 0
        %7458 = vmatpush1.bf16.msra.mxu0 0
        %7459 = vmatprep.subr.bf16.mxu0 0
        %7460 = vmatpush1.bf16.msra.mxu0 0
        %7461 = vmatprep.subr.bf16.mxu0 0
        %7462 = vmatpush1.bf16.msra.mxu0 0
        %7463 = vmatprep.subr.bf16.mxu0 0
        %7464 = vmatpush1.bf16.msra.mxu0 0
        %7465 = vmatprep.subr.bf16.mxu0 0
        %7466 = vmatpush1.bf16.msra.mxu0 0
        %7467 = vmatprep.subr.bf16.mxu0 0
        %7468 = vmatpush1.bf16.msra.mxu0 0
        %7469 = vmatprep.subr.bf16.mxu0 0
        %7470 = vmatpush1.bf16.msra.mxu0 0
        %7471 = vmatprep.subr.bf16.mxu0 0
        %7472 = vmatpush1.bf16.msra.mxu0 %v7452
        %7473 = vmatprep.subr.bf16.mxu0 0
        %7474 = vmatpush2.bf16.msra.mxu0 0
        %7475 = vmatprep.subr.bf16.mxu0 0
        %7476 = vmatpush2.bf16.msra.mxu0 0
        %7477 = vmatprep.subr.bf16.mxu0 0
        %7478 = vmatpush2.bf16.msra.mxu0 0
        %7479 = vmatprep.subr.bf16.mxu0 0
        %7480 = vmatpush2.bf16.msra.mxu0 0
        %7481 = vmatprep.subr.bf16.mxu0 0
        %7482 = vmatpush2.bf16.msra.mxu0 0
        %7483 = vmatprep.subr.bf16.mxu0 0
        %7484 = vmatpush2.bf16.msra.mxu0 0
        %7485 = vmatprep.subr.bf16.mxu0 0
        %7486 = vmatpush2.bf16.msra.mxu0 0
        %7487 = vmatprep.subr.bf16.mxu0 0
        %7488 = vmatpush2.bf16.msra.mxu0 0
        %7489 = vmatprep.mubr.bf16.mxu0 0
        %7490 = vmatmul.mubr.bf16.gmra.mxu0 %v7455
        %v7491 = vpop.f32.mrf.mxu0
        %v7492 = vadd.f32 0.0, %v7491
        %v7493 = vpop.f32.mrf.mxu0
        %v7494 = vpop.f32.mrf.mxu0
        %v7495 = vadd.f32 0.0, %v7494
        %v7496 = vpop.f32.mrf.mxu0
        %7497 = vdwg.mxu0
        %7498 = vrot.lane.b32.xlu0 %v845, 32
        %v7499 = vpop.permute.xlu0 %7498
        %v7502 = vsel %vm847, %v7214, 0
        %7504 = vmatprep.subr.bf16.mxu0 0
        %7505 = vmatpush1.bf16.msra.mxu0 0
        %7506 = vmatprep.subr.bf16.mxu0 0
        %7507 = vmatpush1.bf16.msra.mxu0 0
        %7508 = vmatprep.subr.bf16.mxu0 0
        %7509 = vmatpush1.bf16.msra.mxu0 0
        %7510 = vmatprep.subr.bf16.mxu0 0
        %7511 = vmatpush1.bf16.msra.mxu0 0
        %7512 = vmatprep.subr.bf16.mxu0 0
        %7513 = vmatpush1.bf16.msra.mxu0 0
        %7514 = vmatprep.subr.bf16.mxu0 0
        %7515 = vmatpush1.bf16.msra.mxu0 0
        %7516 = vmatprep.subr.bf16.mxu0 0
        %7517 = vmatpush1.bf16.msra.mxu0 0
        %7518 = vmatprep.subr.bf16.mxu0 0
        %7519 = vmatpush1.bf16.msra.mxu0 %v7499
        %7520 = vmatprep.subr.bf16.mxu0 0
        %7521 = vmatpush2.bf16.msra.mxu0 0
        %7522 = vmatprep.subr.bf16.mxu0 0
        %7523 = vmatpush2.bf16.msra.mxu0 0
        %7524 = vmatprep.subr.bf16.mxu0 0
        %7525 = vmatpush2.bf16.msra.mxu0 0
        %7526 = vmatprep.subr.bf16.mxu0 0
        %7527 = vmatpush2.bf16.msra.mxu0 0
        %7528 = vmatprep.subr.bf16.mxu0 0
        %7529 = vmatpush2.bf16.msra.mxu0 0
        %7530 = vmatprep.subr.bf16.mxu0 0
        %7531 = vmatpush2.bf16.msra.mxu0 0
        %7532 = vmatprep.subr.bf16.mxu0 0
        %7533 = vmatpush2.bf16.msra.mxu0 0
        %7534 = vmatprep.subr.bf16.mxu0 0
        %7535 = vmatpush2.bf16.msra.mxu0 0
        %7536 = vmatprep.mubr.bf16.mxu0 0
        %7537 = vmatmul.mubr.bf16.gmra.mxu0 %v7502
        %v7538 = vpop.f32.mrf.mxu0
        %v7539 = vadd.f32 0.0, %v7538
        %v7540 = vpop.f32.mrf.mxu0
        %v7541 = vpop.f32.mrf.mxu0
        %v7542 = vadd.f32 0.0, %v7541
        %v7543 = vpop.f32.mrf.mxu0
        %7544 = vdwg.mxu0
        %7545 = vrot.lane.b32.xlu0 %v846, 32
        %v7546 = vpop.permute.xlu0 %7545
        %v7549 = vsel %vm847, %v7215, 0
        %7551 = vmatprep.subr.bf16.mxu0 0
        %7552 = vmatpush1.bf16.msra.mxu0 0
        %7553 = vmatprep.subr.bf16.mxu0 0
        %7554 = vmatpush1.bf16.msra.mxu0 0
        %7555 = vmatprep.subr.bf16.mxu0 0
        %7556 = vmatpush1.bf16.msra.mxu0 0
        %7557 = vmatprep.subr.bf16.mxu0 0
        %7558 = vmatpush1.bf16.msra.mxu0 0
        %7559 = vmatprep.subr.bf16.mxu0 0
        %7560 = vmatpush1.bf16.msra.mxu0 0
        %7561 = vmatprep.subr.bf16.mxu0 0
        %7562 = vmatpush1.bf16.msra.mxu0 0
        %7563 = vmatprep.subr.bf16.mxu0 0
        %7564 = vmatpush1.bf16.msra.mxu0 0
        %7565 = vmatprep.subr.bf16.mxu0 0
        %7566 = vmatpush1.bf16.msra.mxu0 %v7546
        %7567 = vmatprep.subr.bf16.mxu0 0
        %7568 = vmatpush2.bf16.msra.mxu0 0
        %7569 = vmatprep.subr.bf16.mxu0 0
        %7570 = vmatpush2.bf16.msra.mxu0 0
        %7571 = vmatprep.subr.bf16.mxu0 0
        %7572 = vmatpush2.bf16.msra.mxu0 0
        %7573 = vmatprep.subr.bf16.mxu0 0
        %7574 = vmatpush2.bf16.msra.mxu0 0
        %7575 = vmatprep.subr.bf16.mxu0 0
        %7576 = vmatpush2.bf16.msra.mxu0 0
        %7577 = vmatprep.subr.bf16.mxu0 0
        %7578 = vmatpush2.bf16.msra.mxu0 0
        %7579 = vmatprep.subr.bf16.mxu0 0
        %7580 = vmatpush2.bf16.msra.mxu0 0
        %7581 = vmatprep.subr.bf16.mxu0 0
        %7582 = vmatpush2.bf16.msra.mxu0 0
        %7583 = vmatprep.mubr.bf16.mxu0 0
        %7584 = vmatmul.mubr.bf16.gmra.mxu0 %v7549
        %v7585 = vpop.f32.mrf.mxu0
        %v7586 = vadd.f32 0.0, %v7585
        %v7587 = vpop.f32.mrf.mxu0
        %v7588 = vpop.f32.mrf.mxu0
        %v7589 = vadd.f32 0.0, %v7588
        %v7590 = vpop.f32.mrf.mxu0
        %7591 = vdwg.mxu0
        %7592 = vrot.lane.b32.xlu0 %v823, 16
        %v7593 = vpop.permute.xlu0 %7592
        %7594 = vrot.lane.b32.xlu0 %v831, 16
        %v7595 = vpop.permute.xlu0 %7594
        %v7597 = vsel %vm847, %v7593, 0
        %v7600 = vsel %vm847, %v7595, 0
        %7602 = vmatprep.subr.bf16.mxu0 0
        %7603 = vmatpush1.bf16.xpose.msra.mxu0 0
        %7604 = vmatprep.subr.bf16.mxu0 0
        %7605 = vmatpush1.bf16.xpose.msra.mxu0 0
        %7606 = vmatprep.subr.bf16.mxu0 0
        %7607 = vmatpush1.bf16.xpose.msra.mxu0 0
        %7608 = vmatprep.subr.bf16.mxu0 0
        %7609 = vmatpush1.bf16.xpose.msra.mxu0 0
        %7610 = vmatprep.subr.bf16.mxu0 0
        %7611 = vmatpush1.bf16.xpose.msra.mxu0 0
        %7612 = vmatprep.subr.bf16.mxu0 0
        %7613 = vmatpush1.bf16.xpose.msra.mxu0 0
        %7614 = vmatprep.subr.bf16.mxu0 0
        %7615 = vmatpush1.bf16.xpose.msra.mxu0 0
        %7616 = vmatprep.subr.bf16.mxu0 0
        %7617 = vmatpush1.bf16.xpose.msra.mxu0 %v7600
        %7618 = vmatprep.subr.bf16.mxu0 0
        %7619 = vmatpush2.bf16.xpose.msra.mxu0 0
        %7620 = vmatprep.subr.bf16.mxu0 0
        %7621 = vmatpush2.bf16.xpose.msra.mxu0 0
        %7622 = vmatprep.subr.bf16.mxu0 0
        %7623 = vmatpush2.bf16.xpose.msra.mxu0 0
        %7624 = vmatprep.subr.bf16.mxu0 0
        %7625 = vmatpush2.bf16.xpose.msra.mxu0 0
        %7626 = vmatprep.subr.bf16.mxu0 0
        %7627 = vmatpush2.bf16.xpose.msra.mxu0 0
        %7628 = vmatprep.subr.bf16.mxu0 0
        %7629 = vmatpush2.bf16.xpose.msra.mxu0 0
        %7630 = vmatprep.subr.bf16.mxu0 0
        %7631 = vmatpush2.bf16.xpose.msra.mxu0 0
        %7632 = vmatprep.subr.bf16.mxu0 0
        %7633 = vmatpush2.bf16.xpose.msra.mxu0 0
        %7634 = vmatprep.mubr.bf16.mxu0 0
        %7635 = vmatmul.mubr.bf16.gmra.mxu0 %v7597
        %v7636 = vpop.f32.mrf.mxu0
        %v7637 = vadd.f32 0.0, %v7636
        %v7638 = vpop.f32.mrf.mxu0
        %v7639 = vpop.f32.mrf.mxu0
        %v7640 = vadd.f32 0.0, %v7639
        %v7641 = vpop.f32.mrf.mxu0
        %7642 = vdwg.mxu0
        %7643 = vrot.lane.b32.xlu0 %v824, 16
        %v7644 = vpop.permute.xlu0 %7643
        %7645 = vrot.lane.b32.xlu0 %v832, 16
        %v7646 = vpop.permute.xlu0 %7645
        %v7648 = vsel %vm847, %v7644, 0
        %v7651 = vsel %vm847, %v7646, 0
        %7653 = vmatprep.subr.bf16.mxu0 0
        %7654 = vmatpush1.bf16.xpose.msra.mxu0 0
        %7655 = vmatprep.subr.bf16.mxu0 0
        %7656 = vmatpush1.bf16.xpose.msra.mxu0 0
        %7657 = vmatprep.subr.bf16.mxu0 0
        %7658 = vmatpush1.bf16.xpose.msra.mxu0 0
        %7659 = vmatprep.subr.bf16.mxu0 0
        %7660 = vmatpush1.bf16.xpose.msra.mxu0 0
        %7661 = vmatprep.subr.bf16.mxu0 0
        %7662 = vmatpush1.bf16.xpose.msra.mxu0 0
        %7663 = vmatprep.subr.bf16.mxu0 0
        %7664 = vmatpush1.bf16.xpose.msra.mxu0 0
        %7665 = vmatprep.subr.bf16.mxu0 0
        %7666 = vmatpush1.bf16.xpose.msra.mxu0 0
        %7667 = vmatprep.subr.bf16.mxu0 0
        %7668 = vmatpush1.bf16.xpose.msra.mxu0 %v7651
        %7669 = vmatprep.subr.bf16.mxu0 0
        %7670 = vmatpush2.bf16.xpose.msra.mxu0 0
        %7671 = vmatprep.subr.bf16.mxu0 0
        %7672 = vmatpush2.bf16.xpose.msra.mxu0 0
        %7673 = vmatprep.subr.bf16.mxu0 0
        %7674 = vmatpush2.bf16.xpose.msra.mxu0 0
        %7675 = vmatprep.subr.bf16.mxu0 0
        %7676 = vmatpush2.bf16.xpose.msra.mxu0 0
        %7677 = vmatprep.subr.bf16.mxu0 0
        %7678 = vmatpush2.bf16.xpose.msra.mxu0 0
        %7679 = vmatprep.subr.bf16.mxu0 0
        %7680 = vmatpush2.bf16.xpose.msra.mxu0 0
        %7681 = vmatprep.subr.bf16.mxu0 0
        %7682 = vmatpush2.bf16.xpose.msra.mxu0 0
        %7683 = vmatprep.subr.bf16.mxu0 0
        %7684 = vmatpush2.bf16.xpose.msra.mxu0 0
        %7685 = vmatprep.mubr.bf16.mxu0 0
        %7686 = vmatmul.mubr.bf16.gmra.mxu0 %v7648
        %v7687 = vpop.f32.mrf.mxu0
        %v7688 = vadd.f32 0.0, %v7687
        %v7689 = vpop.f32.mrf.mxu0
        %v7690 = vpop.f32.mrf.mxu0
        %v7691 = vadd.f32 0.0, %v7690
        %v7692 = vpop.f32.mrf.mxu0
        %7693 = vdwg.mxu0
        %7694 = vrot.lane.b32.xlu0 %v825, 16
        %v7695 = vpop.permute.xlu0 %7694
        %7696 = vrot.lane.b32.xlu0 %v833, 16
        %v7697 = vpop.permute.xlu0 %7696
        %v7699 = vsel %vm847, %v7695, 0
        %v7702 = vsel %vm847, %v7697, 0
        %7704 = vmatprep.subr.bf16.mxu0 0
        %7705 = vmatpush1.bf16.xpose.msra.mxu0 0
        %7706 = vmatprep.subr.bf16.mxu0 0
        %7707 = vmatpush1.bf16.xpose.msra.mxu0 0
        %7708 = vmatprep.subr.bf16.mxu0 0
        %7709 = vmatpush1.bf16.xpose.msra.mxu0 0
        %7710 = vmatprep.subr.bf16.mxu0 0
        %7711 = vmatpush1.bf16.xpose.msra.mxu0 0
        %7712 = vmatprep.subr.bf16.mxu0 0
        %7713 = vmatpush1.bf16.xpose.msra.mxu0 0
        %7714 = vmatprep.subr.bf16.mxu0 0
        %7715 = vmatpush1.bf16.xpose.msra.mxu0 0
        %7716 = vmatprep.subr.bf16.mxu0 0
        %7717 = vmatpush1.bf16.xpose.msra.mxu0 0
        %7718 = vmatprep.subr.bf16.mxu0 0
        %7719 = vmatpush1.bf16.xpose.msra.mxu0 %v7702
        %7720 = vmatprep.subr.bf16.mxu0 0
        %7721 = vmatpush2.bf16.xpose.msra.mxu0 0
        %7722 = vmatprep.subr.bf16.mxu0 0
        %7723 = vmatpush2.bf16.xpose.msra.mxu0 0
        %7724 = vmatprep.subr.bf16.mxu0 0
        %7725 = vmatpush2.bf16.xpose.msra.mxu0 0
        %7726 = vmatprep.subr.bf16.mxu0 0
        %7727 = vmatpush2.bf16.xpose.msra.mxu0 0
        %7728 = vmatprep.subr.bf16.mxu0 0
        %7729 = vmatpush2.bf16.xpose.msra.mxu0 0
        %7730 = vmatprep.subr.bf16.mxu0 0
        %7731 = vmatpush2.bf16.xpose.msra.mxu0 0
        %7732 = vmatprep.subr.bf16.mxu0 0
        %7733 = vmatpush2.bf16.xpose.msra.mxu0 0
        %7734 = vmatprep.subr.bf16.mxu0 0
        %7735 = vmatpush2.bf16.xpose.msra.mxu0 0
        %7736 = vmatprep.mubr.bf16.mxu0 0
        %7737 = vmatmul.mubr.bf16.gmra.mxu0 %v7699
        %v7738 = vpop.f32.mrf.mxu0
        %v7739 = vadd.f32 0.0, %v7738
        %v7740 = vpop.f32.mrf.mxu0
        %v7741 = vpop.f32.mrf.mxu0
        %v7742 = vadd.f32 0.0, %v7741
        %v7743 = vpop.f32.mrf.mxu0
        %7744 = vdwg.mxu0
        %7745 = vrot.lane.b32.xlu0 %v826, 16
        %v7746 = vpop.permute.xlu0 %7745
        %7747 = vrot.lane.b32.xlu0 %v834, 16
        %v7748 = vpop.permute.xlu0 %7747
        %v7750 = vsel %vm847, %v7746, 0
        %v7753 = vsel %vm847, %v7748, 0
        %7755 = vmatprep.subr.bf16.mxu0 0
        %7756 = vmatpush1.bf16.xpose.msra.mxu0 0
        %7757 = vmatprep.subr.bf16.mxu0 0
        %7758 = vmatpush1.bf16.xpose.msra.mxu0 0
        %7759 = vmatprep.subr.bf16.mxu0 0
        %7760 = vmatpush1.bf16.xpose.msra.mxu0 0
        %7761 = vmatprep.subr.bf16.mxu0 0
        %7762 = vmatpush1.bf16.xpose.msra.mxu0 0
        %7763 = vmatprep.subr.bf16.mxu0 0
        %7764 = vmatpush1.bf16.xpose.msra.mxu0 0
        %7765 = vmatprep.subr.bf16.mxu0 0
        %7766 = vmatpush1.bf16.xpose.msra.mxu0 0
        %7767 = vmatprep.subr.bf16.mxu0 0
        %7768 = vmatpush1.bf16.xpose.msra.mxu0 0
        %7769 = vmatprep.subr.bf16.mxu0 0
        %7770 = vmatpush1.bf16.xpose.msra.mxu0 %v7753
        %7771 = vmatprep.subr.bf16.mxu0 0
        %7772 = vmatpush2.bf16.xpose.msra.mxu0 0
        %7773 = vmatprep.subr.bf16.mxu0 0
        %7774 = vmatpush2.bf16.xpose.msra.mxu0 0
        %7775 = vmatprep.subr.bf16.mxu0 0
        %7776 = vmatpush2.bf16.xpose.msra.mxu0 0
        %7777 = vmatprep.subr.bf16.mxu0 0
        %7778 = vmatpush2.bf16.xpose.msra.mxu0 0
        %7779 = vmatprep.subr.bf16.mxu0 0
        %7780 = vmatpush2.bf16.xpose.msra.mxu0 0
        %7781 = vmatprep.subr.bf16.mxu0 0
        %7782 = vmatpush2.bf16.xpose.msra.mxu0 0
        %7783 = vmatprep.subr.bf16.mxu0 0
        %7784 = vmatpush2.bf16.xpose.msra.mxu0 0
        %7785 = vmatprep.subr.bf16.mxu0 0
        %7786 = vmatpush2.bf16.xpose.msra.mxu0 0
        %7787 = vmatprep.mubr.bf16.mxu0 0
        %7788 = vmatmul.mubr.bf16.gmra.mxu0 %v7750
        %v7789 = vpop.f32.mrf.mxu0
        %v7790 = vadd.f32 0.0, %v7789
        %v7791 = vpop.f32.mrf.mxu0
        %v7792 = vpop.f32.mrf.mxu0
        %v7793 = vadd.f32 0.0, %v7792
        %v7794 = vpop.f32.mrf.mxu0
        %7795 = vdwg.mxu0
        %7796 = vrot.lane.b32.xlu0 %v827, 16
        %v7797 = vpop.permute.xlu0 %7796
        %7798 = vrot.lane.b32.xlu0 %v835, 16
        %v7799 = vpop.permute.xlu0 %7798
        %v7801 = vsel %vm847, %v7797, 0
        %v7804 = vsel %vm847, %v7799, 0
        %7806 = vmatprep.subr.bf16.mxu0 0
        %7807 = vmatpush1.bf16.xpose.msra.mxu0 0
        %7808 = vmatprep.subr.bf16.mxu0 0
        %7809 = vmatpush1.bf16.xpose.msra.mxu0 0
        %7810 = vmatprep.subr.bf16.mxu0 0
        %7811 = vmatpush1.bf16.xpose.msra.mxu0 0
        %7812 = vmatprep.subr.bf16.mxu0 0
        %7813 = vmatpush1.bf16.xpose.msra.mxu0 0
        %7814 = vmatprep.subr.bf16.mxu0 0
        %7815 = vmatpush1.bf16.xpose.msra.mxu0 0
        %7816 = vmatprep.subr.bf16.mxu0 0
        %7817 = vmatpush1.bf16.xpose.msra.mxu0 0
        %7818 = vmatprep.subr.bf16.mxu0 0
        %7819 = vmatpush1.bf16.xpose.msra.mxu0 0
        %7820 = vmatprep.subr.bf16.mxu0 0
        %7821 = vmatpush1.bf16.xpose.msra.mxu0 %v7804
        %7822 = vmatprep.subr.bf16.mxu0 0
        %7823 = vmatpush2.bf16.xpose.msra.mxu0 0
        %7824 = vmatprep.subr.bf16.mxu0 0
        %7825 = vmatpush2.bf16.xpose.msra.mxu0 0
        %7826 = vmatprep.subr.bf16.mxu0 0
        %7827 = vmatpush2.bf16.xpose.msra.mxu0 0
        %7828 = vmatprep.subr.bf16.mxu0 0
        %7829 = vmatpush2.bf16.xpose.msra.mxu0 0
        %7830 = vmatprep.subr.bf16.mxu0 0
        %7831 = vmatpush2.bf16.xpose.msra.mxu0 0
        %7832 = vmatprep.subr.bf16.mxu0 0
        %7833 = vmatpush2.bf16.xpose.msra.mxu0 0
        %7834 = vmatprep.subr.bf16.mxu0 0
        %7835 = vmatpush2.bf16.xpose.msra.mxu0 0
        %7836 = vmatprep.subr.bf16.mxu0 0
        %7837 = vmatpush2.bf16.xpose.msra.mxu0 0
        %7838 = vmatprep.mubr.bf16.mxu0 0
        %7839 = vmatmul.mubr.bf16.gmra.mxu0 %v7801
        %v7840 = vpop.f32.mrf.mxu0
        %v7841 = vadd.f32 0.0, %v7840
        %v7842 = vpop.f32.mrf.mxu0
        %v7843 = vpop.f32.mrf.mxu0
        %v7844 = vadd.f32 0.0, %v7843
        %v7845 = vpop.f32.mrf.mxu0
        %7846 = vdwg.mxu0
        %7847 = vrot.lane.b32.xlu0 %v828, 16
        %v7848 = vpop.permute.xlu0 %7847
        %7849 = vrot.lane.b32.xlu0 %v836, 16
        %v7850 = vpop.permute.xlu0 %7849
        %v7852 = vsel %vm847, %v7848, 0
        %v7855 = vsel %vm847, %v7850, 0
        %7857 = vmatprep.subr.bf16.mxu0 0
        %7858 = vmatpush1.bf16.xpose.msra.mxu0 0
        %7859 = vmatprep.subr.bf16.mxu0 0
        %7860 = vmatpush1.bf16.xpose.msra.mxu0 0
        %7861 = vmatprep.subr.bf16.mxu0 0
        %7862 = vmatpush1.bf16.xpose.msra.mxu0 0
        %7863 = vmatprep.subr.bf16.mxu0 0
        %7864 = vmatpush1.bf16.xpose.msra.mxu0 0
        %7865 = vmatprep.subr.bf16.mxu0 0
        %7866 = vmatpush1.bf16.xpose.msra.mxu0 0
        %7867 = vmatprep.subr.bf16.mxu0 0
        %7868 = vmatpush1.bf16.xpose.msra.mxu0 0
        %7869 = vmatprep.subr.bf16.mxu0 0
        %7870 = vmatpush1.bf16.xpose.msra.mxu0 0
        %7871 = vmatprep.subr.bf16.mxu0 0
        %7872 = vmatpush1.bf16.xpose.msra.mxu0 %v7855
        %7873 = vmatprep.subr.bf16.mxu0 0
        %7874 = vmatpush2.bf16.xpose.msra.mxu0 0
        %7875 = vmatprep.subr.bf16.mxu0 0
        %7876 = vmatpush2.bf16.xpose.msra.mxu0 0
        %7877 = vmatprep.subr.bf16.mxu0 0
        %7878 = vmatpush2.bf16.xpose.msra.mxu0 0
        %7879 = vmatprep.subr.bf16.mxu0 0
        %7880 = vmatpush2.bf16.xpose.msra.mxu0 0
        %7881 = vmatprep.subr.bf16.mxu0 0
        %7882 = vmatpush2.bf16.xpose.msra.mxu0 0
        %7883 = vmatprep.subr.bf16.mxu0 0
        %7884 = vmatpush2.bf16.xpose.msra.mxu0 0
        %7885 = vmatprep.subr.bf16.mxu0 0
        %7886 = vmatpush2.bf16.xpose.msra.mxu0 0
        %7887 = vmatprep.subr.bf16.mxu0 0
        %7888 = vmatpush2.bf16.xpose.msra.mxu0 0
        %7889 = vmatprep.mubr.bf16.mxu0 0
        %7890 = vmatmul.mubr.bf16.gmra.mxu0 %v7852
        %v7891 = vpop.f32.mrf.mxu0
        %v7892 = vadd.f32 0.0, %v7891
        %v7893 = vpop.f32.mrf.mxu0
        %v7894 = vpop.f32.mrf.mxu0
        %v7895 = vadd.f32 0.0, %v7894
        %v7896 = vpop.f32.mrf.mxu0
        %7897 = vdwg.mxu0
        %7898 = vrot.lane.b32.xlu0 %v829, 16
        %v7899 = vpop.permute.xlu0 %7898
        %7900 = vrot.lane.b32.xlu0 %v837, 16
        %v7901 = vpop.permute.xlu0 %7900
        %v7903 = vsel %vm847, %v7899, 0
        %v7906 = vsel %vm847, %v7901, 0
        %7908 = vmatprep.subr.bf16.mxu0 0
        %7909 = vmatpush1.bf16.xpose.msra.mxu0 0
        %7910 = vmatprep.subr.bf16.mxu0 0
        %7911 = vmatpush1.bf16.xpose.msra.mxu0 0
        %7912 = vmatprep.subr.bf16.mxu0 0
        %7913 = vmatpush1.bf16.xpose.msra.mxu0 0
        %7914 = vmatprep.subr.bf16.mxu0 0
        %7915 = vmatpush1.bf16.xpose.msra.mxu0 0
        %7916 = vmatprep.subr.bf16.mxu0 0
        %7917 = vmatpush1.bf16.xpose.msra.mxu0 0
        %7918 = vmatprep.subr.bf16.mxu0 0
        %7919 = vmatpush1.bf16.xpose.msra.mxu0 0
        %7920 = vmatprep.subr.bf16.mxu0 0
        %7921 = vmatpush1.bf16.xpose.msra.mxu0 0
        %7922 = vmatprep.subr.bf16.mxu0 0
        %7923 = vmatpush1.bf16.xpose.msra.mxu0 %v7906
        %7924 = vmatprep.subr.bf16.mxu0 0
        %7925 = vmatpush2.bf16.xpose.msra.mxu0 0
        %7926 = vmatprep.subr.bf16.mxu0 0
        %7927 = vmatpush2.bf16.xpose.msra.mxu0 0
        %7928 = vmatprep.subr.bf16.mxu0 0
        %7929 = vmatpush2.bf16.xpose.msra.mxu0 0
        %7930 = vmatprep.subr.bf16.mxu0 0
        %7931 = vmatpush2.bf16.xpose.msra.mxu0 0
        %7932 = vmatprep.subr.bf16.mxu0 0
        %7933 = vmatpush2.bf16.xpose.msra.mxu0 0
        %7934 = vmatprep.subr.bf16.mxu0 0
        %7935 = vmatpush2.bf16.xpose.msra.mxu0 0
        %7936 = vmatprep.subr.bf16.mxu0 0
        %7937 = vmatpush2.bf16.xpose.msra.mxu0 0
        %7938 = vmatprep.subr.bf16.mxu0 0
        %7939 = vmatpush2.bf16.xpose.msra.mxu0 0
        %7940 = vmatprep.mubr.bf16.mxu0 0
        %7941 = vmatmul.mubr.bf16.gmra.mxu0 %v7903
        %v7942 = vpop.f32.mrf.mxu0
        %v7943 = vadd.f32 0.0, %v7942
        %v7944 = vpop.f32.mrf.mxu0
        %v7945 = vpop.f32.mrf.mxu0
        %v7946 = vadd.f32 0.0, %v7945
        %v7947 = vpop.f32.mrf.mxu0
        %7948 = vdwg.mxu0
        %7949 = vrot.lane.b32.xlu0 %v830, 16
        %v7950 = vpop.permute.xlu0 %7949
        %7951 = vrot.lane.b32.xlu0 %v838, 16
        %v7952 = vpop.permute.xlu0 %7951
        %v7954 = vsel %vm847, %v7950, 0
        %v7957 = vsel %vm847, %v7952, 0
        %7959 = vmatprep.subr.bf16.mxu0 0
        %7960 = vmatpush1.bf16.xpose.msra.mxu0 0
        %7961 = vmatprep.subr.bf16.mxu0 0
        %7962 = vmatpush1.bf16.xpose.msra.mxu0 0
        %7963 = vmatprep.subr.bf16.mxu0 0
        %7964 = vmatpush1.bf16.xpose.msra.mxu0 0
        %7965 = vmatprep.subr.bf16.mxu0 0
        %7966 = vmatpush1.bf16.xpose.msra.mxu0 0
        %7967 = vmatprep.subr.bf16.mxu0 0
        %7968 = vmatpush1.bf16.xpose.msra.mxu0 0
        %7969 = vmatprep.subr.bf16.mxu0 0
        %7970 = vmatpush1.bf16.xpose.msra.mxu0 0
        %7971 = vmatprep.subr.bf16.mxu0 0
        %7972 = vmatpush1.bf16.xpose.msra.mxu0 0
        %7973 = vmatprep.subr.bf16.mxu0 0
        %7974 = vmatpush1.bf16.xpose.msra.mxu0 %v7957
        %7975 = vmatprep.subr.bf16.mxu0 0
        %7976 = vmatpush2.bf16.xpose.msra.mxu0 0
        %7977 = vmatprep.subr.bf16.mxu0 0
        %7978 = vmatpush2.bf16.xpose.msra.mxu0 0
        %7979 = vmatprep.subr.bf16.mxu0 0
        %7980 = vmatpush2.bf16.xpose.msra.mxu0 0
        %7981 = vmatprep.subr.bf16.mxu0 0
        %7982 = vmatpush2.bf16.xpose.msra.mxu0 0
        %7983 = vmatprep.subr.bf16.mxu0 0
        %7984 = vmatpush2.bf16.xpose.msra.mxu0 0
        %7985 = vmatprep.subr.bf16.mxu0 0
        %7986 = vmatpush2.bf16.xpose.msra.mxu0 0
        %7987 = vmatprep.subr.bf16.mxu0 0
        %7988 = vmatpush2.bf16.xpose.msra.mxu0 0
        %7989 = vmatprep.subr.bf16.mxu0 0
        %7990 = vmatpush2.bf16.xpose.msra.mxu0 0
        %7991 = vmatprep.mubr.bf16.mxu0 0
        %7992 = vmatmul.mubr.bf16.gmra.mxu0 %v7954
        %v7993 = vpop.f32.mrf.mxu0
        %v7994 = vadd.f32 0.0, %v7993
        %v7995 = vpop.f32.mrf.mxu0
        %v7996 = vpop.f32.mrf.mxu0
        %v7997 = vadd.f32 0.0, %v7996
        %v7998 = vpop.f32.mrf.mxu0
        %7999 = vdwg.mxu0
        %v8000 = vsel %vm847, %v7637, -inf
        %8001 = vmax.xlane.f32.xlu0 %v8000
        %v8002 = vpop.xlane.xlu0 %8001
        %v8003 = vsel %vm847, %v7640, -inf
        %8004 = vmax.xlane.f32.xlu0 %v8003
        %v8005 = vpop.xlane.xlu0 %8004
        %v8006 = vsel %vm847, %v7688, -inf
        %8007 = vmax.xlane.f32.xlu0 %v8006
        %v8008 = vpop.xlane.xlu0 %8007
        %v8009 = vsel %vm847, %v7691, -inf
        %8010 = vmax.xlane.f32.xlu0 %v8009
        %v8011 = vpop.xlane.xlu0 %8010
        %v8012 = vsel %vm847, %v7739, -inf
        %8013 = vmax.xlane.f32.xlu0 %v8012
        %v8014 = vpop.xlane.xlu0 %8013
        %v8015 = vsel %vm847, %v7742, -inf
        %8016 = vmax.xlane.f32.xlu0 %v8015
        %v8017 = vpop.xlane.xlu0 %8016
        %v8018 = vsel %vm847, %v7790, -inf
        %8019 = vmax.xlane.f32.xlu0 %v8018
        %v8020 = vpop.xlane.xlu0 %8019
        %v8021 = vsel %vm847, %v7793, -inf
        %8022 = vmax.xlane.f32.xlu0 %v8021
        %v8023 = vpop.xlane.xlu0 %8022
        %v8024 = vsel %vm847, %v7841, -inf
        %8025 = vmax.xlane.f32.xlu0 %v8024
        %v8026 = vpop.xlane.xlu0 %8025
        %v8027 = vsel %vm847, %v7844, -inf
        %8028 = vmax.xlane.f32.xlu0 %v8027
        %v8029 = vpop.xlane.xlu0 %8028
        %v8030 = vsel %vm847, %v7892, -inf
        %8031 = vmax.xlane.f32.xlu0 %v8030
        %v8032 = vpop.xlane.xlu0 %8031
        %v8033 = vsel %vm847, %v7895, -inf
        %8034 = vmax.xlane.f32.xlu0 %v8033
        %v8035 = vpop.xlane.xlu0 %8034
        %v8036 = vsel %vm847, %v7943, -inf
        %8037 = vmax.xlane.f32.xlu0 %v8036
        %v8038 = vpop.xlane.xlu0 %8037
        %v8039 = vsel %vm847, %v7946, -inf
        %8040 = vmax.xlane.f32.xlu0 %v8039
        %v8041 = vpop.xlane.xlu0 %8040
        %v8042 = vsel %vm847, %v7994, -inf
        %8043 = vmax.xlane.f32.xlu0 %v8042
        %v8044 = vpop.xlane.xlu0 %8043
        %v8045 = vsel %vm847, %v7997, -inf
        %8046 = vmax.xlane.f32.xlu0 %v8045
        %v8047 = vpop.xlane.xlu0 %8046
        %v8048 = vsub.f32 %v7637, %v8002
        %v8049 = vsub.f32 %v7640, %v8005
        %v8050 = vsub.f32 %v7688, %v8008
        %v8051 = vsub.f32 %v7691, %v8011
        %v8052 = vsub.f32 %v7739, %v8014
        %v8053 = vsub.f32 %v7742, %v8017
        %v8054 = vsub.f32 %v7790, %v8020
        %v8055 = vsub.f32 %v7793, %v8023
        %v8056 = vsub.f32 %v7841, %v8026
        %v8057 = vsub.f32 %v7844, %v8029
        %v8058 = vsub.f32 %v7892, %v8032
        %v8059 = vsub.f32 %v7895, %v8035
        %v8060 = vsub.f32 %v7943, %v8038
        %v8061 = vsub.f32 %v7946, %v8041
        %v8062 = vsub.f32 %v7994, %v8044
        %v8063 = vsub.f32 %v7997, %v8047
        %v8064 = vmul.f32 %v8048, 1.442695
        %v8065 = vpow.pop %v8064
        %v8066 = vmul.f32 %v8049, 1.442695
        %v8067 = vpow.pop %v8066
        %v8068 = vmul.f32 %v8050, 1.442695
        %v8069 = vpow.pop %v8068
        %v8070 = vmul.f32 %v8051, 1.442695
        %v8071 = vpow.pop %v8070
        %v8072 = vmul.f32 %v8052, 1.442695
        %v8073 = vpow.pop %v8072
        %v8074 = vmul.f32 %v8053, 1.442695
        %v8075 = vpow.pop %v8074
        %v8076 = vmul.f32 %v8054, 1.442695
        %v8077 = vpow.pop %v8076
        %v8078 = vmul.f32 %v8055, 1.442695
        %v8079 = vpow.pop %v8078
        %v8080 = vmul.f32 %v8056, 1.442695
        %v8081 = vpow.pop %v8080
        %v8082 = vmul.f32 %v8057, 1.442695
        %v8083 = vpow.pop %v8082
        %v8084 = vmul.f32 %v8058, 1.442695
        %v8085 = vpow.pop %v8084
        %v8086 = vmul.f32 %v8059, 1.442695
        %v8087 = vpow.pop %v8086
        %v8088 = vmul.f32 %v8060, 1.442695
        %v8089 = vpow.pop %v8088
        %v8090 = vmul.f32 %v8061, 1.442695
        %v8091 = vpow.pop %v8090
        %v8092 = vmul.f32 %v8062, 1.442695
        %v8093 = vpow.pop %v8092
        %v8094 = vmul.f32 %v8063, 1.442695
        %v8095 = vpow.pop %v8094
        %v8096 = vsel %vm847, %v8065, 0.0
        %8097 = vadd.xlane.f32.xlu0 %v8096
        %v8098 = vpop.xlane.xlu0 %8097
        %v8099 = vsel %vm847, %v8067, 0.0
        %8100 = vadd.xlane.f32.xlu0 %v8099
        %v8101 = vpop.xlane.xlu0 %8100
        %v8102 = vsel %vm847, %v8069, 0.0
        %8103 = vadd.xlane.f32.xlu0 %v8102
        %v8104 = vpop.xlane.xlu0 %8103
        %v8105 = vsel %vm847, %v8071, 0.0
        %8106 = vadd.xlane.f32.xlu0 %v8105
        %v8107 = vpop.xlane.xlu0 %8106
        %v8108 = vsel %vm847, %v8073, 0.0
        %8109 = vadd.xlane.f32.xlu0 %v8108
        %v8110 = vpop.xlane.xlu0 %8109
        %v8111 = vsel %vm847, %v8075, 0.0
        %8112 = vadd.xlane.f32.xlu0 %v8111
        %v8113 = vpop.xlane.xlu0 %8112
        %v8114 = vsel %vm847, %v8077, 0.0
        %8115 = vadd.xlane.f32.xlu0 %v8114
        %v8116 = vpop.xlane.xlu0 %8115
        %v8117 = vsel %vm847, %v8079, 0.0
        %8118 = vadd.xlane.f32.xlu0 %v8117
        %v8119 = vpop.xlane.xlu0 %8118
        %v8120 = vsel %vm847, %v8081, 0.0
        %8121 = vadd.xlane.f32.xlu0 %v8120
        %v8122 = vpop.xlane.xlu0 %8121
        %v8123 = vsel %vm847, %v8083, 0.0
        %8124 = vadd.xlane.f32.xlu0 %v8123
        %v8125 = vpop.xlane.xlu0 %8124
        %v8126 = vsel %vm847, %v8085, 0.0
        %8127 = vadd.xlane.f32.xlu0 %v8126
        %v8128 = vpop.xlane.xlu0 %8127
        %v8129 = vsel %vm847, %v8087, 0.0
        %8130 = vadd.xlane.f32.xlu0 %v8129
        %v8131 = vpop.xlane.xlu0 %8130
        %v8132 = vsel %vm847, %v8089, 0.0
        %8133 = vadd.xlane.f32.xlu0 %v8132
        %v8134 = vpop.xlane.xlu0 %8133
        %v8135 = vsel %vm847, %v8091, 0.0
        %8136 = vadd.xlane.f32.xlu0 %v8135
        %v8137 = vpop.xlane.xlu0 %8136
        %v8138 = vsel %vm847, %v8093, 0.0
        %8139 = vadd.xlane.f32.xlu0 %v8138
        %v8140 = vpop.xlane.xlu0 %8139
        %v8141 = vsel %vm847, %v8095, 0.0
        %8142 = vadd.xlane.f32.xlu0 %v8141
        %v8143 = vpop.xlane.xlu0 %8142
        %v8144 = vrcp.pop %v8098
        %v8145 = vmul.f32 %v8065, %v8144
        %v8146 = vrcp.pop %v8101
        %v8147 = vmul.f32 %v8067, %v8146
        %v8148 = vrcp.pop %v8104
        %v8149 = vmul.f32 %v8069, %v8148
        %v8150 = vrcp.pop %v8107
        %v8151 = vmul.f32 %v8071, %v8150
        %v8152 = vrcp.pop %v8110
        %v8153 = vmul.f32 %v8073, %v8152
        %v8154 = vrcp.pop %v8113
        %v8155 = vmul.f32 %v8075, %v8154
        %v8156 = vrcp.pop %v8116
        %v8157 = vmul.f32 %v8077, %v8156
        %v8158 = vrcp.pop %v8119
        %v8159 = vmul.f32 %v8079, %v8158
        %v8160 = vrcp.pop %v8122
        %v8161 = vmul.f32 %v8081, %v8160
        %v8162 = vrcp.pop %v8125
        %v8163 = vmul.f32 %v8083, %v8162
        %v8164 = vrcp.pop %v8128
        %v8165 = vmul.f32 %v8085, %v8164
        %v8166 = vrcp.pop %v8131
        %v8167 = vmul.f32 %v8087, %v8166
        %v8168 = vrcp.pop %v8134
        %v8169 = vmul.f32 %v8089, %v8168
        %v8170 = vrcp.pop %v8137
        %v8171 = vmul.f32 %v8091, %v8170
        %v8172 = vrcp.pop %v8140
        %v8173 = vmul.f32 %v8093, %v8172
        %v8174 = vrcp.pop %v8143
        %v8175 = vmul.f32 %v8095, %v8174
        %v8176 = vpack.c.bf16 %v8147, %v8145
        %v8177 = vpack.c.bf16 %v8151, %v8149
        %v8178 = vpack.c.bf16 %v8155, %v8153
        %v8179 = vpack.c.bf16 %v8159, %v8157
        %v8180 = vpack.c.bf16 %v8163, %v8161
        %v8181 = vpack.c.bf16 %v8167, %v8165
        %v8182 = vpack.c.bf16 %v8171, %v8169
        %v8183 = vpack.c.bf16 %v8175, %v8173
        %8184 = vrot.lane.b32.xlu0 %v839, 16
        %v8185 = vpop.permute.xlu0 %8184
        %v8188 = vsel %vm847, %v8176, 0
        %8190 = vmatprep.subr.bf16.mxu0 0
        %8191 = vmatpush1.bf16.msra.mxu0 0
        %8192 = vmatprep.subr.bf16.mxu0 0
        %8193 = vmatpush1.bf16.msra.mxu0 0
        %8194 = vmatprep.subr.bf16.mxu0 0
        %8195 = vmatpush1.bf16.msra.mxu0 0
        %8196 = vmatprep.subr.bf16.mxu0 0
        %8197 = vmatpush1.bf16.msra.mxu0 0
        %8198 = vmatprep.subr.bf16.mxu0 0
        %8199 = vmatpush1.bf16.msra.mxu0 0
        %8200 = vmatprep.subr.bf16.mxu0 0
        %8201 = vmatpush1.bf16.msra.mxu0 0
        %8202 = vmatprep.subr.bf16.mxu0 0
        %8203 = vmatpush1.bf16.msra.mxu0 0
        %8204 = vmatprep.subr.bf16.mxu0 0
        %8205 = vmatpush1.bf16.msra.mxu0 %v8185
        %8206 = vmatprep.subr.bf16.mxu0 0
        %8207 = vmatpush2.bf16.msra.mxu0 0
        %8208 = vmatprep.subr.bf16.mxu0 0
        %8209 = vmatpush2.bf16.msra.mxu0 0
        %8210 = vmatprep.subr.bf16.mxu0 0
        %8211 = vmatpush2.bf16.msra.mxu0 0
        %8212 = vmatprep.subr.bf16.mxu0 0
        %8213 = vmatpush2.bf16.msra.mxu0 0
        %8214 = vmatprep.subr.bf16.mxu0 0
        %8215 = vmatpush2.bf16.msra.mxu0 0
        %8216 = vmatprep.subr.bf16.mxu0 0
        %8217 = vmatpush2.bf16.msra.mxu0 0
        %8218 = vmatprep.subr.bf16.mxu0 0
        %8219 = vmatpush2.bf16.msra.mxu0 0
        %8220 = vmatprep.subr.bf16.mxu0 0
        %8221 = vmatpush2.bf16.msra.mxu0 0
        %8222 = vmatprep.mubr.bf16.mxu0 0
        %8223 = vmatmul.mubr.bf16.gmra.mxu0 %v8188
        %v8224 = vpop.f32.mrf.mxu0
        %v8225 = vadd.f32 0.0, %v8224
        %v8226 = vpop.f32.mrf.mxu0
        %v8227 = vpop.f32.mrf.mxu0
        %v8228 = vadd.f32 0.0, %v8227
        %v8229 = vpop.f32.mrf.mxu0
        %8230 = vdwg.mxu0
        %8231 = vrot.lane.b32.xlu0 %v840, 16
        %v8232 = vpop.permute.xlu0 %8231
        %v8235 = vsel %vm847, %v8177, 0
        %8237 = vmatprep.subr.bf16.mxu0 0
        %8238 = vmatpush1.bf16.msra.mxu0 0
        %8239 = vmatprep.subr.bf16.mxu0 0
        %8240 = vmatpush1.bf16.msra.mxu0 0
        %8241 = vmatprep.subr.bf16.mxu0 0
        %8242 = vmatpush1.bf16.msra.mxu0 0
        %8243 = vmatprep.subr.bf16.mxu0 0
        %8244 = vmatpush1.bf16.msra.mxu0 0
        %8245 = vmatprep.subr.bf16.mxu0 0
        %8246 = vmatpush1.bf16.msra.mxu0 0
        %8247 = vmatprep.subr.bf16.mxu0 0
        %8248 = vmatpush1.bf16.msra.mxu0 0
        %8249 = vmatprep.subr.bf16.mxu0 0
        %8250 = vmatpush1.bf16.msra.mxu0 0
        %8251 = vmatprep.subr.bf16.mxu0 0
        %8252 = vmatpush1.bf16.msra.mxu0 %v8232
        %8253 = vmatprep.subr.bf16.mxu0 0
        %8254 = vmatpush2.bf16.msra.mxu0 0
        %8255 = vmatprep.subr.bf16.mxu0 0
        %8256 = vmatpush2.bf16.msra.mxu0 0
        %8257 = vmatprep.subr.bf16.mxu0 0
        %8258 = vmatpush2.bf16.msra.mxu0 0
        %8259 = vmatprep.subr.bf16.mxu0 0
        %8260 = vmatpush2.bf16.msra.mxu0 0
        %8261 = vmatprep.subr.bf16.mxu0 0
        %8262 = vmatpush2.bf16.msra.mxu0 0
        %8263 = vmatprep.subr.bf16.mxu0 0
        %8264 = vmatpush2.bf16.msra.mxu0 0
        %8265 = vmatprep.subr.bf16.mxu0 0
        %8266 = vmatpush2.bf16.msra.mxu0 0
        %8267 = vmatprep.subr.bf16.mxu0 0
        %8268 = vmatpush2.bf16.msra.mxu0 0
        %8269 = vmatprep.mubr.bf16.mxu0 0
        %8270 = vmatmul.mubr.bf16.gmra.mxu0 %v8235
        %v8271 = vpop.f32.mrf.mxu0
        %v8272 = vadd.f32 0.0, %v8271
        %v8273 = vpop.f32.mrf.mxu0
        %v8274 = vpop.f32.mrf.mxu0
        %v8275 = vadd.f32 0.0, %v8274
        %v8276 = vpop.f32.mrf.mxu0
        %8277 = vdwg.mxu0
        %8278 = vrot.lane.b32.xlu0 %v841, 16
        %v8279 = vpop.permute.xlu0 %8278
        %v8282 = vsel %vm847, %v8178, 0
        %8284 = vmatprep.subr.bf16.mxu0 0
        %8285 = vmatpush1.bf16.msra.mxu0 0
        %8286 = vmatprep.subr.bf16.mxu0 0
        %8287 = vmatpush1.bf16.msra.mxu0 0
        %8288 = vmatprep.subr.bf16.mxu0 0
        %8289 = vmatpush1.bf16.msra.mxu0 0
        %8290 = vmatprep.subr.bf16.mxu0 0
        %8291 = vmatpush1.bf16.msra.mxu0 0
        %8292 = vmatprep.subr.bf16.mxu0 0
        %8293 = vmatpush1.bf16.msra.mxu0 0
        %8294 = vmatprep.subr.bf16.mxu0 0
        %8295 = vmatpush1.bf16.msra.mxu0 0
        %8296 = vmatprep.subr.bf16.mxu0 0
        %8297 = vmatpush1.bf16.msra.mxu0 0
        %8298 = vmatprep.subr.bf16.mxu0 0
        %8299 = vmatpush1.bf16.msra.mxu0 %v8279
        %8300 = vmatprep.subr.bf16.mxu0 0
        %8301 = vmatpush2.bf16.msra.mxu0 0
        %8302 = vmatprep.subr.bf16.mxu0 0
        %8303 = vmatpush2.bf16.msra.mxu0 0
        %8304 = vmatprep.subr.bf16.mxu0 0
        %8305 = vmatpush2.bf16.msra.mxu0 0
        %8306 = vmatprep.subr.bf16.mxu0 0
        %8307 = vmatpush2.bf16.msra.mxu0 0
        %8308 = vmatprep.subr.bf16.mxu0 0
        %8309 = vmatpush2.bf16.msra.mxu0 0
        %8310 = vmatprep.subr.bf16.mxu0 0
        %8311 = vmatpush2.bf16.msra.mxu0 0
        %8312 = vmatprep.subr.bf16.mxu0 0
        %8313 = vmatpush2.bf16.msra.mxu0 0
        %8314 = vmatprep.subr.bf16.mxu0 0
        %8315 = vmatpush2.bf16.msra.mxu0 0
        %8316 = vmatprep.mubr.bf16.mxu0 0
        %8317 = vmatmul.mubr.bf16.gmra.mxu0 %v8282
        %v8318 = vpop.f32.mrf.mxu0
        %v8319 = vadd.f32 0.0, %v8318
        %v8320 = vpop.f32.mrf.mxu0
        %v8321 = vpop.f32.mrf.mxu0
        %v8322 = vadd.f32 0.0, %v8321
        %v8323 = vpop.f32.mrf.mxu0
        %8324 = vdwg.mxu0
        %8325 = vrot.lane.b32.xlu0 %v842, 16
        %v8326 = vpop.permute.xlu0 %8325
        %v8329 = vsel %vm847, %v8179, 0
        %8331 = vmatprep.subr.bf16.mxu0 0
        %8332 = vmatpush1.bf16.msra.mxu0 0
        %8333 = vmatprep.subr.bf16.mxu0 0
        %8334 = vmatpush1.bf16.msra.mxu0 0
        %8335 = vmatprep.subr.bf16.mxu0 0
        %8336 = vmatpush1.bf16.msra.mxu0 0
        %8337 = vmatprep.subr.bf16.mxu0 0
        %8338 = vmatpush1.bf16.msra.mxu0 0
        %8339 = vmatprep.subr.bf16.mxu0 0
        %8340 = vmatpush1.bf16.msra.mxu0 0
        %8341 = vmatprep.subr.bf16.mxu0 0
        %8342 = vmatpush1.bf16.msra.mxu0 0
        %8343 = vmatprep.subr.bf16.mxu0 0
        %8344 = vmatpush1.bf16.msra.mxu0 0
        %8345 = vmatprep.subr.bf16.mxu0 0
        %8346 = vmatpush1.bf16.msra.mxu0 %v8326
        %8347 = vmatprep.subr.bf16.mxu0 0
        %8348 = vmatpush2.bf16.msra.mxu0 0
        %8349 = vmatprep.subr.bf16.mxu0 0
        %8350 = vmatpush2.bf16.msra.mxu0 0
        %8351 = vmatprep.subr.bf16.mxu0 0
        %8352 = vmatpush2.bf16.msra.mxu0 0
        %8353 = vmatprep.subr.bf16.mxu0 0
        %8354 = vmatpush2.bf16.msra.mxu0 0
        %8355 = vmatprep.subr.bf16.mxu0 0
        %8356 = vmatpush2.bf16.msra.mxu0 0
        %8357 = vmatprep.subr.bf16.mxu0 0
        %8358 = vmatpush2.bf16.msra.mxu0 0
        %8359 = vmatprep.subr.bf16.mxu0 0
        %8360 = vmatpush2.bf16.msra.mxu0 0
        %8361 = vmatprep.subr.bf16.mxu0 0
        %8362 = vmatpush2.bf16.msra.mxu0 0
        %8363 = vmatprep.mubr.bf16.mxu0 0
        %8364 = vmatmul.mubr.bf16.gmra.mxu0 %v8329
        %v8365 = vpop.f32.mrf.mxu0
        %v8366 = vadd.f32 0.0, %v8365
        %v8367 = vpop.f32.mrf.mxu0
        %v8368 = vpop.f32.mrf.mxu0
        %v8369 = vadd.f32 0.0, %v8368
        %v8370 = vpop.f32.mrf.mxu0
        %8371 = vdwg.mxu0
        %8372 = vrot.lane.b32.xlu0 %v843, 16
        %v8373 = vpop.permute.xlu0 %8372
        %v8376 = vsel %vm847, %v8180, 0
        %8378 = vmatprep.subr.bf16.mxu0 0
        %8379 = vmatpush1.bf16.msra.mxu0 0
        %8380 = vmatprep.subr.bf16.mxu0 0
        %8381 = vmatpush1.bf16.msra.mxu0 0
        %8382 = vmatprep.subr.bf16.mxu0 0
        %8383 = vmatpush1.bf16.msra.mxu0 0
        %8384 = vmatprep.subr.bf16.mxu0 0
        %8385 = vmatpush1.bf16.msra.mxu0 0
        %8386 = vmatprep.subr.bf16.mxu0 0
        %8387 = vmatpush1.bf16.msra.mxu0 0
        %8388 = vmatprep.subr.bf16.mxu0 0
        %8389 = vmatpush1.bf16.msra.mxu0 0
        %8390 = vmatprep.subr.bf16.mxu0 0
        %8391 = vmatpush1.bf16.msra.mxu0 0
        %8392 = vmatprep.subr.bf16.mxu0 0
        %8393 = vmatpush1.bf16.msra.mxu0 %v8373
        %8394 = vmatprep.subr.bf16.mxu0 0
        %8395 = vmatpush2.bf16.msra.mxu0 0
        %8396 = vmatprep.subr.bf16.mxu0 0
        %8397 = vmatpush2.bf16.msra.mxu0 0
        %8398 = vmatprep.subr.bf16.mxu0 0
        %8399 = vmatpush2.bf16.msra.mxu0 0
        %8400 = vmatprep.subr.bf16.mxu0 0
        %8401 = vmatpush2.bf16.msra.mxu0 0
        %8402 = vmatprep.subr.bf16.mxu0 0
        %8403 = vmatpush2.bf16.msra.mxu0 0
        %8404 = vmatprep.subr.bf16.mxu0 0
        %8405 = vmatpush2.bf16.msra.mxu0 0
        %8406 = vmatprep.subr.bf16.mxu0 0
        %8407 = vmatpush2.bf16.msra.mxu0 0
        %8408 = vmatprep.subr.bf16.mxu0 0
        %8409 = vmatpush2.bf16.msra.mxu0 0
        %8410 = vmatprep.mubr.bf16.mxu0 0
        %8411 = vmatmul.mubr.bf16.gmra.mxu0 %v8376
        %v8412 = vpop.f32.mrf.mxu0
        %v8413 = vadd.f32 0.0, %v8412
        %v8414 = vpop.f32.mrf.mxu0
        %v8415 = vpop.f32.mrf.mxu0
        %v8416 = vadd.f32 0.0, %v8415
        %v8417 = vpop.f32.mrf.mxu0
        %8418 = vdwg.mxu0
        %8419 = vrot.lane.b32.xlu0 %v844, 16
        %v8420 = vpop.permute.xlu0 %8419
        %v8423 = vsel %vm847, %v8181, 0
        %8425 = vmatprep.subr.bf16.mxu0 0
        %8426 = vmatpush1.bf16.msra.mxu0 0
        %8427 = vmatprep.subr.bf16.mxu0 0
        %8428 = vmatpush1.bf16.msra.mxu0 0
        %8429 = vmatprep.subr.bf16.mxu0 0
        %8430 = vmatpush1.bf16.msra.mxu0 0
        %8431 = vmatprep.subr.bf16.mxu0 0
        %8432 = vmatpush1.bf16.msra.mxu0 0
        %8433 = vmatprep.subr.bf16.mxu0 0
        %8434 = vmatpush1.bf16.msra.mxu0 0
        %8435 = vmatprep.subr.bf16.mxu0 0
        %8436 = vmatpush1.bf16.msra.mxu0 0
        %8437 = vmatprep.subr.bf16.mxu0 0
        %8438 = vmatpush1.bf16.msra.mxu0 0
        %8439 = vmatprep.subr.bf16.mxu0 0
        %8440 = vmatpush1.bf16.msra.mxu0 %v8420
        %8441 = vmatprep.subr.bf16.mxu0 0
        %8442 = vmatpush2.bf16.msra.mxu0 0
        %8443 = vmatprep.subr.bf16.mxu0 0
        %8444 = vmatpush2.bf16.msra.mxu0 0
        %8445 = vmatprep.subr.bf16.mxu0 0
        %8446 = vmatpush2.bf16.msra.mxu0 0
        %8447 = vmatprep.subr.bf16.mxu0 0
        %8448 = vmatpush2.bf16.msra.mxu0 0
        %8449 = vmatprep.subr.bf16.mxu0 0
        %8450 = vmatpush2.bf16.msra.mxu0 0
        %8451 = vmatprep.subr.bf16.mxu0 0
        %8452 = vmatpush2.bf16.msra.mxu0 0
        %8453 = vmatprep.subr.bf16.mxu0 0
        %8454 = vmatpush2.bf16.msra.mxu0 0
        %8455 = vmatprep.subr.bf16.mxu0 0
        %8456 = vmatpush2.bf16.msra.mxu0 0
        %8457 = vmatprep.mubr.bf16.mxu0 0
        %8458 = vmatmul.mubr.bf16.gmra.mxu0 %v8423
        %v8459 = vpop.f32.mrf.mxu0
        %v8460 = vadd.f32 0.0, %v8459
        %v8461 = vpop.f32.mrf.mxu0
        %v8462 = vpop.f32.mrf.mxu0
        %v8463 = vadd.f32 0.0, %v8462
        %v8464 = vpop.f32.mrf.mxu0
        %8465 = vdwg.mxu0
        %8466 = vrot.lane.b32.xlu0 %v845, 16
        %v8467 = vpop.permute.xlu0 %8466
        %v8470 = vsel %vm847, %v8182, 0
        %8472 = vmatprep.subr.bf16.mxu0 0
        %8473 = vmatpush1.bf16.msra.mxu0 0
        %8474 = vmatprep.subr.bf16.mxu0 0
        %8475 = vmatpush1.bf16.msra.mxu0 0
        %8476 = vmatprep.subr.bf16.mxu0 0
        %8477 = vmatpush1.bf16.msra.mxu0 0
        %8478 = vmatprep.subr.bf16.mxu0 0
        %8479 = vmatpush1.bf16.msra.mxu0 0
        %8480 = vmatprep.subr.bf16.mxu0 0
        %8481 = vmatpush1.bf16.msra.mxu0 0
        %8482 = vmatprep.subr.bf16.mxu0 0
        %8483 = vmatpush1.bf16.msra.mxu0 0
        %8484 = vmatprep.subr.bf16.mxu0 0
        %8485 = vmatpush1.bf16.msra.mxu0 0
        %8486 = vmatprep.subr.bf16.mxu0 0
        %8487 = vmatpush1.bf16.msra.mxu0 %v8467
        %8488 = vmatprep.subr.bf16.mxu0 0
        %8489 = vmatpush2.bf16.msra.mxu0 0
        %8490 = vmatprep.subr.bf16.mxu0 0
        %8491 = vmatpush2.bf16.msra.mxu0 0
        %8492 = vmatprep.subr.bf16.mxu0 0
        %8493 = vmatpush2.bf16.msra.mxu0 0
        %8494 = vmatprep.subr.bf16.mxu0 0
        %8495 = vmatpush2.bf16.msra.mxu0 0
        %8496 = vmatprep.subr.bf16.mxu0 0
        %8497 = vmatpush2.bf16.msra.mxu0 0
        %8498 = vmatprep.subr.bf16.mxu0 0
        %8499 = vmatpush2.bf16.msra.mxu0 0
        %8500 = vmatprep.subr.bf16.mxu0 0
        %8501 = vmatpush2.bf16.msra.mxu0 0
        %8502 = vmatprep.subr.bf16.mxu0 0
        %8503 = vmatpush2.bf16.msra.mxu0 0
        %8504 = vmatprep.mubr.bf16.mxu0 0
        %8505 = vmatmul.mubr.bf16.gmra.mxu0 %v8470
        %v8506 = vpop.f32.mrf.mxu0
        %v8507 = vadd.f32 0.0, %v8506
        %v8508 = vpop.f32.mrf.mxu0
        %v8509 = vpop.f32.mrf.mxu0
        %v8510 = vadd.f32 0.0, %v8509
        %v8511 = vpop.f32.mrf.mxu0
        %8512 = vdwg.mxu0
        %8513 = vrot.lane.b32.xlu0 %v846, 16
        %v8514 = vpop.permute.xlu0 %8513
        %v8517 = vsel %vm847, %v8183, 0
        %8519 = vmatprep.subr.bf16.mxu0 0
        %8520 = vmatpush1.bf16.msra.mxu0 0
        %8521 = vmatprep.subr.bf16.mxu0 0
        %8522 = vmatpush1.bf16.msra.mxu0 0
        %8523 = vmatprep.subr.bf16.mxu0 0
        %8524 = vmatpush1.bf16.msra.mxu0 0
        %8525 = vmatprep.subr.bf16.mxu0 0
        %8526 = vmatpush1.bf16.msra.mxu0 0
        %8527 = vmatprep.subr.bf16.mxu0 0
        %8528 = vmatpush1.bf16.msra.mxu0 0
        %8529 = vmatprep.subr.bf16.mxu0 0
        %8530 = vmatpush1.bf16.msra.mxu0 0
        %8531 = vmatprep.subr.bf16.mxu0 0
        %8532 = vmatpush1.bf16.msra.mxu0 0
        %8533 = vmatprep.subr.bf16.mxu0 0
        %8534 = vmatpush1.bf16.msra.mxu0 %v8514
        %8535 = vmatprep.subr.bf16.mxu0 0
        %8536 = vmatpush2.bf16.msra.mxu0 0
        %8537 = vmatprep.subr.bf16.mxu0 0
        %8538 = vmatpush2.bf16.msra.mxu0 0
        %8539 = vmatprep.subr.bf16.mxu0 0
        %8540 = vmatpush2.bf16.msra.mxu0 0
        %8541 = vmatprep.subr.bf16.mxu0 0
        %8542 = vmatpush2.bf16.msra.mxu0 0
        %8543 = vmatprep.subr.bf16.mxu0 0
        %8544 = vmatpush2.bf16.msra.mxu0 0
        %8545 = vmatprep.subr.bf16.mxu0 0
        %8546 = vmatpush2.bf16.msra.mxu0 0
        %8547 = vmatprep.subr.bf16.mxu0 0
        %8548 = vmatpush2.bf16.msra.mxu0 0
        %8549 = vmatprep.subr.bf16.mxu0 0
        %8550 = vmatpush2.bf16.msra.mxu0 0
        %8551 = vmatprep.mubr.bf16.mxu0 0
        %8552 = vmatmul.mubr.bf16.gmra.mxu0 %v8517
        %v8553 = vpop.f32.mrf.mxu0
        %v8554 = vadd.f32 0.0, %v8553
        %v8555 = vpop.f32.mrf.mxu0
        %v8556 = vpop.f32.mrf.mxu0
        %v8557 = vadd.f32 0.0, %v8556
        %v8558 = vpop.f32.mrf.mxu0
        %8559 = vdwg.mxu0
        %8576 = vrot.lane.b32.xlu0 %v2410, 16
        %v8577 = vpop.permute.xlu0 %8576
        %8578 = vrot.lane.b32.xlu0 %v2413, 16
        %v8579 = vpop.permute.xlu0 %8578
        %8580 = vrot.lane.b32.xlu0 %v2458, 16
        %v8581 = vpop.permute.xlu0 %8580
        %8582 = vrot.lane.b32.xlu0 %v2461, 16
        %v8583 = vpop.permute.xlu0 %8582
        %8584 = vrot.lane.b32.xlu0 %v2506, 16
        %v8585 = vpop.permute.xlu0 %8584
        %8586 = vrot.lane.b32.xlu0 %v2509, 16
        %v8587 = vpop.permute.xlu0 %8586
        %8588 = vrot.lane.b32.xlu0 %v2554, 16
        %v8589 = vpop.permute.xlu0 %8588
        %8590 = vrot.lane.b32.xlu0 %v2557, 16
        %v8591 = vpop.permute.xlu0 %8590
        %8592 = vrot.lane.b32.xlu0 %v2602, 16
        %v8593 = vpop.permute.xlu0 %8592
        %8594 = vrot.lane.b32.xlu0 %v2605, 16
        %v8595 = vpop.permute.xlu0 %8594
        %8596 = vrot.lane.b32.xlu0 %v2650, 16
        %v8597 = vpop.permute.xlu0 %8596
        %8598 = vrot.lane.b32.xlu0 %v2653, 16
        %v8599 = vpop.permute.xlu0 %8598
        %8600 = vrot.lane.b32.xlu0 %v2698, 16
        %v8601 = vpop.permute.xlu0 %8600
        %8602 = vrot.lane.b32.xlu0 %v2701, 16
        %v8603 = vpop.permute.xlu0 %8602
        %8604 = vrot.lane.b32.xlu0 %v2746, 16
        %v8605 = vpop.permute.xlu0 %8604
        %8606 = vrot.lane.b32.xlu0 %v2749, 16
        %v8607 = vpop.permute.xlu0 %8606
        %8640 = vrot.lane.b32.xlu0 %v3385, 32
        %v8641 = vpop.permute.xlu0 %8640
        %8642 = vrot.lane.b32.xlu0 %v3388, 32
        %v8643 = vpop.permute.xlu0 %8642
        %8644 = vrot.lane.b32.xlu0 %v3432, 32
        %v8645 = vpop.permute.xlu0 %8644
        %8646 = vrot.lane.b32.xlu0 %v3435, 32
        %v8647 = vpop.permute.xlu0 %8646
        %8648 = vrot.lane.b32.xlu0 %v3479, 32
        %v8649 = vpop.permute.xlu0 %8648
        %8650 = vrot.lane.b32.xlu0 %v3482, 32
        %v8651 = vpop.permute.xlu0 %8650
        %8652 = vrot.lane.b32.xlu0 %v3526, 32
        %v8653 = vpop.permute.xlu0 %8652
        %8654 = vrot.lane.b32.xlu0 %v3529, 32
        %v8655 = vpop.permute.xlu0 %8654
        %8656 = vrot.lane.b32.xlu0 %v3573, 32
        %v8657 = vpop.permute.xlu0 %8656
        %8658 = vrot.lane.b32.xlu0 %v3576, 32
        %v8659 = vpop.permute.xlu0 %8658
        %8660 = vrot.lane.b32.xlu0 %v3620, 32
        %v8661 = vpop.permute.xlu0 %8660
        %8662 = vrot.lane.b32.xlu0 %v3623, 32
        %v8663 = vpop.permute.xlu0 %8662
        %8664 = vrot.lane.b32.xlu0 %v3667, 32
        %v8665 = vpop.permute.xlu0 %8664
        %8666 = vrot.lane.b32.xlu0 %v3670, 32
        %v8667 = vpop.permute.xlu0 %8666
        %8668 = vrot.lane.b32.xlu0 %v3714, 32
        %v8669 = vpop.permute.xlu0 %8668
        %8670 = vrot.lane.b32.xlu0 %v3717, 32
        %v8671 = vpop.permute.xlu0 %8670
        %8704 = vrot.lane.b32.xlu0 %v4353, 48
        %v8705 = vpop.permute.xlu0 %8704
        %8706 = vrot.lane.b32.xlu0 %v4356, 48
        %v8707 = vpop.permute.xlu0 %8706
        %8708 = vrot.lane.b32.xlu0 %v4400, 48
        %v8709 = vpop.permute.xlu0 %8708
        %8710 = vrot.lane.b32.xlu0 %v4403, 48
        %v8711 = vpop.permute.xlu0 %8710
        %8712 = vrot.lane.b32.xlu0 %v4447, 48
        %v8713 = vpop.permute.xlu0 %8712
        %8714 = vrot.lane.b32.xlu0 %v4450, 48
        %v8715 = vpop.permute.xlu0 %8714
        %8716 = vrot.lane.b32.xlu0 %v4494, 48
        %v8717 = vpop.permute.xlu0 %8716
        %8718 = vrot.lane.b32.xlu0 %v4497, 48
        %v8719 = vpop.permute.xlu0 %8718
        %8720 = vrot.lane.b32.xlu0 %v4541, 48
        %v8721 = vpop.permute.xlu0 %8720
        %8722 = vrot.lane.b32.xlu0 %v4544, 48
        %v8723 = vpop.permute.xlu0 %8722
        %8724 = vrot.lane.b32.xlu0 %v4588, 48
        %v8725 = vpop.permute.xlu0 %8724
        %8726 = vrot.lane.b32.xlu0 %v4591, 48
        %v8727 = vpop.permute.xlu0 %8726
        %8728 = vrot.lane.b32.xlu0 %v4635, 48
        %v8729 = vpop.permute.xlu0 %8728
        %8730 = vrot.lane.b32.xlu0 %v4638, 48
        %v8731 = vpop.permute.xlu0 %8730
        %8732 = vrot.lane.b32.xlu0 %v4682, 48
        %v8733 = vpop.permute.xlu0 %8732
        %8734 = vrot.lane.b32.xlu0 %v4685, 48
        %v8735 = vpop.permute.xlu0 %8734
        %8768 = vrot.lane.b32.xlu0 %v5321, 64
        %v8769 = vpop.permute.xlu0 %8768
        %8770 = vrot.lane.b32.xlu0 %v5324, 64
        %v8771 = vpop.permute.xlu0 %8770
        %8772 = vrot.lane.b32.xlu0 %v5368, 64
        %v8773 = vpop.permute.xlu0 %8772
        %8774 = vrot.lane.b32.xlu0 %v5371, 64
        %v8775 = vpop.permute.xlu0 %8774
        %8776 = vrot.lane.b32.xlu0 %v5415, 64
        %v8777 = vpop.permute.xlu0 %8776
        %8778 = vrot.lane.b32.xlu0 %v5418, 64
        %v8779 = vpop.permute.xlu0 %8778
        %8780 = vrot.lane.b32.xlu0 %v5462, 64
        %v8781 = vpop.permute.xlu0 %8780
        %8782 = vrot.lane.b32.xlu0 %v5465, 64
        %v8783 = vpop.permute.xlu0 %8782
        %8784 = vrot.lane.b32.xlu0 %v5509, 64
        %v8785 = vpop.permute.xlu0 %8784
        %8786 = vrot.lane.b32.xlu0 %v5512, 64
        %v8787 = vpop.permute.xlu0 %8786
        %8788 = vrot.lane.b32.xlu0 %v5556, 64
        %v8789 = vpop.permute.xlu0 %8788
        %8790 = vrot.lane.b32.xlu0 %v5559, 64
        %v8791 = vpop.permute.xlu0 %8790
        %8792 = vrot.lane.b32.xlu0 %v5603, 64
        %v8793 = vpop.permute.xlu0 %8792
        %8794 = vrot.lane.b32.xlu0 %v5606, 64
        %v8795 = vpop.permute.xlu0 %8794
        %8796 = vrot.lane.b32.xlu0 %v5650, 64
        %v8797 = vpop.permute.xlu0 %8796
        %8798 = vrot.lane.b32.xlu0 %v5653, 64
        %v8799 = vpop.permute.xlu0 %8798
        %8832 = vrot.lane.b32.xlu0 %v6289, 80
        %v8833 = vpop.permute.xlu0 %8832
        %8834 = vrot.lane.b32.xlu0 %v6292, 80
        %v8835 = vpop.permute.xlu0 %8834
        %8836 = vrot.lane.b32.xlu0 %v6336, 80
        %v8837 = vpop.permute.xlu0 %8836
        %8838 = vrot.lane.b32.xlu0 %v6339, 80
        %v8839 = vpop.permute.xlu0 %8838
        %8840 = vrot.lane.b32.xlu0 %v6383, 80
        %v8841 = vpop.permute.xlu0 %8840
        %8842 = vrot.lane.b32.xlu0 %v6386, 80
        %v8843 = vpop.permute.xlu0 %8842
        %8844 = vrot.lane.b32.xlu0 %v6430, 80
        %v8845 = vpop.permute.xlu0 %8844
        %8846 = vrot.lane.b32.xlu0 %v6433, 80
        %v8847 = vpop.permute.xlu0 %8846
        %8848 = vrot.lane.b32.xlu0 %v6477, 80
        %v8849 = vpop.permute.xlu0 %8848
        %8850 = vrot.lane.b32.xlu0 %v6480, 80
        %v8851 = vpop.permute.xlu0 %8850
        %8852 = vrot.lane.b32.xlu0 %v6524, 80
        %v8853 = vpop.permute.xlu0 %8852
        %8854 = vrot.lane.b32.xlu0 %v6527, 80
        %v8855 = vpop.permute.xlu0 %8854
        %8856 = vrot.lane.b32.xlu0 %v6571, 80
        %v8857 = vpop.permute.xlu0 %8856
        %8858 = vrot.lane.b32.xlu0 %v6574, 80
        %v8859 = vpop.permute.xlu0 %8858
        %8860 = vrot.lane.b32.xlu0 %v6618, 80
        %v8861 = vpop.permute.xlu0 %8860
        %8862 = vrot.lane.b32.xlu0 %v6621, 80
        %v8863 = vpop.permute.xlu0 %8862
        %8896 = vrot.lane.b32.xlu0 %v7257, 96
        %v8897 = vpop.permute.xlu0 %8896
        %8898 = vrot.lane.b32.xlu0 %v7260, 96
        %v8899 = vpop.permute.xlu0 %8898
        %8900 = vrot.lane.b32.xlu0 %v7304, 96
        %v8901 = vpop.permute.xlu0 %8900
        %8902 = vrot.lane.b32.xlu0 %v7307, 96
        %v8903 = vpop.permute.xlu0 %8902
        %8904 = vrot.lane.b32.xlu0 %v7351, 96
        %v8905 = vpop.permute.xlu0 %8904
        %8906 = vrot.lane.b32.xlu0 %v7354, 96
        %v8907 = vpop.permute.xlu0 %8906
        %8908 = vrot.lane.b32.xlu0 %v7398, 96
        %v8909 = vpop.permute.xlu0 %8908
        %8910 = vrot.lane.b32.xlu0 %v7401, 96
        %v8911 = vpop.permute.xlu0 %8910
        %8912 = vrot.lane.b32.xlu0 %v7445, 96
        %v8913 = vpop.permute.xlu0 %8912
        %8914 = vrot.lane.b32.xlu0 %v7448, 96
        %v8915 = vpop.permute.xlu0 %8914
        %8916 = vrot.lane.b32.xlu0 %v7492, 96
        %v8917 = vpop.permute.xlu0 %8916
        %8918 = vrot.lane.b32.xlu0 %v7495, 96
        %v8919 = vpop.permute.xlu0 %8918
        %8920 = vrot.lane.b32.xlu0 %v7539, 96
        %v8921 = vpop.permute.xlu0 %8920
        %8922 = vrot.lane.b32.xlu0 %v7542, 96
        %v8923 = vpop.permute.xlu0 %8922
        %8924 = vrot.lane.b32.xlu0 %v7586, 96
        %v8925 = vpop.permute.xlu0 %8924
        %8926 = vrot.lane.b32.xlu0 %v7589, 96
        %v8927 = vpop.permute.xlu0 %8926
        %8960 = vrot.lane.b32.xlu0 %v8225, 112
        %v8961 = vpop.permute.xlu0 %8960
        %8962 = vrot.lane.b32.xlu0 %v8228, 112
        %v8963 = vpop.permute.xlu0 %8962
        %8964 = vrot.lane.b32.xlu0 %v8272, 112
        %v8965 = vpop.permute.xlu0 %8964
        %8966 = vrot.lane.b32.xlu0 %v8275, 112
        %v8967 = vpop.permute.xlu0 %8966
        %8968 = vrot.lane.b32.xlu0 %v8319, 112
        %v8969 = vpop.permute.xlu0 %8968
        %8970 = vrot.lane.b32.xlu0 %v8322, 112
        %v8971 = vpop.permute.xlu0 %8970
        %8972 = vrot.lane.b32.xlu0 %v8366, 112
        %v8973 = vpop.permute.xlu0 %8972
        %8974 = vrot.lane.b32.xlu0 %v8369, 112
        %v8975 = vpop.permute.xlu0 %8974
        %8976 = vrot.lane.b32.xlu0 %v8413, 112
        %v8977 = vpop.permute.xlu0 %8976
        %8978 = vrot.lane.b32.xlu0 %v8416, 112
        %v8979 = vpop.permute.xlu0 %8978
        %8980 = vrot.lane.b32.xlu0 %v8460, 112
        %v8981 = vpop.permute.xlu0 %8980
        %8982 = vrot.lane.b32.xlu0 %v8463, 112
        %v8983 = vpop.permute.xlu0 %8982
        %8984 = vrot.lane.b32.xlu0 %v8507, 112
        %v8985 = vpop.permute.xlu0 %8984
        %8986 = vrot.lane.b32.xlu0 %v8510, 112
        %v8987 = vpop.permute.xlu0 %8986
        %8988 = vrot.lane.b32.xlu0 %v8554, 112
        %v8989 = vpop.permute.xlu0 %8988
        %8990 = vrot.lane.b32.xlu0 %v8557, 112
        %v8991 = vpop.permute.xlu0 %8990
        %v9008 = vsel %vm847, %v1446, %v8577
        %v9009 = vsel %vm847, %v1449, %v8579
        %v9010 = vsel %vm847, %v1490, %v8581
        %v9011 = vsel %vm847, %v1493, %v8583
        %v9012 = vsel %vm847, %v1534, %v8585
        %v9013 = vsel %vm847, %v1537, %v8587
        %v9014 = vsel %vm847, %v1578, %v8589
        %v9015 = vsel %vm847, %v1581, %v8591
        %v9016 = vsel %vm847, %v1622, %v8593
        %v9017 = vsel %vm847, %v1625, %v8595
        %v9018 = vsel %vm847, %v1666, %v8597
        %v9019 = vsel %vm847, %v1669, %v8599
        %v9020 = vsel %vm847, %v1710, %v8601
        %v9021 = vsel %vm847, %v1713, %v8603
        %v9022 = vsel %vm847, %v1754, %v8605
        %v9023 = vsel %vm847, %v1757, %v8607
        %vm9024 = vcmask 261120
        %v9025 = vsel %vm9024, %v9008, %v8641
        %v9026 = vsel %vm9024, %v9009, %v8643
        %v9027 = vsel %vm9024, %v9010, %v8645
        %v9028 = vsel %vm9024, %v9011, %v8647
        %v9029 = vsel %vm9024, %v9012, %v8649
        %v9030 = vsel %vm9024, %v9013, %v8651
        %v9031 = vsel %vm9024, %v9014, %v8653
        %v9032 = vsel %vm9024, %v9015, %v8655
        %v9033 = vsel %vm9024, %v9016, %v8657
        %v9034 = vsel %vm9024, %v9017, %v8659
        %v9035 = vsel %vm9024, %v9018, %v8661
        %v9036 = vsel %vm9024, %v9019, %v8663
        %v9037 = vsel %vm9024, %v9020, %v8665
        %v9038 = vsel %vm9024, %v9021, %v8667
        %v9039 = vsel %vm9024, %v9022, %v8669
        %v9040 = vsel %vm9024, %v9023, %v8671
        %vm9041 = vcmask 392192
        %v9042 = vsel %vm9041, %v9025, %v8705
        %v9043 = vsel %vm9041, %v9026, %v8707
        %v9044 = vsel %vm9041, %v9027, %v8709
        %v9045 = vsel %vm9041, %v9028, %v8711
        %v9046 = vsel %vm9041, %v9029, %v8713
        %v9047 = vsel %vm9041, %v9030, %v8715
        %v9048 = vsel %vm9041, %v9031, %v8717
        %v9049 = vsel %vm9041, %v9032, %v8719
        %v9050 = vsel %vm9041, %v9033, %v8721
        %v9051 = vsel %vm9041, %v9034, %v8723
        %v9052 = vsel %vm9041, %v9035, %v8725
        %v9053 = vsel %vm9041, %v9036, %v8727
        %v9054 = vsel %vm9041, %v9037, %v8729
        %v9055 = vsel %vm9041, %v9038, %v8731
        %v9056 = vsel %vm9041, %v9039, %v8733
        %v9057 = vsel %vm9041, %v9040, %v8735
        %vm9058 = vcmask 523264
        %v9059 = vsel %vm9058, %v9042, %v8769
        %v9060 = vsel %vm9058, %v9043, %v8771
        %v9061 = vsel %vm9058, %v9044, %v8773
        %v9062 = vsel %vm9058, %v9045, %v8775
        %v9063 = vsel %vm9058, %v9046, %v8777
        %v9064 = vsel %vm9058, %v9047, %v8779
        %v9065 = vsel %vm9058, %v9048, %v8781
        %v9066 = vsel %vm9058, %v9049, %v8783
        %v9067 = vsel %vm9058, %v9050, %v8785
        %v9068 = vsel %vm9058, %v9051, %v8787
        %v9069 = vsel %vm9058, %v9052, %v8789
        %v9070 = vsel %vm9058, %v9053, %v8791
        %v9071 = vsel %vm9058, %v9054, %v8793
        %v9072 = vsel %vm9058, %v9055, %v8795
        %v9073 = vsel %vm9058, %v9056, %v8797
        %v9074 = vsel %vm9058, %v9057, %v8799
        %vm9075 = vcmask 654336
        %v9076 = vsel %vm9075, %v9059, %v8833
        %v9077 = vsel %vm9075, %v9060, %v8835
        %v9078 = vsel %vm9075, %v9061, %v8837
        %v9079 = vsel %vm9075, %v9062, %v8839
        %v9080 = vsel %vm9075, %v9063, %v8841
        %v9081 = vsel %vm9075, %v9064, %v8843
        %v9082 = vsel %vm9075, %v9065, %v8845
        %v9083 = vsel %vm9075, %v9066, %v8847
        %v9084 = vsel %vm9075, %v9067, %v8849
        %v9085 = vsel %vm9075, %v9068, %v8851
        %v9086 = vsel %vm9075, %v9069, %v8853
        %v9087 = vsel %vm9075, %v9070, %v8855
        %v9088 = vsel %vm9075, %v9071, %v8857
        %v9089 = vsel %vm9075, %v9072, %v8859
        %v9090 = vsel %vm9075, %v9073, %v8861
        %v9091 = vsel %vm9075, %v9074, %v8863
        %vm9092 = vcmask 785408
        %v9093 = vsel %vm9092, %v9076, %v8897
        %v9094 = vsel %vm9092, %v9077, %v8899
        %v9095 = vsel %vm9092, %v9078, %v8901
        %v9096 = vsel %vm9092, %v9079, %v8903
        %v9097 = vsel %vm9092, %v9080, %v8905
        %v9098 = vsel %vm9092, %v9081, %v8907
        %v9099 = vsel %vm9092, %v9082, %v8909
        %v9100 = vsel %vm9092, %v9083, %v8911
        %v9101 = vsel %vm9092, %v9084, %v8913
        %v9102 = vsel %vm9092, %v9085, %v8915
        %v9103 = vsel %vm9092, %v9086, %v8917
        %v9104 = vsel %vm9092, %v9087, %v8919
        %v9105 = vsel %vm9092, %v9088, %v8921
        %v9106 = vsel %vm9092, %v9089, %v8923
        %v9107 = vsel %vm9092, %v9090, %v8925
        %v9108 = vsel %vm9092, %v9091, %v8927
        %vm9109 = vcmask 916480
        %v9110 = vsel %vm9109, %v9093, %v8961
        %v9111 = vsel %vm9109, %v9094, %v8963
        %v9112 = vsel %vm9109, %v9095, %v8965
        %v9113 = vsel %vm9109, %v9096, %v8967
        %v9114 = vsel %vm9109, %v9097, %v8969
        %v9115 = vsel %vm9109, %v9098, %v8971
        %v9116 = vsel %vm9109, %v9099, %v8973
        %v9117 = vsel %vm9109, %v9100, %v8975
        %v9118 = vsel %vm9109, %v9101, %v8977
        %v9119 = vsel %vm9109, %v9102, %v8979
        %v9120 = vsel %vm9109, %v9103, %v8981
        %v9121 = vsel %vm9109, %v9104, %v8983
        %v9122 = vsel %vm9109, %v9105, %v8985
        %v9123 = vsel %vm9109, %v9106, %v8987
        %v9124 = vsel %vm9109, %v9107, %v8989
        %v9125 = vsel %vm9109, %v9108, %v8991
        %v9126 = vpack.c.bf16 %v9111, %v9110
        %v9127 = vpack.c.bf16 %v9113, %v9112
        %v9128 = vpack.c.bf16 %v9115, %v9114
        %v9129 = vpack.c.bf16 %v9117, %v9116
        %v9130 = vpack.c.bf16 %v9119, %v9118
        %v9131 = vpack.c.bf16 %v9121, %v9120
        %v9132 = vpack.c.bf16 %v9123, %v9122
        %v9133 = vpack.c.bf16 %v9125, %v9124
        %v9134 = vlaneseq
        %v9135 = vshrl.u32 %v9134, 7
        %v9136 = vsub.s32 3, %v9135
        %v9137 = vrot.slane %v415, %v9136
        %v9138 = vunpack.c.h.b16 %v368
        %v9139 = vunpack.c.h.b16 %v371
        %v9140 = vunpack.c.h.b16 %v374
        %v9141 = vunpack.c.h.b16 %v377
        %v9142 = vunpack.c.h.b16 %v380
        %v9143 = vunpack.c.h.b16 %v383
        %v9144 = vunpack.c.h.b16 %v386
        %v9145 = vunpack.c.h.b16 %v389
        %v9146 = vunpack.c.h.b16 %v392
        %v9147 = vunpack.c.h.b16 %v395
        %v9148 = vunpack.c.h.b16 %v398
        %v9149 = vunpack.c.h.b16 %v401
        %v9150 = vunpack.c.h.b16 %v404
        %v9151 = vunpack.c.h.b16 %v407
        %v9152 = vunpack.c.h.b16 %v410
        %v9153 = vunpack.c.h.b16 %v413
        %v9154 = vpack.c.b16 %v9139, %v9138
        %v9155 = vpack.c.b16 %v9141, %v9140
        %v9156 = vpack.c.b16 %v9143, %v9142
        %v9157 = vpack.c.b16 %v9145, %v9144
        %v9158 = vpack.c.b16 %v9147, %v9146
        %v9159 = vpack.c.b16 %v9149, %v9148
        %v9160 = vpack.c.b16 %v9151, %v9150
        %v9161 = vpack.c.b16 %v9153, %v9152
        %9170 = vmatprep.subr.bf16.mxu0 0
        %9171 = vmatpush1.bf16.msra.mxu0 %v9161
        %9172 = vmatprep.subr.bf16.mxu0 0
        %9173 = vmatpush1.bf16.msra.mxu0 %v9160
        %9174 = vmatprep.subr.bf16.mxu0 0
        %9175 = vmatpush1.bf16.msra.mxu0 %v9159
        %9176 = vmatprep.subr.bf16.mxu0 0
        %9177 = vmatpush1.bf16.msra.mxu0 %v9158
        %9178 = vmatprep.subr.bf16.mxu0 0
        %9179 = vmatpush1.bf16.msra.mxu0 %v9157
        %9180 = vmatprep.subr.bf16.mxu0 0
        %9181 = vmatpush1.bf16.msra.mxu0 %v9156
        %9182 = vmatprep.subr.bf16.mxu0 0
        %9183 = vmatpush1.bf16.msra.mxu0 %v9155
        %9184 = vmatprep.subr.bf16.mxu0 0
        %9185 = vmatpush1.bf16.msra.mxu0 %v9154
        %9186 = vmatprep.subr.bf16.mxu0 0
        %9187 = vmatpush2.bf16.msra.mxu0 0
        %9188 = vmatprep.subr.bf16.mxu0 0
        %9189 = vmatpush2.bf16.msra.mxu0 0
        %9190 = vmatprep.subr.bf16.mxu0 0
        %9191 = vmatpush2.bf16.msra.mxu0 0
        %9192 = vmatprep.subr.bf16.mxu0 0
        %9193 = vmatpush2.bf16.msra.mxu0 0
        %9194 = vmatprep.subr.bf16.mxu0 0
        %9195 = vmatpush2.bf16.msra.mxu0 0
        %9196 = vmatprep.subr.bf16.mxu0 0
        %9197 = vmatpush2.bf16.msra.mxu0 0
        %9198 = vmatprep.subr.bf16.mxu0 0
        %9199 = vmatpush2.bf16.msra.mxu0 0
        %9200 = vmatprep.subr.bf16.mxu0 0
        %9201 = vmatpush2.bf16.msra.mxu0 0
        %9202 = vmatprep.mubr.bf16.mxu0 0
        %9203 = vmatmul.mubr.bf16.gmra.mxu0 %v9126
        %v9204 = vpop.f32.mrf.mxu0
        %v9205 = vadd.f32 %v9137, %v9204
        %v9206 = vpop.f32.mrf.mxu0
        %v9207 = vpop.f32.mrf.mxu0
        %v9208 = vadd.f32 %v9137, %v9207
        %v9209 = vpop.f32.mrf.mxu0
        %9210 = vmatprep.mubr.bf16.mxu0 0
        %9211 = vmatmul.mubr.bf16.gmra.mxu0 %v9127
        %v9212 = vpop.f32.mrf.mxu0
        %v9213 = vadd.f32 %v9137, %v9212
        %v9214 = vpop.f32.mrf.mxu0
        %v9215 = vpop.f32.mrf.mxu0
        %v9216 = vadd.f32 %v9137, %v9215
        %v9217 = vpop.f32.mrf.mxu0
        %9218 = vmatprep.mubr.bf16.mxu0 0
        %9219 = vmatmul.mubr.bf16.gmra.mxu0 %v9128
        %v9220 = vpop.f32.mrf.mxu0
        %v9221 = vadd.f32 %v9137, %v9220
        %v9222 = vpop.f32.mrf.mxu0
        %v9223 = vpop.f32.mrf.mxu0
        %v9224 = vadd.f32 %v9137, %v9223
        %v9225 = vpop.f32.mrf.mxu0
        %9226 = vmatprep.mubr.bf16.mxu0 0
        %9227 = vmatmul.mubr.bf16.gmra.mxu0 %v9129
        %v9228 = vpop.f32.mrf.mxu0
        %v9229 = vadd.f32 %v9137, %v9228
        %v9230 = vpop.f32.mrf.mxu0
        %v9231 = vpop.f32.mrf.mxu0
        %v9232 = vadd.f32 %v9137, %v9231
        %v9233 = vpop.f32.mrf.mxu0
        %9234 = vmatprep.mubr.bf16.mxu0 0
        %9235 = vmatmul.mubr.bf16.gmra.mxu0 %v9130
        %v9236 = vpop.f32.mrf.mxu0
        %v9237 = vadd.f32 %v9137, %v9236
        %v9238 = vpop.f32.mrf.mxu0
        %v9239 = vpop.f32.mrf.mxu0
        %v9240 = vadd.f32 %v9137, %v9239
        %v9241 = vpop.f32.mrf.mxu0
        %9242 = vmatprep.mubr.bf16.mxu0 0
        %9243 = vmatmul.mubr.bf16.gmra.mxu0 %v9131
        %v9244 = vpop.f32.mrf.mxu0
        %v9245 = vadd.f32 %v9137, %v9244
        %v9246 = vpop.f32.mrf.mxu0
        %v9247 = vpop.f32.mrf.mxu0
        %v9248 = vadd.f32 %v9137, %v9247
        %v9249 = vpop.f32.mrf.mxu0
        %9250 = vmatprep.mubr.bf16.mxu0 0
        %9251 = vmatmul.mubr.bf16.gmra.mxu0 %v9132
        %v9252 = vpop.f32.mrf.mxu0
        %v9253 = vadd.f32 %v9137, %v9252
        %v9254 = vpop.f32.mrf.mxu0
        %v9255 = vpop.f32.mrf.mxu0
        %v9256 = vadd.f32 %v9137, %v9255
        %v9257 = vpop.f32.mrf.mxu0
        %9258 = vmatprep.mubr.bf16.mxu0 0
        %9259 = vmatmul.mubr.bf16.gmra.mxu0 %v9133
        %v9260 = vpop.f32.mrf.mxu0
        %v9261 = vadd.f32 %v9137, %v9260
        %v9262 = vpop.f32.mrf.mxu0
        %v9263 = vpop.f32.mrf.mxu0
        %v9264 = vadd.f32 %v9137, %v9263
        %v9265 = vpop.f32.mrf.mxu0
        %9266 = vdwg.mxu0
        %v9267 = vadd.f32 %v9205, %v351
        %v9268 = vadd.f32 %v9208, %v352
        %v9269 = vadd.f32 %v9213, %v353
        %v9270 = vadd.f32 %v9216, %v354
        %v9271 = vadd.f32 %v9221, %v355
        %v9272 = vadd.f32 %v9224, %v356
        %v9273 = vadd.f32 %v9229, %v357
        %v9274 = vadd.f32 %v9232, %v358
        %v9275 = vadd.f32 %v9237, %v359
        %v9276 = vadd.f32 %v9240, %v360
        %v9277 = vadd.f32 %v9245, %v361
        %v9278 = vadd.f32 %v9248, %v362
        %v9279 = vadd.f32 %v9253, %v363
        %v9280 = vadd.f32 %v9256, %v364
        %v9281 = vadd.f32 %v9261, %v365
        %v9282 = vadd.f32 %v9264, %v366
        %9283 = vadd.xlane.f32.xlu0 %v9267
        %v9284 = vpop.xlane.xlu0 %9283
        %9285 = vadd.xlane.f32.xlu0 %v9268
        %v9286 = vpop.xlane.xlu0 %9285
        %9287 = vadd.xlane.f32.xlu0 %v9269
        %v9288 = vpop.xlane.xlu0 %9287
        %9289 = vadd.xlane.f32.xlu0 %v9270
        %v9290 = vpop.xlane.xlu0 %9289
        %9291 = vadd.xlane.f32.xlu0 %v9271
        %v9292 = vpop.xlane.xlu0 %9291
        %9293 = vadd.xlane.f32.xlu0 %v9272
        %v9294 = vpop.xlane.xlu0 %9293
        %9295 = vadd.xlane.f32.xlu0 %v9273
        %v9296 = vpop.xlane.xlu0 %9295
        %9297 = vadd.xlane.f32.xlu0 %v9274
        %v9298 = vpop.xlane.xlu0 %9297
        %9299 = vadd.xlane.f32.xlu0 %v9275
        %v9300 = vpop.xlane.xlu0 %9299
        %9301 = vadd.xlane.f32.xlu0 %v9276
        %v9302 = vpop.xlane.xlu0 %9301
        %9303 = vadd.xlane.f32.xlu0 %v9277
        %v9304 = vpop.xlane.xlu0 %9303
        %9305 = vadd.xlane.f32.xlu0 %v9278
        %v9306 = vpop.xlane.xlu0 %9305
        %9307 = vadd.xlane.f32.xlu0 %v9279
        %v9308 = vpop.xlane.xlu0 %9307
        %9309 = vadd.xlane.f32.xlu0 %v9280
        %v9310 = vpop.xlane.xlu0 %9309
        %9311 = vadd.xlane.f32.xlu0 %v9281
        %v9312 = vpop.xlane.xlu0 %9311
        %9313 = vadd.xlane.f32.xlu0 %v9282
        %v9314 = vpop.xlane.xlu0 %9313
        %v9315 = vrcp.pop 128.0
        %v9316 = vmul.f32 %v9284, %v9315
        %v9317 = vmul.f32 %v9286, %v9315
        %v9318 = vmul.f32 %v9288, %v9315
        %v9319 = vmul.f32 %v9290, %v9315
        %v9320 = vmul.f32 %v9292, %v9315
        %v9321 = vmul.f32 %v9294, %v9315
        %v9322 = vmul.f32 %v9296, %v9315
        %v9323 = vmul.f32 %v9298, %v9315
        %v9324 = vmul.f32 %v9300, %v9315
        %v9325 = vmul.f32 %v9302, %v9315
        %v9326 = vmul.f32 %v9304, %v9315
        %v9327 = vmul.f32 %v9306, %v9315
        %v9328 = vmul.f32 %v9308, %v9315
        %v9329 = vmul.f32 %v9310, %v9315
        %v9330 = vmul.f32 %v9312, %v9315
        %v9331 = vmul.f32 %v9314, %v9315
        %v9332 = vsub.f32 %v9267, %v9316
        %v9333 = vsub.f32 %v9268, %v9317
        %v9334 = vsub.f32 %v9269, %v9318
        %v9335 = vsub.f32 %v9270, %v9319
        %v9336 = vsub.f32 %v9271, %v9320
        %v9337 = vsub.f32 %v9272, %v9321
        %v9338 = vsub.f32 %v9273, %v9322
        %v9339 = vsub.f32 %v9274, %v9323
        %v9340 = vsub.f32 %v9275, %v9324
        %v9341 = vsub.f32 %v9276, %v9325
        %v9342 = vsub.f32 %v9277, %v9326
        %v9343 = vsub.f32 %v9278, %v9327
        %v9344 = vsub.f32 %v9279, %v9328
        %v9345 = vsub.f32 %v9280, %v9329
        %v9346 = vsub.f32 %v9281, %v9330
        %v9347 = vsub.f32 %v9282, %v9331
        %v9348 = vmul.f32 %v9332, %v9332
        %v9349 = vmul.f32 %v9333, %v9333
        %v9350 = vmul.f32 %v9334, %v9334
        %v9351 = vmul.f32 %v9335, %v9335
        %v9352 = vmul.f32 %v9336, %v9336
        %v9353 = vmul.f32 %v9337, %v9337
        %v9354 = vmul.f32 %v9338, %v9338
        %v9355 = vmul.f32 %v9339, %v9339
        %v9356 = vmul.f32 %v9340, %v9340
        %v9357 = vmul.f32 %v9341, %v9341
        %v9358 = vmul.f32 %v9342, %v9342
        %v9359 = vmul.f32 %v9343, %v9343
        %v9360 = vmul.f32 %v9344, %v9344
        %v9361 = vmul.f32 %v9345, %v9345
        %v9362 = vmul.f32 %v9346, %v9346
        %v9363 = vmul.f32 %v9347, %v9347
        %9364 = vadd.xlane.f32.xlu0 %v9348
        %v9365 = vpop.xlane.xlu0 %9364
        %9366 = vadd.xlane.f32.xlu0 %v9349
        %v9367 = vpop.xlane.xlu0 %9366
        %9368 = vadd.xlane.f32.xlu0 %v9350
        %v9369 = vpop.xlane.xlu0 %9368
        %9370 = vadd.xlane.f32.xlu0 %v9351
        %v9371 = vpop.xlane.xlu0 %9370
        %9372 = vadd.xlane.f32.xlu0 %v9352
        %v9373 = vpop.xlane.xlu0 %9372
        %9374 = vadd.xlane.f32.xlu0 %v9353
        %v9375 = vpop.xlane.xlu0 %9374
        %9376 = vadd.xlane.f32.xlu0 %v9354
        %v9377 = vpop.xlane.xlu0 %9376
        %9378 = vadd.xlane.f32.xlu0 %v9355
        %v9379 = vpop.xlane.xlu0 %9378
        %9380 = vadd.xlane.f32.xlu0 %v9356
        %v9381 = vpop.xlane.xlu0 %9380
        %9382 = vadd.xlane.f32.xlu0 %v9357
        %v9383 = vpop.xlane.xlu0 %9382
        %9384 = vadd.xlane.f32.xlu0 %v9358
        %v9385 = vpop.xlane.xlu0 %9384
        %9386 = vadd.xlane.f32.xlu0 %v9359
        %v9387 = vpop.xlane.xlu0 %9386
        %9388 = vadd.xlane.f32.xlu0 %v9360
        %v9389 = vpop.xlane.xlu0 %9388
        %9390 = vadd.xlane.f32.xlu0 %v9361
        %v9391 = vpop.xlane.xlu0 %9390
        %9392 = vadd.xlane.f32.xlu0 %v9362
        %v9393 = vpop.xlane.xlu0 %9392
        %9394 = vadd.xlane.f32.xlu0 %v9363
        %v9395 = vpop.xlane.xlu0 %9394
        %v9396 = vmul.f32 %v9365, %v9315
        %v9397 = vmul.f32 %v9367, %v9315
        %v9398 = vmul.f32 %v9369, %v9315
        %v9399 = vmul.f32 %v9371, %v9315
        %v9400 = vmul.f32 %v9373, %v9315
        %v9401 = vmul.f32 %v9375, %v9315
        %v9402 = vmul.f32 %v9377, %v9315
        %v9403 = vmul.f32 %v9379, %v9315
        %v9404 = vmul.f32 %v9381, %v9315
        %v9405 = vmul.f32 %v9383, %v9315
        %v9406 = vmul.f32 %v9385, %v9315
        %v9407 = vmul.f32 %v9387, %v9315
        %v9408 = vmul.f32 %v9389, %v9315
        %v9409 = vmul.f32 %v9391, %v9315
        %v9410 = vmul.f32 %v9393, %v9315
        %v9411 = vmul.f32 %v9395, %v9315
        %v9412 = vadd.f32 %v9396, 1e-05
        %v9413 = vadd.f32 %v9397, 1e-05
        %v9414 = vadd.f32 %v9398, 1e-05
        %v9415 = vadd.f32 %v9399, 1e-05
        %v9416 = vadd.f32 %v9400, 1e-05
        %v9417 = vadd.f32 %v9401, 1e-05
        %v9418 = vadd.f32 %v9402, 1e-05
        %v9419 = vadd.f32 %v9403, 1e-05
        %v9420 = vadd.f32 %v9404, 1e-05
        %v9421 = vadd.f32 %v9405, 1e-05
        %v9422 = vadd.f32 %v9406, 1e-05
        %v9423 = vadd.f32 %v9407, 1e-05
        %v9424 = vadd.f32 %v9408, 1e-05
        %v9425 = vadd.f32 %v9409, 1e-05
        %v9426 = vadd.f32 %v9410, 1e-05
        %v9427 = vadd.f32 %v9411, 1e-05
        %v9428 = vrsqrt.pop %v9412
        %v9429 = vrsqrt.pop %v9413
        %v9430 = vrsqrt.pop %v9414
        %v9431 = vrsqrt.pop %v9415
        %v9432 = vrsqrt.pop %v9416
        %v9433 = vrsqrt.pop %v9417
        %v9434 = vrsqrt.pop %v9418
        %v9435 = vrsqrt.pop %v9419
        %v9436 = vrsqrt.pop %v9420
        %v9437 = vrsqrt.pop %v9421
        %v9438 = vrsqrt.pop %v9422
        %v9439 = vrsqrt.pop %v9423
        %v9440 = vrsqrt.pop %v9424
        %v9441 = vrsqrt.pop %v9425
        %v9442 = vrsqrt.pop %v9426
        %v9443 = vrsqrt.pop %v9427
        %v9444 = vmul.f32 %v9332, %v9428
        %v9445 = vmul.f32 %v9333, %v9429
        %v9446 = vmul.f32 %v9334, %v9430
        %v9447 = vmul.f32 %v9335, %v9431
        %v9448 = vmul.f32 %v9336, %v9432
        %v9449 = vmul.f32 %v9337, %v9433
        %v9450 = vmul.f32 %v9338, %v9434
        %v9451 = vmul.f32 %v9339, %v9435
        %v9452 = vmul.f32 %v9340, %v9436
        %v9453 = vmul.f32 %v9341, %v9437
        %v9454 = vmul.f32 %v9342, %v9438
        %v9455 = vmul.f32 %v9343, %v9439
        %v9456 = vmul.f32 %v9344, %v9440
        %v9457 = vmul.f32 %v9345, %v9441
        %v9458 = vmul.f32 %v9346, %v9442
        %v9459 = vmul.f32 %v9347, %v9443
        %v9460 = vlaneseq
        %v9461 = vshrl.u32 %v9460, 7
        %v9462 = vsub.s32 4, %v9461
        %v9463 = vrot.slane %v415, %v9462
        %v9464 = vmul.f32 %v9444, %v9463
        %v9465 = vmul.f32 %v9445, %v9463
        %v9466 = vmul.f32 %v9446, %v9463
        %v9467 = vmul.f32 %v9447, %v9463
        %v9468 = vmul.f32 %v9448, %v9463
        %v9469 = vmul.f32 %v9449, %v9463
        %v9470 = vmul.f32 %v9450, %v9463
        %v9471 = vmul.f32 %v9451, %v9463
        %v9472 = vmul.f32 %v9452, %v9463
        %v9473 = vmul.f32 %v9453, %v9463
        %v9474 = vmul.f32 %v9454, %v9463
        %v9475 = vmul.f32 %v9455, %v9463
        %v9476 = vmul.f32 %v9456, %v9463
        %v9477 = vmul.f32 %v9457, %v9463
        %v9478 = vmul.f32 %v9458, %v9463
        %v9479 = vmul.f32 %v9459, %v9463
        %v9480 = vlaneseq
        %v9481 = vshrl.u32 %v9480, 7
        %v9482 = vsub.s32 5, %v9481
        %v9483 = vrot.slane %v415, %v9482
        %v9484 = vadd.f32 %v9464, %v9483
        %v9485 = vadd.f32 %v9465, %v9483
        %v9486 = vadd.f32 %v9466, %v9483
        %v9487 = vadd.f32 %v9467, %v9483
        %v9488 = vadd.f32 %v9468, %v9483
        %v9489 = vadd.f32 %v9469, %v9483
        %v9490 = vadd.f32 %v9470, %v9483
        %v9491 = vadd.f32 %v9471, %v9483
        %v9492 = vadd.f32 %v9472, %v9483
        %v9493 = vadd.f32 %v9473, %v9483
        %v9494 = vadd.f32 %v9474, %v9483
        %v9495 = vadd.f32 %v9475, %v9483
        %v9496 = vadd.f32 %v9476, %v9483
        %v9497 = vadd.f32 %v9477, %v9483
        %v9498 = vadd.f32 %v9478, %v9483
        %v9499 = vadd.f32 %v9479, %v9483
        %v9500 = vpack.c.bf16 %v9485, %v9484
        %v9501 = vpack.c.bf16 %v9487, %v9486
        %v9502 = vpack.c.bf16 %v9489, %v9488
        %v9503 = vpack.c.bf16 %v9491, %v9490
        %v9504 = vpack.c.bf16 %v9493, %v9492
        %v9505 = vpack.c.bf16 %v9495, %v9494
        %v9506 = vpack.c.bf16 %v9497, %v9496
        %v9507 = vpack.c.bf16 %v9499, %v9498
        %v9508 = vlaneseq
        %v9509 = vshrl.u32 %v9508, 7
        %v9510 = vsub.s32 6, %v9509
        %v9511 = vrot.slane %v415, %v9510
        %v9528 = vunpack.c.l.b16 %v369
        %v9529 = vunpack.c.l.b16 %v372
        %v9530 = vunpack.c.l.b16 %v375
        %v9531 = vunpack.c.l.b16 %v378
        %v9532 = vunpack.c.l.b16 %v381
        %v9533 = vunpack.c.l.b16 %v384
        %v9534 = vunpack.c.l.b16 %v387
        %v9535 = vunpack.c.l.b16 %v390
        %v9536 = vunpack.c.l.b16 %v393
        %v9537 = vunpack.c.l.b16 %v396
        %v9538 = vunpack.c.l.b16 %v399
        %v9539 = vunpack.c.l.b16 %v402
        %v9540 = vunpack.c.l.b16 %v405
        %v9541 = vunpack.c.l.b16 %v408
        %v9542 = vunpack.c.l.b16 %v411
        %v9543 = vunpack.c.l.b16 %v414
        %v9544 = vpack.c.b16 %v9529, %v9528
        %v9545 = vpack.c.b16 %v9531, %v9530
        %v9546 = vpack.c.b16 %v9533, %v9532
        %v9547 = vpack.c.b16 %v9535, %v9534
        %v9548 = vpack.c.b16 %v9537, %v9536
        %v9549 = vpack.c.b16 %v9539, %v9538
        %v9550 = vpack.c.b16 %v9541, %v9540
        %v9551 = vpack.c.b16 %v9543, %v9542
        %9560 = vmatprep.subr.bf16.mxu0 0
        %9561 = vmatpush1.bf16.msra.mxu0 %v9551
        %9562 = vmatprep.subr.bf16.mxu0 0
        %9563 = vmatpush1.bf16.msra.mxu0 %v9550
        %9564 = vmatprep.subr.bf16.mxu0 0
        %9565 = vmatpush1.bf16.msra.mxu0 %v9549
        %9566 = vmatprep.subr.bf16.mxu0 0
        %9567 = vmatpush1.bf16.msra.mxu0 %v9548
        %9568 = vmatprep.subr.bf16.mxu0 0
        %9569 = vmatpush1.bf16.msra.mxu0 %v9547
        %9570 = vmatprep.subr.bf16.mxu0 0
        %9571 = vmatpush1.bf16.msra.mxu0 %v9546
        %9572 = vmatprep.subr.bf16.mxu0 0
        %9573 = vmatpush1.bf16.msra.mxu0 %v9545
        %9574 = vmatprep.subr.bf16.mxu0 0
        %9575 = vmatpush1.bf16.msra.mxu0 %v9544
        %9576 = vmatprep.subr.bf16.mxu0 0
        %9577 = vmatpush2.bf16.msra.mxu0 0
        %9578 = vmatprep.subr.bf16.mxu0 0
        %9579 = vmatpush2.bf16.msra.mxu0 0
        %9580 = vmatprep.subr.bf16.mxu0 0
        %9581 = vmatpush2.bf16.msra.mxu0 0
        %9582 = vmatprep.subr.bf16.mxu0 0
        %9583 = vmatpush2.bf16.msra.mxu0 0
        %9584 = vmatprep.subr.bf16.mxu0 0
        %9585 = vmatpush2.bf16.msra.mxu0 0
        %9586 = vmatprep.subr.bf16.mxu0 0
        %9587 = vmatpush2.bf16.msra.mxu0 0
        %9588 = vmatprep.subr.bf16.mxu0 0
        %9589 = vmatpush2.bf16.msra.mxu0 0
        %9590 = vmatprep.subr.bf16.mxu0 0
        %9591 = vmatpush2.bf16.msra.mxu0 0
        %9592 = vmatprep.mubr.bf16.mxu0 0
        %9593 = vmatmul.mubr.bf16.gmra.mxu0 %v9500
        %v9594 = vpop.f32.mrf.mxu0
        %v9595 = vadd.f32 %v9511, %v9594
        %v9596 = vpop.f32.mrf.mxu0
        %v9597 = vpop.f32.mrf.mxu0
        %v9598 = vadd.f32 %v9511, %v9597
        %v9599 = vpop.f32.mrf.mxu0
        %9600 = vmatprep.mubr.bf16.mxu0 0
        %9601 = vmatmul.mubr.bf16.gmra.mxu0 %v9501
        %v9602 = vpop.f32.mrf.mxu0
        %v9603 = vadd.f32 %v9511, %v9602
        %v9604 = vpop.f32.mrf.mxu0
        %v9605 = vpop.f32.mrf.mxu0
        %v9606 = vadd.f32 %v9511, %v9605
        %v9607 = vpop.f32.mrf.mxu0
        %9608 = vmatprep.mubr.bf16.mxu0 0
        %9609 = vmatmul.mubr.bf16.gmra.mxu0 %v9502
        %v9610 = vpop.f32.mrf.mxu0
        %v9611 = vadd.f32 %v9511, %v9610
        %v9612 = vpop.f32.mrf.mxu0
        %v9613 = vpop.f32.mrf.mxu0
        %v9614 = vadd.f32 %v9511, %v9613
        %v9615 = vpop.f32.mrf.mxu0
        %9616 = vmatprep.mubr.bf16.mxu0 0
        %9617 = vmatmul.mubr.bf16.gmra.mxu0 %v9503
        %v9618 = vpop.f32.mrf.mxu0
        %v9619 = vadd.f32 %v9511, %v9618
        %v9620 = vpop.f32.mrf.mxu0
        %v9621 = vpop.f32.mrf.mxu0
        %v9622 = vadd.f32 %v9511, %v9621
        %v9623 = vpop.f32.mrf.mxu0
        %9624 = vmatprep.mubr.bf16.mxu0 0
        %9625 = vmatmul.mubr.bf16.gmra.mxu0 %v9504
        %v9626 = vpop.f32.mrf.mxu0
        %v9627 = vadd.f32 %v9511, %v9626
        %v9628 = vpop.f32.mrf.mxu0
        %v9629 = vpop.f32.mrf.mxu0
        %v9630 = vadd.f32 %v9511, %v9629
        %v9631 = vpop.f32.mrf.mxu0
        %9632 = vmatprep.mubr.bf16.mxu0 0
        %9633 = vmatmul.mubr.bf16.gmra.mxu0 %v9505
        %v9634 = vpop.f32.mrf.mxu0
        %v9635 = vadd.f32 %v9511, %v9634
        %v9636 = vpop.f32.mrf.mxu0
        %v9637 = vpop.f32.mrf.mxu0
        %v9638 = vadd.f32 %v9511, %v9637
        %v9639 = vpop.f32.mrf.mxu0
        %9640 = vmatprep.mubr.bf16.mxu0 0
        %9641 = vmatmul.mubr.bf16.gmra.mxu0 %v9506
        %v9642 = vpop.f32.mrf.mxu0
        %v9643 = vadd.f32 %v9511, %v9642
        %v9644 = vpop.f32.mrf.mxu0
        %v9645 = vpop.f32.mrf.mxu0
        %v9646 = vadd.f32 %v9511, %v9645
        %v9647 = vpop.f32.mrf.mxu0
        %9648 = vmatprep.mubr.bf16.mxu0 0
        %9649 = vmatmul.mubr.bf16.gmra.mxu0 %v9507
        %v9650 = vpop.f32.mrf.mxu0
        %v9651 = vadd.f32 %v9511, %v9650
        %v9652 = vpop.f32.mrf.mxu0
        %v9653 = vpop.f32.mrf.mxu0
        %v9654 = vadd.f32 %v9511, %v9653
        %v9655 = vpop.f32.mrf.mxu0
        %9656 = vdwg.mxu0
        %v9657 = vmax.f32 %v9595, 0.0
        %v9658 = vmax.f32 %v9598, 0.0
        %v9659 = vmax.f32 %v9603, 0.0
        %v9660 = vmax.f32 %v9606, 0.0
        %v9661 = vmax.f32 %v9611, 0.0
        %v9662 = vmax.f32 %v9614, 0.0
        %v9663 = vmax.f32 %v9619, 0.0
        %v9664 = vmax.f32 %v9622, 0.0
        %v9665 = vmax.f32 %v9627, 0.0
        %v9666 = vmax.f32 %v9630, 0.0
        %v9667 = vmax.f32 %v9635, 0.0
        %v9668 = vmax.f32 %v9638, 0.0
        %v9669 = vmax.f32 %v9643, 0.0
        %v9670 = vmax.f32 %v9646, 0.0
        %v9671 = vmax.f32 %v9651, 0.0
        %v9672 = vmax.f32 %v9654, 0.0
        %v9673 = vpack.c.bf16 %v9658, %v9657
        %v9674 = vpack.c.bf16 %v9660, %v9659
        %v9675 = vpack.c.bf16 %v9662, %v9661
        %v9676 = vpack.c.bf16 %v9664, %v9663
        %v9677 = vpack.c.bf16 %v9666, %v9665
        %v9678 = vpack.c.bf16 %v9668, %v9667
        %v9679 = vpack.c.bf16 %v9670, %v9669
        %v9680 = vpack.c.bf16 %v9672, %v9671
        %v9681 = vlaneseq
        %v9682 = vshrl.u32 %v9681, 7
        %v9683 = vsub.s32 7, %v9682
        %v9684 = vrot.slane %v415, %v9683
        %v9685 = vunpack.c.h.b16 %v369
        %v9686 = vunpack.c.h.b16 %v372
        %v9687 = vunpack.c.h.b16 %v375
        %v9688 = vunpack.c.h.b16 %v378
        %v9689 = vunpack.c.h.b16 %v381
        %v9690 = vunpack.c.h.b16 %v384
        %v9691 = vunpack.c.h.b16 %v387
        %v9692 = vunpack.c.h.b16 %v390
        %v9693 = vunpack.c.h.b16 %v393
        %v9694 = vunpack.c.h.b16 %v396
        %v9695 = vunpack.c.h.b16 %v399
        %v9696 = vunpack.c.h.b16 %v402
        %v9697 = vunpack.c.h.b16 %v405
        %v9698 = vunpack.c.h.b16 %v408
        %v9699 = vunpack.c.h.b16 %v411
        %v9700 = vunpack.c.h.b16 %v414
        %v9701 = vpack.c.b16 %v9686, %v9685
        %v9702 = vpack.c.b16 %v9688, %v9687
        %v9703 = vpack.c.b16 %v9690, %v9689
        %v9704 = vpack.c.b16 %v9692, %v9691
        %v9705 = vpack.c.b16 %v9694, %v9693
        %v9706 = vpack.c.b16 %v9696, %v9695
        %v9707 = vpack.c.b16 %v9698, %v9697
        %v9708 = vpack.c.b16 %v9700, %v9699
        %9717 = vmatprep.subr.bf16.mxu0 0
        %9718 = vmatpush1.bf16.msra.mxu0 %v9708
        %9719 = vmatprep.subr.bf16.mxu0 0
        %9720 = vmatpush1.bf16.msra.mxu0 %v9707
        %9721 = vmatprep.subr.bf16.mxu0 0
        %9722 = vmatpush1.bf16.msra.mxu0 %v9706
        %9723 = vmatprep.subr.bf16.mxu0 0
        %9724 = vmatpush1.bf16.msra.mxu0 %v9705
        %9725 = vmatprep.subr.bf16.mxu0 0
        %9726 = vmatpush1.bf16.msra.mxu0 %v9704
        %9727 = vmatprep.subr.bf16.mxu0 0
        %9728 = vmatpush1.bf16.msra.mxu0 %v9703
        %9729 = vmatprep.subr.bf16.mxu0 0
        %9730 = vmatpush1.bf16.msra.mxu0 %v9702
        %9731 = vmatprep.subr.bf16.mxu0 0
        %9732 = vmatpush1.bf16.msra.mxu0 %v9701
        %9733 = vmatprep.subr.bf16.mxu0 0
        %9734 = vmatpush2.bf16.msra.mxu0 0
        %9735 = vmatprep.subr.bf16.mxu0 0
        %9736 = vmatpush2.bf16.msra.mxu0 0
        %9737 = vmatprep.subr.bf16.mxu0 0
        %9738 = vmatpush2.bf16.msra.mxu0 0
        %9739 = vmatprep.subr.bf16.mxu0 0
        %9740 = vmatpush2.bf16.msra.mxu0 0
        %9741 = vmatprep.subr.bf16.mxu0 0
        %9742 = vmatpush2.bf16.msra.mxu0 0
        %9743 = vmatprep.subr.bf16.mxu0 0
        %9744 = vmatpush2.bf16.msra.mxu0 0
        %9745 = vmatprep.subr.bf16.mxu0 0
        %9746 = vmatpush2.bf16.msra.mxu0 0
        %9747 = vmatprep.subr.bf16.mxu0 0
        %9748 = vmatpush2.bf16.msra.mxu0 0
        %9749 = vmatprep.mubr.bf16.mxu0 0
        %9750 = vmatmul.mubr.bf16.gmra.mxu0 %v9673
        %v9751 = vpop.f32.mrf.mxu0
        %v9752 = vadd.f32 %v9684, %v9751
        %v9753 = vpop.f32.mrf.mxu0
        %v9754 = vpop.f32.mrf.mxu0
        %v9755 = vadd.f32 %v9684, %v9754
        %v9756 = vpop.f32.mrf.mxu0
        %9757 = vmatprep.mubr.bf16.mxu0 0
        %9758 = vmatmul.mubr.bf16.gmra.mxu0 %v9674
        %v9759 = vpop.f32.mrf.mxu0
        %v9760 = vadd.f32 %v9684, %v9759
        %v9761 = vpop.f32.mrf.mxu0
        %v9762 = vpop.f32.mrf.mxu0
        %v9763 = vadd.f32 %v9684, %v9762
        %v9764 = vpop.f32.mrf.mxu0
        %9765 = vmatprep.mubr.bf16.mxu0 0
        %9766 = vmatmul.mubr.bf16.gmra.mxu0 %v9675
        %v9767 = vpop.f32.mrf.mxu0
        %v9768 = vadd.f32 %v9684, %v9767
        %v9769 = vpop.f32.mrf.mxu0
        %v9770 = vpop.f32.mrf.mxu0
        %v9771 = vadd.f32 %v9684, %v9770
        %v9772 = vpop.f32.mrf.mxu0
        %9773 = vmatprep.mubr.bf16.mxu0 0
        %9774 = vmatmul.mubr.bf16.gmra.mxu0 %v9676
        %v9775 = vpop.f32.mrf.mxu0
        %v9776 = vadd.f32 %v9684, %v9775
        %v9777 = vpop.f32.mrf.mxu0
        %v9778 = vpop.f32.mrf.mxu0
        %v9779 = vadd.f32 %v9684, %v9778
        %v9780 = vpop.f32.mrf.mxu0
        %9781 = vmatprep.mubr.bf16.mxu0 0
        %9782 = vmatmul.mubr.bf16.gmra.mxu0 %v9677
        %v9783 = vpop.f32.mrf.mxu0
        %v9784 = vadd.f32 %v9684, %v9783
        %v9785 = vpop.f32.mrf.mxu0
        %v9786 = vpop.f32.mrf.mxu0
        %v9787 = vadd.f32 %v9684, %v9786
        %v9788 = vpop.f32.mrf.mxu0
        %9789 = vmatprep.mubr.bf16.mxu0 0
        %9790 = vmatmul.mubr.bf16.gmra.mxu0 %v9678
        %v9791 = vpop.f32.mrf.mxu0
        %v9792 = vadd.f32 %v9684, %v9791
        %v9793 = vpop.f32.mrf.mxu0
        %v9794 = vpop.f32.mrf.mxu0
        %v9795 = vadd.f32 %v9684, %v9794
        %v9796 = vpop.f32.mrf.mxu0
        %9797 = vmatprep.mubr.bf16.mxu0 0
        %9798 = vmatmul.mubr.bf16.gmra.mxu0 %v9679
        %v9799 = vpop.f32.mrf.mxu0
        %v9800 = vadd.f32 %v9684, %v9799
        %v9801 = vpop.f32.mrf.mxu0
        %v9802 = vpop.f32.mrf.mxu0
        %v9803 = vadd.f32 %v9684, %v9802
        %v9804 = vpop.f32.mrf.mxu0
        %9805 = vmatprep.mubr.bf16.mxu0 0
        %9806 = vmatmul.mubr.bf16.gmra.mxu0 %v9680
        %v9807 = vpop.f32.mrf.mxu0
        %v9808 = vadd.f32 %v9684, %v9807
        %v9809 = vpop.f32.mrf.mxu0
        %v9810 = vpop.f32.mrf.mxu0
        %v9811 = vadd.f32 %v9684, %v9810
        %v9812 = vpop.f32.mrf.mxu0
        %9813 = vdwg.mxu0
        %v9814 = vadd.f32 %v9752, %v9484
        %v9815 = vadd.f32 %v9755, %v9485
        %v9816 = vadd.f32 %v9760, %v9486
        %v9817 = vadd.f32 %v9763, %v9487
        %v9818 = vadd.f32 %v9768, %v9488
        %v9819 = vadd.f32 %v9771, %v9489
        %v9820 = vadd.f32 %v9776, %v9490
        %v9821 = vadd.f32 %v9779, %v9491
        %v9822 = vadd.f32 %v9784, %v9492
        %v9823 = vadd.f32 %v9787, %v9493
        %v9824 = vadd.f32 %v9792, %v9494
        %v9825 = vadd.f32 %v9795, %v9495
        %v9826 = vadd.f32 %v9800, %v9496
        %v9827 = vadd.f32 %v9803, %v9497
        %v9828 = vadd.f32 %v9808, %v9498
        %v9829 = vadd.f32 %v9811, %v9499
        %9830 = vadd.xlane.f32.xlu0 %v9814
        %v9831 = vpop.xlane.xlu0 %9830
        %9832 = vadd.xlane.f32.xlu0 %v9815
        %v9833 = vpop.xlane.xlu0 %9832
        %9834 = vadd.xlane.f32.xlu0 %v9816
        %v9835 = vpop.xlane.xlu0 %9834
        %9836 = vadd.xlane.f32.xlu0 %v9817
        %v9837 = vpop.xlane.xlu0 %9836
        %9838 = vadd.xlane.f32.xlu0 %v9818
        %v9839 = vpop.xlane.xlu0 %9838
        %9840 = vadd.xlane.f32.xlu0 %v9819
        %v9841 = vpop.xlane.xlu0 %9840
        %9842 = vadd.xlane.f32.xlu0 %v9820
        %v9843 = vpop.xlane.xlu0 %9842
        %9844 = vadd.xlane.f32.xlu0 %v9821
        %v9845 = vpop.xlane.xlu0 %9844
        %9846 = vadd.xlane.f32.xlu0 %v9822
        %v9847 = vpop.xlane.xlu0 %9846
        %9848 = vadd.xlane.f32.xlu0 %v9823
        %v9849 = vpop.xlane.xlu0 %9848
        %9850 = vadd.xlane.f32.xlu0 %v9824
        %v9851 = vpop.xlane.xlu0 %9850
        %9852 = vadd.xlane.f32.xlu0 %v9825
        %v9853 = vpop.xlane.xlu0 %9852
        %9854 = vadd.xlane.f32.xlu0 %v9826
        %v9855 = vpop.xlane.xlu0 %9854
        %9856 = vadd.xlane.f32.xlu0 %v9827
        %v9857 = vpop.xlane.xlu0 %9856
        %9858 = vadd.xlane.f32.xlu0 %v9828
        %v9859 = vpop.xlane.xlu0 %9858
        %9860 = vadd.xlane.f32.xlu0 %v9829
        %v9861 = vpop.xlane.xlu0 %9860
        %v9862 = vmul.f32 %v9831, %v9315
        %v9863 = vmul.f32 %v9833, %v9315
        %v9864 = vmul.f32 %v9835, %v9315
        %v9865 = vmul.f32 %v9837, %v9315
        %v9866 = vmul.f32 %v9839, %v9315
        %v9867 = vmul.f32 %v9841, %v9315
        %v9868 = vmul.f32 %v9843, %v9315
        %v9869 = vmul.f32 %v9845, %v9315
        %v9870 = vmul.f32 %v9847, %v9315
        %v9871 = vmul.f32 %v9849, %v9315
        %v9872 = vmul.f32 %v9851, %v9315
        %v9873 = vmul.f32 %v9853, %v9315
        %v9874 = vmul.f32 %v9855, %v9315
        %v9875 = vmul.f32 %v9857, %v9315
        %v9876 = vmul.f32 %v9859, %v9315
        %v9877 = vmul.f32 %v9861, %v9315
        %v9878 = vsub.f32 %v9814, %v9862
        %v9879 = vsub.f32 %v9815, %v9863
        %v9880 = vsub.f32 %v9816, %v9864
        %v9881 = vsub.f32 %v9817, %v9865
        %v9882 = vsub.f32 %v9818, %v9866
        %v9883 = vsub.f32 %v9819, %v9867
        %v9884 = vsub.f32 %v9820, %v9868
        %v9885 = vsub.f32 %v9821, %v9869
        %v9886 = vsub.f32 %v9822, %v9870
        %v9887 = vsub.f32 %v9823, %v9871
        %v9888 = vsub.f32 %v9824, %v9872
        %v9889 = vsub.f32 %v9825, %v9873
        %v9890 = vsub.f32 %v9826, %v9874
        %v9891 = vsub.f32 %v9827, %v9875
        %v9892 = vsub.f32 %v9828, %v9876
        %v9893 = vsub.f32 %v9829, %v9877
        %v9894 = vmul.f32 %v9878, %v9878
        %v9895 = vmul.f32 %v9879, %v9879
        %v9896 = vmul.f32 %v9880, %v9880
        %v9897 = vmul.f32 %v9881, %v9881
        %v9898 = vmul.f32 %v9882, %v9882
        %v9899 = vmul.f32 %v9883, %v9883
        %v9900 = vmul.f32 %v9884, %v9884
        %v9901 = vmul.f32 %v9885, %v9885
        %v9902 = vmul.f32 %v9886, %v9886
        %v9903 = vmul.f32 %v9887, %v9887
        %v9904 = vmul.f32 %v9888, %v9888
        %v9905 = vmul.f32 %v9889, %v9889
        %v9906 = vmul.f32 %v9890, %v9890
        %v9907 = vmul.f32 %v9891, %v9891
        %v9908 = vmul.f32 %v9892, %v9892
        %v9909 = vmul.f32 %v9893, %v9893
        %9910 = vadd.xlane.f32.xlu0 %v9894
        %v9911 = vpop.xlane.xlu0 %9910
        %9912 = vadd.xlane.f32.xlu0 %v9895
        %v9913 = vpop.xlane.xlu0 %9912
        %9914 = vadd.xlane.f32.xlu0 %v9896
        %v9915 = vpop.xlane.xlu0 %9914
        %9916 = vadd.xlane.f32.xlu0 %v9897
        %v9917 = vpop.xlane.xlu0 %9916
        %9918 = vadd.xlane.f32.xlu0 %v9898
        %v9919 = vpop.xlane.xlu0 %9918
        %9920 = vadd.xlane.f32.xlu0 %v9899
        %v9921 = vpop.xlane.xlu0 %9920
        %9922 = vadd.xlane.f32.xlu0 %v9900
        %v9923 = vpop.xlane.xlu0 %9922
        %9924 = vadd.xlane.f32.xlu0 %v9901
        %v9925 = vpop.xlane.xlu0 %9924
        %9926 = vadd.xlane.f32.xlu0 %v9902
        %v9927 = vpop.xlane.xlu0 %9926
        %9928 = vadd.xlane.f32.xlu0 %v9903
        %v9929 = vpop.xlane.xlu0 %9928
        %9930 = vadd.xlane.f32.xlu0 %v9904
        %v9931 = vpop.xlane.xlu0 %9930
        %9932 = vadd.xlane.f32.xlu0 %v9905
        %v9933 = vpop.xlane.xlu0 %9932
        %9934 = vadd.xlane.f32.xlu0 %v9906
        %v9935 = vpop.xlane.xlu0 %9934
        %9936 = vadd.xlane.f32.xlu0 %v9907
        %v9937 = vpop.xlane.xlu0 %9936
        %9938 = vadd.xlane.f32.xlu0 %v9908
        %v9939 = vpop.xlane.xlu0 %9938
        %9940 = vadd.xlane.f32.xlu0 %v9909
        %v9941 = vpop.xlane.xlu0 %9940
        %v9942 = vmul.f32 %v9911, %v9315
        %v9943 = vmul.f32 %v9913, %v9315
        %v9944 = vmul.f32 %v9915, %v9315
        %v9945 = vmul.f32 %v9917, %v9315
        %v9946 = vmul.f32 %v9919, %v9315
        %v9947 = vmul.f32 %v9921, %v9315
        %v9948 = vmul.f32 %v9923, %v9315
        %v9949 = vmul.f32 %v9925, %v9315
        %v9950 = vmul.f32 %v9927, %v9315
        %v9951 = vmul.f32 %v9929, %v9315
        %v9952 = vmul.f32 %v9931, %v9315
        %v9953 = vmul.f32 %v9933, %v9315
        %v9954 = vmul.f32 %v9935, %v9315
        %v9955 = vmul.f32 %v9937, %v9315
        %v9956 = vmul.f32 %v9939, %v9315
        %v9957 = vmul.f32 %v9941, %v9315
        %v9958 = vadd.f32 %v9942, 1e-05
        %v9959 = vadd.f32 %v9943, 1e-05
        %v9960 = vadd.f32 %v9944, 1e-05
        %v9961 = vadd.f32 %v9945, 1e-05
        %v9962 = vadd.f32 %v9946, 1e-05
        %v9963 = vadd.f32 %v9947, 1e-05
        %v9964 = vadd.f32 %v9948, 1e-05
        %v9965 = vadd.f32 %v9949, 1e-05
        %v9966 = vadd.f32 %v9950, 1e-05
        %v9967 = vadd.f32 %v9951, 1e-05
        %v9968 = vadd.f32 %v9952, 1e-05
        %v9969 = vadd.f32 %v9953, 1e-05
        %v9970 = vadd.f32 %v9954, 1e-05
        %v9971 = vadd.f32 %v9955, 1e-05
        %v9972 = vadd.f32 %v9956, 1e-05
        %v9973 = vadd.f32 %v9957, 1e-05
        %v9974 = vrsqrt.pop %v9958
        %v9975 = vrsqrt.pop %v9959
        %v9976 = vrsqrt.pop %v9960
        %v9977 = vrsqrt.pop %v9961
        %v9978 = vrsqrt.pop %v9962
        %v9979 = vrsqrt.pop %v9963
        %v9980 = vrsqrt.pop %v9964
        %v9981 = vrsqrt.pop %v9965
        %v9982 = vrsqrt.pop %v9966
        %v9983 = vrsqrt.pop %v9967
        %v9984 = vrsqrt.pop %v9968
        %v9985 = vrsqrt.pop %v9969
        %v9986 = vrsqrt.pop %v9970
        %v9987 = vrsqrt.pop %v9971
        %v9988 = vrsqrt.pop %v9972
        %v9989 = vrsqrt.pop %v9973
        %v9990 = vmul.f32 %v9878, %v9974
        %v9991 = vmul.f32 %v9879, %v9975
        %v9992 = vmul.f32 %v9880, %v9976
        %v9993 = vmul.f32 %v9881, %v9977
        %v9994 = vmul.f32 %v9882, %v9978
        %v9995 = vmul.f32 %v9883, %v9979
        %v9996 = vmul.f32 %v9884, %v9980
        %v9997 = vmul.f32 %v9885, %v9981
        %v9998 = vmul.f32 %v9886, %v9982
        %v9999 = vmul.f32 %v9887, %v9983
        %v10000 = vmul.f32 %v9888, %v9984
        %v10001 = vmul.f32 %v9889, %v9985
        %v10002 = vmul.f32 %v9890, %v9986
        %v10003 = vmul.f32 %v9891, %v9987
        %v10004 = vmul.f32 %v9892, %v9988
        %v10005 = vmul.f32 %v9893, %v9989
        %v10006 = vlaneseq
        %v10007 = vshrl.u32 %v10006, 7
        %v10008 = vsub.s32 0, %v10007
        %v10009 = vrot.slane %v416, %v10008
        %v10010 = vmul.f32 %v9990, %v10009
        %v10011 = vmul.f32 %v9991, %v10009
        %v10012 = vmul.f32 %v9992, %v10009
        %v10013 = vmul.f32 %v9993, %v10009
        %v10014 = vmul.f32 %v9994, %v10009
        %v10015 = vmul.f32 %v9995, %v10009
        %v10016 = vmul.f32 %v9996, %v10009
        %v10017 = vmul.f32 %v9997, %v10009
        %v10018 = vmul.f32 %v9998, %v10009
        %v10019 = vmul.f32 %v9999, %v10009
        %v10020 = vmul.f32 %v10000, %v10009
        %v10021 = vmul.f32 %v10001, %v10009
        %v10022 = vmul.f32 %v10002, %v10009
        %v10023 = vmul.f32 %v10003, %v10009
        %v10024 = vmul.f32 %v10004, %v10009
        %v10025 = vmul.f32 %v10005, %v10009
        %v10026 = vlaneseq
        %v10027 = vshrl.u32 %v10026, 7
        %v10028 = vsub.s32 1, %v10027
        %v10029 = vrot.slane %v416, %v10028
        %v10030 = vadd.f32 %v10010, %v10029
        %v10031 = vadd.f32 %v10011, %v10029
        %v10032 = vadd.f32 %v10012, %v10029
        %v10033 = vadd.f32 %v10013, %v10029
        %v10034 = vadd.f32 %v10014, %v10029
        %v10035 = vadd.f32 %v10015, %v10029
        %v10036 = vadd.f32 %v10016, %v10029
        %v10037 = vadd.f32 %v10017, %v10029
        %v10038 = vadd.f32 %v10018, %v10029
        %v10039 = vadd.f32 %v10019, %v10029
        %v10040 = vadd.f32 %v10020, %v10029
        %v10041 = vadd.f32 %v10021, %v10029
        %v10042 = vadd.f32 %v10022, %v10029
        %v10043 = vadd.f32 %v10023, %v10029
        %v10044 = vadd.f32 %v10024, %v10029
        %v10045 = vadd.f32 %v10025, %v10029
        %10046 = vst [vmem:[#allocation2] sm:$0xff] %v10030
        %10047 = vst [vmem:[#allocation2 + $0x8] sm:$0xff] %v10031
        %10048 = vst [vmem:[#allocation2 + $0x10] sm:$0xff] %v10032
        %10049 = vst [vmem:[#allocation2 + $0x18] sm:$0xff] %v10033
        %10050 = vst [vmem:[#allocation2 + $0x20] sm:$0xff] %v10034
        %10051 = vst [vmem:[#allocation2 + $0x28] sm:$0xff] %v10035
        %10052 = vst [vmem:[#allocation2 + $0x30] sm:$0xff] %v10036
        %10053 = vst [vmem:[#allocation2 + $0x38] sm:$0xff] %v10037
        %10054 = vst [vmem:[#allocation2 + $0x40] sm:$0xff] %v10038
        %10055 = vst [vmem:[#allocation2 + $0x48] sm:$0xff] %v10039
        %10056 = vst [vmem:[#allocation2 + $0x50] sm:$0xff] %v10040
        %10057 = vst [vmem:[#allocation2 + $0x58] sm:$0xff] %v10041
        %10058 = vst [vmem:[#allocation2 + $0x60] sm:$0xff] %v10042
        %10059 = vst [vmem:[#allocation2 + $0x68] sm:$0xff] %v10043
        %10060 = vst [vmem:[#allocation2 + $0x70] sm:$0xff] %v10044
        %10061 = vst [vmem:[#allocation2 + $0x78] sm:$0xff] %v10045
        %p10062 = scmp.eq.s32.totalorder %s23, 1
        // Predicated region
        $region57: #{tpu_custom_call.1} parent=35 // pred_check
          %p10063 = pneg %p10062
        $region58: #{tpu_custom_call.1} parent=35 // pred_check_branch
          %10065 = sbr.rel (%p10063) target = $region60
        $region59: #{tpu_custom_call.1} parent=35 // pred_region
          %10066 = vst [vmem:[#allocation10] sm:$0xff] %v10030
          %10067 = vst [vmem:[#allocation10 + $0x8] sm:$0xff] %v10031
          %10068 = vst [vmem:[#allocation10 + $0x10] sm:$0xff] %v10032
          %10069 = vst [vmem:[#allocation10 + $0x18] sm:$0xff] %v10033
          %10070 = vst [vmem:[#allocation10 + $0x20] sm:$0xff] %v10034
          %10071 = vst [vmem:[#allocation10 + $0x28] sm:$0xff] %v10035
          %10072 = vst [vmem:[#allocation10 + $0x30] sm:$0xff] %v10036
          %10073 = vst [vmem:[#allocation10 + $0x38] sm:$0xff] %v10037
          %10074 = vst [vmem:[#allocation10 + $0x40] sm:$0xff] %v10038
          %10075 = vst [vmem:[#allocation10 + $0x48] sm:$0xff] %v10039
          %10076 = vst [vmem:[#allocation10 + $0x50] sm:$0xff] %v10040
          %10077 = vst [vmem:[#allocation10 + $0x58] sm:$0xff] %v10041
          %10078 = vst [vmem:[#allocation10 + $0x60] sm:$0xff] %v10042
          %10079 = vst [vmem:[#allocation10 + $0x68] sm:$0xff] %v10043
          %10080 = vst [vmem:[#allocation10 + $0x70] sm:$0xff] %v10044
          %10081 = vst [vmem:[#allocation10 + $0x78] sm:$0xff] %v10045
        $region60: #{tpu_custom_call.1} parent=35 // pred_fallthru
          _
        // Predicated region
        $region61: #{tpu_custom_call.1} parent=35 // pred_check
          %p10082 = pneg %p147
        $region62: #{tpu_custom_call.1} parent=35 // pred_check_branch
          %10084 = sbr.rel (%p10082) target = $region64
        $region63: #{tpu_custom_call.1} parent=35 // pred_region
          %s10085 = smul.u32 8, %s22
          %s10087 = ssub.s32 2048, 2048
          %10088 = vsyncadd [#allocation5], %s10087
          %s10089 = smul.addr %s10085, 2
          %s10090 = smul.addr %s10089, 128
          %s10091 = scalar_lea.hbm %s4, %s10090
          %s10092 = sshll.u32 [#allocation10], 4
          %s10093 = int_to_ptr.vmem [resolvable:$true] %s10092
          %10098 = dma.vmem_to_hbm [thread:$0]  %s10093, 2048, %s10091, [#allocation5], 128, 128, 8
        $region64: #{tpu_custom_call.1} parent=35 // pred_fallthru
          _
        // Predicated region
        $region65: #{tpu_custom_call.1} parent=35 // pred_check
          %p10099 = pneg %p147
        $region66: #{tpu_custom_call.1} parent=35 // pred_check_branch
          %10101 = sbr.rel (%p10099) target = $region68
        $region67: #{tpu_custom_call.1} parent=35 // pred_region
          %10102 = dma.done [#allocation5], 2048
        $region68: #{tpu_custom_call.1} parent=35 // pred_fallthru
          _
      $region36: #{tpu_custom_call.1} parent=5 // pred_fallthru
        _
      %p10103 = scmp.le.s32.totalorder 2, %s13
      // Predicated region
      $region69: #{tpu_custom_call.1} parent=5 // pred_check
        %p10104 = pneg %p10103
      $region70: #{tpu_custom_call.1} parent=5 // pred_check_branch
        %10106 = sbr.rel (%p10104) target = $region72
      $region71: #{tpu_custom_call.1} parent=5 // pred_region
        %s10107 = ssub.s32 %s13, 2
      $region72: #{tpu_custom_call.1} parent=5 // pred_fallthru
        _
    $region6: #{tpu_custom_call.1} parent=1 // loop_footer
      %s17 = sadd.s32 1, %s13
    $region7: #{tpu_custom_call.1} parent=1 // loop_footer_branch
      %12 = sbr.rel target = $region3
    $region8: #{tpu_custom_call.1} parent=1 // loop_exit
      _
    %10108 = vsyncpa [#allocation4], 1
    %s10109 = scalar_lea.sflag [#allocation4], 1
    %10110 = vsyncpa %s10109, 1
    %10111 = vsyncpa [#allocation7], 1
    %10112 = vsyncpa [#allocation5], 1
    %s10113 = scalar_lea.sflag [#allocation5], 1
    %10114 = vsyncpa %s10113, 1

</llo_original>
